<compile_context>
chip_gen: v5e
topology: v5e:2x2
jax: 0.10.0
libtpu: 0.0.40
codegen_flags: <defaults>
</compile_context>

<pallas_src>
import functools
import math

import jax
import jax.numpy as jnp
from jax import lax
from jax.experimental import pallas as pl
from jax.experimental.pallas import tpu as pltpu  # noqa: F401  (TPU backend)

LN_EPS = 1e-5          # torch.nn.LayerNorm default
NEG_INF = -1e9


def _decoder_layer_kernel(n_heads, n_hide, B, N, Tq, Tm,
                          x_ref, m_ref, ak_ref, w_ref, vec_ref, o_ref):
    F = x_ref.shape[-1]
    H = n_heads
    dk = F // H
    G = B * N
    scale = 1.0 / math.sqrt(float(dk))

    vec = vec_ref[...]                               # (11, 128) f32 bias / LN slab

    def ln(v, gi, bi):
        mu = jnp.mean(v, axis=-1, keepdims=True)
        var = jnp.mean((v - mu) ** 2, axis=-1, keepdims=True)
        return (v - mu) * lax.rsqrt(var + LN_EPS) * vec[gi:gi + 1, :F] + vec[bi:bi + 1, :F]

    def split_heads(a2, T):
        # (G*T, F) -> (H*G, T, dk): heads merged into the single batch dim so the
        # score and P@V contractions are ONE batched dot_general each.
        parts = [a2[:, h * dk:(h + 1) * dk].reshape(G, T, dk) for h in range(H)]
        return jnp.stack(parts, axis=0).reshape(H * G, T, dk)

    def attention(q2, k2, v2, Tk, wo_idx, bo_idx, mask_bias):
        qb = (split_heads(q2, Tq) * scale).astype(jnp.bfloat16)
        kb = split_heads(k2, Tk).astype(jnp.bfloat16)
        vb = split_heads(v2, Tk).astype(jnp.bfloat16)
        s = jnp.einsum('bqd,bkd->bqk', qb, kb,
                       preferred_element_type=jnp.float32)          # (H*G, Tq, Tk)
        if mask_bias is not None:
            s = s + mask_bias[None, :, :]
        s = s - jnp.max(s, axis=-1, keepdims=True)
        p = jnp.exp(s)
        p = p * pl.reciprocal(jnp.sum(p, axis=-1, keepdims=True), approx=True)
        ctx = jnp.einsum('bqk,bkd->bqd', p.astype(jnp.bfloat16), vb,
                         preferred_element_type=jnp.float32)        # (H*G, Tq, dk)
        ctx = ctx.reshape(H, G * Tq, dk)
        ctx_flat = jnp.concatenate([ctx[h] for h in range(H)], axis=-1)   # (G*Tq, F)
        out = jnp.dot(ctx_flat.astype(jnp.bfloat16), w_ref[wo_idx],
                      preferred_element_type=jnp.float32)[:, :F]
        return out + vec[bo_idx:bo_idx + 1, :F]

    x2 = x_ref[...]                                  # (B*N*Tq, F) f32 residual stream
    m2 = m_ref[...]                                  # (B*N*Tm, F) f32 encoder memory

    # ---------- sublayer 0: masked multi-head self-attention ----------
    n_hide_c = min(n_hide, Tq - 1)
    row = lax.broadcasted_iota(jnp.int32, (Tq, Tq), 0)
    col = lax.broadcasted_iota(jnp.int32, (Tq, Tq), 1)
    allowed = (col <= row) & ((row == col) | ((row - col) > n_hide_c))
    mask_bias = jnp.where(allowed, 0.0, NEG_INF).astype(jnp.float32)

    xn = ln(x2, 5, 6)
    qkv = jnp.dot(xn.astype(jnp.bfloat16), w_ref[0],                # fused QKV proj
                  preferred_element_type=jnp.float32) + vec[0:1, :]  # (GT, 128)
    x2 = x2 + attention(qkv[:, 0:F], qkv[:, F:2 * F], qkv[:, 2 * F:3 * F],
                        Tq, 1, 1, mask_bias)

    # ---------- sublayer 1: multi-head cross-attention over memory ----------
    xn = ln(x2, 7, 8)
    q = jnp.dot(xn.astype(jnp.bfloat16), w_ref[2],
                preferred_element_type=jnp.float32)[:, :F] + vec[2:3, :F]
    kv = jnp.dot(m2.astype(jnp.bfloat16), w_ref[3],                  # fused KV proj
                 preferred_element_type=jnp.float32) + vec[3:4, :]   # (GM, 128)
    x2 = x2 + attention(q, kv[:, 0:F], kv[:, F:2 * F], Tm, 4, 4, None)

    # ---------- sublayer 2: spatial GCN feed-forward ----------
    # (I_B ⊗ A ⊗ I_T) @ x on the flat (B*N*T, F) layout == per-timestep A @ x_t,
    # so no transpose / relayout between attention and the GCN is needed.
    xn = ln(x2, 9, 10)
    z = jnp.dot(ak_ref[...], xn.astype(jnp.bfloat16),
                preferred_element_type=jnp.float32)                  # (GT, F)
    z = jnp.dot(z.astype(jnp.bfloat16), w_ref[5],
                preferred_element_type=jnp.float32)[:, :F]
    x2 = x2 + jnp.maximum(z, 0.0)                                    # relu(relu(.)) == relu(.)

    o_ref[...] = x2.astype(o_ref.dtype)


def pack_params(params, B, N, Tq):
    """One-time packing of the 26 small parameters into 3 slabs (done outside jit)."""
    F = params["theta"].shape[0]
    p1, p2 = params["self_attn"], params["src_attn"]

    def pad_cols(a):
        return jnp.pad(a, ((0, 0), (0, 128 - a.shape[1])))

    w_slab = jnp.stack([
        pad_cols(jnp.concatenate([p1["wq"], p1["wk"], p1["wv"]], axis=1)),  # 0: fused QKV (self)
        pad_cols(p1["wo"]),                                                 # 1: Wo (self)
        pad_cols(p2["wq"]),                                                 # 2: Wq (cross)
        pad_cols(jnp.concatenate([p2["wk"], p2["wv"]], axis=1)),            # 3: fused KV (cross)
        pad_cols(p2["wo"]),                                                 # 4: Wo (cross)
        pad_cols(params["theta"]),                                          # 5: GCN Theta
    ], axis=0).astype(jnp.bfloat16)                                         # (6, F, 128)

    vec_slab = jnp.concatenate([
        pad_cols(jnp.concatenate([p1["bq"], p1["bk"], p1["bv"]], axis=1)),  # 0
        pad_cols(p1["bo"]),                                                 # 1
        pad_cols(p2["bq"]),                                                 # 2
        pad_cols(jnp.concatenate([p2["bk"], p2["bv"]], axis=1)),            # 3
        pad_cols(p2["bo"]),                                                 # 4
        pad_cols(params["ln0"]["gamma"]), pad_cols(params["ln0"]["beta"]),  # 5, 6
        pad_cols(params["ln1"]["gamma"]), pad_cols(params["ln1"]["beta"]),  # 7, 8
        pad_cols(params["ln2"]["gamma"]), pad_cols(params["ln2"]["beta"]),  # 9, 10
    ], axis=0).astype(jnp.float32)                                          # (11, 128)

    a_kron = jnp.kron(jnp.eye(B, dtype=jnp.float32),
                      jnp.kron(params["adj"], jnp.eye(Tq, dtype=jnp.float32)))
    return {"w_slab": w_slab, "vec_slab": vec_slab,
            "a_kron": a_kron.astype(jnp.bfloat16)}


def decoder_layer(x, memory, packed, n_heads, n_hide=0):
    """x: (B, N, T', F), memory: (B, N, T, F) -> (B, N, T', F)"""
    B, N, Tq, F = x.shape
    Tm = memory.shape[2]
    GT, GM = B * N * Tq, B * N * Tm
    x2 = x.reshape(GT, F)
    m2 = memory.reshape(GM, F)

    kernel = functools.partial(_decoder_layer_kernel, n_heads, n_hide, B, N, Tq, Tm)
    out = pl.pallas_call(
        kernel,
        out_shape=jax.ShapeDtypeStruct((GT, F), x.dtype),
        grid=(),                                   # single invocation: whole problem fits VMEM
        in_specs=[
            pl.BlockSpec((GT, F), lambda: (0, 0)),
            pl.BlockSpec((GM, F), lambda: (0, 0)),
            pl.BlockSpec((GT, GT), lambda: (0, 0)),
            pl.BlockSpec((6, F, 128), lambda: (0, 0, 0)),
            pl.BlockSpec((11, 128), lambda: (0, 0)),
        ],
        out_specs=pl.BlockSpec((GT, F), lambda: (0, 0)),
    )(x2, m2, packed["a_kron"], packed["w_slab"], packed["vec_slab"])
    return out.reshape(B, N, Tq, F)


# ------------------------------ pure-JAX reference ------------------------------------
def decoder_layer_reference(x, memory, params, n_heads, n_hide):
    B, N, Tq, F = x.shape
    dk = F // n_heads
    HI = lax.Precision.HIGHEST

    def ln(v, p):
        mu = jnp.mean(v, axis=-1, keepdims=True)
        var = jnp.mean((v - mu) ** 2, axis=-1, keepdims=True)
        return (v - mu) * lax.rsqrt(var + LN_EPS) * p["gamma"][0] + p["beta"][0]

    def mha(q_in, kv_in, p, mask):
        Tk = kv_in.shape[2]
        q = jnp.einsum('bntf,fg->bntg', q_in, p["wq"], precision=HI) + p["bq"][0]
        k = jnp.einsum('bntf,fg->bntg', kv_in, p["wk"], precision=HI) + p["bk"][0]
        v = jnp.einsum('bntf,fg->bntg', kv_in, p["wv"], precision=HI) + p["bv"][0]
        q = q.reshape(B, N, Tq, n_heads, dk)
        k = k.reshape(B, N, Tk, n_heads, dk)
        v = v.reshape(B, N, Tk, n_heads, dk)
        s = jnp.einsum('bnqhd,bnkhd->bnhqk', q, k, precision=HI) / math.sqrt(dk)
        if mask is not None:
            s = jnp.where(mask, s, NEG_INF)
        a = jax.nn.softmax(s, axis=-1)
        o = jnp.einsum('bnhqk,bnkhd->bnqhd', a, v, precision=HI).reshape(B, N, Tq, F)
        return jnp.einsum('bntf,fg->bntg', o, p["wo"], precision=HI) + p["bo"][0]

    n_hide = min(n_hide, Tq - 1)
    row = jnp.arange(Tq)[:, None]
    col = jnp.arange(Tq)[None, :]
    allowed = (col <= row) & ((row == col) | ((row - col) > n_hide))

    xn = ln(x, params["ln0"])
    x = x + mha(xn, xn, params["self_attn"], allowed)
    xn = ln(x, params["ln1"])
    x = x + mha(xn, memory, params["src_attn"], None)
    xn = ln(x, params["ln2"])
    z = jnp.einsum('mn,bntf->bmtf', params["adj"], xn, precision=HI)
    z = jnp.einsum('bntf,fg->bntg', z, params["theta"], precision=HI)
    return x + jnp.maximum(z, 0.0)


# -------------------------------- parameter init --------------------------------------
def _linear_init(key, fan_in, fan_out):
    # torch.nn.Linear default: U(-1/sqrt(fan_in), 1/sqrt(fan_in))
    kw, kb = jax.random.split(key)
    bound = 1.0 / math.sqrt(fan_in)
    w = jax.random.uniform(kw, (fan_in, fan_out), jnp.float32, -bound, bound)
    b = jax.random.uniform(kb, (1, fan_out), jnp.float32, -bound, bound)
    return w, b


def _mha_params(key, F):
    keys = jax.random.split(key, 4)
    p = {}
    for n, k in zip(["q", "k", "v", "o"], keys):
        w, b = _linear_init(k, F, F)
        p["w" + n], p["b" + n] = w, b
    return p


def _ln_params(F):
    return {"gamma": jnp.ones((1, F), jnp.float32),
            "beta": jnp.zeros((1, F), jnp.float32)}


def _sym_norm_adj(N):
    eye = jnp.eye(N, dtype=jnp.float32)
    A = eye + jnp.roll(eye, 1, axis=0) + jnp.roll(eye, -1, axis=0)  # ring + self loops
    A = jnp.minimum(A, 1.0)
    d_inv_sqrt = 1.0 / jnp.sqrt(jnp.sum(A, axis=1))
    return A * d_inv_sqrt[:, None] * d_inv_sqrt[None, :]


def init_params(key, N, F):
    k1, k2, k3 = jax.random.split(key, 3)
    theta, _ = _linear_init(k3, F, F)  # GCN Theta is bias-free; discard bias
    return {
        "self_attn": _mha_params(k1, F),
        "src_attn": _mha_params(k2, F),
        "ln0": _ln_params(F),
        "ln1": _ln_params(F),
        "ln2": _ln_params(F),
        "theta": theta,
        "adj": _sym_norm_adj(N),
    }
    # TODO(synk): dropout is a no-op here (eval-mode semantics); rate is not used.


if __name__ == "__main__":
    B, N, Tq, Tm, F, H = 2, 8, 8, 16, 32, 4
    n_hide = 1

    key = jax.random.PRNGKey(0)
    kx, km, kp = jax.random.split(key, 3)
    x = jax.random.normal(kx, (B, N, Tq, F), jnp.float32)       # decoder input (B,N,T',F)
    memory = jax.random.normal(km, (B, N, Tm, F), jnp.float32)  # encoder memory (B,N,T,F)
    params = init_params(kp, N, F)
    packed = pack_params(params, B, N, Tq)                      # one-time, outside the jit

    fwd = jax.jit(functools.partial(decoder_layer, n_heads=H, n_hide=n_hide))
    out = jax.block_until_ready(fwd(x, memory, packed))

    assert out.shape == (B, N, Tq, F)
    assert bool(jnp.all(jnp.isfinite(out)))
    ref = decoder_layer_reference(x, memory, params, H, n_hide)
    err = float(jnp.max(jnp.abs(out - ref)))
    # bf16 MXU operands (f32 accumulation) + approx reciprocal => looser tol than pure f32.
    assert err < 5e-2, f"mismatch vs pure-JAX reference: max abs err = {err}"
    print("KERNEL_OK")
</pallas_src>

<mosaic_0001>
module attributes {stable_mosaic.version = 11 : i64} {
  func.func @_decoder_layer_kernel(%arg0: memref<128x32xf32, #tpu.memory_space<vmem>>, %arg1: memref<256x32xf32, #tpu.memory_space<vmem>>, %arg2: memref<128x128xbf16, #tpu.memory_space<vmem>>, %arg3: memref<6x32x128xbf16, #tpu.memory_space<vmem>>, %arg4: memref<11x128xf32, #tpu.memory_space<vmem>>, %arg5: memref<128x32xf32, #tpu.memory_space<vmem>>) attributes {dimension_semantics = [], scalar_prefetch = 0 : i64, scratch_operands = 0 : i64, tpu.core_type = #tpu.core_type<tc>} {
    %c0 = arith.constant 0 : index
    %c0_0 = arith.constant 0 : index
    %0 = vector.load %arg4[%c0, %c0_0] : memref<11x128xf32, #tpu.memory_space<vmem>>, vector<11x128xf32>
    %c0_1 = arith.constant 0 : index
    %c0_2 = arith.constant 0 : index
    %1 = vector.load %arg0[%c0_1, %c0_2] : memref<128x32xf32, #tpu.memory_space<vmem>>, vector<128x32xf32>
    %c0_3 = arith.constant 0 : index
    %c0_4 = arith.constant 0 : index
    %2 = vector.load %arg1[%c0_3, %c0_4] : memref<256x32xf32, #tpu.memory_space<vmem>>, vector<256x32xf32>
    %3 = tpu.iota {dimensions = array<i32: 0>} : vector<8x8xi32>
    %4 = tpu.iota {dimensions = array<i32: 1>} : vector<8x8xi32>
    %5 = arith.cmpi sle, %4, %3 : vector<8x8xi32>
    %6 = arith.cmpi eq, %3, %4 : vector<8x8xi32>
    %7 = arith.subi %3, %4 : vector<8x8xi32>
    %c1_i32 = arith.constant 1 : i32
    %8 = vector.broadcast %c1_i32 : i32 to vector<8x8xi32>
    %9 = arith.cmpi sgt, %7, %8 : vector<8x8xi32>
    %10 = arith.ori %6, %9 : vector<8x8xi1>
    %11 = arith.andi %5, %10 : vector<8x8xi1>
    %cst = arith.constant 0.000000e+00 : f32
    %cst_5 = arith.constant -1.000000e+09 : f32
    %12 = vector.broadcast %cst : f32 to vector<8x8xf32>
    %13 = vector.broadcast %cst_5 : f32 to vector<8x8xf32>
    %14 = arith.select %11, %12, %13 : vector<8x8xi1>, vector<8x8xf32>
    %cst_6 = arith.constant dense<0.000000e+00> : vector<128xf32>
    %15 = vector.multi_reduction <add>, %1, %cst_6 [1] : vector<128x32xf32> to vector<128xf32>
    %16 = vector.shape_cast %15 : vector<128xf32> to vector<128x1xf32>
    %cst_7 = arith.constant 3.200000e+01 : f32
    %17 = vector.broadcast %cst_7 : f32 to vector<128x1xf32>
    %18 = arith.divf %16, %17 : vector<128x1xf32>
    %19 = vector.broadcast %18 : vector<128x1xf32> to vector<128x32xf32>
    %20 = arith.subf %1, %19 : vector<128x32xf32>
    %21 = arith.mulf %20, %20 : vector<128x32xf32>
    %cst_8 = arith.constant dense<0.000000e+00> : vector<128xf32>
    %22 = vector.multi_reduction <add>, %21, %cst_8 [1] : vector<128x32xf32> to vector<128xf32>
    %23 = vector.shape_cast %22 : vector<128xf32> to vector<128x1xf32>
    %cst_9 = arith.constant 3.200000e+01 : f32
    %24 = vector.broadcast %cst_9 : f32 to vector<128x1xf32>
    %25 = arith.divf %23, %24 : vector<128x1xf32>
    %26 = vector.broadcast %18 : vector<128x1xf32> to vector<128x32xf32>
    %27 = arith.subf %1, %26 : vector<128x32xf32>
    %cst_10 = arith.constant 9.99999974E-6 : f32
    %28 = vector.broadcast %cst_10 : f32 to vector<128x1xf32>
    %29 = arith.addf %25, %28 : vector<128x1xf32>
    %30 = math.rsqrt %29 : vector<128x1xf32>
    %31 = vector.broadcast %30 : vector<128x1xf32> to vector<128x32xf32>
    %32 = arith.mulf %27, %31 : vector<128x32xf32>
    %33 = vector.extract_strided_slice %0 {offsets = [5, 0], sizes = [1, 32], strides = [1, 1]} : vector<11x128xf32> to vector<1x32xf32>
    %34 = vector.broadcast %33 : vector<1x32xf32> to vector<128x32xf32>
    %35 = arith.mulf %32, %34 : vector<128x32xf32>
    %36 = vector.extract_strided_slice %0 {offsets = [6, 0], sizes = [1, 32], strides = [1, 1]} : vector<11x128xf32> to vector<1x32xf32>
    %37 = vector.broadcast %36 : vector<1x32xf32> to vector<128x32xf32>
    %38 = arith.addf %35, %37 : vector<128x32xf32>
    %39 = arith.truncf %38 : vector<128x32xf32> to vector<128x32xbf16>
    %c0_11 = arith.constant 0 : index
    %c0_12 = arith.constant 0 : index
    %c0_13 = arith.constant 0 : index
    %40 = vector.load %arg3[%c0_11, %c0_12, %c0_13] : memref<6x32x128xbf16, #tpu.memory_space<vmem>>, vector<1x32x128xbf16>
    %41 = vector.shape_cast %40 : vector<1x32x128xbf16> to vector<32x128xbf16>
    %cst_14 = arith.constant dense<0.000000e+00> : vector<128x128xf32>
    %42 = tpu.matmul %39, %41, %cst_14 {dimension_numbers = #tpu.dot_dimension_numbers<[1], [0], [0], [1], [0, 0, 1, 1], [], []>} : vector<128x32xbf16>, vector<32x128xbf16>, vector<128x128xf32> -> vector<128x128xf32>
    %43 = vector.extract_strided_slice %0 {offsets = [0, 0], sizes = [1, 128], strides = [1, 1]} : vector<11x128xf32> to vector<1x128xf32>
    %44 = vector.broadcast %43 : vector<1x128xf32> to vector<128x128xf32>
    %45 = arith.addf %42, %44 : vector<128x128xf32>
    %46 = vector.extract_strided_slice %45 {offsets = [0, 0], sizes = [128, 32], strides = [1, 1]} : vector<128x128xf32> to vector<128x32xf32>
    %47 = vector.extract_strided_slice %45 {offsets = [0, 32], sizes = [128, 32], strides = [1, 1]} : vector<128x128xf32> to vector<128x32xf32>
    %48 = vector.extract_strided_slice %45 {offsets = [0, 64], sizes = [128, 32], strides = [1, 1]} : vector<128x128xf32> to vector<128x32xf32>
    %49 = vector.extract_strided_slice %46 {offsets = [0, 0], sizes = [128, 8], strides = [1, 1]} : vector<128x32xf32> to vector<128x8xf32>
    %50 = vector.shape_cast %49 : vector<128x8xf32> to vector<16x8x8xf32>
    %51 = vector.extract_strided_slice %46 {offsets = [0, 8], sizes = [128, 8], strides = [1, 1]} : vector<128x32xf32> to vector<128x8xf32>
    %52 = vector.shape_cast %51 : vector<128x8xf32> to vector<16x8x8xf32>
    %53 = vector.extract_strided_slice %46 {offsets = [0, 16], sizes = [128, 8], strides = [1, 1]} : vector<128x32xf32> to vector<128x8xf32>
    %54 = vector.shape_cast %53 : vector<128x8xf32> to vector<16x8x8xf32>
    %55 = vector.extract_strided_slice %46 {offsets = [0, 24], sizes = [128, 8], strides = [1, 1]} : vector<128x32xf32> to vector<128x8xf32>
    %56 = vector.shape_cast %55 : vector<128x8xf32> to vector<16x8x8xf32>
    %57 = vector.shape_cast %50 : vector<16x8x8xf32> to vector<1x16x8x8xf32>
    %58 = vector.shape_cast %52 : vector<16x8x8xf32> to vector<1x16x8x8xf32>
    %59 = vector.shape_cast %54 : vector<16x8x8xf32> to vector<1x16x8x8xf32>
    %60 = vector.shape_cast %56 : vector<16x8x8xf32> to vector<1x16x8x8xf32>
    %61 = tpu.concatenate %57, %58, %59, %60 in 0 : vector<1x16x8x8xf32>, vector<1x16x8x8xf32>, vector<1x16x8x8xf32>, vector<1x16x8x8xf32> -> vector<4x16x8x8xf32>
    %62 = vector.shape_cast %61 : vector<4x16x8x8xf32> to vector<64x8x8xf32>
    %cst_15 = arith.constant 0.353553385 : f32
    %63 = vector.broadcast %cst_15 : f32 to vector<64x8x8xf32>
    %64 = arith.mulf %62, %63 : vector<64x8x8xf32>
    %65 = arith.truncf %64 : vector<64x8x8xf32> to vector<64x8x8xbf16>
    %66 = vector.extract_strided_slice %47 {offsets = [0, 0], sizes = [128, 8], strides = [1, 1]} : vector<128x32xf32> to vector<128x8xf32>
    %67 = vector.shape_cast %66 : vector<128x8xf32> to vector<16x8x8xf32>
    %68 = vector.extract_strided_slice %47 {offsets = [0, 8], sizes = [128, 8], strides = [1, 1]} : vector<128x32xf32> to vector<128x8xf32>
    %69 = vector.shape_cast %68 : vector<128x8xf32> to vector<16x8x8xf32>
    %70 = vector.extract_strided_slice %47 {offsets = [0, 16], sizes = [128, 8], strides = [1, 1]} : vector<128x32xf32> to vector<128x8xf32>
    %71 = vector.shape_cast %70 : vector<128x8xf32> to vector<16x8x8xf32>
    %72 = vector.extract_strided_slice %47 {offsets = [0, 24], sizes = [128, 8], strides = [1, 1]} : vector<128x32xf32> to vector<128x8xf32>
    %73 = vector.shape_cast %72 : vector<128x8xf32> to vector<16x8x8xf32>
    %74 = vector.shape_cast %67 : vector<16x8x8xf32> to vector<1x16x8x8xf32>
    %75 = vector.shape_cast %69 : vector<16x8x8xf32> to vector<1x16x8x8xf32>
    %76 = vector.shape_cast %71 : vector<16x8x8xf32> to vector<1x16x8x8xf32>
    %77 = vector.shape_cast %73 : vector<16x8x8xf32> to vector<1x16x8x8xf32>
    %78 = tpu.concatenate %74, %75, %76, %77 in 0 : vector<1x16x8x8xf32>, vector<1x16x8x8xf32>, vector<1x16x8x8xf32>, vector<1x16x8x8xf32> -> vector<4x16x8x8xf32>
    %79 = vector.shape_cast %78 : vector<4x16x8x8xf32> to vector<64x8x8xf32>
    %80 = arith.truncf %79 : vector<64x8x8xf32> to vector<64x8x8xbf16>
    %81 = vector.extract_strided_slice %48 {offsets = [0, 0], sizes = [128, 8], strides = [1, 1]} : vector<128x32xf32> to vector<128x8xf32>
    %82 = vector.shape_cast %81 : vector<128x8xf32> to vector<16x8x8xf32>
    %83 = vector.extract_strided_slice %48 {offsets = [0, 8], sizes = [128, 8], strides = [1, 1]} : vector<128x32xf32> to vector<128x8xf32>
    %84 = vector.shape_cast %83 : vector<128x8xf32> to vector<16x8x8xf32>
    %85 = vector.extract_strided_slice %48 {offsets = [0, 16], sizes = [128, 8], strides = [1, 1]} : vector<128x32xf32> to vector<128x8xf32>
    %86 = vector.shape_cast %85 : vector<128x8xf32> to vector<16x8x8xf32>
    %87 = vector.extract_strided_slice %48 {offsets = [0, 24], sizes = [128, 8], strides = [1, 1]} : vector<128x32xf32> to vector<128x8xf32>
    %88 = vector.shape_cast %87 : vector<128x8xf32> to vector<16x8x8xf32>
    %89 = vector.shape_cast %82 : vector<16x8x8xf32> to vector<1x16x8x8xf32>
    %90 = vector.shape_cast %84 : vector<16x8x8xf32> to vector<1x16x8x8xf32>
    %91 = vector.shape_cast %86 : vector<16x8x8xf32> to vector<1x16x8x8xf32>
    %92 = vector.shape_cast %88 : vector<16x8x8xf32> to vector<1x16x8x8xf32>
    %93 = tpu.concatenate %89, %90, %91, %92 in 0 : vector<1x16x8x8xf32>, vector<1x16x8x8xf32>, vector<1x16x8x8xf32>, vector<1x16x8x8xf32> -> vector<4x16x8x8xf32>
    %94 = vector.shape_cast %93 : vector<4x16x8x8xf32> to vector<64x8x8xf32>
    %95 = arith.truncf %94 : vector<64x8x8xf32> to vector<64x8x8xbf16>
    "tpu.trace_start"() <{level = 10 : i32, message = "bqd,bkd->bqk"}> : () -> ()
    %cst_16 = arith.constant dense<0.000000e+00> : vector<64x8x8xf32>
    %96 = tpu.matmul %65, %80, %cst_16 {dimension_numbers = #tpu.dot_dimension_numbers<[2], [2], [1], [1], [0, 0, 0, 1, 1, 1], [0], [0]>} : vector<64x8x8xbf16>, vector<64x8x8xbf16>, vector<64x8x8xf32> -> vector<64x8x8xf32>
    "tpu.trace_stop"() : () -> ()
    %97 = vector.shape_cast %14 : vector<8x8xf32> to vector<1x8x8xf32>
    %98 = vector.broadcast %97 : vector<1x8x8xf32> to vector<64x8x8xf32>
    %99 = arith.addf %96, %98 : vector<64x8x8xf32>
    %cst_17 = arith.constant dense<0xFF800000> : vector<64x8xf32>
    %100 = vector.multi_reduction <maximumf>, %99, %cst_17 [2] : vector<64x8x8xf32> to vector<64x8xf32>
    %101 = vector.shape_cast %100 : vector<64x8xf32> to vector<64x8x1xf32>
    %102 = vector.broadcast %101 : vector<64x8x1xf32> to vector<64x8x8xf32>
    %103 = arith.subf %99, %102 : vector<64x8x8xf32>
    %104 = math.exp %103 : vector<64x8x8xf32>
    %cst_18 = arith.constant dense<0.000000e+00> : vector<64x8xf32>
    %105 = vector.multi_reduction <add>, %104, %cst_18 [2] : vector<64x8x8xf32> to vector<64x8xf32>
    %106 = vector.shape_cast %105 : vector<64x8xf32> to vector<64x8x1xf32>
    %107 = tpu.reciprocal %106 {approx = true} : vector<64x8x1xf32> -> vector<64x8x1xf32>
    %108 = vector.broadcast %107 : vector<64x8x1xf32> to vector<64x8x8xf32>
    %109 = arith.mulf %104, %108 : vector<64x8x8xf32>
    %110 = arith.truncf %109 : vector<64x8x8xf32> to vector<64x8x8xbf16>
    "tpu.trace_start"() <{level = 10 : i32, message = "bqk,bkd->bqd"}> : () -> ()
    %cst_19 = arith.constant dense<0.000000e+00> : vector<64x8x8xf32>
    %111 = tpu.matmul %110, %95, %cst_19 {dimension_numbers = #tpu.dot_dimension_numbers<[2], [1], [1], [2], [0, 0, 0, 1, 1, 2], [0], [0]>} : vector<64x8x8xbf16>, vector<64x8x8xbf16>, vector<64x8x8xf32> -> vector<64x8x8xf32>
    "tpu.trace_stop"() : () -> ()
    %112 = vector.shape_cast %111 : vector<64x8x8xf32> to vector<4x128x8xf32>
    %113 = vector.extract_strided_slice %112 {offsets = [0, 0, 0], sizes = [1, 128, 8], strides = [1, 1, 1]} : vector<4x128x8xf32> to vector<1x128x8xf32>
    %114 = vector.shape_cast %113 : vector<1x128x8xf32> to vector<128x8xf32>
    %115 = vector.extract_strided_slice %112 {offsets = [1, 0, 0], sizes = [1, 128, 8], strides = [1, 1, 1]} : vector<4x128x8xf32> to vector<1x128x8xf32>
    %116 = vector.shape_cast %115 : vector<1x128x8xf32> to vector<128x8xf32>
    %117 = vector.extract_strided_slice %112 {offsets = [2, 0, 0], sizes = [1, 128, 8], strides = [1, 1, 1]} : vector<4x128x8xf32> to vector<1x128x8xf32>
    %118 = vector.shape_cast %117 : vector<1x128x8xf32> to vector<128x8xf32>
    %119 = vector.extract_strided_slice %112 {offsets = [3, 0, 0], sizes = [1, 128, 8], strides = [1, 1, 1]} : vector<4x128x8xf32> to vector<1x128x8xf32>
    %120 = vector.shape_cast %119 : vector<1x128x8xf32> to vector<128x8xf32>
    %121 = tpu.concatenate %114, %116, %118, %120 in 1 : vector<128x8xf32>, vector<128x8xf32>, vector<128x8xf32>, vector<128x8xf32> -> vector<128x32xf32>
    %122 = arith.truncf %121 : vector<128x32xf32> to vector<128x32xbf16>
    %c1 = arith.constant 1 : index
    %c0_20 = arith.constant 0 : index
    %c0_21 = arith.constant 0 : index
    %123 = vector.load %arg3[%c1, %c0_20, %c0_21] : memref<6x32x128xbf16, #tpu.memory_space<vmem>>, vector<1x32x128xbf16>
    %124 = vector.shape_cast %123 : vector<1x32x128xbf16> to vector<32x128xbf16>
    %cst_22 = arith.constant dense<0.000000e+00> : vector<128x128xf32>
    %125 = tpu.matmul %122, %124, %cst_22 {dimension_numbers = #tpu.dot_dimension_numbers<[1], [0], [0], [1], [0, 0, 1, 1], [], []>} : vector<128x32xbf16>, vector<32x128xbf16>, vector<128x128xf32> -> vector<128x128xf32>
    %126 = vector.extract_strided_slice %125 {offsets = [0, 0], sizes = [128, 32], strides = [1, 1]} : vector<128x128xf32> to vector<128x32xf32>
    %127 = vector.extract_strided_slice %0 {offsets = [1, 0], sizes = [1, 32], strides = [1, 1]} : vector<11x128xf32> to vector<1x32xf32>
    %128 = vector.broadcast %127 : vector<1x32xf32> to vector<128x32xf32>
    %129 = arith.addf %126, %128 : vector<128x32xf32>
    %130 = arith.addf %1, %129 : vector<128x32xf32>
    %cst_23 = arith.constant dense<0.000000e+00> : vector<128xf32>
    %131 = vector.multi_reduction <add>, %130, %cst_23 [1] : vector<128x32xf32> to vector<128xf32>
    %132 = vector.shape_cast %131 : vector<128xf32> to vector<128x1xf32>
    %cst_24 = arith.constant 3.200000e+01 : f32
    %133 = vector.broadcast %cst_24 : f32 to vector<128x1xf32>
    %134 = arith.divf %132, %133 : vector<128x1xf32>
    %135 = vector.broadcast %134 : vector<128x1xf32> to vector<128x32xf32>
    %136 = arith.subf %130, %135 : vector<128x32xf32>
    %137 = arith.mulf %136, %136 : vector<128x32xf32>
    %cst_25 = arith.constant dense<0.000000e+00> : vector<128xf32>
    %138 = vector.multi_reduction <add>, %137, %cst_25 [1] : vector<128x32xf32> to vector<128xf32>
    %139 = vector.shape_cast %138 : vector<128xf32> to vector<128x1xf32>
    %cst_26 = arith.constant 3.200000e+01 : f32
    %140 = vector.broadcast %cst_26 : f32 to vector<128x1xf32>
    %141 = arith.divf %139, %140 : vector<128x1xf32>
    %142 = vector.broadcast %134 : vector<128x1xf32> to vector<128x32xf32>
    %143 = arith.subf %130, %142 : vector<128x32xf32>
    %cst_27 = arith.constant 9.99999974E-6 : f32
    %144 = vector.broadcast %cst_27 : f32 to vector<128x1xf32>
    %145 = arith.addf %141, %144 : vector<128x1xf32>
    %146 = math.rsqrt %145 : vector<128x1xf32>
    %147 = vector.broadcast %146 : vector<128x1xf32> to vector<128x32xf32>
    %148 = arith.mulf %143, %147 : vector<128x32xf32>
    %149 = vector.extract_strided_slice %0 {offsets = [7, 0], sizes = [1, 32], strides = [1, 1]} : vector<11x128xf32> to vector<1x32xf32>
    %150 = vector.broadcast %149 : vector<1x32xf32> to vector<128x32xf32>
    %151 = arith.mulf %148, %150 : vector<128x32xf32>
    %152 = vector.extract_strided_slice %0 {offsets = [8, 0], sizes = [1, 32], strides = [1, 1]} : vector<11x128xf32> to vector<1x32xf32>
    %153 = vector.broadcast %152 : vector<1x32xf32> to vector<128x32xf32>
    %154 = arith.addf %151, %153 : vector<128x32xf32>
    %155 = arith.truncf %154 : vector<128x32xf32> to vector<128x32xbf16>
    %c2 = arith.constant 2 : index
    %c0_28 = arith.constant 0 : index
    %c0_29 = arith.constant 0 : index
    %156 = vector.load %arg3[%c2, %c0_28, %c0_29] : memref<6x32x128xbf16, #tpu.memory_space<vmem>>, vector<1x32x128xbf16>
    %157 = vector.shape_cast %156 : vector<1x32x128xbf16> to vector<32x128xbf16>
    %cst_30 = arith.constant dense<0.000000e+00> : vector<128x128xf32>
    %158 = tpu.matmul %155, %157, %cst_30 {dimension_numbers = #tpu.dot_dimension_numbers<[1], [0], [0], [1], [0, 0, 1, 1], [], []>} : vector<128x32xbf16>, vector<32x128xbf16>, vector<128x128xf32> -> vector<128x128xf32>
    %159 = vector.extract_strided_slice %158 {offsets = [0, 0], sizes = [128, 32], strides = [1, 1]} : vector<128x128xf32> to vector<128x32xf32>
    %160 = vector.extract_strided_slice %0 {offsets = [2, 0], sizes = [1, 32], strides = [1, 1]} : vector<11x128xf32> to vector<1x32xf32>
    %161 = vector.broadcast %160 : vector<1x32xf32> to vector<128x32xf32>
    %162 = arith.addf %159, %161 : vector<128x32xf32>
    %163 = arith.truncf %2 : vector<256x32xf32> to vector<256x32xbf16>
    %c3 = arith.constant 3 : index
    %c0_31 = arith.constant 0 : index
    %c0_32 = arith.constant 0 : index
    %164 = vector.load %arg3[%c3, %c0_31, %c0_32] : memref<6x32x128xbf16, #tpu.memory_space<vmem>>, vector<1x32x128xbf16>
    %165 = vector.shape_cast %164 : vector<1x32x128xbf16> to vector<32x128xbf16>
    %cst_33 = arith.constant dense<0.000000e+00> : vector<256x128xf32>
    %166 = tpu.matmul %163, %165, %cst_33 {dimension_numbers = #tpu.dot_dimension_numbers<[1], [0], [0], [1], [0, 0, 1, 1], [], []>} : vector<256x32xbf16>, vector<32x128xbf16>, vector<256x128xf32> -> vector<256x128xf32>
    %167 = vector.extract_strided_slice %0 {offsets = [3, 0], sizes = [1, 128], strides = [1, 1]} : vector<11x128xf32> to vector<1x128xf32>
    %168 = vector.broadcast %167 : vector<1x128xf32> to vector<256x128xf32>
    %169 = arith.addf %166, %168 : vector<256x128xf32>
    %170 = vector.extract_strided_slice %169 {offsets = [0, 0], sizes = [256, 32], strides = [1, 1]} : vector<256x128xf32> to vector<256x32xf32>
    %171 = vector.extract_strided_slice %169 {offsets = [0, 32], sizes = [256, 32], strides = [1, 1]} : vector<256x128xf32> to vector<256x32xf32>
    %172 = vector.extract_strided_slice %162 {offsets = [0, 0], sizes = [128, 8], strides = [1, 1]} : vector<128x32xf32> to vector<128x8xf32>
    %173 = vector.shape_cast %172 : vector<128x8xf32> to vector<16x8x8xf32>
    %174 = vector.extract_strided_slice %162 {offsets = [0, 8], sizes = [128, 8], strides = [1, 1]} : vector<128x32xf32> to vector<128x8xf32>
    %175 = vector.shape_cast %174 : vector<128x8xf32> to vector<16x8x8xf32>
    %176 = vector.extract_strided_slice %162 {offsets = [0, 16], sizes = [128, 8], strides = [1, 1]} : vector<128x32xf32> to vector<128x8xf32>
    %177 = vector.shape_cast %176 : vector<128x8xf32> to vector<16x8x8xf32>
    %178 = vector.extract_strided_slice %162 {offsets = [0, 24], sizes = [128, 8], strides = [1, 1]} : vector<128x32xf32> to vector<128x8xf32>
    %179 = vector.shape_cast %178 : vector<128x8xf32> to vector<16x8x8xf32>
    %180 = vector.shape_cast %173 : vector<16x8x8xf32> to vector<1x16x8x8xf32>
    %181 = vector.shape_cast %175 : vector<16x8x8xf32> to vector<1x16x8x8xf32>
    %182 = vector.shape_cast %177 : vector<16x8x8xf32> to vector<1x16x8x8xf32>
    %183 = vector.shape_cast %179 : vector<16x8x8xf32> to vector<1x16x8x8xf32>
    %184 = tpu.concatenate %180, %181, %182, %183 in 0 : vector<1x16x8x8xf32>, vector<1x16x8x8xf32>, vector<1x16x8x8xf32>, vector<1x16x8x8xf32> -> vector<4x16x8x8xf32>
    %185 = vector.shape_cast %184 : vector<4x16x8x8xf32> to vector<64x8x8xf32>
    %cst_34 = arith.constant 0.353553385 : f32
    %186 = vector.broadcast %cst_34 : f32 to vector<64x8x8xf32>
    %187 = arith.mulf %185, %186 : vector<64x8x8xf32>
    %188 = arith.truncf %187 : vector<64x8x8xf32> to vector<64x8x8xbf16>
    %189 = vector.extract_strided_slice %170 {offsets = [0, 0], sizes = [256, 8], strides = [1, 1]} : vector<256x32xf32> to vector<256x8xf32>
    %190 = vector.shape_cast %189 : vector<256x8xf32> to vector<16x16x8xf32>
    %191 = vector.extract_strided_slice %170 {offsets = [0, 8], sizes = [256, 8], strides = [1, 1]} : vector<256x32xf32> to vector<256x8xf32>
    %192 = vector.shape_cast %191 : vector<256x8xf32> to vector<16x16x8xf32>
    %193 = vector.extract_strided_slice %170 {offsets = [0, 16], sizes = [256, 8], strides = [1, 1]} : vector<256x32xf32> to vector<256x8xf32>
    %194 = vector.shape_cast %193 : vector<256x8xf32> to vector<16x16x8xf32>
    %195 = vector.extract_strided_slice %170 {offsets = [0, 24], sizes = [256, 8], strides = [1, 1]} : vector<256x32xf32> to vector<256x8xf32>
    %196 = vector.shape_cast %195 : vector<256x8xf32> to vector<16x16x8xf32>
    %197 = vector.shape_cast %190 : vector<16x16x8xf32> to vector<1x16x16x8xf32>
    %198 = vector.shape_cast %192 : vector<16x16x8xf32> to vector<1x16x16x8xf32>
    %199 = vector.shape_cast %194 : vector<16x16x8xf32> to vector<1x16x16x8xf32>
    %200 = vector.shape_cast %196 : vector<16x16x8xf32> to vector<1x16x16x8xf32>
    %201 = tpu.concatenate %197, %198, %199, %200 in 0 : vector<1x16x16x8xf32>, vector<1x16x16x8xf32>, vector<1x16x16x8xf32>, vector<1x16x16x8xf32> -> vector<4x16x16x8xf32>
    %202 = vector.shape_cast %201 : vector<4x16x16x8xf32> to vector<64x16x8xf32>
    %203 = arith.truncf %202 : vector<64x16x8xf32> to vector<64x16x8xbf16>
    %204 = vector.extract_strided_slice %171 {offsets = [0, 0], sizes = [256, 8], strides = [1, 1]} : vector<256x32xf32> to vector<256x8xf32>
    %205 = vector.shape_cast %204 : vector<256x8xf32> to vector<16x16x8xf32>
    %206 = vector.extract_strided_slice %171 {offsets = [0, 8], sizes = [256, 8], strides = [1, 1]} : vector<256x32xf32> to vector<256x8xf32>
    %207 = vector.shape_cast %206 : vector<256x8xf32> to vector<16x16x8xf32>
    %208 = vector.extract_strided_slice %171 {offsets = [0, 16], sizes = [256, 8], strides = [1, 1]} : vector<256x32xf32> to vector<256x8xf32>
    %209 = vector.shape_cast %208 : vector<256x8xf32> to vector<16x16x8xf32>
    %210 = vector.extract_strided_slice %171 {offsets = [0, 24], sizes = [256, 8], strides = [1, 1]} : vector<256x32xf32> to vector<256x8xf32>
    %211 = vector.shape_cast %210 : vector<256x8xf32> to vector<16x16x8xf32>
    %212 = vector.shape_cast %205 : vector<16x16x8xf32> to vector<1x16x16x8xf32>
    %213 = vector.shape_cast %207 : vector<16x16x8xf32> to vector<1x16x16x8xf32>
    %214 = vector.shape_cast %209 : vector<16x16x8xf32> to vector<1x16x16x8xf32>
    %215 = vector.shape_cast %211 : vector<16x16x8xf32> to vector<1x16x16x8xf32>
    %216 = tpu.concatenate %212, %213, %214, %215 in 0 : vector<1x16x16x8xf32>, vector<1x16x16x8xf32>, vector<1x16x16x8xf32>, vector<1x16x16x8xf32> -> vector<4x16x16x8xf32>
    %217 = vector.shape_cast %216 : vector<4x16x16x8xf32> to vector<64x16x8xf32>
    %218 = arith.truncf %217 : vector<64x16x8xf32> to vector<64x16x8xbf16>
    "tpu.trace_start"() <{level = 10 : i32, message = "bqd,bkd->bqk"}> : () -> ()
    %cst_35 = arith.constant dense<0.000000e+00> : vector<64x8x16xf32>
    %219 = tpu.matmul %188, %203, %cst_35 {dimension_numbers = #tpu.dot_dimension_numbers<[2], [2], [1], [1], [0, 0, 0, 1, 1, 1], [0], [0]>} : vector<64x8x8xbf16>, vector<64x16x8xbf16>, vector<64x8x16xf32> -> vector<64x8x16xf32>
    "tpu.trace_stop"() : () -> ()
    %cst_36 = arith.constant dense<0xFF800000> : vector<64x8xf32>
    %220 = vector.multi_reduction <maximumf>, %219, %cst_36 [2] : vector<64x8x16xf32> to vector<64x8xf32>
    %221 = vector.shape_cast %220 : vector<64x8xf32> to vector<64x8x1xf32>
    %222 = vector.broadcast %221 : vector<64x8x1xf32> to vector<64x8x16xf32>
    %223 = arith.subf %219, %222 : vector<64x8x16xf32>
    %224 = math.exp %223 : vector<64x8x16xf32>
    %cst_37 = arith.constant dense<0.000000e+00> : vector<64x8xf32>
    %225 = vector.multi_reduction <add>, %224, %cst_37 [2] : vector<64x8x16xf32> to vector<64x8xf32>
    %226 = vector.shape_cast %225 : vector<64x8xf32> to vector<64x8x1xf32>
    %227 = tpu.reciprocal %226 {approx = true} : vector<64x8x1xf32> -> vector<64x8x1xf32>
    %228 = vector.broadcast %227 : vector<64x8x1xf32> to vector<64x8x16xf32>
    %229 = arith.mulf %224, %228 : vector<64x8x16xf32>
    %230 = arith.truncf %229 : vector<64x8x16xf32> to vector<64x8x16xbf16>
    "tpu.trace_start"() <{level = 10 : i32, message = "bqk,bkd->bqd"}> : () -> ()
    %cst_38 = arith.constant dense<0.000000e+00> : vector<64x8x8xf32>
    %231 = tpu.matmul %230, %218, %cst_38 {dimension_numbers = #tpu.dot_dimension_numbers<[2], [1], [1], [2], [0, 0, 0, 1, 1, 2], [0], [0]>} : vector<64x8x16xbf16>, vector<64x16x8xbf16>, vector<64x8x8xf32> -> vector<64x8x8xf32>
    "tpu.trace_stop"() : () -> ()
    %232 = vector.shape_cast %231 : vector<64x8x8xf32> to vector<4x128x8xf32>
    %233 = vector.extract_strided_slice %232 {offsets = [0, 0, 0], sizes = [1, 128, 8], strides = [1, 1, 1]} : vector<4x128x8xf32> to vector<1x128x8xf32>
    %234 = vector.shape_cast %233 : vector<1x128x8xf32> to vector<128x8xf32>
    %235 = vector.extract_strided_slice %232 {offsets = [1, 0, 0], sizes = [1, 128, 8], strides = [1, 1, 1]} : vector<4x128x8xf32> to vector<1x128x8xf32>
    %236 = vector.shape_cast %235 : vector<1x128x8xf32> to vector<128x8xf32>
    %237 = vector.extract_strided_slice %232 {offsets = [2, 0, 0], sizes = [1, 128, 8], strides = [1, 1, 1]} : vector<4x128x8xf32> to vector<1x128x8xf32>
    %238 = vector.shape_cast %237 : vector<1x128x8xf32> to vector<128x8xf32>
    %239 = vector.extract_strided_slice %232 {offsets = [3, 0, 0], sizes = [1, 128, 8], strides = [1, 1, 1]} : vector<4x128x8xf32> to vector<1x128x8xf32>
    %240 = vector.shape_cast %239 : vector<1x128x8xf32> to vector<128x8xf32>
    %241 = tpu.concatenate %234, %236, %238, %240 in 1 : vector<128x8xf32>, vector<128x8xf32>, vector<128x8xf32>, vector<128x8xf32> -> vector<128x32xf32>
    %242 = arith.truncf %241 : vector<128x32xf32> to vector<128x32xbf16>
    %c4 = arith.constant 4 : index
    %c0_39 = arith.constant 0 : index
    %c0_40 = arith.constant 0 : index
    %243 = vector.load %arg3[%c4, %c0_39, %c0_40] : memref<6x32x128xbf16, #tpu.memory_space<vmem>>, vector<1x32x128xbf16>
    %244 = vector.shape_cast %243 : vector<1x32x128xbf16> to vector<32x128xbf16>
    %cst_41 = arith.constant dense<0.000000e+00> : vector<128x128xf32>
    %245 = tpu.matmul %242, %244, %cst_41 {dimension_numbers = #tpu.dot_dimension_numbers<[1], [0], [0], [1], [0, 0, 1, 1], [], []>} : vector<128x32xbf16>, vector<32x128xbf16>, vector<128x128xf32> -> vector<128x128xf32>
    %246 = vector.extract_strided_slice %245 {offsets = [0, 0], sizes = [128, 32], strides = [1, 1]} : vector<128x128xf32> to vector<128x32xf32>
    %247 = vector.extract_strided_slice %0 {offsets = [4, 0], sizes = [1, 32], strides = [1, 1]} : vector<11x128xf32> to vector<1x32xf32>
    %248 = vector.broadcast %247 : vector<1x32xf32> to vector<128x32xf32>
    %249 = arith.addf %246, %248 : vector<128x32xf32>
    %250 = arith.addf %130, %249 : vector<128x32xf32>
    %cst_42 = arith.constant dense<0.000000e+00> : vector<128xf32>
    %251 = vector.multi_reduction <add>, %250, %cst_42 [1] : vector<128x32xf32> to vector<128xf32>
    %252 = vector.shape_cast %251 : vector<128xf32> to vector<128x1xf32>
    %cst_43 = arith.constant 3.200000e+01 : f32
    %253 = vector.broadcast %cst_43 : f32 to vector<128x1xf32>
    %254 = arith.divf %252, %253 : vector<128x1xf32>
    %255 = vector.broadcast %254 : vector<128x1xf32> to vector<128x32xf32>
    %256 = arith.subf %250, %255 : vector<128x32xf32>
    %257 = arith.mulf %256, %256 : vector<128x32xf32>
    %cst_44 = arith.constant dense<0.000000e+00> : vector<128xf32>
    %258 = vector.multi_reduction <add>, %257, %cst_44 [1] : vector<128x32xf32> to vector<128xf32>
    %259 = vector.shape_cast %258 : vector<128xf32> to vector<128x1xf32>
    %cst_45 = arith.constant 3.200000e+01 : f32
    %260 = vector.broadcast %cst_45 : f32 to vector<128x1xf32>
    %261 = arith.divf %259, %260 : vector<128x1xf32>
    %262 = vector.broadcast %254 : vector<128x1xf32> to vector<128x32xf32>
    %263 = arith.subf %250, %262 : vector<128x32xf32>
    %cst_46 = arith.constant 9.99999974E-6 : f32
    %264 = vector.broadcast %cst_46 : f32 to vector<128x1xf32>
    %265 = arith.addf %261, %264 : vector<128x1xf32>
    %266 = math.rsqrt %265 : vector<128x1xf32>
    %267 = vector.broadcast %266 : vector<128x1xf32> to vector<128x32xf32>
    %268 = arith.mulf %263, %267 : vector<128x32xf32>
    %269 = vector.extract_strided_slice %0 {offsets = [9, 0], sizes = [1, 32], strides = [1, 1]} : vector<11x128xf32> to vector<1x32xf32>
    %270 = vector.broadcast %269 : vector<1x32xf32> to vector<128x32xf32>
    %271 = arith.mulf %268, %270 : vector<128x32xf32>
    %272 = vector.extract_strided_slice %0 {offsets = [10, 0], sizes = [1, 32], strides = [1, 1]} : vector<11x128xf32> to vector<1x32xf32>
    %273 = vector.broadcast %272 : vector<1x32xf32> to vector<128x32xf32>
    %274 = arith.addf %271, %273 : vector<128x32xf32>
    %c0_47 = arith.constant 0 : index
    %c0_48 = arith.constant 0 : index
    %275 = vector.load %arg2[%c0_47, %c0_48] : memref<128x128xbf16, #tpu.memory_space<vmem>>, vector<128x128xbf16>
    %276 = arith.truncf %274 : vector<128x32xf32> to vector<128x32xbf16>
    %cst_49 = arith.constant dense<0.000000e+00> : vector<128x32xf32>
    %277 = tpu.matmul %275, %276, %cst_49 {dimension_numbers = #tpu.dot_dimension_numbers<[1], [0], [0], [1], [0, 0, 1, 1], [], []>} : vector<128x128xbf16>, vector<128x32xbf16>, vector<128x32xf32> -> vector<128x32xf32>
    %278 = arith.truncf %277 : vector<128x32xf32> to vector<128x32xbf16>
    %c5 = arith.constant 5 : index
    %c0_50 = arith.constant 0 : index
    %c0_51 = arith.constant 0 : index
    %279 = vector.load %arg3[%c5, %c0_50, %c0_51] : memref<6x32x128xbf16, #tpu.memory_space<vmem>>, vector<1x32x128xbf16>
    %280 = vector.shape_cast %279 : vector<1x32x128xbf16> to vector<32x128xbf16>
    %cst_52 = arith.constant dense<0.000000e+00> : vector<128x128xf32>
    %281 = tpu.matmul %278, %280, %cst_52 {dimension_numbers = #tpu.dot_dimension_numbers<[1], [0], [0], [1], [0, 0, 1, 1], [], []>} : vector<128x32xbf16>, vector<32x128xbf16>, vector<128x128xf32> -> vector<128x128xf32>
    %282 = vector.extract_strided_slice %281 {offsets = [0, 0], sizes = [128, 32], strides = [1, 1]} : vector<128x128xf32> to vector<128x32xf32>
    %cst_53 = arith.constant 0.000000e+00 : f32
    %283 = vector.broadcast %cst_53 : f32 to vector<128x32xf32>
    %284 = arith.maximumf %282, %283 : vector<128x32xf32>
    %285 = arith.addf %250, %284 : vector<128x32xf32>
    %c0_54 = arith.constant 0 : index
    %c0_55 = arith.constant 0 : index
    %286 = vector.load %arg5[%c0_54, %c0_55] : memref<128x32xf32, #tpu.memory_space<vmem>>, vector<128x32xf32>
    tpu.vector_store %arg5[%c0_54, %c0_55], %285 {strides = array<i32>} : memref<128x32xf32, #tpu.memory_space<vmem>>, vector<128x32xf32>,
    return
  }
}

</mosaic_0001>

<llo_original>
// kernel: decoder_layer.1
$region0: #{decoder_layer.1}
  #allocation0 [shape = 'u32[]', space=smem, size = 0x4, offset = 0x4, fixed_abs, tag = 'smem constant byte address 0x4 - core index']
  #allocation1 [shape = 'u32[72,128]{1,0:T(1,128)}', space=vmem, size = 0x9000, scoped, tag = 'internal scratch']
  %s0 = inlined_call_operand.hbm [shape: f32[128,32], index: 0, kind: input, shape index: {}]
  %s1 = inlined_call_operand.hbm [shape: f32[256,32], index: 1, kind: input, shape index: {}]
  %s2 = inlined_call_operand.hbm [shape: bf16[128,128], index: 2, kind: input, shape index: {}]
  %s3 = inlined_call_operand.hbm [shape: bf16[6,32,128], index: 3, kind: input, shape index: {}]
  %s4 = inlined_call_operand.hbm [shape: f32[11,128], index: 4, kind: input, shape index: {}]
  %s5 = inlined_call_operand.hbm [shape: f32[128,32], index: 5, kind: output, shape index: {}]
  %s6 = sld [smem:[#allocation0]]
  $region50: #{decoder_layer.1} parent=0
    _
  %s8 = ssub.s32 1, %s6
  %s9 = scalar_select 0, %s8, %s6
  $region1: #{decoder_layer.1} parent=0
    #allocation2 [shape = 'u8[65536]{0}', space=vmem, size = 0x10000, scoped, tag = 'input window, operand 0, single buffered']
    #allocation3 [shape = 's32[1]{0}', space=sflag, size = 0x4, scoped, tag = 'scoped memory for decoder_layer.1']
    #allocation4 [shape = 's32[1]{0}', space=sflag, size = 0x4, scoped, tag = 'scoped memory for decoder_layer.1']
    #allocation5 [shape = 'u8[131072]{0}', space=vmem, size = 0x20000, scoped, tag = 'input window, operand 1, single buffered']
    #allocation6 [shape = 's32[1]{0}', space=sflag, size = 0x4, scoped, tag = 'scoped memory for decoder_layer.1']
    #allocation7 [shape = 'u8[32768]{0}', space=vmem, size = 0x8000, scoped, tag = 'input window, operand 2, single buffered']
    #allocation8 [shape = 'u8[49152]{0}', space=vmem, size = 0xc000, scoped, tag = 'input window, operand 3, single buffered']
    #allocation9 [shape = 's32[1]{0}', space=sflag, size = 0x4, scoped, tag = 'scoped memory for decoder_layer.1']
    #allocation10 [shape = 'u8[8192]{0}', space=vmem, size = 0x2000, scoped, tag = 'input window, operand 4, single buffered']
    #allocation11 [shape = 'u8[65536]{0}', space=vmem, size = 0x10000, scoped, tag = 'output window, operand 0, single buffered']
    %10 = vsyncpa [#allocation3], 0
    %11 = vsyncpa [#allocation6], 0
    %12 = vsyncpa [#allocation9], 0
    %13 = vsyncpa [#allocation4], 0
    // Predicated region
    $region2: #{decoder_layer.1} parent=1 // pred_check
      _
    $region3: #{decoder_layer.1} parent=1 // pred_check_branch
      %15 = sbr.rel (0) target = $region5
    $region4: #{decoder_layer.1} parent=1 // pred_region
      %17 = vsyncadd [#allocation3], 0
      %s18 = sshll.u32 %s0, 4
      %s19 = int_to_ptr.hbm [resolvable:$true] %s18
      %s20 = sshll.u32 [#allocation2], 4
      %s21 = int_to_ptr.vmem [resolvable:$true] %s20
      %26 = dma.hbm_to_vmem [thread:$0]  %s19, 2048, %s21, [#allocation3], 128, 128, 8
    $region5: #{decoder_layer.1} parent=1 // pred_fallthru
      _
    // Predicated region
    $region6: #{decoder_layer.1} parent=1 // pred_check
      _
    $region7: #{decoder_layer.1} parent=1 // pred_check_branch
      %28 = sbr.rel (0) target = $region9
    $region8: #{decoder_layer.1} parent=1 // pred_region
      %30 = vsyncadd [#allocation6], 0
      %s31 = sshll.u32 %s1, 4
      %s32 = int_to_ptr.hbm [resolvable:$true] %s31
      %s33 = sshll.u32 [#allocation5], 4
      %s34 = int_to_ptr.vmem [resolvable:$true] %s33
      %39 = dma.hbm_to_vmem [thread:$0]  %s32, 4096, %s34, [#allocation6], 128, 128, 8
    $region9: #{decoder_layer.1} parent=1 // pred_fallthru
      _
    // Predicated region
    $region10: #{decoder_layer.1} parent=1 // pred_check
      _
    $region11: #{decoder_layer.1} parent=1 // pred_check_branch
      %41 = sbr.rel (0) target = $region13
    $region12: #{decoder_layer.1} parent=1 // pred_region
      %43 = vsyncadd [#allocation6], 0
      %s44 = sshll.u32 %s2, 4
      %s45 = int_to_ptr.hbm [resolvable:$true] %s44
      %s46 = sshll.u32 [#allocation7], 4
      %s47 = int_to_ptr.vmem [resolvable:$true] %s46
      %52 = dma.hbm_to_vmem [thread:$0]  %s45, 1024, %s47, [#allocation6], 64, 64, 4
    $region13: #{decoder_layer.1} parent=1 // pred_fallthru
      _
    // Predicated region
    $region14: #{decoder_layer.1} parent=1 // pred_check
      _
    $region15: #{decoder_layer.1} parent=1 // pred_check_branch
      %54 = sbr.rel (0) target = $region17
    $region16: #{decoder_layer.1} parent=1 // pred_region
      %56 = vsyncadd [#allocation9], 0
      %s57 = sshll.u32 %s3, 4
      %s58 = int_to_ptr.hbm [resolvable:$true] %s57
      %s59 = sshll.u32 [#allocation8], 4
      %s60 = int_to_ptr.vmem [resolvable:$true] %s59
      %65 = dma.hbm_to_vmem [thread:$0]  %s58, 1536, %s60, [#allocation9], 64, 64, 4
    $region17: #{decoder_layer.1} parent=1 // pred_fallthru
      _
    // Predicated region
    $region18: #{decoder_layer.1} parent=1 // pred_check
      _
    $region19: #{decoder_layer.1} parent=1 // pred_check_branch
      %67 = sbr.rel (0) target = $region21
    $region20: #{decoder_layer.1} parent=1 // pred_region
      %69 = vsyncadd [#allocation9], 0
      %s70 = sshll.u32 %s4, 4
      %s71 = int_to_ptr.hbm [resolvable:$true] %s70
      %s72 = sshll.u32 [#allocation10], 4
      %s73 = int_to_ptr.vmem [resolvable:$true] %s72
      %78 = dma.hbm_to_vmem [thread:$0]  %s71, 256, %s73, [#allocation9], 128, 128, 8
    $region21: #{decoder_layer.1} parent=1 // pred_fallthru
      _
    // Predicated region
    $region22: #{decoder_layer.1} parent=1 // pred_check
      _
    $region23: #{decoder_layer.1} parent=1 // pred_check_branch
      %80 = sbr.rel (0) target = $region25
    $region24: #{decoder_layer.1} parent=1 // pred_region
      %82 = dma.done [#allocation3], 2048
    $region25: #{decoder_layer.1} parent=1 // pred_fallthru
      _
    // Predicated region
    $region26: #{decoder_layer.1} parent=1 // pred_check
      _
    $region27: #{decoder_layer.1} parent=1 // pred_check_branch
      %84 = sbr.rel (0) target = $region29
    $region28: #{decoder_layer.1} parent=1 // pred_region
      %86 = dma.done [#allocation6], 4096
    $region29: #{decoder_layer.1} parent=1 // pred_fallthru
      _
    // Predicated region
    $region30: #{decoder_layer.1} parent=1 // pred_check
      _
    $region31: #{decoder_layer.1} parent=1 // pred_check_branch
      %88 = sbr.rel (0) target = $region33
    $region32: #{decoder_layer.1} parent=1 // pred_region
      %90 = dma.done [#allocation6], 1024
    $region33: #{decoder_layer.1} parent=1 // pred_fallthru
      _
    // Predicated region
    $region34: #{decoder_layer.1} parent=1 // pred_check
      _
    $region35: #{decoder_layer.1} parent=1 // pred_check_branch
      %92 = sbr.rel (0) target = $region37
    $region36: #{decoder_layer.1} parent=1 // pred_region
      %94 = dma.done [#allocation9], 1536
    $region37: #{decoder_layer.1} parent=1 // pred_fallthru
      _
    // Predicated region
    $region38: #{decoder_layer.1} parent=1 // pred_check
      _
    $region39: #{decoder_layer.1} parent=1 // pred_check_branch
      %96 = sbr.rel (0) target = $region41
    $region40: #{decoder_layer.1} parent=1 // pred_region
      %98 = dma.done [#allocation9], 256
    $region41: #{decoder_layer.1} parent=1 // pred_fallthru
      _
    %v100 = vld [vmem:[#allocation10] sm:$0xff]
    %v101 = vld [vmem:[#allocation10 + $0x8] sm:$0x7]
    %v102 = vld [vmem:[#allocation2] sm:$0xff]
    %v103 = vld [vmem:[#allocation2 + $0x8] sm:$0xff]
    %v104 = vld [vmem:[#allocation2 + $0x10] sm:$0xff]
    %v105 = vld [vmem:[#allocation2 + $0x18] sm:$0xff]
    %v106 = vld [vmem:[#allocation2 + $0x20] sm:$0xff]
    %v107 = vld [vmem:[#allocation2 + $0x28] sm:$0xff]
    %v108 = vld [vmem:[#allocation2 + $0x30] sm:$0xff]
    %v109 = vld [vmem:[#allocation2 + $0x38] sm:$0xff]
    %v110 = vld [vmem:[#allocation2 + $0x40] sm:$0xff]
    %v111 = vld [vmem:[#allocation2 + $0x48] sm:$0xff]
    %v112 = vld [vmem:[#allocation2 + $0x50] sm:$0xff]
    %v113 = vld [vmem:[#allocation2 + $0x58] sm:$0xff]
    %v114 = vld [vmem:[#allocation2 + $0x60] sm:$0xff]
    %v115 = vld [vmem:[#allocation2 + $0x68] sm:$0xff]
    %v116 = vld [vmem:[#allocation2 + $0x70] sm:$0xff]
    %v117 = vld [vmem:[#allocation2 + $0x78] sm:$0xff]
    %v118 = vld [vmem:[#allocation5] sm:$0xff]
    %v119 = vld [vmem:[#allocation5 + $0x8] sm:$0xff]
    %v120 = vld [vmem:[#allocation5 + $0x10] sm:$0xff]
    %v121 = vld [vmem:[#allocation5 + $0x18] sm:$0xff]
    %v122 = vld [vmem:[#allocation5 + $0x20] sm:$0xff]
    %v123 = vld [vmem:[#allocation5 + $0x28] sm:$0xff]
    %v124 = vld [vmem:[#allocation5 + $0x30] sm:$0xff]
    %v125 = vld [vmem:[#allocation5 + $0x38] sm:$0xff]
    %v126 = vld [vmem:[#allocation5 + $0x40] sm:$0xff]
    %v127 = vld [vmem:[#allocation5 + $0x48] sm:$0xff]
    %v128 = vld [vmem:[#allocation5 + $0x50] sm:$0xff]
    %v129 = vld [vmem:[#allocation5 + $0x58] sm:$0xff]
    %v130 = vld [vmem:[#allocation5 + $0x60] sm:$0xff]
    %v131 = vld [vmem:[#allocation5 + $0x68] sm:$0xff]
    %v132 = vld [vmem:[#allocation5 + $0x70] sm:$0xff]
    %v133 = vld [vmem:[#allocation5 + $0x78] sm:$0xff]
    %v134 = vld [vmem:[#allocation5 + $0x80] sm:$0xff]
    %v135 = vld [vmem:[#allocation5 + $0x88] sm:$0xff]
    %v136 = vld [vmem:[#allocation5 + $0x90] sm:$0xff]
    %v137 = vld [vmem:[#allocation5 + $0x98] sm:$0xff]
    %v138 = vld [vmem:[#allocation5 + $0xa0] sm:$0xff]
    %v139 = vld [vmem:[#allocation5 + $0xa8] sm:$0xff]
    %v140 = vld [vmem:[#allocation5 + $0xb0] sm:$0xff]
    %v141 = vld [vmem:[#allocation5 + $0xb8] sm:$0xff]
    %v142 = vld [vmem:[#allocation5 + $0xc0] sm:$0xff]
    %v143 = vld [vmem:[#allocation5 + $0xc8] sm:$0xff]
    %v144 = vld [vmem:[#allocation5 + $0xd0] sm:$0xff]
    %v145 = vld [vmem:[#allocation5 + $0xd8] sm:$0xff]
    %v146 = vld [vmem:[#allocation5 + $0xe0] sm:$0xff]
    %v147 = vld [vmem:[#allocation5 + $0xe8] sm:$0xff]
    %v148 = vld [vmem:[#allocation5 + $0xf0] sm:$0xff]
    %v149 = vld [vmem:[#allocation5 + $0xf8] sm:$0xff]
    %v150 = vlaneseq
    %v151 = vshrl.u32 %v150, 7
    %v152 = vlaneseq
    %v153 = vand.u32 %v152, 127
    %vm154 = vcmp.le.s32.totalorder %v153, %v151
    %vm155 = vcmp.eq.s32.totalorder %v151, %v153
    %v156 = vsub.s32 %v151, %v153
    %vm157 = vcmp.gt.s32.totalorder %v156, 1
    %vm158 = vmor %vm155, %vm157
    %vm159 = vmand %vm154, %vm158
    %v160 = vsel %vm159, 0.0, -1e+09
    %vm161 = vcmask 261120
    %v162 = vsel %vm161, %v102, 0.0
    %163 = vadd.xlane.f32.xlu0 %v162
    %v164 = vpop.xlane.xlu0 %163
    %v165 = vsel %vm161, %v103, 0.0
    %166 = vadd.xlane.f32.xlu0 %v165
    %v167 = vpop.xlane.xlu0 %166
    %v168 = vsel %vm161, %v104, 0.0
    %169 = vadd.xlane.f32.xlu0 %v168
    %v170 = vpop.xlane.xlu0 %169
    %v171 = vsel %vm161, %v105, 0.0
    %172 = vadd.xlane.f32.xlu0 %v171
    %v173 = vpop.xlane.xlu0 %172
    %v174 = vsel %vm161, %v106, 0.0
    %175 = vadd.xlane.f32.xlu0 %v174
    %v176 = vpop.xlane.xlu0 %175
    %v177 = vsel %vm161, %v107, 0.0
    %178 = vadd.xlane.f32.xlu0 %v177
    %v179 = vpop.xlane.xlu0 %178
    %v180 = vsel %vm161, %v108, 0.0
    %181 = vadd.xlane.f32.xlu0 %v180
    %v182 = vpop.xlane.xlu0 %181
    %v183 = vsel %vm161, %v109, 0.0
    %184 = vadd.xlane.f32.xlu0 %v183
    %v185 = vpop.xlane.xlu0 %184
    %v186 = vsel %vm161, %v110, 0.0
    %187 = vadd.xlane.f32.xlu0 %v186
    %v188 = vpop.xlane.xlu0 %187
    %v189 = vsel %vm161, %v111, 0.0
    %190 = vadd.xlane.f32.xlu0 %v189
    %v191 = vpop.xlane.xlu0 %190
    %v192 = vsel %vm161, %v112, 0.0
    %193 = vadd.xlane.f32.xlu0 %v192
    %v194 = vpop.xlane.xlu0 %193
    %v195 = vsel %vm161, %v113, 0.0
    %196 = vadd.xlane.f32.xlu0 %v195
    %v197 = vpop.xlane.xlu0 %196
    %v198 = vsel %vm161, %v114, 0.0
    %199 = vadd.xlane.f32.xlu0 %v198
    %v200 = vpop.xlane.xlu0 %199
    %v201 = vsel %vm161, %v115, 0.0
    %202 = vadd.xlane.f32.xlu0 %v201
    %v203 = vpop.xlane.xlu0 %202
    %v204 = vsel %vm161, %v116, 0.0
    %205 = vadd.xlane.f32.xlu0 %v204
    %v206 = vpop.xlane.xlu0 %205
    %v207 = vsel %vm161, %v117, 0.0
    %208 = vadd.xlane.f32.xlu0 %v207
    %v209 = vpop.xlane.xlu0 %208
    %v210 = vrcp.pop 32.0
    %v211 = vmul.f32 32.0, %v210
    %v212 = vsub.f32 1.0, %v211
    %v213 = vmul.f32 %v210, %v212
    %v214 = vadd.f32 %v210, %v213
    %vm215 = vweird.f32 %v210
    %v216 = vsel %vm215, %v210, %v214
    %v217 = vmul.f32 %v164, %v216
    %v218 = vmul.f32 %v167, %v216
    %v219 = vmul.f32 %v170, %v216
    %v220 = vmul.f32 %v173, %v216
    %v221 = vmul.f32 %v176, %v216
    %v222 = vmul.f32 %v179, %v216
    %v223 = vmul.f32 %v182, %v216
    %v224 = vmul.f32 %v185, %v216
    %v225 = vmul.f32 %v188, %v216
    %v226 = vmul.f32 %v191, %v216
    %v227 = vmul.f32 %v194, %v216
    %v228 = vmul.f32 %v197, %v216
    %v229 = vmul.f32 %v200, %v216
    %v230 = vmul.f32 %v203, %v216
    %v231 = vmul.f32 %v206, %v216
    %v232 = vmul.f32 %v209, %v216
    %v233 = vsub.f32 %v102, %v217
    %v234 = vsub.f32 %v103, %v218
    %v235 = vsub.f32 %v104, %v219
    %v236 = vsub.f32 %v105, %v220
    %v237 = vsub.f32 %v106, %v221
    %v238 = vsub.f32 %v107, %v222
    %v239 = vsub.f32 %v108, %v223
    %v240 = vsub.f32 %v109, %v224
    %v241 = vsub.f32 %v110, %v225
    %v242 = vsub.f32 %v111, %v226
    %v243 = vsub.f32 %v112, %v227
    %v244 = vsub.f32 %v113, %v228
    %v245 = vsub.f32 %v114, %v229
    %v246 = vsub.f32 %v115, %v230
    %v247 = vsub.f32 %v116, %v231
    %v248 = vsub.f32 %v117, %v232
    %v249 = vmul.f32 %v233, %v233
    %v250 = vmul.f32 %v234, %v234
    %v251 = vmul.f32 %v235, %v235
    %v252 = vmul.f32 %v236, %v236
    %v253 = vmul.f32 %v237, %v237
    %v254 = vmul.f32 %v238, %v238
    %v255 = vmul.f32 %v239, %v239
    %v256 = vmul.f32 %v240, %v240
    %v257 = vmul.f32 %v241, %v241
    %v258 = vmul.f32 %v242, %v242
    %v259 = vmul.f32 %v243, %v243
    %v260 = vmul.f32 %v244, %v244
    %v261 = vmul.f32 %v245, %v245
    %v262 = vmul.f32 %v246, %v246
    %v263 = vmul.f32 %v247, %v247
    %v264 = vmul.f32 %v248, %v248
    %v265 = vsel %vm161, %v249, 0.0
    %266 = vadd.xlane.f32.xlu0 %v265
    %v267 = vpop.xlane.xlu0 %266
    %v268 = vsel %vm161, %v250, 0.0
    %269 = vadd.xlane.f32.xlu0 %v268
    %v270 = vpop.xlane.xlu0 %269
    %v271 = vsel %vm161, %v251, 0.0
    %272 = vadd.xlane.f32.xlu0 %v271
    %v273 = vpop.xlane.xlu0 %272
    %v274 = vsel %vm161, %v252, 0.0
    %275 = vadd.xlane.f32.xlu0 %v274
    %v276 = vpop.xlane.xlu0 %275
    %v277 = vsel %vm161, %v253, 0.0
    %278 = vadd.xlane.f32.xlu0 %v277
    %v279 = vpop.xlane.xlu0 %278
    %v280 = vsel %vm161, %v254, 0.0
    %281 = vadd.xlane.f32.xlu0 %v280
    %v282 = vpop.xlane.xlu0 %281
    %v283 = vsel %vm161, %v255, 0.0
    %284 = vadd.xlane.f32.xlu0 %v283
    %v285 = vpop.xlane.xlu0 %284
    %v286 = vsel %vm161, %v256, 0.0
    %287 = vadd.xlane.f32.xlu0 %v286
    %v288 = vpop.xlane.xlu0 %287
    %v289 = vsel %vm161, %v257, 0.0
    %290 = vadd.xlane.f32.xlu0 %v289
    %v291 = vpop.xlane.xlu0 %290
    %v292 = vsel %vm161, %v258, 0.0
    %293 = vadd.xlane.f32.xlu0 %v292
    %v294 = vpop.xlane.xlu0 %293
    %v295 = vsel %vm161, %v259, 0.0
    %296 = vadd.xlane.f32.xlu0 %v295
    %v297 = vpop.xlane.xlu0 %296
    %v298 = vsel %vm161, %v260, 0.0
    %299 = vadd.xlane.f32.xlu0 %v298
    %v300 = vpop.xlane.xlu0 %299
    %v301 = vsel %vm161, %v261, 0.0
    %302 = vadd.xlane.f32.xlu0 %v301
    %v303 = vpop.xlane.xlu0 %302
    %v304 = vsel %vm161, %v262, 0.0
    %305 = vadd.xlane.f32.xlu0 %v304
    %v306 = vpop.xlane.xlu0 %305
    %v307 = vsel %vm161, %v263, 0.0
    %308 = vadd.xlane.f32.xlu0 %v307
    %v309 = vpop.xlane.xlu0 %308
    %v310 = vsel %vm161, %v264, 0.0
    %311 = vadd.xlane.f32.xlu0 %v310
    %v312 = vpop.xlane.xlu0 %311
    %v313 = vmul.f32 %v267, %v216
    %v314 = vmul.f32 %v270, %v216
    %v315 = vmul.f32 %v273, %v216
    %v316 = vmul.f32 %v276, %v216
    %v317 = vmul.f32 %v279, %v216
    %v318 = vmul.f32 %v282, %v216
    %v319 = vmul.f32 %v285, %v216
    %v320 = vmul.f32 %v288, %v216
    %v321 = vmul.f32 %v291, %v216
    %v322 = vmul.f32 %v294, %v216
    %v323 = vmul.f32 %v297, %v216
    %v324 = vmul.f32 %v300, %v216
    %v325 = vmul.f32 %v303, %v216
    %v326 = vmul.f32 %v306, %v216
    %v327 = vmul.f32 %v309, %v216
    %v328 = vmul.f32 %v312, %v216
    %v329 = vadd.f32 %v313, 1e-05
    %v330 = vadd.f32 %v314, 1e-05
    %v331 = vadd.f32 %v315, 1e-05
    %v332 = vadd.f32 %v316, 1e-05
    %v333 = vadd.f32 %v317, 1e-05
    %v334 = vadd.f32 %v318, 1e-05
    %v335 = vadd.f32 %v319, 1e-05
    %v336 = vadd.f32 %v320, 1e-05
    %v337 = vadd.f32 %v321, 1e-05
    %v338 = vadd.f32 %v322, 1e-05
    %v339 = vadd.f32 %v323, 1e-05
    %v340 = vadd.f32 %v324, 1e-05
    %v341 = vadd.f32 %v325, 1e-05
    %v342 = vadd.f32 %v326, 1e-05
    %v343 = vadd.f32 %v327, 1e-05
    %v344 = vadd.f32 %v328, 1e-05
    %v345 = vrsqrt.pop %v329
    %v346 = vmul.f32 %v345, %v329
    %v347 = vmul.f32 %v346, %v345
    %v348 = vmul.f32 0.5, %v347
    %v349 = vsub.f32 1.5, %v348
    %v350 = vmul.f32 %v345, %v349
    %vm351 = vweird.f32 %v329
    %vm352 = vweird.f32 %v345
    %vm353 = vmor %vm351, %vm352
    %v354 = vsel %vm353, %v345, %v350
    %v355 = vrsqrt.pop %v330
    %v356 = vmul.f32 %v355, %v330
    %v357 = vmul.f32 %v356, %v355
    %v358 = vmul.f32 0.5, %v357
    %v359 = vsub.f32 1.5, %v358
    %v360 = vmul.f32 %v355, %v359
    %vm361 = vweird.f32 %v330
    %vm362 = vweird.f32 %v355
    %vm363 = vmor %vm361, %vm362
    %v364 = vsel %vm363, %v355, %v360
    %v365 = vrsqrt.pop %v331
    %v366 = vmul.f32 %v365, %v331
    %v367 = vmul.f32 %v366, %v365
    %v368 = vmul.f32 0.5, %v367
    %v369 = vsub.f32 1.5, %v368
    %v370 = vmul.f32 %v365, %v369
    %vm371 = vweird.f32 %v331
    %vm372 = vweird.f32 %v365
    %vm373 = vmor %vm371, %vm372
    %v374 = vsel %vm373, %v365, %v370
    %v375 = vrsqrt.pop %v332
    %v376 = vmul.f32 %v375, %v332
    %v377 = vmul.f32 %v376, %v375
    %v378 = vmul.f32 0.5, %v377
    %v379 = vsub.f32 1.5, %v378
    %v380 = vmul.f32 %v375, %v379
    %vm381 = vweird.f32 %v332
    %vm382 = vweird.f32 %v375
    %vm383 = vmor %vm381, %vm382
    %v384 = vsel %vm383, %v375, %v380
    %v385 = vrsqrt.pop %v333
    %v386 = vmul.f32 %v385, %v333
    %v387 = vmul.f32 %v386, %v385
    %v388 = vmul.f32 0.5, %v387
    %v389 = vsub.f32 1.5, %v388
    %v390 = vmul.f32 %v385, %v389
    %vm391 = vweird.f32 %v333
    %vm392 = vweird.f32 %v385
    %vm393 = vmor %vm391, %vm392
    %v394 = vsel %vm393, %v385, %v390
    %v395 = vrsqrt.pop %v334
    %v396 = vmul.f32 %v395, %v334
    %v397 = vmul.f32 %v396, %v395
    %v398 = vmul.f32 0.5, %v397
    %v399 = vsub.f32 1.5, %v398
    %v400 = vmul.f32 %v395, %v399
    %vm401 = vweird.f32 %v334
    %vm402 = vweird.f32 %v395
    %vm403 = vmor %vm401, %vm402
    %v404 = vsel %vm403, %v395, %v400
    %v405 = vrsqrt.pop %v335
    %v406 = vmul.f32 %v405, %v335
    %v407 = vmul.f32 %v406, %v405
    %v408 = vmul.f32 0.5, %v407
    %v409 = vsub.f32 1.5, %v408
    %v410 = vmul.f32 %v405, %v409
    %vm411 = vweird.f32 %v335
    %vm412 = vweird.f32 %v405
    %vm413 = vmor %vm411, %vm412
    %v414 = vsel %vm413, %v405, %v410
    %v415 = vrsqrt.pop %v336
    %v416 = vmul.f32 %v415, %v336
    %v417 = vmul.f32 %v416, %v415
    %v418 = vmul.f32 0.5, %v417
    %v419 = vsub.f32 1.5, %v418
    %v420 = vmul.f32 %v415, %v419
    %vm421 = vweird.f32 %v336
    %vm422 = vweird.f32 %v415
    %vm423 = vmor %vm421, %vm422
    %v424 = vsel %vm423, %v415, %v420
    %v425 = vrsqrt.pop %v337
    %v426 = vmul.f32 %v425, %v337
    %v427 = vmul.f32 %v426, %v425
    %v428 = vmul.f32 0.5, %v427
    %v429 = vsub.f32 1.5, %v428
    %v430 = vmul.f32 %v425, %v429
    %vm431 = vweird.f32 %v337
    %vm432 = vweird.f32 %v425
    %vm433 = vmor %vm431, %vm432
    %v434 = vsel %vm433, %v425, %v430
    %v435 = vrsqrt.pop %v338
    %v436 = vmul.f32 %v435, %v338
    %v437 = vmul.f32 %v436, %v435
    %v438 = vmul.f32 0.5, %v437
    %v439 = vsub.f32 1.5, %v438
    %v440 = vmul.f32 %v435, %v439
    %vm441 = vweird.f32 %v338
    %vm442 = vweird.f32 %v435
    %vm443 = vmor %vm441, %vm442
    %v444 = vsel %vm443, %v435, %v440
    %v445 = vrsqrt.pop %v339
    %v446 = vmul.f32 %v445, %v339
    %v447 = vmul.f32 %v446, %v445
    %v448 = vmul.f32 0.5, %v447
    %v449 = vsub.f32 1.5, %v448
    %v450 = vmul.f32 %v445, %v449
    %vm451 = vweird.f32 %v339
    %vm452 = vweird.f32 %v445
    %vm453 = vmor %vm451, %vm452
    %v454 = vsel %vm453, %v445, %v450
    %v455 = vrsqrt.pop %v340
    %v456 = vmul.f32 %v455, %v340
    %v457 = vmul.f32 %v456, %v455
    %v458 = vmul.f32 0.5, %v457
    %v459 = vsub.f32 1.5, %v458
    %v460 = vmul.f32 %v455, %v459
    %vm461 = vweird.f32 %v340
    %vm462 = vweird.f32 %v455
    %vm463 = vmor %vm461, %vm462
    %v464 = vsel %vm463, %v455, %v460
    %v465 = vrsqrt.pop %v341
    %v466 = vmul.f32 %v465, %v341
    %v467 = vmul.f32 %v466, %v465
    %v468 = vmul.f32 0.5, %v467
    %v469 = vsub.f32 1.5, %v468
    %v470 = vmul.f32 %v465, %v469
    %vm471 = vweird.f32 %v341
    %vm472 = vweird.f32 %v465
    %vm473 = vmor %vm471, %vm472
    %v474 = vsel %vm473, %v465, %v470
    %v475 = vrsqrt.pop %v342
    %v476 = vmul.f32 %v475, %v342
    %v477 = vmul.f32 %v476, %v475
    %v478 = vmul.f32 0.5, %v477
    %v479 = vsub.f32 1.5, %v478
    %v480 = vmul.f32 %v475, %v479
    %vm481 = vweird.f32 %v342
    %vm482 = vweird.f32 %v475
    %vm483 = vmor %vm481, %vm482
    %v484 = vsel %vm483, %v475, %v480
    %v485 = vrsqrt.pop %v343
    %v486 = vmul.f32 %v485, %v343
    %v487 = vmul.f32 %v486, %v485
    %v488 = vmul.f32 0.5, %v487
    %v489 = vsub.f32 1.5, %v488
    %v490 = vmul.f32 %v485, %v489
    %vm491 = vweird.f32 %v343
    %vm492 = vweird.f32 %v485
    %vm493 = vmor %vm491, %vm492
    %v494 = vsel %vm493, %v485, %v490
    %v495 = vrsqrt.pop %v344
    %v496 = vmul.f32 %v495, %v344
    %v497 = vmul.f32 %v496, %v495
    %v498 = vmul.f32 0.5, %v497
    %v499 = vsub.f32 1.5, %v498
    %v500 = vmul.f32 %v495, %v499
    %vm501 = vweird.f32 %v344
    %vm502 = vweird.f32 %v495
    %vm503 = vmor %vm501, %vm502
    %v504 = vsel %vm503, %v495, %v500
    %v505 = vmul.f32 %v233, %v354
    %v506 = vmul.f32 %v234, %v364
    %v507 = vmul.f32 %v235, %v374
    %v508 = vmul.f32 %v236, %v384
    %v509 = vmul.f32 %v237, %v394
    %v510 = vmul.f32 %v238, %v404
    %v511 = vmul.f32 %v239, %v414
    %v512 = vmul.f32 %v240, %v424
    %v513 = vmul.f32 %v241, %v434
    %v514 = vmul.f32 %v242, %v444
    %v515 = vmul.f32 %v243, %v454
    %v516 = vmul.f32 %v244, %v464
    %v517 = vmul.f32 %v245, %v474
    %v518 = vmul.f32 %v246, %v484
    %v519 = vmul.f32 %v247, %v494
    %v520 = vmul.f32 %v248, %v504
    %v521 = vperm.slane %v100, 5
    %v522 = vmul.f32 %v505, %v521
    %v523 = vmul.f32 %v506, %v521
    %v524 = vmul.f32 %v507, %v521
    %v525 = vmul.f32 %v508, %v521
    %v526 = vmul.f32 %v509, %v521
    %v527 = vmul.f32 %v510, %v521
    %v528 = vmul.f32 %v511, %v521
    %v529 = vmul.f32 %v512, %v521
    %v530 = vmul.f32 %v513, %v521
    %v531 = vmul.f32 %v514, %v521
    %v532 = vmul.f32 %v515, %v521
    %v533 = vmul.f32 %v516, %v521
    %v534 = vmul.f32 %v517, %v521
    %v535 = vmul.f32 %v518, %v521
    %v536 = vmul.f32 %v519, %v521
    %v537 = vmul.f32 %v520, %v521
    %v538 = vperm.slane %v100, 6
    %v539 = vadd.f32 %v522, %v538
    %v540 = vadd.f32 %v523, %v538
    %v541 = vadd.f32 %v524, %v538
    %v542 = vadd.f32 %v525, %v538
    %v543 = vadd.f32 %v526, %v538
    %v544 = vadd.f32 %v527, %v538
    %v545 = vadd.f32 %v528, %v538
    %v546 = vadd.f32 %v529, %v538
    %v547 = vadd.f32 %v530, %v538
    %v548 = vadd.f32 %v531, %v538
    %v549 = vadd.f32 %v532, %v538
    %v550 = vadd.f32 %v533, %v538
    %v551 = vadd.f32 %v534, %v538
    %v552 = vadd.f32 %v535, %v538
    %v553 = vadd.f32 %v536, %v538
    %v554 = vadd.f32 %v537, %v538
    %v555 = vpack.c.bf16 %v540, %v539
    %v556 = vpack.c.bf16 %v542, %v541
    %v557 = vpack.c.bf16 %v544, %v543
    %v558 = vpack.c.bf16 %v546, %v545
    %v559 = vpack.c.bf16 %v548, %v547
    %v560 = vpack.c.bf16 %v550, %v549
    %v561 = vpack.c.bf16 %v552, %v551
    %v562 = vpack.c.bf16 %v554, %v553
    %v563 = vld [vmem:[#allocation8] sm:$0xf]
    %v564 = vld [vmem:[#allocation8 + $0x4] sm:$0xf]
    %v565 = vld [vmem:[#allocation8 + $0x8] sm:$0xf]
    %v566 = vld [vmem:[#allocation8 + $0xc] sm:$0xf]
    %v567 = vperm.slane %v100, 0
    %v572 = vunpack.c.l.b16 %v563
    %v573 = vunpack.c.l.b16 %v564
    %v574 = vunpack.c.l.b16 %v565
    %v575 = vunpack.c.l.b16 %v566
    %v576 = vpack.c.b16 %v573, %v572
    %v577 = vpack.c.b16 %v575, %v574
    %v581 = vsel %vm161, %v555, 0
    %v584 = vsel %vm161, %v556, 0
    %v587 = vsel %vm161, %v557, 0
    %v590 = vsel %vm161, %v558, 0
    %v593 = vsel %vm161, %v559, 0
    %v596 = vsel %vm161, %v560, 0
    %v599 = vsel %vm161, %v561, 0
    %v602 = vsel %vm161, %v562, 0
    %604 = vmatpush.bf16.msra.mxu0 0
    %605 = vmatpush.bf16.msra.mxu0 0
    %606 = vmatpush.bf16.msra.mxu0 0
    %607 = vmatpush.bf16.msra.mxu0 0
    %608 = vmatpush.bf16.msra.mxu0 0
    %609 = vmatpush.bf16.msra.mxu0 0
    %610 = vmatpush.bf16.msra.mxu0 %v577
    %611 = vmatpush.bf16.msra.mxu0 %v576
    %612 = vmatmul.bf16.gmra.mxu0 %v581
    %v613 = vpop.f32.mrf.mxu0
    %v614 = vadd.f32 %v567, %v613
    %v615 = vpop.f32.mrf.mxu0
    %v616 = vadd.f32 %v567, %v615
    %617 = vmatmul.bf16.gmra.mxu0 %v584
    %v618 = vpop.f32.mrf.mxu0
    %v619 = vadd.f32 %v567, %v618
    %v620 = vpop.f32.mrf.mxu0
    %v621 = vadd.f32 %v567, %v620
    %622 = vmatmul.bf16.gmra.mxu0 %v587
    %v623 = vpop.f32.mrf.mxu0
    %v624 = vadd.f32 %v567, %v623
    %v625 = vpop.f32.mrf.mxu0
    %v626 = vadd.f32 %v567, %v625
    %627 = vmatmul.bf16.gmra.mxu0 %v590
    %v628 = vpop.f32.mrf.mxu0
    %v629 = vadd.f32 %v567, %v628
    %v630 = vpop.f32.mrf.mxu0
    %v631 = vadd.f32 %v567, %v630
    %632 = vmatmul.bf16.gmra.mxu0 %v593
    %v633 = vpop.f32.mrf.mxu0
    %v634 = vadd.f32 %v567, %v633
    %v635 = vpop.f32.mrf.mxu0
    %v636 = vadd.f32 %v567, %v635
    %637 = vmatmul.bf16.gmra.mxu0 %v596
    %v638 = vpop.f32.mrf.mxu0
    %v639 = vadd.f32 %v567, %v638
    %v640 = vpop.f32.mrf.mxu0
    %v641 = vadd.f32 %v567, %v640
    %642 = vmatmul.bf16.gmra.mxu0 %v599
    %v643 = vpop.f32.mrf.mxu0
    %v644 = vadd.f32 %v567, %v643
    %v645 = vpop.f32.mrf.mxu0
    %v646 = vadd.f32 %v567, %v645
    %647 = vmatmul.bf16.gmra.mxu0 %v602
    %v648 = vpop.f32.mrf.mxu0
    %v649 = vadd.f32 %v567, %v648
    %v650 = vpop.f32.mrf.mxu0
    %v651 = vadd.f32 %v567, %v650
    %652 = vdwg.mxu0
    %669 = vrot.lane.b32.xlu0 %v614, 120
    %v670 = vpop.permute.xlu0 %669
    %671 = vrot.lane.b32.xlu0 %v616, 120
    %v672 = vpop.permute.xlu0 %671
    %673 = vrot.lane.b32.xlu0 %v619, 120
    %v674 = vpop.permute.xlu0 %673
    %675 = vrot.lane.b32.xlu0 %v621, 120
    %v676 = vpop.permute.xlu0 %675
    %677 = vrot.lane.b32.xlu0 %v624, 120
    %v678 = vpop.permute.xlu0 %677
    %679 = vrot.lane.b32.xlu0 %v626, 120
    %v680 = vpop.permute.xlu0 %679
    %681 = vrot.lane.b32.xlu0 %v629, 120
    %v682 = vpop.permute.xlu0 %681
    %683 = vrot.lane.b32.xlu0 %v631, 120
    %v684 = vpop.permute.xlu0 %683
    %685 = vrot.lane.b32.xlu0 %v634, 120
    %v686 = vpop.permute.xlu0 %685
    %687 = vrot.lane.b32.xlu0 %v636, 120
    %v688 = vpop.permute.xlu0 %687
    %689 = vrot.lane.b32.xlu0 %v639, 120
    %v690 = vpop.permute.xlu0 %689
    %691 = vrot.lane.b32.xlu0 %v641, 120
    %v692 = vpop.permute.xlu0 %691
    %693 = vrot.lane.b32.xlu0 %v644, 120
    %v694 = vpop.permute.xlu0 %693
    %695 = vrot.lane.b32.xlu0 %v646, 120
    %v696 = vpop.permute.xlu0 %695
    %697 = vrot.lane.b32.xlu0 %v649, 120
    %v698 = vpop.permute.xlu0 %697
    %699 = vrot.lane.b32.xlu0 %v651, 120
    %v700 = vpop.permute.xlu0 %699
    %717 = vrot.lane.b32.xlu0 %v614, 112
    %v718 = vpop.permute.xlu0 %717
    %719 = vrot.lane.b32.xlu0 %v616, 112
    %v720 = vpop.permute.xlu0 %719
    %721 = vrot.lane.b32.xlu0 %v619, 112
    %v722 = vpop.permute.xlu0 %721
    %723 = vrot.lane.b32.xlu0 %v621, 112
    %v724 = vpop.permute.xlu0 %723
    %725 = vrot.lane.b32.xlu0 %v624, 112
    %v726 = vpop.permute.xlu0 %725
    %727 = vrot.lane.b32.xlu0 %v626, 112
    %v728 = vpop.permute.xlu0 %727
    %729 = vrot.lane.b32.xlu0 %v629, 112
    %v730 = vpop.permute.xlu0 %729
    %731 = vrot.lane.b32.xlu0 %v631, 112
    %v732 = vpop.permute.xlu0 %731
    %733 = vrot.lane.b32.xlu0 %v634, 112
    %v734 = vpop.permute.xlu0 %733
    %735 = vrot.lane.b32.xlu0 %v636, 112
    %v736 = vpop.permute.xlu0 %735
    %737 = vrot.lane.b32.xlu0 %v639, 112
    %v738 = vpop.permute.xlu0 %737
    %739 = vrot.lane.b32.xlu0 %v641, 112
    %v740 = vpop.permute.xlu0 %739
    %741 = vrot.lane.b32.xlu0 %v644, 112
    %v742 = vpop.permute.xlu0 %741
    %743 = vrot.lane.b32.xlu0 %v646, 112
    %v744 = vpop.permute.xlu0 %743
    %745 = vrot.lane.b32.xlu0 %v649, 112
    %v746 = vpop.permute.xlu0 %745
    %747 = vrot.lane.b32.xlu0 %v651, 112
    %v748 = vpop.permute.xlu0 %747
    %765 = vrot.lane.b32.xlu0 %v614, 104
    %v766 = vpop.permute.xlu0 %765
    %767 = vrot.lane.b32.xlu0 %v616, 104
    %v768 = vpop.permute.xlu0 %767
    %769 = vrot.lane.b32.xlu0 %v619, 104
    %v770 = vpop.permute.xlu0 %769
    %771 = vrot.lane.b32.xlu0 %v621, 104
    %v772 = vpop.permute.xlu0 %771
    %773 = vrot.lane.b32.xlu0 %v624, 104
    %v774 = vpop.permute.xlu0 %773
    %775 = vrot.lane.b32.xlu0 %v626, 104
    %v776 = vpop.permute.xlu0 %775
    %777 = vrot.lane.b32.xlu0 %v629, 104
    %v778 = vpop.permute.xlu0 %777
    %779 = vrot.lane.b32.xlu0 %v631, 104
    %v780 = vpop.permute.xlu0 %779
    %781 = vrot.lane.b32.xlu0 %v634, 104
    %v782 = vpop.permute.xlu0 %781
    %783 = vrot.lane.b32.xlu0 %v636, 104
    %v784 = vpop.permute.xlu0 %783
    %785 = vrot.lane.b32.xlu0 %v639, 104
    %v786 = vpop.permute.xlu0 %785
    %787 = vrot.lane.b32.xlu0 %v641, 104
    %v788 = vpop.permute.xlu0 %787
    %789 = vrot.lane.b32.xlu0 %v644, 104
    %v790 = vpop.permute.xlu0 %789
    %791 = vrot.lane.b32.xlu0 %v646, 104
    %v792 = vpop.permute.xlu0 %791
    %793 = vrot.lane.b32.xlu0 %v649, 104
    %v794 = vpop.permute.xlu0 %793
    %795 = vrot.lane.b32.xlu0 %v651, 104
    %v796 = vpop.permute.xlu0 %795
    %v813 = vmul.f32 %v614, 0.35355338
    %v814 = vmul.f32 %v616, 0.35355338
    %v815 = vmul.f32 %v619, 0.35355338
    %v816 = vmul.f32 %v621, 0.35355338
    %v817 = vmul.f32 %v624, 0.35355338
    %v818 = vmul.f32 %v626, 0.35355338
    %v819 = vmul.f32 %v629, 0.35355338
    %v820 = vmul.f32 %v631, 0.35355338
    %v821 = vmul.f32 %v634, 0.35355338
    %v822 = vmul.f32 %v636, 0.35355338
    %v823 = vmul.f32 %v639, 0.35355338
    %v824 = vmul.f32 %v641, 0.35355338
    %v825 = vmul.f32 %v644, 0.35355338
    %v826 = vmul.f32 %v646, 0.35355338
    %v827 = vmul.f32 %v649, 0.35355338
    %v828 = vmul.f32 %v651, 0.35355338
    %v829 = vmul.f32 %v670, 0.35355338
    %v830 = vmul.f32 %v672, 0.35355338
    %v831 = vmul.f32 %v674, 0.35355338
    %v832 = vmul.f32 %v676, 0.35355338
    %v833 = vmul.f32 %v678, 0.35355338
    %v834 = vmul.f32 %v680, 0.35355338
    %v835 = vmul.f32 %v682, 0.35355338
    %v836 = vmul.f32 %v684, 0.35355338
    %v837 = vmul.f32 %v686, 0.35355338
    %v838 = vmul.f32 %v688, 0.35355338
    %v839 = vmul.f32 %v690, 0.35355338
    %v840 = vmul.f32 %v692, 0.35355338
    %v841 = vmul.f32 %v694, 0.35355338
    %v842 = vmul.f32 %v696, 0.35355338
    %v843 = vmul.f32 %v698, 0.35355338
    %v844 = vmul.f32 %v700, 0.35355338
    %v845 = vmul.f32 %v718, 0.35355338
    %v846 = vmul.f32 %v720, 0.35355338
    %v847 = vmul.f32 %v722, 0.35355338
    %v848 = vmul.f32 %v724, 0.35355338
    %v849 = vmul.f32 %v726, 0.35355338
    %v850 = vmul.f32 %v728, 0.35355338
    %v851 = vmul.f32 %v730, 0.35355338
    %v852 = vmul.f32 %v732, 0.35355338
    %v853 = vmul.f32 %v734, 0.35355338
    %v854 = vmul.f32 %v736, 0.35355338
    %v855 = vmul.f32 %v738, 0.35355338
    %v856 = vmul.f32 %v740, 0.35355338
    %v857 = vmul.f32 %v742, 0.35355338
    %v858 = vmul.f32 %v744, 0.35355338
    %v859 = vmul.f32 %v746, 0.35355338
    %v860 = vmul.f32 %v748, 0.35355338
    %v861 = vmul.f32 %v766, 0.35355338
    %v862 = vmul.f32 %v768, 0.35355338
    %v863 = vmul.f32 %v770, 0.35355338
    %v864 = vmul.f32 %v772, 0.35355338
    %v865 = vmul.f32 %v774, 0.35355338
    %v866 = vmul.f32 %v776, 0.35355338
    %v867 = vmul.f32 %v778, 0.35355338
    %v868 = vmul.f32 %v780, 0.35355338
    %v869 = vmul.f32 %v782, 0.35355338
    %v870 = vmul.f32 %v784, 0.35355338
    %v871 = vmul.f32 %v786, 0.35355338
    %v872 = vmul.f32 %v788, 0.35355338
    %v873 = vmul.f32 %v790, 0.35355338
    %v874 = vmul.f32 %v792, 0.35355338
    %v875 = vmul.f32 %v794, 0.35355338
    %v876 = vmul.f32 %v796, 0.35355338
    %v877 = vpack.c.bf16 %v813, %v813
    %v878 = vpack.c.bf16 %v814, %v814
    %v879 = vpack.c.bf16 %v815, %v815
    %v880 = vpack.c.bf16 %v816, %v816
    %v881 = vpack.c.bf16 %v817, %v817
    %v882 = vpack.c.bf16 %v818, %v818
    %v883 = vpack.c.bf16 %v819, %v819
    %v884 = vpack.c.bf16 %v820, %v820
    %v885 = vpack.c.bf16 %v821, %v821
    %v886 = vpack.c.bf16 %v822, %v822
    %v887 = vpack.c.bf16 %v823, %v823
    %v888 = vpack.c.bf16 %v824, %v824
    %v889 = vpack.c.bf16 %v825, %v825
    %v890 = vpack.c.bf16 %v826, %v826
    %v891 = vpack.c.bf16 %v827, %v827
    %v892 = vpack.c.bf16 %v828, %v828
    %v893 = vpack.c.bf16 %v829, %v829
    %v894 = vpack.c.bf16 %v830, %v830
    %v895 = vpack.c.bf16 %v831, %v831
    %v896 = vpack.c.bf16 %v832, %v832
    %v897 = vpack.c.bf16 %v833, %v833
    %v898 = vpack.c.bf16 %v834, %v834
    %v899 = vpack.c.bf16 %v835, %v835
    %v900 = vpack.c.bf16 %v836, %v836
    %v901 = vpack.c.bf16 %v837, %v837
    %v902 = vpack.c.bf16 %v838, %v838
    %v903 = vpack.c.bf16 %v839, %v839
    %v904 = vpack.c.bf16 %v840, %v840
    %v905 = vpack.c.bf16 %v841, %v841
    %v906 = vpack.c.bf16 %v842, %v842
    %v907 = vpack.c.bf16 %v843, %v843
    %v908 = vpack.c.bf16 %v844, %v844
    %v909 = vpack.c.bf16 %v845, %v845
    %v910 = vpack.c.bf16 %v846, %v846
    %v911 = vpack.c.bf16 %v847, %v847
    %v912 = vpack.c.bf16 %v848, %v848
    %v913 = vpack.c.bf16 %v849, %v849
    %v914 = vpack.c.bf16 %v850, %v850
    %v915 = vpack.c.bf16 %v851, %v851
    %v916 = vpack.c.bf16 %v852, %v852
    %v917 = vpack.c.bf16 %v853, %v853
    %v918 = vpack.c.bf16 %v854, %v854
    %v919 = vpack.c.bf16 %v855, %v855
    %v920 = vpack.c.bf16 %v856, %v856
    %v921 = vpack.c.bf16 %v857, %v857
    %v922 = vpack.c.bf16 %v858, %v858
    %v923 = vpack.c.bf16 %v859, %v859
    %v924 = vpack.c.bf16 %v860, %v860
    %v925 = vpack.c.bf16 %v861, %v861
    %v926 = vpack.c.bf16 %v862, %v862
    %v927 = vpack.c.bf16 %v863, %v863
    %v928 = vpack.c.bf16 %v864, %v864
    %v929 = vpack.c.bf16 %v865, %v865
    %v930 = vpack.c.bf16 %v866, %v866
    %v931 = vpack.c.bf16 %v867, %v867
    %v932 = vpack.c.bf16 %v868, %v868
    %v933 = vpack.c.bf16 %v869, %v869
    %v934 = vpack.c.bf16 %v870, %v870
    %v935 = vpack.c.bf16 %v871, %v871
    %v936 = vpack.c.bf16 %v872, %v872
    %v937 = vpack.c.bf16 %v873, %v873
    %v938 = vpack.c.bf16 %v874, %v874
    %v939 = vpack.c.bf16 %v875, %v875
    %v940 = vpack.c.bf16 %v876, %v876
    %v941 = vpack.c.bf16 %v614, %v614
    %v942 = vpack.c.bf16 %v616, %v616
    %v943 = vpack.c.bf16 %v619, %v619
    %v944 = vpack.c.bf16 %v621, %v621
    %v945 = vpack.c.bf16 %v624, %v624
    %v946 = vpack.c.bf16 %v626, %v626
    %v947 = vpack.c.bf16 %v629, %v629
    %v948 = vpack.c.bf16 %v631, %v631
    %v949 = vpack.c.bf16 %v634, %v634
    %v950 = vpack.c.bf16 %v636, %v636
    %v951 = vpack.c.bf16 %v639, %v639
    %v952 = vpack.c.bf16 %v641, %v641
    %v953 = vpack.c.bf16 %v644, %v644
    %v954 = vpack.c.bf16 %v646, %v646
    %v955 = vpack.c.bf16 %v649, %v649
    %v956 = vpack.c.bf16 %v651, %v651
    %v957 = vpack.c.bf16 %v670, %v670
    %v958 = vpack.c.bf16 %v672, %v672
    %v959 = vpack.c.bf16 %v674, %v674
    %v960 = vpack.c.bf16 %v676, %v676
    %v961 = vpack.c.bf16 %v678, %v678
    %v962 = vpack.c.bf16 %v680, %v680
    %v963 = vpack.c.bf16 %v682, %v682
    %v964 = vpack.c.bf16 %v684, %v684
    %v965 = vpack.c.bf16 %v686, %v686
    %v966 = vpack.c.bf16 %v688, %v688
    %v967 = vpack.c.bf16 %v690, %v690
    %v968 = vpack.c.bf16 %v692, %v692
    %v969 = vpack.c.bf16 %v694, %v694
    %v970 = vpack.c.bf16 %v696, %v696
    %v971 = vpack.c.bf16 %v698, %v698
    %v972 = vpack.c.bf16 %v700, %v700
    %v973 = vpack.c.bf16 %v718, %v718
    %v974 = vpack.c.bf16 %v720, %v720
    %v975 = vpack.c.bf16 %v722, %v722
    %v976 = vpack.c.bf16 %v724, %v724
    %v977 = vpack.c.bf16 %v726, %v726
    %v978 = vpack.c.bf16 %v728, %v728
    %v979 = vpack.c.bf16 %v730, %v730
    %v980 = vpack.c.bf16 %v732, %v732
    %v981 = vpack.c.bf16 %v734, %v734
    %v982 = vpack.c.bf16 %v736, %v736
    %v983 = vpack.c.bf16 %v738, %v738
    %v984 = vpack.c.bf16 %v740, %v740
    %v985 = vpack.c.bf16 %v742, %v742
    %v986 = vpack.c.bf16 %v744, %v744
    %v987 = vpack.c.bf16 %v746, %v746
    %v988 = vpack.c.bf16 %v748, %v748
    %v989 = vpack.c.bf16 %v766, %v766
    %v990 = vpack.c.bf16 %v768, %v768
    %v991 = vpack.c.bf16 %v770, %v770
    %v992 = vpack.c.bf16 %v772, %v772
    %v993 = vpack.c.bf16 %v774, %v774
    %v994 = vpack.c.bf16 %v776, %v776
    %v995 = vpack.c.bf16 %v778, %v778
    %v996 = vpack.c.bf16 %v780, %v780
    %v997 = vpack.c.bf16 %v782, %v782
    %v998 = vpack.c.bf16 %v784, %v784
    %v999 = vpack.c.bf16 %v786, %v786
    %v1000 = vpack.c.bf16 %v788, %v788
    %v1001 = vpack.c.bf16 %v790, %v790
    %v1002 = vpack.c.bf16 %v792, %v792
    %v1003 = vpack.c.bf16 %v794, %v794
    %v1004 = vpack.c.bf16 %v796, %v796
    %v1006 = vunpack.c.l.b16 %v941
    %v1007 = vpack.c.b16 %v1006, %v1006
    %1008 = vrot.lane.b32.xlu0 %v1007, 96
    %v1009 = vpop.permute.xlu0 %1008
    %vm1010 = vcmask 64512
    %v1012 = vsel %vm1010, %v877, 0
    %v1015 = vsel %vm1010, %v1009, 0
    %1017 = vmatpush.bf16.xpose.msra.mxu0 0
    %1018 = vmatpush.bf16.xpose.msra.mxu0 0
    %1019 = vmatpush.bf16.xpose.msra.mxu0 0
    %1020 = vmatpush.bf16.xpose.msra.mxu0 0
    %1021 = vmatpush.bf16.xpose.msra.mxu0 0
    %1022 = vmatpush.bf16.xpose.msra.mxu0 0
    %1023 = vmatpush.bf16.xpose.msra.mxu0 0
    %1024 = vmatpush.bf16.xpose.msra.mxu0 %v1015
    %1025 = vmatmul.bf16.gmra.mxu0 %v1012
    %v1026 = vpop.f32.mrf.mxu0
    %v1027 = vadd.f32 %v160, %v1026
    %v1028 = vpop.f32.mrf.mxu0
    %1029 = vdwg.mxu0
    %v1031 = vunpack.c.l.b16 %v942
    %v1032 = vpack.c.b16 %v1031, %v1031
    %1033 = vrot.lane.b32.xlu0 %v1032, 96
    %v1034 = vpop.permute.xlu0 %1033
    %v1036 = vsel %vm1010, %v878, 0
    %v1039 = vsel %vm1010, %v1034, 0
    %1041 = vmatpush.bf16.xpose.msra.mxu0 0
    %1042 = vmatpush.bf16.xpose.msra.mxu0 0
    %1043 = vmatpush.bf16.xpose.msra.mxu0 0
    %1044 = vmatpush.bf16.xpose.msra.mxu0 0
    %1045 = vmatpush.bf16.xpose.msra.mxu0 0
    %1046 = vmatpush.bf16.xpose.msra.mxu0 0
    %1047 = vmatpush.bf16.xpose.msra.mxu0 0
    %1048 = vmatpush.bf16.xpose.msra.mxu0 %v1039
    %1049 = vmatmul.bf16.gmra.mxu0 %v1036
    %v1050 = vpop.f32.mrf.mxu0
    %v1051 = vadd.f32 %v160, %v1050
    %v1052 = vpop.f32.mrf.mxu0
    %1053 = vdwg.mxu0
    %v1055 = vunpack.c.l.b16 %v943
    %v1056 = vpack.c.b16 %v1055, %v1055
    %1057 = vrot.lane.b32.xlu0 %v1056, 96
    %v1058 = vpop.permute.xlu0 %1057
    %v1060 = vsel %vm1010, %v879, 0
    %v1063 = vsel %vm1010, %v1058, 0
    %1065 = vmatpush.bf16.xpose.msra.mxu0 0
    %1066 = vmatpush.bf16.xpose.msra.mxu0 0
    %1067 = vmatpush.bf16.xpose.msra.mxu0 0
    %1068 = vmatpush.bf16.xpose.msra.mxu0 0
    %1069 = vmatpush.bf16.xpose.msra.mxu0 0
    %1070 = vmatpush.bf16.xpose.msra.mxu0 0
    %1071 = vmatpush.bf16.xpose.msra.mxu0 0
    %1072 = vmatpush.bf16.xpose.msra.mxu0 %v1063
    %1073 = vmatmul.bf16.gmra.mxu0 %v1060
    %v1074 = vpop.f32.mrf.mxu0
    %v1075 = vadd.f32 %v160, %v1074
    %v1076 = vpop.f32.mrf.mxu0
    %1077 = vdwg.mxu0
    %v1079 = vunpack.c.l.b16 %v944
    %v1080 = vpack.c.b16 %v1079, %v1079
    %1081 = vrot.lane.b32.xlu0 %v1080, 96
    %v1082 = vpop.permute.xlu0 %1081
    %v1084 = vsel %vm1010, %v880, 0
    %v1087 = vsel %vm1010, %v1082, 0
    %1089 = vmatpush.bf16.xpose.msra.mxu0 0
    %1090 = vmatpush.bf16.xpose.msra.mxu0 0
    %1091 = vmatpush.bf16.xpose.msra.mxu0 0
    %1092 = vmatpush.bf16.xpose.msra.mxu0 0
    %1093 = vmatpush.bf16.xpose.msra.mxu0 0
    %1094 = vmatpush.bf16.xpose.msra.mxu0 0
    %1095 = vmatpush.bf16.xpose.msra.mxu0 0
    %1096 = vmatpush.bf16.xpose.msra.mxu0 %v1087
    %1097 = vmatmul.bf16.gmra.mxu0 %v1084
    %v1098 = vpop.f32.mrf.mxu0
    %v1099 = vadd.f32 %v160, %v1098
    %v1100 = vpop.f32.mrf.mxu0
    %1101 = vdwg.mxu0
    %v1103 = vunpack.c.l.b16 %v945
    %v1104 = vpack.c.b16 %v1103, %v1103
    %1105 = vrot.lane.b32.xlu0 %v1104, 96
    %v1106 = vpop.permute.xlu0 %1105
    %v1108 = vsel %vm1010, %v881, 0
    %v1111 = vsel %vm1010, %v1106, 0
    %1113 = vmatpush.bf16.xpose.msra.mxu0 0
    %1114 = vmatpush.bf16.xpose.msra.mxu0 0
    %1115 = vmatpush.bf16.xpose.msra.mxu0 0
    %1116 = vmatpush.bf16.xpose.msra.mxu0 0
    %1117 = vmatpush.bf16.xpose.msra.mxu0 0
    %1118 = vmatpush.bf16.xpose.msra.mxu0 0
    %1119 = vmatpush.bf16.xpose.msra.mxu0 0
    %1120 = vmatpush.bf16.xpose.msra.mxu0 %v1111
    %1121 = vmatmul.bf16.gmra.mxu0 %v1108
    %v1122 = vpop.f32.mrf.mxu0
    %v1123 = vadd.f32 %v160, %v1122
    %v1124 = vpop.f32.mrf.mxu0
    %1125 = vdwg.mxu0
    %v1127 = vunpack.c.l.b16 %v946
    %v1128 = vpack.c.b16 %v1127, %v1127
    %1129 = vrot.lane.b32.xlu0 %v1128, 96
    %v1130 = vpop.permute.xlu0 %1129
    %v1132 = vsel %vm1010, %v882, 0
    %v1135 = vsel %vm1010, %v1130, 0
    %1137 = vmatpush.bf16.xpose.msra.mxu0 0
    %1138 = vmatpush.bf16.xpose.msra.mxu0 0
    %1139 = vmatpush.bf16.xpose.msra.mxu0 0
    %1140 = vmatpush.bf16.xpose.msra.mxu0 0
    %1141 = vmatpush.bf16.xpose.msra.mxu0 0
    %1142 = vmatpush.bf16.xpose.msra.mxu0 0
    %1143 = vmatpush.bf16.xpose.msra.mxu0 0
    %1144 = vmatpush.bf16.xpose.msra.mxu0 %v1135
    %1145 = vmatmul.bf16.gmra.mxu0 %v1132
    %v1146 = vpop.f32.mrf.mxu0
    %v1147 = vadd.f32 %v160, %v1146
    %v1148 = vpop.f32.mrf.mxu0
    %1149 = vdwg.mxu0
    %v1151 = vunpack.c.l.b16 %v947
    %v1152 = vpack.c.b16 %v1151, %v1151
    %1153 = vrot.lane.b32.xlu0 %v1152, 96
    %v1154 = vpop.permute.xlu0 %1153
    %v1156 = vsel %vm1010, %v883, 0
    %v1159 = vsel %vm1010, %v1154, 0
    %1161 = vmatpush.bf16.xpose.msra.mxu0 0
    %1162 = vmatpush.bf16.xpose.msra.mxu0 0
    %1163 = vmatpush.bf16.xpose.msra.mxu0 0
    %1164 = vmatpush.bf16.xpose.msra.mxu0 0
    %1165 = vmatpush.bf16.xpose.msra.mxu0 0
    %1166 = vmatpush.bf16.xpose.msra.mxu0 0
    %1167 = vmatpush.bf16.xpose.msra.mxu0 0
    %1168 = vmatpush.bf16.xpose.msra.mxu0 %v1159
    %1169 = vmatmul.bf16.gmra.mxu0 %v1156
    %v1170 = vpop.f32.mrf.mxu0
    %v1171 = vadd.f32 %v160, %v1170
    %v1172 = vpop.f32.mrf.mxu0
    %1173 = vdwg.mxu0
    %v1175 = vunpack.c.l.b16 %v948
    %v1176 = vpack.c.b16 %v1175, %v1175
    %1177 = vrot.lane.b32.xlu0 %v1176, 96
    %v1178 = vpop.permute.xlu0 %1177
    %v1180 = vsel %vm1010, %v884, 0
    %v1183 = vsel %vm1010, %v1178, 0
    %1185 = vmatpush.bf16.xpose.msra.mxu0 0
    %1186 = vmatpush.bf16.xpose.msra.mxu0 0
    %1187 = vmatpush.bf16.xpose.msra.mxu0 0
    %1188 = vmatpush.bf16.xpose.msra.mxu0 0
    %1189 = vmatpush.bf16.xpose.msra.mxu0 0
    %1190 = vmatpush.bf16.xpose.msra.mxu0 0
    %1191 = vmatpush.bf16.xpose.msra.mxu0 0
    %1192 = vmatpush.bf16.xpose.msra.mxu0 %v1183
    %1193 = vmatmul.bf16.gmra.mxu0 %v1180
    %v1194 = vpop.f32.mrf.mxu0
    %v1195 = vadd.f32 %v160, %v1194
    %v1196 = vpop.f32.mrf.mxu0
    %1197 = vdwg.mxu0
    %v1199 = vunpack.c.l.b16 %v949
    %v1200 = vpack.c.b16 %v1199, %v1199
    %1201 = vrot.lane.b32.xlu0 %v1200, 96
    %v1202 = vpop.permute.xlu0 %1201
    %v1204 = vsel %vm1010, %v885, 0
    %v1207 = vsel %vm1010, %v1202, 0
    %1209 = vmatpush.bf16.xpose.msra.mxu0 0
    %1210 = vmatpush.bf16.xpose.msra.mxu0 0
    %1211 = vmatpush.bf16.xpose.msra.mxu0 0
    %1212 = vmatpush.bf16.xpose.msra.mxu0 0
    %1213 = vmatpush.bf16.xpose.msra.mxu0 0
    %1214 = vmatpush.bf16.xpose.msra.mxu0 0
    %1215 = vmatpush.bf16.xpose.msra.mxu0 0
    %1216 = vmatpush.bf16.xpose.msra.mxu0 %v1207
    %1217 = vmatmul.bf16.gmra.mxu0 %v1204
    %v1218 = vpop.f32.mrf.mxu0
    %v1219 = vadd.f32 %v160, %v1218
    %v1220 = vpop.f32.mrf.mxu0
    %1221 = vdwg.mxu0
    %v1223 = vunpack.c.l.b16 %v950
    %v1224 = vpack.c.b16 %v1223, %v1223
    %1225 = vrot.lane.b32.xlu0 %v1224, 96
    %v1226 = vpop.permute.xlu0 %1225
    %v1228 = vsel %vm1010, %v886, 0
    %v1231 = vsel %vm1010, %v1226, 0
    %1233 = vmatpush.bf16.xpose.msra.mxu0 0
    %1234 = vmatpush.bf16.xpose.msra.mxu0 0
    %1235 = vmatpush.bf16.xpose.msra.mxu0 0
    %1236 = vmatpush.bf16.xpose.msra.mxu0 0
    %1237 = vmatpush.bf16.xpose.msra.mxu0 0
    %1238 = vmatpush.bf16.xpose.msra.mxu0 0
    %1239 = vmatpush.bf16.xpose.msra.mxu0 0
    %1240 = vmatpush.bf16.xpose.msra.mxu0 %v1231
    %1241 = vmatmul.bf16.gmra.mxu0 %v1228
    %v1242 = vpop.f32.mrf.mxu0
    %v1243 = vadd.f32 %v160, %v1242
    %v1244 = vpop.f32.mrf.mxu0
    %1245 = vdwg.mxu0
    %v1247 = vunpack.c.l.b16 %v951
    %v1248 = vpack.c.b16 %v1247, %v1247
    %1249 = vrot.lane.b32.xlu0 %v1248, 96
    %v1250 = vpop.permute.xlu0 %1249
    %v1252 = vsel %vm1010, %v887, 0
    %v1255 = vsel %vm1010, %v1250, 0
    %1257 = vmatpush.bf16.xpose.msra.mxu0 0
    %1258 = vmatpush.bf16.xpose.msra.mxu0 0
    %1259 = vmatpush.bf16.xpose.msra.mxu0 0
    %1260 = vmatpush.bf16.xpose.msra.mxu0 0
    %1261 = vmatpush.bf16.xpose.msra.mxu0 0
    %1262 = vmatpush.bf16.xpose.msra.mxu0 0
    %1263 = vmatpush.bf16.xpose.msra.mxu0 0
    %1264 = vmatpush.bf16.xpose.msra.mxu0 %v1255
    %1265 = vmatmul.bf16.gmra.mxu0 %v1252
    %v1266 = vpop.f32.mrf.mxu0
    %v1267 = vadd.f32 %v160, %v1266
    %v1268 = vpop.f32.mrf.mxu0
    %1269 = vdwg.mxu0
    %v1271 = vunpack.c.l.b16 %v952
    %v1272 = vpack.c.b16 %v1271, %v1271
    %1273 = vrot.lane.b32.xlu0 %v1272, 96
    %v1274 = vpop.permute.xlu0 %1273
    %v1276 = vsel %vm1010, %v888, 0
    %v1279 = vsel %vm1010, %v1274, 0
    %1281 = vmatpush.bf16.xpose.msra.mxu0 0
    %1282 = vmatpush.bf16.xpose.msra.mxu0 0
    %1283 = vmatpush.bf16.xpose.msra.mxu0 0
    %1284 = vmatpush.bf16.xpose.msra.mxu0 0
    %1285 = vmatpush.bf16.xpose.msra.mxu0 0
    %1286 = vmatpush.bf16.xpose.msra.mxu0 0
    %1287 = vmatpush.bf16.xpose.msra.mxu0 0
    %1288 = vmatpush.bf16.xpose.msra.mxu0 %v1279
    %1289 = vmatmul.bf16.gmra.mxu0 %v1276
    %v1290 = vpop.f32.mrf.mxu0
    %v1291 = vadd.f32 %v160, %v1290
    %v1292 = vpop.f32.mrf.mxu0
    %1293 = vdwg.mxu0
    %v1295 = vunpack.c.l.b16 %v953
    %v1296 = vpack.c.b16 %v1295, %v1295
    %1297 = vrot.lane.b32.xlu0 %v1296, 96
    %v1298 = vpop.permute.xlu0 %1297
    %v1300 = vsel %vm1010, %v889, 0
    %v1303 = vsel %vm1010, %v1298, 0
    %1305 = vmatpush.bf16.xpose.msra.mxu0 0
    %1306 = vmatpush.bf16.xpose.msra.mxu0 0
    %1307 = vmatpush.bf16.xpose.msra.mxu0 0
    %1308 = vmatpush.bf16.xpose.msra.mxu0 0
    %1309 = vmatpush.bf16.xpose.msra.mxu0 0
    %1310 = vmatpush.bf16.xpose.msra.mxu0 0
    %1311 = vmatpush.bf16.xpose.msra.mxu0 0
    %1312 = vmatpush.bf16.xpose.msra.mxu0 %v1303
    %1313 = vmatmul.bf16.gmra.mxu0 %v1300
    %v1314 = vpop.f32.mrf.mxu0
    %v1315 = vadd.f32 %v160, %v1314
    %v1316 = vpop.f32.mrf.mxu0
    %1317 = vdwg.mxu0
    %v1319 = vunpack.c.l.b16 %v954
    %v1320 = vpack.c.b16 %v1319, %v1319
    %1321 = vrot.lane.b32.xlu0 %v1320, 96
    %v1322 = vpop.permute.xlu0 %1321
    %v1324 = vsel %vm1010, %v890, 0
    %v1327 = vsel %vm1010, %v1322, 0
    %1329 = vmatpush.bf16.xpose.msra.mxu0 0
    %1330 = vmatpush.bf16.xpose.msra.mxu0 0
    %1331 = vmatpush.bf16.xpose.msra.mxu0 0
    %1332 = vmatpush.bf16.xpose.msra.mxu0 0
    %1333 = vmatpush.bf16.xpose.msra.mxu0 0
    %1334 = vmatpush.bf16.xpose.msra.mxu0 0
    %1335 = vmatpush.bf16.xpose.msra.mxu0 0
    %1336 = vmatpush.bf16.xpose.msra.mxu0 %v1327
    %1337 = vmatmul.bf16.gmra.mxu0 %v1324
    %v1338 = vpop.f32.mrf.mxu0
    %v1339 = vadd.f32 %v160, %v1338
    %v1340 = vpop.f32.mrf.mxu0
    %1341 = vdwg.mxu0
    %v1343 = vunpack.c.l.b16 %v955
    %v1344 = vpack.c.b16 %v1343, %v1343
    %1345 = vrot.lane.b32.xlu0 %v1344, 96
    %v1346 = vpop.permute.xlu0 %1345
    %v1348 = vsel %vm1010, %v891, 0
    %v1351 = vsel %vm1010, %v1346, 0
    %1353 = vmatpush.bf16.xpose.msra.mxu0 0
    %1354 = vmatpush.bf16.xpose.msra.mxu0 0
    %1355 = vmatpush.bf16.xpose.msra.mxu0 0
    %1356 = vmatpush.bf16.xpose.msra.mxu0 0
    %1357 = vmatpush.bf16.xpose.msra.mxu0 0
    %1358 = vmatpush.bf16.xpose.msra.mxu0 0
    %1359 = vmatpush.bf16.xpose.msra.mxu0 0
    %1360 = vmatpush.bf16.xpose.msra.mxu0 %v1351
    %1361 = vmatmul.bf16.gmra.mxu0 %v1348
    %v1362 = vpop.f32.mrf.mxu0
    %v1363 = vadd.f32 %v160, %v1362
    %v1364 = vpop.f32.mrf.mxu0
    %1365 = vdwg.mxu0
    %v1367 = vunpack.c.l.b16 %v956
    %v1368 = vpack.c.b16 %v1367, %v1367
    %1369 = vrot.lane.b32.xlu0 %v1368, 96
    %v1370 = vpop.permute.xlu0 %1369
    %v1372 = vsel %vm1010, %v892, 0
    %v1375 = vsel %vm1010, %v1370, 0
    %1377 = vmatpush.bf16.xpose.msra.mxu0 0
    %1378 = vmatpush.bf16.xpose.msra.mxu0 0
    %1379 = vmatpush.bf16.xpose.msra.mxu0 0
    %1380 = vmatpush.bf16.xpose.msra.mxu0 0
    %1381 = vmatpush.bf16.xpose.msra.mxu0 0
    %1382 = vmatpush.bf16.xpose.msra.mxu0 0
    %1383 = vmatpush.bf16.xpose.msra.mxu0 0
    %1384 = vmatpush.bf16.xpose.msra.mxu0 %v1375
    %1385 = vmatmul.bf16.gmra.mxu0 %v1372
    %v1386 = vpop.f32.mrf.mxu0
    %v1387 = vadd.f32 %v160, %v1386
    %v1388 = vpop.f32.mrf.mxu0
    %1389 = vdwg.mxu0
    %v1391 = vunpack.c.l.b16 %v957
    %v1392 = vpack.c.b16 %v1391, %v1391
    %1393 = vrot.lane.b32.xlu0 %v1392, 96
    %v1394 = vpop.permute.xlu0 %1393
    %v1396 = vsel %vm1010, %v893, 0
    %v1399 = vsel %vm1010, %v1394, 0
    %1401 = vmatpush.bf16.xpose.msra.mxu0 0
    %1402 = vmatpush.bf16.xpose.msra.mxu0 0
    %1403 = vmatpush.bf16.xpose.msra.mxu0 0
    %1404 = vmatpush.bf16.xpose.msra.mxu0 0
    %1405 = vmatpush.bf16.xpose.msra.mxu0 0
    %1406 = vmatpush.bf16.xpose.msra.mxu0 0
    %1407 = vmatpush.bf16.xpose.msra.mxu0 0
    %1408 = vmatpush.bf16.xpose.msra.mxu0 %v1399
    %1409 = vmatmul.bf16.gmra.mxu0 %v1396
    %v1410 = vpop.f32.mrf.mxu0
    %v1411 = vadd.f32 %v160, %v1410
    %v1412 = vpop.f32.mrf.mxu0
    %1413 = vdwg.mxu0
    %v1415 = vunpack.c.l.b16 %v958
    %v1416 = vpack.c.b16 %v1415, %v1415
    %1417 = vrot.lane.b32.xlu0 %v1416, 96
    %v1418 = vpop.permute.xlu0 %1417
    %v1420 = vsel %vm1010, %v894, 0
    %v1423 = vsel %vm1010, %v1418, 0
    %1425 = vmatpush.bf16.xpose.msra.mxu0 0
    %1426 = vmatpush.bf16.xpose.msra.mxu0 0
    %1427 = vmatpush.bf16.xpose.msra.mxu0 0
    %1428 = vmatpush.bf16.xpose.msra.mxu0 0
    %1429 = vmatpush.bf16.xpose.msra.mxu0 0
    %1430 = vmatpush.bf16.xpose.msra.mxu0 0
    %1431 = vmatpush.bf16.xpose.msra.mxu0 0
    %1432 = vmatpush.bf16.xpose.msra.mxu0 %v1423
    %1433 = vmatmul.bf16.gmra.mxu0 %v1420
    %v1434 = vpop.f32.mrf.mxu0
    %v1435 = vadd.f32 %v160, %v1434
    %v1436 = vpop.f32.mrf.mxu0
    %1437 = vdwg.mxu0
    %v1439 = vunpack.c.l.b16 %v959
    %v1440 = vpack.c.b16 %v1439, %v1439
    %1441 = vrot.lane.b32.xlu0 %v1440, 96
    %v1442 = vpop.permute.xlu0 %1441
    %v1444 = vsel %vm1010, %v895, 0
    %v1447 = vsel %vm1010, %v1442, 0
    %1449 = vmatpush.bf16.xpose.msra.mxu0 0
    %1450 = vmatpush.bf16.xpose.msra.mxu0 0
    %1451 = vmatpush.bf16.xpose.msra.mxu0 0
    %1452 = vmatpush.bf16.xpose.msra.mxu0 0
    %1453 = vmatpush.bf16.xpose.msra.mxu0 0
    %1454 = vmatpush.bf16.xpose.msra.mxu0 0
    %1455 = vmatpush.bf16.xpose.msra.mxu0 0
    %1456 = vmatpush.bf16.xpose.msra.mxu0 %v1447
    %1457 = vmatmul.bf16.gmra.mxu0 %v1444
    %v1458 = vpop.f32.mrf.mxu0
    %v1459 = vadd.f32 %v160, %v1458
    %v1460 = vpop.f32.mrf.mxu0
    %1461 = vdwg.mxu0
    %v1463 = vunpack.c.l.b16 %v960
    %v1464 = vpack.c.b16 %v1463, %v1463
    %1465 = vrot.lane.b32.xlu0 %v1464, 96
    %v1466 = vpop.permute.xlu0 %1465
    %v1468 = vsel %vm1010, %v896, 0
    %v1471 = vsel %vm1010, %v1466, 0
    %1473 = vmatpush.bf16.xpose.msra.mxu0 0
    %1474 = vmatpush.bf16.xpose.msra.mxu0 0
    %1475 = vmatpush.bf16.xpose.msra.mxu0 0
    %1476 = vmatpush.bf16.xpose.msra.mxu0 0
    %1477 = vmatpush.bf16.xpose.msra.mxu0 0
    %1478 = vmatpush.bf16.xpose.msra.mxu0 0
    %1479 = vmatpush.bf16.xpose.msra.mxu0 0
    %1480 = vmatpush.bf16.xpose.msra.mxu0 %v1471
    %1481 = vmatmul.bf16.gmra.mxu0 %v1468
    %v1482 = vpop.f32.mrf.mxu0
    %v1483 = vadd.f32 %v160, %v1482
    %v1484 = vpop.f32.mrf.mxu0
    %1485 = vdwg.mxu0
    %v1487 = vunpack.c.l.b16 %v961
    %v1488 = vpack.c.b16 %v1487, %v1487
    %1489 = vrot.lane.b32.xlu0 %v1488, 96
    %v1490 = vpop.permute.xlu0 %1489
    %v1492 = vsel %vm1010, %v897, 0
    %v1495 = vsel %vm1010, %v1490, 0
    %1497 = vmatpush.bf16.xpose.msra.mxu0 0
    %1498 = vmatpush.bf16.xpose.msra.mxu0 0
    %1499 = vmatpush.bf16.xpose.msra.mxu0 0
    %1500 = vmatpush.bf16.xpose.msra.mxu0 0
    %1501 = vmatpush.bf16.xpose.msra.mxu0 0
    %1502 = vmatpush.bf16.xpose.msra.mxu0 0
    %1503 = vmatpush.bf16.xpose.msra.mxu0 0
    %1504 = vmatpush.bf16.xpose.msra.mxu0 %v1495
    %1505 = vmatmul.bf16.gmra.mxu0 %v1492
    %v1506 = vpop.f32.mrf.mxu0
    %v1507 = vadd.f32 %v160, %v1506
    %v1508 = vpop.f32.mrf.mxu0
    %1509 = vdwg.mxu0
    %v1511 = vunpack.c.l.b16 %v962
    %v1512 = vpack.c.b16 %v1511, %v1511
    %1513 = vrot.lane.b32.xlu0 %v1512, 96
    %v1514 = vpop.permute.xlu0 %1513
    %v1516 = vsel %vm1010, %v898, 0
    %v1519 = vsel %vm1010, %v1514, 0
    %1521 = vmatpush.bf16.xpose.msra.mxu0 0
    %1522 = vmatpush.bf16.xpose.msra.mxu0 0
    %1523 = vmatpush.bf16.xpose.msra.mxu0 0
    %1524 = vmatpush.bf16.xpose.msra.mxu0 0
    %1525 = vmatpush.bf16.xpose.msra.mxu0 0
    %1526 = vmatpush.bf16.xpose.msra.mxu0 0
    %1527 = vmatpush.bf16.xpose.msra.mxu0 0
    %1528 = vmatpush.bf16.xpose.msra.mxu0 %v1519
    %1529 = vmatmul.bf16.gmra.mxu0 %v1516
    %v1530 = vpop.f32.mrf.mxu0
    %v1531 = vadd.f32 %v160, %v1530
    %v1532 = vpop.f32.mrf.mxu0
    %1533 = vdwg.mxu0
    %v1535 = vunpack.c.l.b16 %v963
    %v1536 = vpack.c.b16 %v1535, %v1535
    %1537 = vrot.lane.b32.xlu0 %v1536, 96
    %v1538 = vpop.permute.xlu0 %1537
    %v1540 = vsel %vm1010, %v899, 0
    %v1543 = vsel %vm1010, %v1538, 0
    %1545 = vmatpush.bf16.xpose.msra.mxu0 0
    %1546 = vmatpush.bf16.xpose.msra.mxu0 0
    %1547 = vmatpush.bf16.xpose.msra.mxu0 0
    %1548 = vmatpush.bf16.xpose.msra.mxu0 0
    %1549 = vmatpush.bf16.xpose.msra.mxu0 0
    %1550 = vmatpush.bf16.xpose.msra.mxu0 0
    %1551 = vmatpush.bf16.xpose.msra.mxu0 0
    %1552 = vmatpush.bf16.xpose.msra.mxu0 %v1543
    %1553 = vmatmul.bf16.gmra.mxu0 %v1540
    %v1554 = vpop.f32.mrf.mxu0
    %v1555 = vadd.f32 %v160, %v1554
    %v1556 = vpop.f32.mrf.mxu0
    %1557 = vdwg.mxu0
    %v1559 = vunpack.c.l.b16 %v964
    %v1560 = vpack.c.b16 %v1559, %v1559
    %1561 = vrot.lane.b32.xlu0 %v1560, 96
    %v1562 = vpop.permute.xlu0 %1561
    %v1564 = vsel %vm1010, %v900, 0
    %v1567 = vsel %vm1010, %v1562, 0
    %1569 = vmatpush.bf16.xpose.msra.mxu0 0
    %1570 = vmatpush.bf16.xpose.msra.mxu0 0
    %1571 = vmatpush.bf16.xpose.msra.mxu0 0
    %1572 = vmatpush.bf16.xpose.msra.mxu0 0
    %1573 = vmatpush.bf16.xpose.msra.mxu0 0
    %1574 = vmatpush.bf16.xpose.msra.mxu0 0
    %1575 = vmatpush.bf16.xpose.msra.mxu0 0
    %1576 = vmatpush.bf16.xpose.msra.mxu0 %v1567
    %1577 = vmatmul.bf16.gmra.mxu0 %v1564
    %v1578 = vpop.f32.mrf.mxu0
    %v1579 = vadd.f32 %v160, %v1578
    %v1580 = vpop.f32.mrf.mxu0
    %1581 = vdwg.mxu0
    %v1583 = vunpack.c.l.b16 %v965
    %v1584 = vpack.c.b16 %v1583, %v1583
    %1585 = vrot.lane.b32.xlu0 %v1584, 96
    %v1586 = vpop.permute.xlu0 %1585
    %v1588 = vsel %vm1010, %v901, 0
    %v1591 = vsel %vm1010, %v1586, 0
    %1593 = vmatpush.bf16.xpose.msra.mxu0 0
    %1594 = vmatpush.bf16.xpose.msra.mxu0 0
    %1595 = vmatpush.bf16.xpose.msra.mxu0 0
    %1596 = vmatpush.bf16.xpose.msra.mxu0 0
    %1597 = vmatpush.bf16.xpose.msra.mxu0 0
    %1598 = vmatpush.bf16.xpose.msra.mxu0 0
    %1599 = vmatpush.bf16.xpose.msra.mxu0 0
    %1600 = vmatpush.bf16.xpose.msra.mxu0 %v1591
    %1601 = vmatmul.bf16.gmra.mxu0 %v1588
    %v1602 = vpop.f32.mrf.mxu0
    %v1603 = vadd.f32 %v160, %v1602
    %v1604 = vpop.f32.mrf.mxu0
    %1605 = vdwg.mxu0
    %v1607 = vunpack.c.l.b16 %v966
    %v1608 = vpack.c.b16 %v1607, %v1607
    %1609 = vrot.lane.b32.xlu0 %v1608, 96
    %v1610 = vpop.permute.xlu0 %1609
    %v1612 = vsel %vm1010, %v902, 0
    %v1615 = vsel %vm1010, %v1610, 0
    %1617 = vmatpush.bf16.xpose.msra.mxu0 0
    %1618 = vmatpush.bf16.xpose.msra.mxu0 0
    %1619 = vmatpush.bf16.xpose.msra.mxu0 0
    %1620 = vmatpush.bf16.xpose.msra.mxu0 0
    %1621 = vmatpush.bf16.xpose.msra.mxu0 0
    %1622 = vmatpush.bf16.xpose.msra.mxu0 0
    %1623 = vmatpush.bf16.xpose.msra.mxu0 0
    %1624 = vmatpush.bf16.xpose.msra.mxu0 %v1615
    %1625 = vmatmul.bf16.gmra.mxu0 %v1612
    %v1626 = vpop.f32.mrf.mxu0
    %v1627 = vadd.f32 %v160, %v1626
    %v1628 = vpop.f32.mrf.mxu0
    %1629 = vdwg.mxu0
    %v1631 = vunpack.c.l.b16 %v967
    %v1632 = vpack.c.b16 %v1631, %v1631
    %1633 = vrot.lane.b32.xlu0 %v1632, 96
    %v1634 = vpop.permute.xlu0 %1633
    %v1636 = vsel %vm1010, %v903, 0
    %v1639 = vsel %vm1010, %v1634, 0
    %1641 = vmatpush.bf16.xpose.msra.mxu0 0
    %1642 = vmatpush.bf16.xpose.msra.mxu0 0
    %1643 = vmatpush.bf16.xpose.msra.mxu0 0
    %1644 = vmatpush.bf16.xpose.msra.mxu0 0
    %1645 = vmatpush.bf16.xpose.msra.mxu0 0
    %1646 = vmatpush.bf16.xpose.msra.mxu0 0
    %1647 = vmatpush.bf16.xpose.msra.mxu0 0
    %1648 = vmatpush.bf16.xpose.msra.mxu0 %v1639
    %1649 = vmatmul.bf16.gmra.mxu0 %v1636
    %v1650 = vpop.f32.mrf.mxu0
    %v1651 = vadd.f32 %v160, %v1650
    %v1652 = vpop.f32.mrf.mxu0
    %1653 = vdwg.mxu0
    %v1655 = vunpack.c.l.b16 %v968
    %v1656 = vpack.c.b16 %v1655, %v1655
    %1657 = vrot.lane.b32.xlu0 %v1656, 96
    %v1658 = vpop.permute.xlu0 %1657
    %v1660 = vsel %vm1010, %v904, 0
    %v1663 = vsel %vm1010, %v1658, 0
    %1665 = vmatpush.bf16.xpose.msra.mxu0 0
    %1666 = vmatpush.bf16.xpose.msra.mxu0 0
    %1667 = vmatpush.bf16.xpose.msra.mxu0 0
    %1668 = vmatpush.bf16.xpose.msra.mxu0 0
    %1669 = vmatpush.bf16.xpose.msra.mxu0 0
    %1670 = vmatpush.bf16.xpose.msra.mxu0 0
    %1671 = vmatpush.bf16.xpose.msra.mxu0 0
    %1672 = vmatpush.bf16.xpose.msra.mxu0 %v1663
    %1673 = vmatmul.bf16.gmra.mxu0 %v1660
    %v1674 = vpop.f32.mrf.mxu0
    %v1675 = vadd.f32 %v160, %v1674
    %v1676 = vpop.f32.mrf.mxu0
    %1677 = vdwg.mxu0
    %v1679 = vunpack.c.l.b16 %v969
    %v1680 = vpack.c.b16 %v1679, %v1679
    %1681 = vrot.lane.b32.xlu0 %v1680, 96
    %v1682 = vpop.permute.xlu0 %1681
    %v1684 = vsel %vm1010, %v905, 0
    %v1687 = vsel %vm1010, %v1682, 0
    %1689 = vmatpush.bf16.xpose.msra.mxu0 0
    %1690 = vmatpush.bf16.xpose.msra.mxu0 0
    %1691 = vmatpush.bf16.xpose.msra.mxu0 0
    %1692 = vmatpush.bf16.xpose.msra.mxu0 0
    %1693 = vmatpush.bf16.xpose.msra.mxu0 0
    %1694 = vmatpush.bf16.xpose.msra.mxu0 0
    %1695 = vmatpush.bf16.xpose.msra.mxu0 0
    %1696 = vmatpush.bf16.xpose.msra.mxu0 %v1687
    %1697 = vmatmul.bf16.gmra.mxu0 %v1684
    %v1698 = vpop.f32.mrf.mxu0
    %v1699 = vadd.f32 %v160, %v1698
    %v1700 = vpop.f32.mrf.mxu0
    %1701 = vdwg.mxu0
    %v1703 = vunpack.c.l.b16 %v970
    %v1704 = vpack.c.b16 %v1703, %v1703
    %1705 = vrot.lane.b32.xlu0 %v1704, 96
    %v1706 = vpop.permute.xlu0 %1705
    %v1708 = vsel %vm1010, %v906, 0
    %v1711 = vsel %vm1010, %v1706, 0
    %1713 = vmatpush.bf16.xpose.msra.mxu0 0
    %1714 = vmatpush.bf16.xpose.msra.mxu0 0
    %1715 = vmatpush.bf16.xpose.msra.mxu0 0
    %1716 = vmatpush.bf16.xpose.msra.mxu0 0
    %1717 = vmatpush.bf16.xpose.msra.mxu0 0
    %1718 = vmatpush.bf16.xpose.msra.mxu0 0
    %1719 = vmatpush.bf16.xpose.msra.mxu0 0
    %1720 = vmatpush.bf16.xpose.msra.mxu0 %v1711
    %1721 = vmatmul.bf16.gmra.mxu0 %v1708
    %v1722 = vpop.f32.mrf.mxu0
    %v1723 = vadd.f32 %v160, %v1722
    %v1724 = vpop.f32.mrf.mxu0
    %1725 = vdwg.mxu0
    %v1727 = vunpack.c.l.b16 %v971
    %v1728 = vpack.c.b16 %v1727, %v1727
    %1729 = vrot.lane.b32.xlu0 %v1728, 96
    %v1730 = vpop.permute.xlu0 %1729
    %v1732 = vsel %vm1010, %v907, 0
    %v1735 = vsel %vm1010, %v1730, 0
    %1737 = vmatpush.bf16.xpose.msra.mxu0 0
    %1738 = vmatpush.bf16.xpose.msra.mxu0 0
    %1739 = vmatpush.bf16.xpose.msra.mxu0 0
    %1740 = vmatpush.bf16.xpose.msra.mxu0 0
    %1741 = vmatpush.bf16.xpose.msra.mxu0 0
    %1742 = vmatpush.bf16.xpose.msra.mxu0 0
    %1743 = vmatpush.bf16.xpose.msra.mxu0 0
    %1744 = vmatpush.bf16.xpose.msra.mxu0 %v1735
    %1745 = vmatmul.bf16.gmra.mxu0 %v1732
    %v1746 = vpop.f32.mrf.mxu0
    %v1747 = vadd.f32 %v160, %v1746
    %v1748 = vpop.f32.mrf.mxu0
    %1749 = vdwg.mxu0
    %v1751 = vunpack.c.l.b16 %v972
    %v1752 = vpack.c.b16 %v1751, %v1751
    %1753 = vrot.lane.b32.xlu0 %v1752, 96
    %v1754 = vpop.permute.xlu0 %1753
    %v1756 = vsel %vm1010, %v908, 0
    %v1759 = vsel %vm1010, %v1754, 0
    %1761 = vmatpush.bf16.xpose.msra.mxu0 0
    %1762 = vmatpush.bf16.xpose.msra.mxu0 0
    %1763 = vmatpush.bf16.xpose.msra.mxu0 0
    %1764 = vmatpush.bf16.xpose.msra.mxu0 0
    %1765 = vmatpush.bf16.xpose.msra.mxu0 0
    %1766 = vmatpush.bf16.xpose.msra.mxu0 0
    %1767 = vmatpush.bf16.xpose.msra.mxu0 0
    %1768 = vmatpush.bf16.xpose.msra.mxu0 %v1759
    %1769 = vmatmul.bf16.gmra.mxu0 %v1756
    %v1770 = vpop.f32.mrf.mxu0
    %v1771 = vadd.f32 %v160, %v1770
    %v1772 = vpop.f32.mrf.mxu0
    %1773 = vdwg.mxu0
    %v1775 = vunpack.c.l.b16 %v973
    %v1776 = vpack.c.b16 %v1775, %v1775
    %1777 = vrot.lane.b32.xlu0 %v1776, 96
    %v1778 = vpop.permute.xlu0 %1777
    %v1780 = vsel %vm1010, %v909, 0
    %v1783 = vsel %vm1010, %v1778, 0
    %1785 = vmatpush.bf16.xpose.msra.mxu0 0
    %1786 = vmatpush.bf16.xpose.msra.mxu0 0
    %1787 = vmatpush.bf16.xpose.msra.mxu0 0
    %1788 = vmatpush.bf16.xpose.msra.mxu0 0
    %1789 = vmatpush.bf16.xpose.msra.mxu0 0
    %1790 = vmatpush.bf16.xpose.msra.mxu0 0
    %1791 = vmatpush.bf16.xpose.msra.mxu0 0
    %1792 = vmatpush.bf16.xpose.msra.mxu0 %v1783
    %1793 = vmatmul.bf16.gmra.mxu0 %v1780
    %v1794 = vpop.f32.mrf.mxu0
    %v1795 = vadd.f32 %v160, %v1794
    %v1796 = vpop.f32.mrf.mxu0
    %1797 = vdwg.mxu0
    %v1799 = vunpack.c.l.b16 %v974
    %v1800 = vpack.c.b16 %v1799, %v1799
    %1801 = vrot.lane.b32.xlu0 %v1800, 96
    %v1802 = vpop.permute.xlu0 %1801
    %v1804 = vsel %vm1010, %v910, 0
    %v1807 = vsel %vm1010, %v1802, 0
    %1809 = vmatpush.bf16.xpose.msra.mxu0 0
    %1810 = vmatpush.bf16.xpose.msra.mxu0 0
    %1811 = vmatpush.bf16.xpose.msra.mxu0 0
    %1812 = vmatpush.bf16.xpose.msra.mxu0 0
    %1813 = vmatpush.bf16.xpose.msra.mxu0 0
    %1814 = vmatpush.bf16.xpose.msra.mxu0 0
    %1815 = vmatpush.bf16.xpose.msra.mxu0 0
    %1816 = vmatpush.bf16.xpose.msra.mxu0 %v1807
    %1817 = vmatmul.bf16.gmra.mxu0 %v1804
    %v1818 = vpop.f32.mrf.mxu0
    %v1819 = vadd.f32 %v160, %v1818
    %v1820 = vpop.f32.mrf.mxu0
    %1821 = vdwg.mxu0
    %v1823 = vunpack.c.l.b16 %v975
    %v1824 = vpack.c.b16 %v1823, %v1823
    %1825 = vrot.lane.b32.xlu0 %v1824, 96
    %v1826 = vpop.permute.xlu0 %1825
    %v1828 = vsel %vm1010, %v911, 0
    %v1831 = vsel %vm1010, %v1826, 0
    %1833 = vmatpush.bf16.xpose.msra.mxu0 0
    %1834 = vmatpush.bf16.xpose.msra.mxu0 0
    %1835 = vmatpush.bf16.xpose.msra.mxu0 0
    %1836 = vmatpush.bf16.xpose.msra.mxu0 0
    %1837 = vmatpush.bf16.xpose.msra.mxu0 0
    %1838 = vmatpush.bf16.xpose.msra.mxu0 0
    %1839 = vmatpush.bf16.xpose.msra.mxu0 0
    %1840 = vmatpush.bf16.xpose.msra.mxu0 %v1831
    %1841 = vmatmul.bf16.gmra.mxu0 %v1828
    %v1842 = vpop.f32.mrf.mxu0
    %v1843 = vadd.f32 %v160, %v1842
    %v1844 = vpop.f32.mrf.mxu0
    %1845 = vdwg.mxu0
    %v1847 = vunpack.c.l.b16 %v976
    %v1848 = vpack.c.b16 %v1847, %v1847
    %1849 = vrot.lane.b32.xlu0 %v1848, 96
    %v1850 = vpop.permute.xlu0 %1849
    %v1852 = vsel %vm1010, %v912, 0
    %v1855 = vsel %vm1010, %v1850, 0
    %1857 = vmatpush.bf16.xpose.msra.mxu0 0
    %1858 = vmatpush.bf16.xpose.msra.mxu0 0
    %1859 = vmatpush.bf16.xpose.msra.mxu0 0
    %1860 = vmatpush.bf16.xpose.msra.mxu0 0
    %1861 = vmatpush.bf16.xpose.msra.mxu0 0
    %1862 = vmatpush.bf16.xpose.msra.mxu0 0
    %1863 = vmatpush.bf16.xpose.msra.mxu0 0
    %1864 = vmatpush.bf16.xpose.msra.mxu0 %v1855
    %1865 = vmatmul.bf16.gmra.mxu0 %v1852
    %v1866 = vpop.f32.mrf.mxu0
    %v1867 = vadd.f32 %v160, %v1866
    %v1868 = vpop.f32.mrf.mxu0
    %1869 = vdwg.mxu0
    %v1871 = vunpack.c.l.b16 %v977
    %v1872 = vpack.c.b16 %v1871, %v1871
    %1873 = vrot.lane.b32.xlu0 %v1872, 96
    %v1874 = vpop.permute.xlu0 %1873
    %v1876 = vsel %vm1010, %v913, 0
    %v1879 = vsel %vm1010, %v1874, 0
    %1881 = vmatpush.bf16.xpose.msra.mxu0 0
    %1882 = vmatpush.bf16.xpose.msra.mxu0 0
    %1883 = vmatpush.bf16.xpose.msra.mxu0 0
    %1884 = vmatpush.bf16.xpose.msra.mxu0 0
    %1885 = vmatpush.bf16.xpose.msra.mxu0 0
    %1886 = vmatpush.bf16.xpose.msra.mxu0 0
    %1887 = vmatpush.bf16.xpose.msra.mxu0 0
    %1888 = vmatpush.bf16.xpose.msra.mxu0 %v1879
    %1889 = vmatmul.bf16.gmra.mxu0 %v1876
    %v1890 = vpop.f32.mrf.mxu0
    %v1891 = vadd.f32 %v160, %v1890
    %v1892 = vpop.f32.mrf.mxu0
    %1893 = vdwg.mxu0
    %v1895 = vunpack.c.l.b16 %v978
    %v1896 = vpack.c.b16 %v1895, %v1895
    %1897 = vrot.lane.b32.xlu0 %v1896, 96
    %v1898 = vpop.permute.xlu0 %1897
    %v1900 = vsel %vm1010, %v914, 0
    %v1903 = vsel %vm1010, %v1898, 0
    %1905 = vmatpush.bf16.xpose.msra.mxu0 0
    %1906 = vmatpush.bf16.xpose.msra.mxu0 0
    %1907 = vmatpush.bf16.xpose.msra.mxu0 0
    %1908 = vmatpush.bf16.xpose.msra.mxu0 0
    %1909 = vmatpush.bf16.xpose.msra.mxu0 0
    %1910 = vmatpush.bf16.xpose.msra.mxu0 0
    %1911 = vmatpush.bf16.xpose.msra.mxu0 0
    %1912 = vmatpush.bf16.xpose.msra.mxu0 %v1903
    %1913 = vmatmul.bf16.gmra.mxu0 %v1900
    %v1914 = vpop.f32.mrf.mxu0
    %v1915 = vadd.f32 %v160, %v1914
    %v1916 = vpop.f32.mrf.mxu0
    %1917 = vdwg.mxu0
    %v1919 = vunpack.c.l.b16 %v979
    %v1920 = vpack.c.b16 %v1919, %v1919
    %1921 = vrot.lane.b32.xlu0 %v1920, 96
    %v1922 = vpop.permute.xlu0 %1921
    %v1924 = vsel %vm1010, %v915, 0
    %v1927 = vsel %vm1010, %v1922, 0
    %1929 = vmatpush.bf16.xpose.msra.mxu0 0
    %1930 = vmatpush.bf16.xpose.msra.mxu0 0
    %1931 = vmatpush.bf16.xpose.msra.mxu0 0
    %1932 = vmatpush.bf16.xpose.msra.mxu0 0
    %1933 = vmatpush.bf16.xpose.msra.mxu0 0
    %1934 = vmatpush.bf16.xpose.msra.mxu0 0
    %1935 = vmatpush.bf16.xpose.msra.mxu0 0
    %1936 = vmatpush.bf16.xpose.msra.mxu0 %v1927
    %1937 = vmatmul.bf16.gmra.mxu0 %v1924
    %v1938 = vpop.f32.mrf.mxu0
    %v1939 = vadd.f32 %v160, %v1938
    %v1940 = vpop.f32.mrf.mxu0
    %1941 = vdwg.mxu0
    %v1943 = vunpack.c.l.b16 %v980
    %v1944 = vpack.c.b16 %v1943, %v1943
    %1945 = vrot.lane.b32.xlu0 %v1944, 96
    %v1946 = vpop.permute.xlu0 %1945
    %v1948 = vsel %vm1010, %v916, 0
    %v1951 = vsel %vm1010, %v1946, 0
    %1953 = vmatpush.bf16.xpose.msra.mxu0 0
    %1954 = vmatpush.bf16.xpose.msra.mxu0 0
    %1955 = vmatpush.bf16.xpose.msra.mxu0 0
    %1956 = vmatpush.bf16.xpose.msra.mxu0 0
    %1957 = vmatpush.bf16.xpose.msra.mxu0 0
    %1958 = vmatpush.bf16.xpose.msra.mxu0 0
    %1959 = vmatpush.bf16.xpose.msra.mxu0 0
    %1960 = vmatpush.bf16.xpose.msra.mxu0 %v1951
    %1961 = vmatmul.bf16.gmra.mxu0 %v1948
    %v1962 = vpop.f32.mrf.mxu0
    %v1963 = vadd.f32 %v160, %v1962
    %v1964 = vpop.f32.mrf.mxu0
    %1965 = vdwg.mxu0
    %v1967 = vunpack.c.l.b16 %v981
    %v1968 = vpack.c.b16 %v1967, %v1967
    %1969 = vrot.lane.b32.xlu0 %v1968, 96
    %v1970 = vpop.permute.xlu0 %1969
    %v1972 = vsel %vm1010, %v917, 0
    %v1975 = vsel %vm1010, %v1970, 0
    %1977 = vmatpush.bf16.xpose.msra.mxu0 0
    %1978 = vmatpush.bf16.xpose.msra.mxu0 0
    %1979 = vmatpush.bf16.xpose.msra.mxu0 0
    %1980 = vmatpush.bf16.xpose.msra.mxu0 0
    %1981 = vmatpush.bf16.xpose.msra.mxu0 0
    %1982 = vmatpush.bf16.xpose.msra.mxu0 0
    %1983 = vmatpush.bf16.xpose.msra.mxu0 0
    %1984 = vmatpush.bf16.xpose.msra.mxu0 %v1975
    %1985 = vmatmul.bf16.gmra.mxu0 %v1972
    %v1986 = vpop.f32.mrf.mxu0
    %v1987 = vadd.f32 %v160, %v1986
    %v1988 = vpop.f32.mrf.mxu0
    %1989 = vdwg.mxu0
    %v1991 = vunpack.c.l.b16 %v982
    %v1992 = vpack.c.b16 %v1991, %v1991
    %1993 = vrot.lane.b32.xlu0 %v1992, 96
    %v1994 = vpop.permute.xlu0 %1993
    %v1996 = vsel %vm1010, %v918, 0
    %v1999 = vsel %vm1010, %v1994, 0
    %2001 = vmatpush.bf16.xpose.msra.mxu0 0
    %2002 = vmatpush.bf16.xpose.msra.mxu0 0
    %2003 = vmatpush.bf16.xpose.msra.mxu0 0
    %2004 = vmatpush.bf16.xpose.msra.mxu0 0
    %2005 = vmatpush.bf16.xpose.msra.mxu0 0
    %2006 = vmatpush.bf16.xpose.msra.mxu0 0
    %2007 = vmatpush.bf16.xpose.msra.mxu0 0
    %2008 = vmatpush.bf16.xpose.msra.mxu0 %v1999
    %2009 = vmatmul.bf16.gmra.mxu0 %v1996
    %v2010 = vpop.f32.mrf.mxu0
    %v2011 = vadd.f32 %v160, %v2010
    %v2012 = vpop.f32.mrf.mxu0
    %2013 = vdwg.mxu0
    %v2015 = vunpack.c.l.b16 %v983
    %v2016 = vpack.c.b16 %v2015, %v2015
    %2017 = vrot.lane.b32.xlu0 %v2016, 96
    %v2018 = vpop.permute.xlu0 %2017
    %v2020 = vsel %vm1010, %v919, 0
    %v2023 = vsel %vm1010, %v2018, 0
    %2025 = vmatpush.bf16.xpose.msra.mxu0 0
    %2026 = vmatpush.bf16.xpose.msra.mxu0 0
    %2027 = vmatpush.bf16.xpose.msra.mxu0 0
    %2028 = vmatpush.bf16.xpose.msra.mxu0 0
    %2029 = vmatpush.bf16.xpose.msra.mxu0 0
    %2030 = vmatpush.bf16.xpose.msra.mxu0 0
    %2031 = vmatpush.bf16.xpose.msra.mxu0 0
    %2032 = vmatpush.bf16.xpose.msra.mxu0 %v2023
    %2033 = vmatmul.bf16.gmra.mxu0 %v2020
    %v2034 = vpop.f32.mrf.mxu0
    %v2035 = vadd.f32 %v160, %v2034
    %v2036 = vpop.f32.mrf.mxu0
    %2037 = vdwg.mxu0
    %v2039 = vunpack.c.l.b16 %v984
    %v2040 = vpack.c.b16 %v2039, %v2039
    %2041 = vrot.lane.b32.xlu0 %v2040, 96
    %v2042 = vpop.permute.xlu0 %2041
    %v2044 = vsel %vm1010, %v920, 0
    %v2047 = vsel %vm1010, %v2042, 0
    %2049 = vmatpush.bf16.xpose.msra.mxu0 0
    %2050 = vmatpush.bf16.xpose.msra.mxu0 0
    %2051 = vmatpush.bf16.xpose.msra.mxu0 0
    %2052 = vmatpush.bf16.xpose.msra.mxu0 0
    %2053 = vmatpush.bf16.xpose.msra.mxu0 0
    %2054 = vmatpush.bf16.xpose.msra.mxu0 0
    %2055 = vmatpush.bf16.xpose.msra.mxu0 0
    %2056 = vmatpush.bf16.xpose.msra.mxu0 %v2047
    %2057 = vmatmul.bf16.gmra.mxu0 %v2044
    %v2058 = vpop.f32.mrf.mxu0
    %v2059 = vadd.f32 %v160, %v2058
    %v2060 = vpop.f32.mrf.mxu0
    %2061 = vdwg.mxu0
    %v2063 = vunpack.c.l.b16 %v985
    %v2064 = vpack.c.b16 %v2063, %v2063
    %2065 = vrot.lane.b32.xlu0 %v2064, 96
    %v2066 = vpop.permute.xlu0 %2065
    %v2068 = vsel %vm1010, %v921, 0
    %v2071 = vsel %vm1010, %v2066, 0
    %2073 = vmatpush.bf16.xpose.msra.mxu0 0
    %2074 = vmatpush.bf16.xpose.msra.mxu0 0
    %2075 = vmatpush.bf16.xpose.msra.mxu0 0
    %2076 = vmatpush.bf16.xpose.msra.mxu0 0
    %2077 = vmatpush.bf16.xpose.msra.mxu0 0
    %2078 = vmatpush.bf16.xpose.msra.mxu0 0
    %2079 = vmatpush.bf16.xpose.msra.mxu0 0
    %2080 = vmatpush.bf16.xpose.msra.mxu0 %v2071
    %2081 = vmatmul.bf16.gmra.mxu0 %v2068
    %v2082 = vpop.f32.mrf.mxu0
    %v2083 = vadd.f32 %v160, %v2082
    %v2084 = vpop.f32.mrf.mxu0
    %2085 = vdwg.mxu0
    %v2087 = vunpack.c.l.b16 %v986
    %v2088 = vpack.c.b16 %v2087, %v2087
    %2089 = vrot.lane.b32.xlu0 %v2088, 96
    %v2090 = vpop.permute.xlu0 %2089
    %v2092 = vsel %vm1010, %v922, 0
    %v2095 = vsel %vm1010, %v2090, 0
    %2097 = vmatpush.bf16.xpose.msra.mxu0 0
    %2098 = vmatpush.bf16.xpose.msra.mxu0 0
    %2099 = vmatpush.bf16.xpose.msra.mxu0 0
    %2100 = vmatpush.bf16.xpose.msra.mxu0 0
    %2101 = vmatpush.bf16.xpose.msra.mxu0 0
    %2102 = vmatpush.bf16.xpose.msra.mxu0 0
    %2103 = vmatpush.bf16.xpose.msra.mxu0 0
    %2104 = vmatpush.bf16.xpose.msra.mxu0 %v2095
    %2105 = vmatmul.bf16.gmra.mxu0 %v2092
    %v2106 = vpop.f32.mrf.mxu0
    %v2107 = vadd.f32 %v160, %v2106
    %v2108 = vpop.f32.mrf.mxu0
    %2109 = vdwg.mxu0
    %v2111 = vunpack.c.l.b16 %v987
    %v2112 = vpack.c.b16 %v2111, %v2111
    %2113 = vrot.lane.b32.xlu0 %v2112, 96
    %v2114 = vpop.permute.xlu0 %2113
    %v2116 = vsel %vm1010, %v923, 0
    %v2119 = vsel %vm1010, %v2114, 0
    %2121 = vmatpush.bf16.xpose.msra.mxu0 0
    %2122 = vmatpush.bf16.xpose.msra.mxu0 0
    %2123 = vmatpush.bf16.xpose.msra.mxu0 0
    %2124 = vmatpush.bf16.xpose.msra.mxu0 0
    %2125 = vmatpush.bf16.xpose.msra.mxu0 0
    %2126 = vmatpush.bf16.xpose.msra.mxu0 0
    %2127 = vmatpush.bf16.xpose.msra.mxu0 0
    %2128 = vmatpush.bf16.xpose.msra.mxu0 %v2119
    %2129 = vmatmul.bf16.gmra.mxu0 %v2116
    %v2130 = vpop.f32.mrf.mxu0
    %v2131 = vadd.f32 %v160, %v2130
    %v2132 = vpop.f32.mrf.mxu0
    %2133 = vdwg.mxu0
    %v2135 = vunpack.c.l.b16 %v988
    %v2136 = vpack.c.b16 %v2135, %v2135
    %2137 = vrot.lane.b32.xlu0 %v2136, 96
    %v2138 = vpop.permute.xlu0 %2137
    %v2140 = vsel %vm1010, %v924, 0
    %v2143 = vsel %vm1010, %v2138, 0
    %2145 = vmatpush.bf16.xpose.msra.mxu0 0
    %2146 = vmatpush.bf16.xpose.msra.mxu0 0
    %2147 = vmatpush.bf16.xpose.msra.mxu0 0
    %2148 = vmatpush.bf16.xpose.msra.mxu0 0
    %2149 = vmatpush.bf16.xpose.msra.mxu0 0
    %2150 = vmatpush.bf16.xpose.msra.mxu0 0
    %2151 = vmatpush.bf16.xpose.msra.mxu0 0
    %2152 = vmatpush.bf16.xpose.msra.mxu0 %v2143
    %2153 = vmatmul.bf16.gmra.mxu0 %v2140
    %v2154 = vpop.f32.mrf.mxu0
    %v2155 = vadd.f32 %v160, %v2154
    %v2156 = vpop.f32.mrf.mxu0
    %2157 = vdwg.mxu0
    %v2159 = vunpack.c.l.b16 %v989
    %v2160 = vpack.c.b16 %v2159, %v2159
    %2161 = vrot.lane.b32.xlu0 %v2160, 96
    %v2162 = vpop.permute.xlu0 %2161
    %v2164 = vsel %vm1010, %v925, 0
    %v2167 = vsel %vm1010, %v2162, 0
    %2169 = vmatpush.bf16.xpose.msra.mxu0 0
    %2170 = vmatpush.bf16.xpose.msra.mxu0 0
    %2171 = vmatpush.bf16.xpose.msra.mxu0 0
    %2172 = vmatpush.bf16.xpose.msra.mxu0 0
    %2173 = vmatpush.bf16.xpose.msra.mxu0 0
    %2174 = vmatpush.bf16.xpose.msra.mxu0 0
    %2175 = vmatpush.bf16.xpose.msra.mxu0 0
    %2176 = vmatpush.bf16.xpose.msra.mxu0 %v2167
    %2177 = vmatmul.bf16.gmra.mxu0 %v2164
    %v2178 = vpop.f32.mrf.mxu0
    %v2179 = vadd.f32 %v160, %v2178
    %v2180 = vpop.f32.mrf.mxu0
    %2181 = vdwg.mxu0
    %v2183 = vunpack.c.l.b16 %v990
    %v2184 = vpack.c.b16 %v2183, %v2183
    %2185 = vrot.lane.b32.xlu0 %v2184, 96
    %v2186 = vpop.permute.xlu0 %2185
    %v2188 = vsel %vm1010, %v926, 0
    %v2191 = vsel %vm1010, %v2186, 0
    %2193 = vmatpush.bf16.xpose.msra.mxu0 0
    %2194 = vmatpush.bf16.xpose.msra.mxu0 0
    %2195 = vmatpush.bf16.xpose.msra.mxu0 0
    %2196 = vmatpush.bf16.xpose.msra.mxu0 0
    %2197 = vmatpush.bf16.xpose.msra.mxu0 0
    %2198 = vmatpush.bf16.xpose.msra.mxu0 0
    %2199 = vmatpush.bf16.xpose.msra.mxu0 0
    %2200 = vmatpush.bf16.xpose.msra.mxu0 %v2191
    %2201 = vmatmul.bf16.gmra.mxu0 %v2188
    %v2202 = vpop.f32.mrf.mxu0
    %v2203 = vadd.f32 %v160, %v2202
    %v2204 = vpop.f32.mrf.mxu0
    %2205 = vdwg.mxu0
    %v2207 = vunpack.c.l.b16 %v991
    %v2208 = vpack.c.b16 %v2207, %v2207
    %2209 = vrot.lane.b32.xlu0 %v2208, 96
    %v2210 = vpop.permute.xlu0 %2209
    %v2212 = vsel %vm1010, %v927, 0
    %v2215 = vsel %vm1010, %v2210, 0
    %2217 = vmatpush.bf16.xpose.msra.mxu0 0
    %2218 = vmatpush.bf16.xpose.msra.mxu0 0
    %2219 = vmatpush.bf16.xpose.msra.mxu0 0
    %2220 = vmatpush.bf16.xpose.msra.mxu0 0
    %2221 = vmatpush.bf16.xpose.msra.mxu0 0
    %2222 = vmatpush.bf16.xpose.msra.mxu0 0
    %2223 = vmatpush.bf16.xpose.msra.mxu0 0
    %2224 = vmatpush.bf16.xpose.msra.mxu0 %v2215
    %2225 = vmatmul.bf16.gmra.mxu0 %v2212
    %v2226 = vpop.f32.mrf.mxu0
    %v2227 = vadd.f32 %v160, %v2226
    %v2228 = vpop.f32.mrf.mxu0
    %2229 = vdwg.mxu0
    %v2231 = vunpack.c.l.b16 %v992
    %v2232 = vpack.c.b16 %v2231, %v2231
    %2233 = vrot.lane.b32.xlu0 %v2232, 96
    %v2234 = vpop.permute.xlu0 %2233
    %v2236 = vsel %vm1010, %v928, 0
    %v2239 = vsel %vm1010, %v2234, 0
    %2241 = vmatpush.bf16.xpose.msra.mxu0 0
    %2242 = vmatpush.bf16.xpose.msra.mxu0 0
    %2243 = vmatpush.bf16.xpose.msra.mxu0 0
    %2244 = vmatpush.bf16.xpose.msra.mxu0 0
    %2245 = vmatpush.bf16.xpose.msra.mxu0 0
    %2246 = vmatpush.bf16.xpose.msra.mxu0 0
    %2247 = vmatpush.bf16.xpose.msra.mxu0 0
    %2248 = vmatpush.bf16.xpose.msra.mxu0 %v2239
    %2249 = vmatmul.bf16.gmra.mxu0 %v2236
    %v2250 = vpop.f32.mrf.mxu0
    %v2251 = vadd.f32 %v160, %v2250
    %v2252 = vpop.f32.mrf.mxu0
    %2253 = vdwg.mxu0
    %v2255 = vunpack.c.l.b16 %v993
    %v2256 = vpack.c.b16 %v2255, %v2255
    %2257 = vrot.lane.b32.xlu0 %v2256, 96
    %v2258 = vpop.permute.xlu0 %2257
    %v2260 = vsel %vm1010, %v929, 0
    %v2263 = vsel %vm1010, %v2258, 0
    %2265 = vmatpush.bf16.xpose.msra.mxu0 0
    %2266 = vmatpush.bf16.xpose.msra.mxu0 0
    %2267 = vmatpush.bf16.xpose.msra.mxu0 0
    %2268 = vmatpush.bf16.xpose.msra.mxu0 0
    %2269 = vmatpush.bf16.xpose.msra.mxu0 0
    %2270 = vmatpush.bf16.xpose.msra.mxu0 0
    %2271 = vmatpush.bf16.xpose.msra.mxu0 0
    %2272 = vmatpush.bf16.xpose.msra.mxu0 %v2263
    %2273 = vmatmul.bf16.gmra.mxu0 %v2260
    %v2274 = vpop.f32.mrf.mxu0
    %v2275 = vadd.f32 %v160, %v2274
    %v2276 = vpop.f32.mrf.mxu0
    %2277 = vdwg.mxu0
    %v2279 = vunpack.c.l.b16 %v994
    %v2280 = vpack.c.b16 %v2279, %v2279
    %2281 = vrot.lane.b32.xlu0 %v2280, 96
    %v2282 = vpop.permute.xlu0 %2281
    %v2284 = vsel %vm1010, %v930, 0
    %v2287 = vsel %vm1010, %v2282, 0
    %2289 = vmatpush.bf16.xpose.msra.mxu0 0
    %2290 = vmatpush.bf16.xpose.msra.mxu0 0
    %2291 = vmatpush.bf16.xpose.msra.mxu0 0
    %2292 = vmatpush.bf16.xpose.msra.mxu0 0
    %2293 = vmatpush.bf16.xpose.msra.mxu0 0
    %2294 = vmatpush.bf16.xpose.msra.mxu0 0
    %2295 = vmatpush.bf16.xpose.msra.mxu0 0
    %2296 = vmatpush.bf16.xpose.msra.mxu0 %v2287
    %2297 = vmatmul.bf16.gmra.mxu0 %v2284
    %v2298 = vpop.f32.mrf.mxu0
    %v2299 = vadd.f32 %v160, %v2298
    %v2300 = vpop.f32.mrf.mxu0
    %2301 = vdwg.mxu0
    %v2303 = vunpack.c.l.b16 %v995
    %v2304 = vpack.c.b16 %v2303, %v2303
    %2305 = vrot.lane.b32.xlu0 %v2304, 96
    %v2306 = vpop.permute.xlu0 %2305
    %v2308 = vsel %vm1010, %v931, 0
    %v2311 = vsel %vm1010, %v2306, 0
    %2313 = vmatpush.bf16.xpose.msra.mxu0 0
    %2314 = vmatpush.bf16.xpose.msra.mxu0 0
    %2315 = vmatpush.bf16.xpose.msra.mxu0 0
    %2316 = vmatpush.bf16.xpose.msra.mxu0 0
    %2317 = vmatpush.bf16.xpose.msra.mxu0 0
    %2318 = vmatpush.bf16.xpose.msra.mxu0 0
    %2319 = vmatpush.bf16.xpose.msra.mxu0 0
    %2320 = vmatpush.bf16.xpose.msra.mxu0 %v2311
    %2321 = vmatmul.bf16.gmra.mxu0 %v2308
    %v2322 = vpop.f32.mrf.mxu0
    %v2323 = vadd.f32 %v160, %v2322
    %v2324 = vpop.f32.mrf.mxu0
    %2325 = vdwg.mxu0
    %v2327 = vunpack.c.l.b16 %v996
    %v2328 = vpack.c.b16 %v2327, %v2327
    %2329 = vrot.lane.b32.xlu0 %v2328, 96
    %v2330 = vpop.permute.xlu0 %2329
    %v2332 = vsel %vm1010, %v932, 0
    %v2335 = vsel %vm1010, %v2330, 0
    %2337 = vmatpush.bf16.xpose.msra.mxu0 0
    %2338 = vmatpush.bf16.xpose.msra.mxu0 0
    %2339 = vmatpush.bf16.xpose.msra.mxu0 0
    %2340 = vmatpush.bf16.xpose.msra.mxu0 0
    %2341 = vmatpush.bf16.xpose.msra.mxu0 0
    %2342 = vmatpush.bf16.xpose.msra.mxu0 0
    %2343 = vmatpush.bf16.xpose.msra.mxu0 0
    %2344 = vmatpush.bf16.xpose.msra.mxu0 %v2335
    %2345 = vmatmul.bf16.gmra.mxu0 %v2332
    %v2346 = vpop.f32.mrf.mxu0
    %v2347 = vadd.f32 %v160, %v2346
    %v2348 = vpop.f32.mrf.mxu0
    %2349 = vdwg.mxu0
    %v2351 = vunpack.c.l.b16 %v997
    %v2352 = vpack.c.b16 %v2351, %v2351
    %2353 = vrot.lane.b32.xlu0 %v2352, 96
    %v2354 = vpop.permute.xlu0 %2353
    %v2356 = vsel %vm1010, %v933, 0
    %v2359 = vsel %vm1010, %v2354, 0
    %2361 = vmatpush.bf16.xpose.msra.mxu0 0
    %2362 = vmatpush.bf16.xpose.msra.mxu0 0
    %2363 = vmatpush.bf16.xpose.msra.mxu0 0
    %2364 = vmatpush.bf16.xpose.msra.mxu0 0
    %2365 = vmatpush.bf16.xpose.msra.mxu0 0
    %2366 = vmatpush.bf16.xpose.msra.mxu0 0
    %2367 = vmatpush.bf16.xpose.msra.mxu0 0
    %2368 = vmatpush.bf16.xpose.msra.mxu0 %v2359
    %2369 = vmatmul.bf16.gmra.mxu0 %v2356
    %v2370 = vpop.f32.mrf.mxu0
    %v2371 = vadd.f32 %v160, %v2370
    %v2372 = vpop.f32.mrf.mxu0
    %2373 = vdwg.mxu0
    %v2375 = vunpack.c.l.b16 %v998
    %v2376 = vpack.c.b16 %v2375, %v2375
    %2377 = vrot.lane.b32.xlu0 %v2376, 96
    %v2378 = vpop.permute.xlu0 %2377
    %v2380 = vsel %vm1010, %v934, 0
    %v2383 = vsel %vm1010, %v2378, 0
    %2385 = vmatpush.bf16.xpose.msra.mxu0 0
    %2386 = vmatpush.bf16.xpose.msra.mxu0 0
    %2387 = vmatpush.bf16.xpose.msra.mxu0 0
    %2388 = vmatpush.bf16.xpose.msra.mxu0 0
    %2389 = vmatpush.bf16.xpose.msra.mxu0 0
    %2390 = vmatpush.bf16.xpose.msra.mxu0 0
    %2391 = vmatpush.bf16.xpose.msra.mxu0 0
    %2392 = vmatpush.bf16.xpose.msra.mxu0 %v2383
    %2393 = vmatmul.bf16.gmra.mxu0 %v2380
    %v2394 = vpop.f32.mrf.mxu0
    %v2395 = vadd.f32 %v160, %v2394
    %v2396 = vpop.f32.mrf.mxu0
    %2397 = vdwg.mxu0
    %v2399 = vunpack.c.l.b16 %v999
    %v2400 = vpack.c.b16 %v2399, %v2399
    %2401 = vrot.lane.b32.xlu0 %v2400, 96
    %v2402 = vpop.permute.xlu0 %2401
    %v2404 = vsel %vm1010, %v935, 0
    %v2407 = vsel %vm1010, %v2402, 0
    %2409 = vmatpush.bf16.xpose.msra.mxu0 0
    %2410 = vmatpush.bf16.xpose.msra.mxu0 0
    %2411 = vmatpush.bf16.xpose.msra.mxu0 0
    %2412 = vmatpush.bf16.xpose.msra.mxu0 0
    %2413 = vmatpush.bf16.xpose.msra.mxu0 0
    %2414 = vmatpush.bf16.xpose.msra.mxu0 0
    %2415 = vmatpush.bf16.xpose.msra.mxu0 0
    %2416 = vmatpush.bf16.xpose.msra.mxu0 %v2407
    %2417 = vmatmul.bf16.gmra.mxu0 %v2404
    %v2418 = vpop.f32.mrf.mxu0
    %v2419 = vadd.f32 %v160, %v2418
    %v2420 = vpop.f32.mrf.mxu0
    %2421 = vdwg.mxu0
    %v2423 = vunpack.c.l.b16 %v1000
    %v2424 = vpack.c.b16 %v2423, %v2423
    %2425 = vrot.lane.b32.xlu0 %v2424, 96
    %v2426 = vpop.permute.xlu0 %2425
    %v2428 = vsel %vm1010, %v936, 0
    %v2431 = vsel %vm1010, %v2426, 0
    %2433 = vmatpush.bf16.xpose.msra.mxu0 0
    %2434 = vmatpush.bf16.xpose.msra.mxu0 0
    %2435 = vmatpush.bf16.xpose.msra.mxu0 0
    %2436 = vmatpush.bf16.xpose.msra.mxu0 0
    %2437 = vmatpush.bf16.xpose.msra.mxu0 0
    %2438 = vmatpush.bf16.xpose.msra.mxu0 0
    %2439 = vmatpush.bf16.xpose.msra.mxu0 0
    %2440 = vmatpush.bf16.xpose.msra.mxu0 %v2431
    %2441 = vmatmul.bf16.gmra.mxu0 %v2428
    %v2442 = vpop.f32.mrf.mxu0
    %v2443 = vadd.f32 %v160, %v2442
    %v2444 = vpop.f32.mrf.mxu0
    %2445 = vdwg.mxu0
    %v2447 = vunpack.c.l.b16 %v1001
    %v2448 = vpack.c.b16 %v2447, %v2447
    %2449 = vrot.lane.b32.xlu0 %v2448, 96
    %v2450 = vpop.permute.xlu0 %2449
    %v2452 = vsel %vm1010, %v937, 0
    %v2455 = vsel %vm1010, %v2450, 0
    %2457 = vmatpush.bf16.xpose.msra.mxu0 0
    %2458 = vmatpush.bf16.xpose.msra.mxu0 0
    %2459 = vmatpush.bf16.xpose.msra.mxu0 0
    %2460 = vmatpush.bf16.xpose.msra.mxu0 0
    %2461 = vmatpush.bf16.xpose.msra.mxu0 0
    %2462 = vmatpush.bf16.xpose.msra.mxu0 0
    %2463 = vmatpush.bf16.xpose.msra.mxu0 0
    %2464 = vmatpush.bf16.xpose.msra.mxu0 %v2455
    %2465 = vmatmul.bf16.gmra.mxu0 %v2452
    %v2466 = vpop.f32.mrf.mxu0
    %v2467 = vadd.f32 %v160, %v2466
    %v2468 = vpop.f32.mrf.mxu0
    %2469 = vdwg.mxu0
    %v2471 = vunpack.c.l.b16 %v1002
    %v2472 = vpack.c.b16 %v2471, %v2471
    %2473 = vrot.lane.b32.xlu0 %v2472, 96
    %v2474 = vpop.permute.xlu0 %2473
    %v2476 = vsel %vm1010, %v938, 0
    %v2479 = vsel %vm1010, %v2474, 0
    %2481 = vmatpush.bf16.xpose.msra.mxu0 0
    %2482 = vmatpush.bf16.xpose.msra.mxu0 0
    %2483 = vmatpush.bf16.xpose.msra.mxu0 0
    %2484 = vmatpush.bf16.xpose.msra.mxu0 0
    %2485 = vmatpush.bf16.xpose.msra.mxu0 0
    %2486 = vmatpush.bf16.xpose.msra.mxu0 0
    %2487 = vmatpush.bf16.xpose.msra.mxu0 0
    %2488 = vmatpush.bf16.xpose.msra.mxu0 %v2479
    %2489 = vmatmul.bf16.gmra.mxu0 %v2476
    %v2490 = vpop.f32.mrf.mxu0
    %v2491 = vadd.f32 %v160, %v2490
    %v2492 = vpop.f32.mrf.mxu0
    %2493 = vdwg.mxu0
    %v2495 = vunpack.c.l.b16 %v1003
    %v2496 = vpack.c.b16 %v2495, %v2495
    %2497 = vrot.lane.b32.xlu0 %v2496, 96
    %v2498 = vpop.permute.xlu0 %2497
    %v2500 = vsel %vm1010, %v939, 0
    %v2503 = vsel %vm1010, %v2498, 0
    %2505 = vmatpush.bf16.xpose.msra.mxu0 0
    %2506 = vmatpush.bf16.xpose.msra.mxu0 0
    %2507 = vmatpush.bf16.xpose.msra.mxu0 0
    %2508 = vmatpush.bf16.xpose.msra.mxu0 0
    %2509 = vmatpush.bf16.xpose.msra.mxu0 0
    %2510 = vmatpush.bf16.xpose.msra.mxu0 0
    %2511 = vmatpush.bf16.xpose.msra.mxu0 0
    %2512 = vmatpush.bf16.xpose.msra.mxu0 %v2503
    %2513 = vmatmul.bf16.gmra.mxu0 %v2500
    %v2514 = vpop.f32.mrf.mxu0
    %v2515 = vadd.f32 %v160, %v2514
    %v2516 = vpop.f32.mrf.mxu0
    %2517 = vdwg.mxu0
    %v2519 = vunpack.c.l.b16 %v1004
    %v2520 = vpack.c.b16 %v2519, %v2519
    %2521 = vrot.lane.b32.xlu0 %v2520, 96
    %v2522 = vpop.permute.xlu0 %2521
    %v2524 = vsel %vm1010, %v940, 0
    %v2527 = vsel %vm1010, %v2522, 0
    %2529 = vmatpush.bf16.xpose.msra.mxu0 0
    %2530 = vmatpush.bf16.xpose.msra.mxu0 0
    %2531 = vmatpush.bf16.xpose.msra.mxu0 0
    %2532 = vmatpush.bf16.xpose.msra.mxu0 0
    %2533 = vmatpush.bf16.xpose.msra.mxu0 0
    %2534 = vmatpush.bf16.xpose.msra.mxu0 0
    %2535 = vmatpush.bf16.xpose.msra.mxu0 0
    %2536 = vmatpush.bf16.xpose.msra.mxu0 %v2527
    %2537 = vmatmul.bf16.gmra.mxu0 %v2524
    %v2538 = vpop.f32.mrf.mxu0
    %v2539 = vadd.f32 %v160, %v2538
    %v2540 = vpop.f32.mrf.mxu0
    %2541 = vdwg.mxu0
    %v2542 = vsel %vm1010, %v1027, -inf
    %2543 = vmax.xlane.f32.xlu0 %v2542
    %v2544 = vpop.xlane.xlu0 %2543
    %v2545 = vsel %vm1010, %v1051, -inf
    %2546 = vmax.xlane.f32.xlu0 %v2545
    %v2547 = vpop.xlane.xlu0 %2546
    %v2548 = vsel %vm1010, %v1075, -inf
    %2549 = vmax.xlane.f32.xlu0 %v2548
    %v2550 = vpop.xlane.xlu0 %2549
    %v2551 = vsel %vm1010, %v1099, -inf
    %2552 = vmax.xlane.f32.xlu0 %v2551
    %v2553 = vpop.xlane.xlu0 %2552
    %v2554 = vsel %vm1010, %v1123, -inf
    %2555 = vmax.xlane.f32.xlu0 %v2554
    %v2556 = vpop.xlane.xlu0 %2555
    %v2557 = vsel %vm1010, %v1147, -inf
    %2558 = vmax.xlane.f32.xlu0 %v2557
    %v2559 = vpop.xlane.xlu0 %2558
    %v2560 = vsel %vm1010, %v1171, -inf
    %2561 = vmax.xlane.f32.xlu0 %v2560
    %v2562 = vpop.xlane.xlu0 %2561
    %v2563 = vsel %vm1010, %v1195, -inf
    %2564 = vmax.xlane.f32.xlu0 %v2563
    %v2565 = vpop.xlane.xlu0 %2564
    %v2566 = vsel %vm1010, %v1219, -inf
    %2567 = vmax.xlane.f32.xlu0 %v2566
    %v2568 = vpop.xlane.xlu0 %2567
    %v2569 = vsel %vm1010, %v1243, -inf
    %2570 = vmax.xlane.f32.xlu0 %v2569
    %v2571 = vpop.xlane.xlu0 %2570
    %v2572 = vsel %vm1010, %v1267, -inf
    %2573 = vmax.xlane.f32.xlu0 %v2572
    %v2574 = vpop.xlane.xlu0 %2573
    %v2575 = vsel %vm1010, %v1291, -inf
    %2576 = vmax.xlane.f32.xlu0 %v2575
    %v2577 = vpop.xlane.xlu0 %2576
    %v2578 = vsel %vm1010, %v1315, -inf
    %2579 = vmax.xlane.f32.xlu0 %v2578
    %v2580 = vpop.xlane.xlu0 %2579
    %v2581 = vsel %vm1010, %v1339, -inf
    %2582 = vmax.xlane.f32.xlu0 %v2581
    %v2583 = vpop.xlane.xlu0 %2582
    %v2584 = vsel %vm1010, %v1363, -inf
    %2585 = vmax.xlane.f32.xlu0 %v2584
    %v2586 = vpop.xlane.xlu0 %2585
    %v2587 = vsel %vm1010, %v1387, -inf
    %2588 = vmax.xlane.f32.xlu0 %v2587
    %v2589 = vpop.xlane.xlu0 %2588
    %v2590 = vsel %vm1010, %v1411, -inf
    %2591 = vmax.xlane.f32.xlu0 %v2590
    %v2592 = vpop.xlane.xlu0 %2591
    %v2593 = vsel %vm1010, %v1435, -inf
    %2594 = vmax.xlane.f32.xlu0 %v2593
    %v2595 = vpop.xlane.xlu0 %2594
    %v2596 = vsel %vm1010, %v1459, -inf
    %2597 = vmax.xlane.f32.xlu0 %v2596
    %v2598 = vpop.xlane.xlu0 %2597
    %v2599 = vsel %vm1010, %v1483, -inf
    %2600 = vmax.xlane.f32.xlu0 %v2599
    %v2601 = vpop.xlane.xlu0 %2600
    %v2602 = vsel %vm1010, %v1507, -inf
    %2603 = vmax.xlane.f32.xlu0 %v2602
    %v2604 = vpop.xlane.xlu0 %2603
    %v2605 = vsel %vm1010, %v1531, -inf
    %2606 = vmax.xlane.f32.xlu0 %v2605
    %v2607 = vpop.xlane.xlu0 %2606
    %v2608 = vsel %vm1010, %v1555, -inf
    %2609 = vmax.xlane.f32.xlu0 %v2608
    %v2610 = vpop.xlane.xlu0 %2609
    %v2611 = vsel %vm1010, %v1579, -inf
    %2612 = vmax.xlane.f32.xlu0 %v2611
    %v2613 = vpop.xlane.xlu0 %2612
    %v2614 = vsel %vm1010, %v1603, -inf
    %2615 = vmax.xlane.f32.xlu0 %v2614
    %v2616 = vpop.xlane.xlu0 %2615
    %v2617 = vsel %vm1010, %v1627, -inf
    %2618 = vmax.xlane.f32.xlu0 %v2617
    %v2619 = vpop.xlane.xlu0 %2618
    %v2620 = vsel %vm1010, %v1651, -inf
    %2621 = vmax.xlane.f32.xlu0 %v2620
    %v2622 = vpop.xlane.xlu0 %2621
    %v2623 = vsel %vm1010, %v1675, -inf
    %2624 = vmax.xlane.f32.xlu0 %v2623
    %v2625 = vpop.xlane.xlu0 %2624
    %v2626 = vsel %vm1010, %v1699, -inf
    %2627 = vmax.xlane.f32.xlu0 %v2626
    %v2628 = vpop.xlane.xlu0 %2627
    %v2629 = vsel %vm1010, %v1723, -inf
    %2630 = vmax.xlane.f32.xlu0 %v2629
    %v2631 = vpop.xlane.xlu0 %2630
    %v2632 = vsel %vm1010, %v1747, -inf
    %2633 = vmax.xlane.f32.xlu0 %v2632
    %v2634 = vpop.xlane.xlu0 %2633
    %v2635 = vsel %vm1010, %v1771, -inf
    %2636 = vmax.xlane.f32.xlu0 %v2635
    %v2637 = vpop.xlane.xlu0 %2636
    %v2638 = vsel %vm1010, %v1795, -inf
    %2639 = vmax.xlane.f32.xlu0 %v2638
    %v2640 = vpop.xlane.xlu0 %2639
    %v2641 = vsel %vm1010, %v1819, -inf
    %2642 = vmax.xlane.f32.xlu0 %v2641
    %v2643 = vpop.xlane.xlu0 %2642
    %v2644 = vsel %vm1010, %v1843, -inf
    %2645 = vmax.xlane.f32.xlu0 %v2644
    %v2646 = vpop.xlane.xlu0 %2645
    %v2647 = vsel %vm1010, %v1867, -inf
    %2648 = vmax.xlane.f32.xlu0 %v2647
    %v2649 = vpop.xlane.xlu0 %2648
    %v2650 = vsel %vm1010, %v1891, -inf
    %2651 = vmax.xlane.f32.xlu0 %v2650
    %v2652 = vpop.xlane.xlu0 %2651
    %v2653 = vsel %vm1010, %v1915, -inf
    %2654 = vmax.xlane.f32.xlu0 %v2653
    %v2655 = vpop.xlane.xlu0 %2654
    %v2656 = vsel %vm1010, %v1939, -inf
    %2657 = vmax.xlane.f32.xlu0 %v2656
    %v2658 = vpop.xlane.xlu0 %2657
    %v2659 = vsel %vm1010, %v1963, -inf
    %2660 = vmax.xlane.f32.xlu0 %v2659
    %v2661 = vpop.xlane.xlu0 %2660
    %v2662 = vsel %vm1010, %v1987, -inf
    %2663 = vmax.xlane.f32.xlu0 %v2662
    %v2664 = vpop.xlane.xlu0 %2663
    %v2665 = vsel %vm1010, %v2011, -inf
    %2666 = vmax.xlane.f32.xlu0 %v2665
    %v2667 = vpop.xlane.xlu0 %2666
    %v2668 = vsel %vm1010, %v2035, -inf
    %2669 = vmax.xlane.f32.xlu0 %v2668
    %v2670 = vpop.xlane.xlu0 %2669
    %v2671 = vsel %vm1010, %v2059, -inf
    %2672 = vmax.xlane.f32.xlu0 %v2671
    %v2673 = vpop.xlane.xlu0 %2672
    %v2674 = vsel %vm1010, %v2083, -inf
    %2675 = vmax.xlane.f32.xlu0 %v2674
    %v2676 = vpop.xlane.xlu0 %2675
    %v2677 = vsel %vm1010, %v2107, -inf
    %2678 = vmax.xlane.f32.xlu0 %v2677
    %v2679 = vpop.xlane.xlu0 %2678
    %v2680 = vsel %vm1010, %v2131, -inf
    %2681 = vmax.xlane.f32.xlu0 %v2680
    %v2682 = vpop.xlane.xlu0 %2681
    %v2683 = vsel %vm1010, %v2155, -inf
    %2684 = vmax.xlane.f32.xlu0 %v2683
    %v2685 = vpop.xlane.xlu0 %2684
    %v2686 = vsel %vm1010, %v2179, -inf
    %2687 = vmax.xlane.f32.xlu0 %v2686
    %v2688 = vpop.xlane.xlu0 %2687
    %v2689 = vsel %vm1010, %v2203, -inf
    %2690 = vmax.xlane.f32.xlu0 %v2689
    %v2691 = vpop.xlane.xlu0 %2690
    %v2692 = vsel %vm1010, %v2227, -inf
    %2693 = vmax.xlane.f32.xlu0 %v2692
    %v2694 = vpop.xlane.xlu0 %2693
    %v2695 = vsel %vm1010, %v2251, -inf
    %2696 = vmax.xlane.f32.xlu0 %v2695
    %v2697 = vpop.xlane.xlu0 %2696
    %v2698 = vsel %vm1010, %v2275, -inf
    %2699 = vmax.xlane.f32.xlu0 %v2698
    %v2700 = vpop.xlane.xlu0 %2699
    %v2701 = vsel %vm1010, %v2299, -inf
    %2702 = vmax.xlane.f32.xlu0 %v2701
    %v2703 = vpop.xlane.xlu0 %2702
    %v2704 = vsel %vm1010, %v2323, -inf
    %2705 = vmax.xlane.f32.xlu0 %v2704
    %v2706 = vpop.xlane.xlu0 %2705
    %v2707 = vsel %vm1010, %v2347, -inf
    %2708 = vmax.xlane.f32.xlu0 %v2707
    %v2709 = vpop.xlane.xlu0 %2708
    %v2710 = vsel %vm1010, %v2371, -inf
    %2711 = vmax.xlane.f32.xlu0 %v2710
    %v2712 = vpop.xlane.xlu0 %2711
    %v2713 = vsel %vm1010, %v2395, -inf
    %2714 = vmax.xlane.f32.xlu0 %v2713
    %v2715 = vpop.xlane.xlu0 %2714
    %v2716 = vsel %vm1010, %v2419, -inf
    %2717 = vmax.xlane.f32.xlu0 %v2716
    %v2718 = vpop.xlane.xlu0 %2717
    %v2719 = vsel %vm1010, %v2443, -inf
    %2720 = vmax.xlane.f32.xlu0 %v2719
    %v2721 = vpop.xlane.xlu0 %2720
    %v2722 = vsel %vm1010, %v2467, -inf
    %2723 = vmax.xlane.f32.xlu0 %v2722
    %v2724 = vpop.xlane.xlu0 %2723
    %v2725 = vsel %vm1010, %v2491, -inf
    %2726 = vmax.xlane.f32.xlu0 %v2725
    %v2727 = vpop.xlane.xlu0 %2726
    %v2728 = vsel %vm1010, %v2515, -inf
    %2729 = vmax.xlane.f32.xlu0 %v2728
    %v2730 = vpop.xlane.xlu0 %2729
    %v2731 = vsel %vm1010, %v2539, -inf
    %2732 = vmax.xlane.f32.xlu0 %v2731
    %v2733 = vpop.xlane.xlu0 %2732
    %v2734 = vsub.f32 %v1027, %v2544
    %v2735 = vsub.f32 %v1051, %v2547
    %v2736 = vsub.f32 %v1075, %v2550
    %v2737 = vsub.f32 %v1099, %v2553
    %v2738 = vsub.f32 %v1123, %v2556
    %v2739 = vsub.f32 %v1147, %v2559
    %v2740 = vsub.f32 %v1171, %v2562
    %v2741 = vsub.f32 %v1195, %v2565
    %v2742 = vsub.f32 %v1219, %v2568
    %v2743 = vsub.f32 %v1243, %v2571
    %v2744 = vsub.f32 %v1267, %v2574
    %v2745 = vsub.f32 %v1291, %v2577
    %v2746 = vsub.f32 %v1315, %v2580
    %v2747 = vsub.f32 %v1339, %v2583
    %v2748 = vsub.f32 %v1363, %v2586
    %v2749 = vsub.f32 %v1387, %v2589
    %v2750 = vsub.f32 %v1411, %v2592
    %v2751 = vsub.f32 %v1435, %v2595
    %v2752 = vsub.f32 %v1459, %v2598
    %v2753 = vsub.f32 %v1483, %v2601
    %v2754 = vsub.f32 %v1507, %v2604
    %v2755 = vsub.f32 %v1531, %v2607
    %v2756 = vsub.f32 %v1555, %v2610
    %v2757 = vsub.f32 %v1579, %v2613
    %v2758 = vsub.f32 %v1603, %v2616
    %v2759 = vsub.f32 %v1627, %v2619
    %v2760 = vsub.f32 %v1651, %v2622
    %v2761 = vsub.f32 %v1675, %v2625
    %v2762 = vsub.f32 %v1699, %v2628
    %v2763 = vsub.f32 %v1723, %v2631
    %v2764 = vsub.f32 %v1747, %v2634
    %v2765 = vsub.f32 %v1771, %v2637
    %v2766 = vsub.f32 %v1795, %v2640
    %v2767 = vsub.f32 %v1819, %v2643
    %v2768 = vsub.f32 %v1843, %v2646
    %v2769 = vsub.f32 %v1867, %v2649
    %v2770 = vsub.f32 %v1891, %v2652
    %v2771 = vsub.f32 %v1915, %v2655
    %v2772 = vsub.f32 %v1939, %v2658
    %v2773 = vsub.f32 %v1963, %v2661
    %v2774 = vsub.f32 %v1987, %v2664
    %v2775 = vsub.f32 %v2011, %v2667
    %v2776 = vsub.f32 %v2035, %v2670
    %v2777 = vsub.f32 %v2059, %v2673
    %v2778 = vsub.f32 %v2083, %v2676
    %v2779 = vsub.f32 %v2107, %v2679
    %v2780 = vsub.f32 %v2131, %v2682
    %v2781 = vsub.f32 %v2155, %v2685
    %v2782 = vsub.f32 %v2179, %v2688
    %v2783 = vsub.f32 %v2203, %v2691
    %v2784 = vsub.f32 %v2227, %v2694
    %v2785 = vsub.f32 %v2251, %v2697
    %v2786 = vsub.f32 %v2275, %v2700
    %v2787 = vsub.f32 %v2299, %v2703
    %v2788 = vsub.f32 %v2323, %v2706
    %v2789 = vsub.f32 %v2347, %v2709
    %v2790 = vsub.f32 %v2371, %v2712
    %v2791 = vsub.f32 %v2395, %v2715
    %v2792 = vsub.f32 %v2419, %v2718
    %v2793 = vsub.f32 %v2443, %v2721
    %v2794 = vsub.f32 %v2467, %v2724
    %v2795 = vsub.f32 %v2491, %v2727
    %v2796 = vsub.f32 %v2515, %v2730
    %v2797 = vsub.f32 %v2539, %v2733
    %v2798 = vmul.f32 %v2734, 1.442695
    %v2799 = vpow.pop %v2798
    %v2800 = vmul.f32 %v2735, 1.442695
    %v2801 = vpow.pop %v2800
    %v2802 = vmul.f32 %v2736, 1.442695
    %v2803 = vpow.pop %v2802
    %v2804 = vmul.f32 %v2737, 1.442695
    %v2805 = vpow.pop %v2804
    %v2806 = vmul.f32 %v2738, 1.442695
    %v2807 = vpow.pop %v2806
    %v2808 = vmul.f32 %v2739, 1.442695
    %v2809 = vpow.pop %v2808
    %v2810 = vmul.f32 %v2740, 1.442695
    %v2811 = vpow.pop %v2810
    %v2812 = vmul.f32 %v2741, 1.442695
    %v2813 = vpow.pop %v2812
    %v2814 = vmul.f32 %v2742, 1.442695
    %v2815 = vpow.pop %v2814
    %v2816 = vmul.f32 %v2743, 1.442695
    %v2817 = vpow.pop %v2816
    %v2818 = vmul.f32 %v2744, 1.442695
    %v2819 = vpow.pop %v2818
    %v2820 = vmul.f32 %v2745, 1.442695
    %v2821 = vpow.pop %v2820
    %v2822 = vmul.f32 %v2746, 1.442695
    %v2823 = vpow.pop %v2822
    %v2824 = vmul.f32 %v2747, 1.442695
    %v2825 = vpow.pop %v2824
    %v2826 = vmul.f32 %v2748, 1.442695
    %v2827 = vpow.pop %v2826
    %v2828 = vmul.f32 %v2749, 1.442695
    %v2829 = vpow.pop %v2828
    %v2830 = vmul.f32 %v2750, 1.442695
    %v2831 = vpow.pop %v2830
    %v2832 = vmul.f32 %v2751, 1.442695
    %v2833 = vpow.pop %v2832
    %v2834 = vmul.f32 %v2752, 1.442695
    %v2835 = vpow.pop %v2834
    %v2836 = vmul.f32 %v2753, 1.442695
    %v2837 = vpow.pop %v2836
    %v2838 = vmul.f32 %v2754, 1.442695
    %v2839 = vpow.pop %v2838
    %v2840 = vmul.f32 %v2755, 1.442695
    %v2841 = vpow.pop %v2840
    %v2842 = vmul.f32 %v2756, 1.442695
    %v2843 = vpow.pop %v2842
    %v2844 = vmul.f32 %v2757, 1.442695
    %v2845 = vpow.pop %v2844
    %v2846 = vmul.f32 %v2758, 1.442695
    %v2847 = vpow.pop %v2846
    %v2848 = vmul.f32 %v2759, 1.442695
    %v2849 = vpow.pop %v2848
    %v2850 = vmul.f32 %v2760, 1.442695
    %v2851 = vpow.pop %v2850
    %v2852 = vmul.f32 %v2761, 1.442695
    %v2853 = vpow.pop %v2852
    %v2854 = vmul.f32 %v2762, 1.442695
    %v2855 = vpow.pop %v2854
    %v2856 = vmul.f32 %v2763, 1.442695
    %v2857 = vpow.pop %v2856
    %v2858 = vmul.f32 %v2764, 1.442695
    %v2859 = vpow.pop %v2858
    %v2860 = vmul.f32 %v2765, 1.442695
    %v2861 = vpow.pop %v2860
    %v2862 = vmul.f32 %v2766, 1.442695
    %v2863 = vpow.pop %v2862
    %v2864 = vmul.f32 %v2767, 1.442695
    %v2865 = vpow.pop %v2864
    %v2866 = vmul.f32 %v2768, 1.442695
    %v2867 = vpow.pop %v2866
    %v2868 = vmul.f32 %v2769, 1.442695
    %v2869 = vpow.pop %v2868
    %v2870 = vmul.f32 %v2770, 1.442695
    %v2871 = vpow.pop %v2870
    %v2872 = vmul.f32 %v2771, 1.442695
    %v2873 = vpow.pop %v2872
    %v2874 = vmul.f32 %v2772, 1.442695
    %v2875 = vpow.pop %v2874
    %v2876 = vmul.f32 %v2773, 1.442695
    %v2877 = vpow.pop %v2876
    %v2878 = vmul.f32 %v2774, 1.442695
    %v2879 = vpow.pop %v2878
    %v2880 = vmul.f32 %v2775, 1.442695
    %v2881 = vpow.pop %v2880
    %v2882 = vmul.f32 %v2776, 1.442695
    %v2883 = vpow.pop %v2882
    %v2884 = vmul.f32 %v2777, 1.442695
    %v2885 = vpow.pop %v2884
    %v2886 = vmul.f32 %v2778, 1.442695
    %v2887 = vpow.pop %v2886
    %v2888 = vmul.f32 %v2779, 1.442695
    %v2889 = vpow.pop %v2888
    %v2890 = vmul.f32 %v2780, 1.442695
    %v2891 = vpow.pop %v2890
    %v2892 = vmul.f32 %v2781, 1.442695
    %v2893 = vpow.pop %v2892
    %v2894 = vmul.f32 %v2782, 1.442695
    %v2895 = vpow.pop %v2894
    %v2896 = vmul.f32 %v2783, 1.442695
    %v2897 = vpow.pop %v2896
    %v2898 = vmul.f32 %v2784, 1.442695
    %v2899 = vpow.pop %v2898
    %v2900 = vmul.f32 %v2785, 1.442695
    %v2901 = vpow.pop %v2900
    %v2902 = vmul.f32 %v2786, 1.442695
    %v2903 = vpow.pop %v2902
    %v2904 = vmul.f32 %v2787, 1.442695
    %v2905 = vpow.pop %v2904
    %v2906 = vmul.f32 %v2788, 1.442695
    %v2907 = vpow.pop %v2906
    %v2908 = vmul.f32 %v2789, 1.442695
    %v2909 = vpow.pop %v2908
    %v2910 = vmul.f32 %v2790, 1.442695
    %v2911 = vpow.pop %v2910
    %v2912 = vmul.f32 %v2791, 1.442695
    %v2913 = vpow.pop %v2912
    %v2914 = vmul.f32 %v2792, 1.442695
    %v2915 = vpow.pop %v2914
    %v2916 = vmul.f32 %v2793, 1.442695
    %v2917 = vpow.pop %v2916
    %v2918 = vmul.f32 %v2794, 1.442695
    %v2919 = vpow.pop %v2918
    %v2920 = vmul.f32 %v2795, 1.442695
    %v2921 = vpow.pop %v2920
    %v2922 = vmul.f32 %v2796, 1.442695
    %v2923 = vpow.pop %v2922
    %v2924 = vmul.f32 %v2797, 1.442695
    %v2925 = vpow.pop %v2924
    %v2926 = vsel %vm1010, %v2799, 0.0
    %2927 = vadd.xlane.f32.xlu0 %v2926
    %v2928 = vpop.xlane.xlu0 %2927
    %v2929 = vsel %vm1010, %v2801, 0.0
    %2930 = vadd.xlane.f32.xlu0 %v2929
    %v2931 = vpop.xlane.xlu0 %2930
    %v2932 = vsel %vm1010, %v2803, 0.0
    %2933 = vadd.xlane.f32.xlu0 %v2932
    %v2934 = vpop.xlane.xlu0 %2933
    %v2935 = vsel %vm1010, %v2805, 0.0
    %2936 = vadd.xlane.f32.xlu0 %v2935
    %v2937 = vpop.xlane.xlu0 %2936
    %v2938 = vsel %vm1010, %v2807, 0.0
    %2939 = vadd.xlane.f32.xlu0 %v2938
    %v2940 = vpop.xlane.xlu0 %2939
    %v2941 = vsel %vm1010, %v2809, 0.0
    %2942 = vadd.xlane.f32.xlu0 %v2941
    %v2943 = vpop.xlane.xlu0 %2942
    %v2944 = vsel %vm1010, %v2811, 0.0
    %2945 = vadd.xlane.f32.xlu0 %v2944
    %v2946 = vpop.xlane.xlu0 %2945
    %v2947 = vsel %vm1010, %v2813, 0.0
    %2948 = vadd.xlane.f32.xlu0 %v2947
    %v2949 = vpop.xlane.xlu0 %2948
    %v2950 = vsel %vm1010, %v2815, 0.0
    %2951 = vadd.xlane.f32.xlu0 %v2950
    %v2952 = vpop.xlane.xlu0 %2951
    %v2953 = vsel %vm1010, %v2817, 0.0
    %2954 = vadd.xlane.f32.xlu0 %v2953
    %v2955 = vpop.xlane.xlu0 %2954
    %v2956 = vsel %vm1010, %v2819, 0.0
    %2957 = vadd.xlane.f32.xlu0 %v2956
    %v2958 = vpop.xlane.xlu0 %2957
    %v2959 = vsel %vm1010, %v2821, 0.0
    %2960 = vadd.xlane.f32.xlu0 %v2959
    %v2961 = vpop.xlane.xlu0 %2960
    %v2962 = vsel %vm1010, %v2823, 0.0
    %2963 = vadd.xlane.f32.xlu0 %v2962
    %v2964 = vpop.xlane.xlu0 %2963
    %v2965 = vsel %vm1010, %v2825, 0.0
    %2966 = vadd.xlane.f32.xlu0 %v2965
    %v2967 = vpop.xlane.xlu0 %2966
    %v2968 = vsel %vm1010, %v2827, 0.0
    %2969 = vadd.xlane.f32.xlu0 %v2968
    %v2970 = vpop.xlane.xlu0 %2969
    %v2971 = vsel %vm1010, %v2829, 0.0
    %2972 = vadd.xlane.f32.xlu0 %v2971
    %v2973 = vpop.xlane.xlu0 %2972
    %v2974 = vsel %vm1010, %v2831, 0.0
    %2975 = vadd.xlane.f32.xlu0 %v2974
    %v2976 = vpop.xlane.xlu0 %2975
    %v2977 = vsel %vm1010, %v2833, 0.0
    %2978 = vadd.xlane.f32.xlu0 %v2977
    %v2979 = vpop.xlane.xlu0 %2978
    %v2980 = vsel %vm1010, %v2835, 0.0
    %2981 = vadd.xlane.f32.xlu0 %v2980
    %v2982 = vpop.xlane.xlu0 %2981
    %v2983 = vsel %vm1010, %v2837, 0.0
    %2984 = vadd.xlane.f32.xlu0 %v2983
    %v2985 = vpop.xlane.xlu0 %2984
    %v2986 = vsel %vm1010, %v2839, 0.0
    %2987 = vadd.xlane.f32.xlu0 %v2986
    %v2988 = vpop.xlane.xlu0 %2987
    %v2989 = vsel %vm1010, %v2841, 0.0
    %2990 = vadd.xlane.f32.xlu0 %v2989
    %v2991 = vpop.xlane.xlu0 %2990
    %v2992 = vsel %vm1010, %v2843, 0.0
    %2993 = vadd.xlane.f32.xlu0 %v2992
    %v2994 = vpop.xlane.xlu0 %2993
    %v2995 = vsel %vm1010, %v2845, 0.0
    %2996 = vadd.xlane.f32.xlu0 %v2995
    %v2997 = vpop.xlane.xlu0 %2996
    %v2998 = vsel %vm1010, %v2847, 0.0
    %2999 = vadd.xlane.f32.xlu0 %v2998
    %v3000 = vpop.xlane.xlu0 %2999
    %v3001 = vsel %vm1010, %v2849, 0.0
    %3002 = vadd.xlane.f32.xlu0 %v3001
    %v3003 = vpop.xlane.xlu0 %3002
    %v3004 = vsel %vm1010, %v2851, 0.0
    %3005 = vadd.xlane.f32.xlu0 %v3004
    %v3006 = vpop.xlane.xlu0 %3005
    %v3007 = vsel %vm1010, %v2853, 0.0
    %3008 = vadd.xlane.f32.xlu0 %v3007
    %v3009 = vpop.xlane.xlu0 %3008
    %v3010 = vsel %vm1010, %v2855, 0.0
    %3011 = vadd.xlane.f32.xlu0 %v3010
    %v3012 = vpop.xlane.xlu0 %3011
    %v3013 = vsel %vm1010, %v2857, 0.0
    %3014 = vadd.xlane.f32.xlu0 %v3013
    %v3015 = vpop.xlane.xlu0 %3014
    %v3016 = vsel %vm1010, %v2859, 0.0
    %3017 = vadd.xlane.f32.xlu0 %v3016
    %v3018 = vpop.xlane.xlu0 %3017
    %v3019 = vsel %vm1010, %v2861, 0.0
    %3020 = vadd.xlane.f32.xlu0 %v3019
    %v3021 = vpop.xlane.xlu0 %3020
    %v3022 = vsel %vm1010, %v2863, 0.0
    %3023 = vadd.xlane.f32.xlu0 %v3022
    %v3024 = vpop.xlane.xlu0 %3023
    %v3025 = vsel %vm1010, %v2865, 0.0
    %3026 = vadd.xlane.f32.xlu0 %v3025
    %v3027 = vpop.xlane.xlu0 %3026
    %v3028 = vsel %vm1010, %v2867, 0.0
    %3029 = vadd.xlane.f32.xlu0 %v3028
    %v3030 = vpop.xlane.xlu0 %3029
    %v3031 = vsel %vm1010, %v2869, 0.0
    %3032 = vadd.xlane.f32.xlu0 %v3031
    %v3033 = vpop.xlane.xlu0 %3032
    %v3034 = vsel %vm1010, %v2871, 0.0
    %3035 = vadd.xlane.f32.xlu0 %v3034
    %v3036 = vpop.xlane.xlu0 %3035
    %v3037 = vsel %vm1010, %v2873, 0.0
    %3038 = vadd.xlane.f32.xlu0 %v3037
    %v3039 = vpop.xlane.xlu0 %3038
    %v3040 = vsel %vm1010, %v2875, 0.0
    %3041 = vadd.xlane.f32.xlu0 %v3040
    %v3042 = vpop.xlane.xlu0 %3041
    %v3043 = vsel %vm1010, %v2877, 0.0
    %3044 = vadd.xlane.f32.xlu0 %v3043
    %v3045 = vpop.xlane.xlu0 %3044
    %v3046 = vsel %vm1010, %v2879, 0.0
    %3047 = vadd.xlane.f32.xlu0 %v3046
    %v3048 = vpop.xlane.xlu0 %3047
    %v3049 = vsel %vm1010, %v2881, 0.0
    %3050 = vadd.xlane.f32.xlu0 %v3049
    %v3051 = vpop.xlane.xlu0 %3050
    %v3052 = vsel %vm1010, %v2883, 0.0
    %3053 = vadd.xlane.f32.xlu0 %v3052
    %v3054 = vpop.xlane.xlu0 %3053
    %v3055 = vsel %vm1010, %v2885, 0.0
    %3056 = vadd.xlane.f32.xlu0 %v3055
    %v3057 = vpop.xlane.xlu0 %3056
    %v3058 = vsel %vm1010, %v2887, 0.0
    %3059 = vadd.xlane.f32.xlu0 %v3058
    %v3060 = vpop.xlane.xlu0 %3059
    %v3061 = vsel %vm1010, %v2889, 0.0
    %3062 = vadd.xlane.f32.xlu0 %v3061
    %v3063 = vpop.xlane.xlu0 %3062
    %v3064 = vsel %vm1010, %v2891, 0.0
    %3065 = vadd.xlane.f32.xlu0 %v3064
    %v3066 = vpop.xlane.xlu0 %3065
    %v3067 = vsel %vm1010, %v2893, 0.0
    %3068 = vadd.xlane.f32.xlu0 %v3067
    %v3069 = vpop.xlane.xlu0 %3068
    %v3070 = vsel %vm1010, %v2895, 0.0
    %3071 = vadd.xlane.f32.xlu0 %v3070
    %v3072 = vpop.xlane.xlu0 %3071
    %v3073 = vsel %vm1010, %v2897, 0.0
    %3074 = vadd.xlane.f32.xlu0 %v3073
    %v3075 = vpop.xlane.xlu0 %3074
    %v3076 = vsel %vm1010, %v2899, 0.0
    %3077 = vadd.xlane.f32.xlu0 %v3076
    %v3078 = vpop.xlane.xlu0 %3077
    %v3079 = vsel %vm1010, %v2901, 0.0
    %3080 = vadd.xlane.f32.xlu0 %v3079
    %v3081 = vpop.xlane.xlu0 %3080
    %v3082 = vsel %vm1010, %v2903, 0.0
    %3083 = vadd.xlane.f32.xlu0 %v3082
    %v3084 = vpop.xlane.xlu0 %3083
    %v3085 = vsel %vm1010, %v2905, 0.0
    %3086 = vadd.xlane.f32.xlu0 %v3085
    %v3087 = vpop.xlane.xlu0 %3086
    %v3088 = vsel %vm1010, %v2907, 0.0
    %3089 = vadd.xlane.f32.xlu0 %v3088
    %v3090 = vpop.xlane.xlu0 %3089
    %v3091 = vsel %vm1010, %v2909, 0.0
    %3092 = vadd.xlane.f32.xlu0 %v3091
    %v3093 = vpop.xlane.xlu0 %3092
    %v3094 = vsel %vm1010, %v2911, 0.0
    %3095 = vadd.xlane.f32.xlu0 %v3094
    %v3096 = vpop.xlane.xlu0 %3095
    %v3097 = vsel %vm1010, %v2913, 0.0
    %3098 = vadd.xlane.f32.xlu0 %v3097
    %v3099 = vpop.xlane.xlu0 %3098
    %v3100 = vsel %vm1010, %v2915, 0.0
    %3101 = vadd.xlane.f32.xlu0 %v3100
    %v3102 = vpop.xlane.xlu0 %3101
    %v3103 = vsel %vm1010, %v2917, 0.0
    %3104 = vadd.xlane.f32.xlu0 %v3103
    %v3105 = vpop.xlane.xlu0 %3104
    %v3106 = vsel %vm1010, %v2919, 0.0
    %3107 = vadd.xlane.f32.xlu0 %v3106
    %v3108 = vpop.xlane.xlu0 %3107
    %v3109 = vsel %vm1010, %v2921, 0.0
    %3110 = vadd.xlane.f32.xlu0 %v3109
    %v3111 = vpop.xlane.xlu0 %3110
    %v3112 = vsel %vm1010, %v2923, 0.0
    %3113 = vadd.xlane.f32.xlu0 %v3112
    %v3114 = vpop.xlane.xlu0 %3113
    %v3115 = vsel %vm1010, %v2925, 0.0
    %3116 = vadd.xlane.f32.xlu0 %v3115
    %v3117 = vpop.xlane.xlu0 %3116
    %v3118 = vrcp.pop %v2928
    %v3119 = vrcp.pop %v2931
    %v3120 = vrcp.pop %v2934
    %v3121 = vrcp.pop %v2937
    %v3122 = vrcp.pop %v2940
    %v3123 = vrcp.pop %v2943
    %v3124 = vrcp.pop %v2946
    %v3125 = vrcp.pop %v2949
    %v3126 = vrcp.pop %v2952
    %v3127 = vrcp.pop %v2955
    %v3128 = vrcp.pop %v2958
    %v3129 = vrcp.pop %v2961
    %v3130 = vrcp.pop %v2964
    %v3131 = vrcp.pop %v2967
    %v3132 = vrcp.pop %v2970
    %v3133 = vrcp.pop %v2973
    %v3134 = vrcp.pop %v2976
    %v3135 = vrcp.pop %v2979
    %v3136 = vrcp.pop %v2982
    %v3137 = vrcp.pop %v2985
    %v3138 = vrcp.pop %v2988
    %v3139 = vrcp.pop %v2991
    %v3140 = vrcp.pop %v2994
    %v3141 = vrcp.pop %v2997
    %v3142 = vrcp.pop %v3000
    %v3143 = vrcp.pop %v3003
    %v3144 = vrcp.pop %v3006
    %v3145 = vrcp.pop %v3009
    %v3146 = vrcp.pop %v3012
    %v3147 = vrcp.pop %v3015
    %v3148 = vrcp.pop %v3018
    %v3149 = vrcp.pop %v3021
    %v3150 = vrcp.pop %v3024
    %v3151 = vrcp.pop %v3027
    %v3152 = vrcp.pop %v3030
    %v3153 = vrcp.pop %v3033
    %v3154 = vrcp.pop %v3036
    %v3155 = vrcp.pop %v3039
    %v3156 = vrcp.pop %v3042
    %v3157 = vrcp.pop %v3045
    %v3158 = vrcp.pop %v3048
    %v3159 = vrcp.pop %v3051
    %v3160 = vrcp.pop %v3054
    %v3161 = vrcp.pop %v3057
    %v3162 = vrcp.pop %v3060
    %v3163 = vrcp.pop %v3063
    %v3164 = vrcp.pop %v3066
    %v3165 = vrcp.pop %v3069
    %v3166 = vrcp.pop %v3072
    %v3167 = vrcp.pop %v3075
    %v3168 = vrcp.pop %v3078
    %v3169 = vrcp.pop %v3081
    %v3170 = vrcp.pop %v3084
    %v3171 = vrcp.pop %v3087
    %v3172 = vrcp.pop %v3090
    %v3173 = vrcp.pop %v3093
    %v3174 = vrcp.pop %v3096
    %v3175 = vrcp.pop %v3099
    %v3176 = vrcp.pop %v3102
    %v3177 = vrcp.pop %v3105
    %v3178 = vrcp.pop %v3108
    %v3179 = vrcp.pop %v3111
    %v3180 = vrcp.pop %v3114
    %v3181 = vrcp.pop %v3117
    %v3182 = vmul.f32 %v2799, %v3118
    %v3183 = vmul.f32 %v2801, %v3119
    %v3184 = vmul.f32 %v2803, %v3120
    %v3185 = vmul.f32 %v2805, %v3121
    %v3186 = vmul.f32 %v2807, %v3122
    %v3187 = vmul.f32 %v2809, %v3123
    %v3188 = vmul.f32 %v2811, %v3124
    %v3189 = vmul.f32 %v2813, %v3125
    %v3190 = vmul.f32 %v2815, %v3126
    %v3191 = vmul.f32 %v2817, %v3127
    %v3192 = vmul.f32 %v2819, %v3128
    %v3193 = vmul.f32 %v2821, %v3129
    %v3194 = vmul.f32 %v2823, %v3130
    %v3195 = vmul.f32 %v2825, %v3131
    %v3196 = vmul.f32 %v2827, %v3132
    %v3197 = vmul.f32 %v2829, %v3133
    %v3198 = vmul.f32 %v2831, %v3134
    %v3199 = vmul.f32 %v2833, %v3135
    %v3200 = vmul.f32 %v2835, %v3136
    %v3201 = vmul.f32 %v2837, %v3137
    %v3202 = vmul.f32 %v2839, %v3138
    %v3203 = vmul.f32 %v2841, %v3139
    %v3204 = vmul.f32 %v2843, %v3140
    %v3205 = vmul.f32 %v2845, %v3141
    %v3206 = vmul.f32 %v2847, %v3142
    %v3207 = vmul.f32 %v2849, %v3143
    %v3208 = vmul.f32 %v2851, %v3144
    %v3209 = vmul.f32 %v2853, %v3145
    %v3210 = vmul.f32 %v2855, %v3146
    %v3211 = vmul.f32 %v2857, %v3147
    %v3212 = vmul.f32 %v2859, %v3148
    %v3213 = vmul.f32 %v2861, %v3149
    %v3214 = vmul.f32 %v2863, %v3150
    %v3215 = vmul.f32 %v2865, %v3151
    %v3216 = vmul.f32 %v2867, %v3152
    %v3217 = vmul.f32 %v2869, %v3153
    %v3218 = vmul.f32 %v2871, %v3154
    %v3219 = vmul.f32 %v2873, %v3155
    %v3220 = vmul.f32 %v2875, %v3156
    %v3221 = vmul.f32 %v2877, %v3157
    %v3222 = vmul.f32 %v2879, %v3158
    %v3223 = vmul.f32 %v2881, %v3159
    %v3224 = vmul.f32 %v2883, %v3160
    %v3225 = vmul.f32 %v2885, %v3161
    %v3226 = vmul.f32 %v2887, %v3162
    %v3227 = vmul.f32 %v2889, %v3163
    %v3228 = vmul.f32 %v2891, %v3164
    %v3229 = vmul.f32 %v2893, %v3165
    %v3230 = vmul.f32 %v2895, %v3166
    %v3231 = vmul.f32 %v2897, %v3167
    %v3232 = vmul.f32 %v2899, %v3168
    %v3233 = vmul.f32 %v2901, %v3169
    %v3234 = vmul.f32 %v2903, %v3170
    %v3235 = vmul.f32 %v2905, %v3171
    %v3236 = vmul.f32 %v2907, %v3172
    %v3237 = vmul.f32 %v2909, %v3173
    %v3238 = vmul.f32 %v2911, %v3174
    %v3239 = vmul.f32 %v2913, %v3175
    %v3240 = vmul.f32 %v2915, %v3176
    %v3241 = vmul.f32 %v2917, %v3177
    %v3242 = vmul.f32 %v2919, %v3178
    %v3243 = vmul.f32 %v2921, %v3179
    %v3244 = vmul.f32 %v2923, %v3180
    %v3245 = vmul.f32 %v2925, %v3181
    %v3246 = vpack.c.bf16 %v3182, %v3182
    %v3247 = vpack.c.bf16 %v3183, %v3183
    %v3248 = vpack.c.bf16 %v3184, %v3184
    %v3249 = vpack.c.bf16 %v3185, %v3185
    %v3250 = vpack.c.bf16 %v3186, %v3186
    %v3251 = vpack.c.bf16 %v3187, %v3187
    %v3252 = vpack.c.bf16 %v3188, %v3188
    %v3253 = vpack.c.bf16 %v3189, %v3189
    %v3254 = vpack.c.bf16 %v3190, %v3190
    %v3255 = vpack.c.bf16 %v3191, %v3191
    %v3256 = vpack.c.bf16 %v3192, %v3192
    %v3257 = vpack.c.bf16 %v3193, %v3193
    %v3258 = vpack.c.bf16 %v3194, %v3194
    %v3259 = vpack.c.bf16 %v3195, %v3195
    %v3260 = vpack.c.bf16 %v3196, %v3196
    %v3261 = vpack.c.bf16 %v3197, %v3197
    %v3262 = vpack.c.bf16 %v3198, %v3198
    %v3263 = vpack.c.bf16 %v3199, %v3199
    %v3264 = vpack.c.bf16 %v3200, %v3200
    %v3265 = vpack.c.bf16 %v3201, %v3201
    %v3266 = vpack.c.bf16 %v3202, %v3202
    %v3267 = vpack.c.bf16 %v3203, %v3203
    %v3268 = vpack.c.bf16 %v3204, %v3204
    %v3269 = vpack.c.bf16 %v3205, %v3205
    %v3270 = vpack.c.bf16 %v3206, %v3206
    %v3271 = vpack.c.bf16 %v3207, %v3207
    %v3272 = vpack.c.bf16 %v3208, %v3208
    %v3273 = vpack.c.bf16 %v3209, %v3209
    %v3274 = vpack.c.bf16 %v3210, %v3210
    %v3275 = vpack.c.bf16 %v3211, %v3211
    %v3276 = vpack.c.bf16 %v3212, %v3212
    %v3277 = vpack.c.bf16 %v3213, %v3213
    %v3278 = vpack.c.bf16 %v3214, %v3214
    %v3279 = vpack.c.bf16 %v3215, %v3215
    %v3280 = vpack.c.bf16 %v3216, %v3216
    %v3281 = vpack.c.bf16 %v3217, %v3217
    %v3282 = vpack.c.bf16 %v3218, %v3218
    %v3283 = vpack.c.bf16 %v3219, %v3219
    %v3284 = vpack.c.bf16 %v3220, %v3220
    %v3285 = vpack.c.bf16 %v3221, %v3221
    %v3286 = vpack.c.bf16 %v3222, %v3222
    %v3287 = vpack.c.bf16 %v3223, %v3223
    %v3288 = vpack.c.bf16 %v3224, %v3224
    %v3289 = vpack.c.bf16 %v3225, %v3225
    %v3290 = vpack.c.bf16 %v3226, %v3226
    %v3291 = vpack.c.bf16 %v3227, %v3227
    %v3292 = vpack.c.bf16 %v3228, %v3228
    %v3293 = vpack.c.bf16 %v3229, %v3229
    %v3294 = vpack.c.bf16 %v3230, %v3230
    %v3295 = vpack.c.bf16 %v3231, %v3231
    %v3296 = vpack.c.bf16 %v3232, %v3232
    %v3297 = vpack.c.bf16 %v3233, %v3233
    %v3298 = vpack.c.bf16 %v3234, %v3234
    %v3299 = vpack.c.bf16 %v3235, %v3235
    %v3300 = vpack.c.bf16 %v3236, %v3236
    %v3301 = vpack.c.bf16 %v3237, %v3237
    %v3302 = vpack.c.bf16 %v3238, %v3238
    %v3303 = vpack.c.bf16 %v3239, %v3239
    %v3304 = vpack.c.bf16 %v3240, %v3240
    %v3305 = vpack.c.bf16 %v3241, %v3241
    %v3306 = vpack.c.bf16 %v3242, %v3242
    %v3307 = vpack.c.bf16 %v3243, %v3243
    %v3308 = vpack.c.bf16 %v3244, %v3244
    %v3309 = vpack.c.bf16 %v3245, %v3245
    %3310 = vrot.lane.b32.xlu0 %v1007, 64
    %v3311 = vpop.permute.xlu0 %3310
    %v3313 = vsel %vm1010, %v3246, 0
    %vm3315 = vcmask 1043456
    %v3317 = vsel %vm3315, %v3311, 0
    %3319 = vmatpush.bf16.msra.mxu0 0
    %3320 = vmatpush.bf16.msra.mxu0 0
    %3321 = vmatpush.bf16.msra.mxu0 0
    %3322 = vmatpush.bf16.msra.mxu0 0
    %3323 = vmatpush.bf16.msra.mxu0 0
    %3324 = vmatpush.bf16.msra.mxu0 0
    %3325 = vmatpush.bf16.msra.mxu0 0
    %3326 = vmatpush.bf16.msra.mxu0 %v3317
    %3327 = vmatmul.bf16.gmra.mxu0 %v3313
    %v3328 = vpop.f32.mrf.mxu0
    %v3329 = vadd.f32 0.0, %v3328
    %v3330 = vpop.f32.mrf.mxu0
    %3331 = vdwg.mxu0
    %3332 = vrot.lane.b32.xlu0 %v1032, 64
    %v3333 = vpop.permute.xlu0 %3332
    %v3335 = vsel %vm1010, %v3247, 0
    %v3338 = vsel %vm3315, %v3333, 0
    %3340 = vmatpush.bf16.msra.mxu0 0
    %3341 = vmatpush.bf16.msra.mxu0 0
    %3342 = vmatpush.bf16.msra.mxu0 0
    %3343 = vmatpush.bf16.msra.mxu0 0
    %3344 = vmatpush.bf16.msra.mxu0 0
    %3345 = vmatpush.bf16.msra.mxu0 0
    %3346 = vmatpush.bf16.msra.mxu0 0
    %3347 = vmatpush.bf16.msra.mxu0 %v3338
    %3348 = vmatmul.bf16.gmra.mxu0 %v3335
    %v3349 = vpop.f32.mrf.mxu0
    %v3350 = vadd.f32 0.0, %v3349
    %v3351 = vpop.f32.mrf.mxu0
    %3352 = vdwg.mxu0
    %3353 = vrot.lane.b32.xlu0 %v1056, 64
    %v3354 = vpop.permute.xlu0 %3353
    %v3356 = vsel %vm1010, %v3248, 0
    %v3359 = vsel %vm3315, %v3354, 0
    %3361 = vmatpush.bf16.msra.mxu0 0
    %3362 = vmatpush.bf16.msra.mxu0 0
    %3363 = vmatpush.bf16.msra.mxu0 0
    %3364 = vmatpush.bf16.msra.mxu0 0
    %3365 = vmatpush.bf16.msra.mxu0 0
    %3366 = vmatpush.bf16.msra.mxu0 0
    %3367 = vmatpush.bf16.msra.mxu0 0
    %3368 = vmatpush.bf16.msra.mxu0 %v3359
    %3369 = vmatmul.bf16.gmra.mxu0 %v3356
    %v3370 = vpop.f32.mrf.mxu0
    %v3371 = vadd.f32 0.0, %v3370
    %v3372 = vpop.f32.mrf.mxu0
    %3373 = vdwg.mxu0
    %3374 = vrot.lane.b32.xlu0 %v1080, 64
    %v3375 = vpop.permute.xlu0 %3374
    %v3377 = vsel %vm1010, %v3249, 0
    %v3380 = vsel %vm3315, %v3375, 0
    %3382 = vmatpush.bf16.msra.mxu0 0
    %3383 = vmatpush.bf16.msra.mxu0 0
    %3384 = vmatpush.bf16.msra.mxu0 0
    %3385 = vmatpush.bf16.msra.mxu0 0
    %3386 = vmatpush.bf16.msra.mxu0 0
    %3387 = vmatpush.bf16.msra.mxu0 0
    %3388 = vmatpush.bf16.msra.mxu0 0
    %3389 = vmatpush.bf16.msra.mxu0 %v3380
    %3390 = vmatmul.bf16.gmra.mxu0 %v3377
    %v3391 = vpop.f32.mrf.mxu0
    %v3392 = vadd.f32 0.0, %v3391
    %v3393 = vpop.f32.mrf.mxu0
    %3394 = vdwg.mxu0
    %3395 = vrot.lane.b32.xlu0 %v1104, 64
    %v3396 = vpop.permute.xlu0 %3395
    %v3398 = vsel %vm1010, %v3250, 0
    %v3401 = vsel %vm3315, %v3396, 0
    %3403 = vmatpush.bf16.msra.mxu0 0
    %3404 = vmatpush.bf16.msra.mxu0 0
    %3405 = vmatpush.bf16.msra.mxu0 0
    %3406 = vmatpush.bf16.msra.mxu0 0
    %3407 = vmatpush.bf16.msra.mxu0 0
    %3408 = vmatpush.bf16.msra.mxu0 0
    %3409 = vmatpush.bf16.msra.mxu0 0
    %3410 = vmatpush.bf16.msra.mxu0 %v3401
    %3411 = vmatmul.bf16.gmra.mxu0 %v3398
    %v3412 = vpop.f32.mrf.mxu0
    %v3413 = vadd.f32 0.0, %v3412
    %v3414 = vpop.f32.mrf.mxu0
    %3415 = vdwg.mxu0
    %3416 = vrot.lane.b32.xlu0 %v1128, 64
    %v3417 = vpop.permute.xlu0 %3416
    %v3419 = vsel %vm1010, %v3251, 0
    %v3422 = vsel %vm3315, %v3417, 0
    %3424 = vmatpush.bf16.msra.mxu0 0
    %3425 = vmatpush.bf16.msra.mxu0 0
    %3426 = vmatpush.bf16.msra.mxu0 0
    %3427 = vmatpush.bf16.msra.mxu0 0
    %3428 = vmatpush.bf16.msra.mxu0 0
    %3429 = vmatpush.bf16.msra.mxu0 0
    %3430 = vmatpush.bf16.msra.mxu0 0
    %3431 = vmatpush.bf16.msra.mxu0 %v3422
    %3432 = vmatmul.bf16.gmra.mxu0 %v3419
    %v3433 = vpop.f32.mrf.mxu0
    %v3434 = vadd.f32 0.0, %v3433
    %v3435 = vpop.f32.mrf.mxu0
    %3436 = vdwg.mxu0
    %3437 = vrot.lane.b32.xlu0 %v1152, 64
    %v3438 = vpop.permute.xlu0 %3437
    %v3440 = vsel %vm1010, %v3252, 0
    %v3443 = vsel %vm3315, %v3438, 0
    %3445 = vmatpush.bf16.msra.mxu0 0
    %3446 = vmatpush.bf16.msra.mxu0 0
    %3447 = vmatpush.bf16.msra.mxu0 0
    %3448 = vmatpush.bf16.msra.mxu0 0
    %3449 = vmatpush.bf16.msra.mxu0 0
    %3450 = vmatpush.bf16.msra.mxu0 0
    %3451 = vmatpush.bf16.msra.mxu0 0
    %3452 = vmatpush.bf16.msra.mxu0 %v3443
    %3453 = vmatmul.bf16.gmra.mxu0 %v3440
    %v3454 = vpop.f32.mrf.mxu0
    %v3455 = vadd.f32 0.0, %v3454
    %v3456 = vpop.f32.mrf.mxu0
    %3457 = vdwg.mxu0
    %3458 = vrot.lane.b32.xlu0 %v1176, 64
    %v3459 = vpop.permute.xlu0 %3458
    %v3461 = vsel %vm1010, %v3253, 0
    %v3464 = vsel %vm3315, %v3459, 0
    %3466 = vmatpush.bf16.msra.mxu0 0
    %3467 = vmatpush.bf16.msra.mxu0 0
    %3468 = vmatpush.bf16.msra.mxu0 0
    %3469 = vmatpush.bf16.msra.mxu0 0
    %3470 = vmatpush.bf16.msra.mxu0 0
    %3471 = vmatpush.bf16.msra.mxu0 0
    %3472 = vmatpush.bf16.msra.mxu0 0
    %3473 = vmatpush.bf16.msra.mxu0 %v3464
    %3474 = vmatmul.bf16.gmra.mxu0 %v3461
    %v3475 = vpop.f32.mrf.mxu0
    %v3476 = vadd.f32 0.0, %v3475
    %v3477 = vpop.f32.mrf.mxu0
    %3478 = vdwg.mxu0
    %3479 = vrot.lane.b32.xlu0 %v1200, 64
    %v3480 = vpop.permute.xlu0 %3479
    %v3482 = vsel %vm1010, %v3254, 0
    %v3485 = vsel %vm3315, %v3480, 0
    %3487 = vmatpush.bf16.msra.mxu0 0
    %3488 = vmatpush.bf16.msra.mxu0 0
    %3489 = vmatpush.bf16.msra.mxu0 0
    %3490 = vmatpush.bf16.msra.mxu0 0
    %3491 = vmatpush.bf16.msra.mxu0 0
    %3492 = vmatpush.bf16.msra.mxu0 0
    %3493 = vmatpush.bf16.msra.mxu0 0
    %3494 = vmatpush.bf16.msra.mxu0 %v3485
    %3495 = vmatmul.bf16.gmra.mxu0 %v3482
    %v3496 = vpop.f32.mrf.mxu0
    %v3497 = vadd.f32 0.0, %v3496
    %v3498 = vpop.f32.mrf.mxu0
    %3499 = vdwg.mxu0
    %3500 = vrot.lane.b32.xlu0 %v1224, 64
    %v3501 = vpop.permute.xlu0 %3500
    %v3503 = vsel %vm1010, %v3255, 0
    %v3506 = vsel %vm3315, %v3501, 0
    %3508 = vmatpush.bf16.msra.mxu0 0
    %3509 = vmatpush.bf16.msra.mxu0 0
    %3510 = vmatpush.bf16.msra.mxu0 0
    %3511 = vmatpush.bf16.msra.mxu0 0
    %3512 = vmatpush.bf16.msra.mxu0 0
    %3513 = vmatpush.bf16.msra.mxu0 0
    %3514 = vmatpush.bf16.msra.mxu0 0
    %3515 = vmatpush.bf16.msra.mxu0 %v3506
    %3516 = vmatmul.bf16.gmra.mxu0 %v3503
    %v3517 = vpop.f32.mrf.mxu0
    %v3518 = vadd.f32 0.0, %v3517
    %v3519 = vpop.f32.mrf.mxu0
    %3520 = vdwg.mxu0
    %3521 = vrot.lane.b32.xlu0 %v1248, 64
    %v3522 = vpop.permute.xlu0 %3521
    %v3524 = vsel %vm1010, %v3256, 0
    %v3527 = vsel %vm3315, %v3522, 0
    %3529 = vmatpush.bf16.msra.mxu0 0
    %3530 = vmatpush.bf16.msra.mxu0 0
    %3531 = vmatpush.bf16.msra.mxu0 0
    %3532 = vmatpush.bf16.msra.mxu0 0
    %3533 = vmatpush.bf16.msra.mxu0 0
    %3534 = vmatpush.bf16.msra.mxu0 0
    %3535 = vmatpush.bf16.msra.mxu0 0
    %3536 = vmatpush.bf16.msra.mxu0 %v3527
    %3537 = vmatmul.bf16.gmra.mxu0 %v3524
    %v3538 = vpop.f32.mrf.mxu0
    %v3539 = vadd.f32 0.0, %v3538
    %v3540 = vpop.f32.mrf.mxu0
    %3541 = vdwg.mxu0
    %3542 = vrot.lane.b32.xlu0 %v1272, 64
    %v3543 = vpop.permute.xlu0 %3542
    %v3545 = vsel %vm1010, %v3257, 0
    %v3548 = vsel %vm3315, %v3543, 0
    %3550 = vmatpush.bf16.msra.mxu0 0
    %3551 = vmatpush.bf16.msra.mxu0 0
    %3552 = vmatpush.bf16.msra.mxu0 0
    %3553 = vmatpush.bf16.msra.mxu0 0
    %3554 = vmatpush.bf16.msra.mxu0 0
    %3555 = vmatpush.bf16.msra.mxu0 0
    %3556 = vmatpush.bf16.msra.mxu0 0
    %3557 = vmatpush.bf16.msra.mxu0 %v3548
    %3558 = vmatmul.bf16.gmra.mxu0 %v3545
    %v3559 = vpop.f32.mrf.mxu0
    %v3560 = vadd.f32 0.0, %v3559
    %v3561 = vpop.f32.mrf.mxu0
    %3562 = vdwg.mxu0
    %3563 = vrot.lane.b32.xlu0 %v1296, 64
    %v3564 = vpop.permute.xlu0 %3563
    %v3566 = vsel %vm1010, %v3258, 0
    %v3569 = vsel %vm3315, %v3564, 0
    %3571 = vmatpush.bf16.msra.mxu0 0
    %3572 = vmatpush.bf16.msra.mxu0 0
    %3573 = vmatpush.bf16.msra.mxu0 0
    %3574 = vmatpush.bf16.msra.mxu0 0
    %3575 = vmatpush.bf16.msra.mxu0 0
    %3576 = vmatpush.bf16.msra.mxu0 0
    %3577 = vmatpush.bf16.msra.mxu0 0
    %3578 = vmatpush.bf16.msra.mxu0 %v3569
    %3579 = vmatmul.bf16.gmra.mxu0 %v3566
    %v3580 = vpop.f32.mrf.mxu0
    %v3581 = vadd.f32 0.0, %v3580
    %v3582 = vpop.f32.mrf.mxu0
    %3583 = vdwg.mxu0
    %3584 = vrot.lane.b32.xlu0 %v1320, 64
    %v3585 = vpop.permute.xlu0 %3584
    %v3587 = vsel %vm1010, %v3259, 0
    %v3590 = vsel %vm3315, %v3585, 0
    %3592 = vmatpush.bf16.msra.mxu0 0
    %3593 = vmatpush.bf16.msra.mxu0 0
    %3594 = vmatpush.bf16.msra.mxu0 0
    %3595 = vmatpush.bf16.msra.mxu0 0
    %3596 = vmatpush.bf16.msra.mxu0 0
    %3597 = vmatpush.bf16.msra.mxu0 0
    %3598 = vmatpush.bf16.msra.mxu0 0
    %3599 = vmatpush.bf16.msra.mxu0 %v3590
    %3600 = vmatmul.bf16.gmra.mxu0 %v3587
    %v3601 = vpop.f32.mrf.mxu0
    %v3602 = vadd.f32 0.0, %v3601
    %v3603 = vpop.f32.mrf.mxu0
    %3604 = vdwg.mxu0
    %3605 = vrot.lane.b32.xlu0 %v1344, 64
    %v3606 = vpop.permute.xlu0 %3605
    %v3608 = vsel %vm1010, %v3260, 0
    %v3611 = vsel %vm3315, %v3606, 0
    %3613 = vmatpush.bf16.msra.mxu0 0
    %3614 = vmatpush.bf16.msra.mxu0 0
    %3615 = vmatpush.bf16.msra.mxu0 0
    %3616 = vmatpush.bf16.msra.mxu0 0
    %3617 = vmatpush.bf16.msra.mxu0 0
    %3618 = vmatpush.bf16.msra.mxu0 0
    %3619 = vmatpush.bf16.msra.mxu0 0
    %3620 = vmatpush.bf16.msra.mxu0 %v3611
    %3621 = vmatmul.bf16.gmra.mxu0 %v3608
    %v3622 = vpop.f32.mrf.mxu0
    %v3623 = vadd.f32 0.0, %v3622
    %v3624 = vpop.f32.mrf.mxu0
    %3625 = vdwg.mxu0
    %3626 = vrot.lane.b32.xlu0 %v1368, 64
    %v3627 = vpop.permute.xlu0 %3626
    %v3629 = vsel %vm1010, %v3261, 0
    %v3632 = vsel %vm3315, %v3627, 0
    %3634 = vmatpush.bf16.msra.mxu0 0
    %3635 = vmatpush.bf16.msra.mxu0 0
    %3636 = vmatpush.bf16.msra.mxu0 0
    %3637 = vmatpush.bf16.msra.mxu0 0
    %3638 = vmatpush.bf16.msra.mxu0 0
    %3639 = vmatpush.bf16.msra.mxu0 0
    %3640 = vmatpush.bf16.msra.mxu0 0
    %3641 = vmatpush.bf16.msra.mxu0 %v3632
    %3642 = vmatmul.bf16.gmra.mxu0 %v3629
    %v3643 = vpop.f32.mrf.mxu0
    %v3644 = vadd.f32 0.0, %v3643
    %v3645 = vpop.f32.mrf.mxu0
    %3646 = vdwg.mxu0
    %3647 = vrot.lane.b32.xlu0 %v1392, 64
    %v3648 = vpop.permute.xlu0 %3647
    %v3650 = vsel %vm1010, %v3262, 0
    %v3653 = vsel %vm3315, %v3648, 0
    %3655 = vmatpush.bf16.msra.mxu0 0
    %3656 = vmatpush.bf16.msra.mxu0 0
    %3657 = vmatpush.bf16.msra.mxu0 0
    %3658 = vmatpush.bf16.msra.mxu0 0
    %3659 = vmatpush.bf16.msra.mxu0 0
    %3660 = vmatpush.bf16.msra.mxu0 0
    %3661 = vmatpush.bf16.msra.mxu0 0
    %3662 = vmatpush.bf16.msra.mxu0 %v3653
    %3663 = vmatmul.bf16.gmra.mxu0 %v3650
    %v3664 = vpop.f32.mrf.mxu0
    %v3665 = vadd.f32 0.0, %v3664
    %v3666 = vpop.f32.mrf.mxu0
    %3667 = vdwg.mxu0
    %3668 = vrot.lane.b32.xlu0 %v1416, 64
    %v3669 = vpop.permute.xlu0 %3668
    %v3671 = vsel %vm1010, %v3263, 0
    %v3674 = vsel %vm3315, %v3669, 0
    %3676 = vmatpush.bf16.msra.mxu0 0
    %3677 = vmatpush.bf16.msra.mxu0 0
    %3678 = vmatpush.bf16.msra.mxu0 0
    %3679 = vmatpush.bf16.msra.mxu0 0
    %3680 = vmatpush.bf16.msra.mxu0 0
    %3681 = vmatpush.bf16.msra.mxu0 0
    %3682 = vmatpush.bf16.msra.mxu0 0
    %3683 = vmatpush.bf16.msra.mxu0 %v3674
    %3684 = vmatmul.bf16.gmra.mxu0 %v3671
    %v3685 = vpop.f32.mrf.mxu0
    %v3686 = vadd.f32 0.0, %v3685
    %v3687 = vpop.f32.mrf.mxu0
    %3688 = vdwg.mxu0
    %3689 = vrot.lane.b32.xlu0 %v1440, 64
    %v3690 = vpop.permute.xlu0 %3689
    %v3692 = vsel %vm1010, %v3264, 0
    %v3695 = vsel %vm3315, %v3690, 0
    %3697 = vmatpush.bf16.msra.mxu0 0
    %3698 = vmatpush.bf16.msra.mxu0 0
    %3699 = vmatpush.bf16.msra.mxu0 0
    %3700 = vmatpush.bf16.msra.mxu0 0
    %3701 = vmatpush.bf16.msra.mxu0 0
    %3702 = vmatpush.bf16.msra.mxu0 0
    %3703 = vmatpush.bf16.msra.mxu0 0
    %3704 = vmatpush.bf16.msra.mxu0 %v3695
    %3705 = vmatmul.bf16.gmra.mxu0 %v3692
    %v3706 = vpop.f32.mrf.mxu0
    %v3707 = vadd.f32 0.0, %v3706
    %v3708 = vpop.f32.mrf.mxu0
    %3709 = vdwg.mxu0
    %3710 = vrot.lane.b32.xlu0 %v1464, 64
    %v3711 = vpop.permute.xlu0 %3710
    %v3713 = vsel %vm1010, %v3265, 0
    %v3716 = vsel %vm3315, %v3711, 0
    %3718 = vmatpush.bf16.msra.mxu0 0
    %3719 = vmatpush.bf16.msra.mxu0 0
    %3720 = vmatpush.bf16.msra.mxu0 0
    %3721 = vmatpush.bf16.msra.mxu0 0
    %3722 = vmatpush.bf16.msra.mxu0 0
    %3723 = vmatpush.bf16.msra.mxu0 0
    %3724 = vmatpush.bf16.msra.mxu0 0
    %3725 = vmatpush.bf16.msra.mxu0 %v3716
    %3726 = vmatmul.bf16.gmra.mxu0 %v3713
    %v3727 = vpop.f32.mrf.mxu0
    %v3728 = vadd.f32 0.0, %v3727
    %v3729 = vpop.f32.mrf.mxu0
    %3730 = vdwg.mxu0
    %3731 = vrot.lane.b32.xlu0 %v1488, 64
    %v3732 = vpop.permute.xlu0 %3731
    %v3734 = vsel %vm1010, %v3266, 0
    %v3737 = vsel %vm3315, %v3732, 0
    %3739 = vmatpush.bf16.msra.mxu0 0
    %3740 = vmatpush.bf16.msra.mxu0 0
    %3741 = vmatpush.bf16.msra.mxu0 0
    %3742 = vmatpush.bf16.msra.mxu0 0
    %3743 = vmatpush.bf16.msra.mxu0 0
    %3744 = vmatpush.bf16.msra.mxu0 0
    %3745 = vmatpush.bf16.msra.mxu0 0
    %3746 = vmatpush.bf16.msra.mxu0 %v3737
    %3747 = vmatmul.bf16.gmra.mxu0 %v3734
    %v3748 = vpop.f32.mrf.mxu0
    %v3749 = vadd.f32 0.0, %v3748
    %v3750 = vpop.f32.mrf.mxu0
    %3751 = vdwg.mxu0
    %3752 = vrot.lane.b32.xlu0 %v1512, 64
    %v3753 = vpop.permute.xlu0 %3752
    %v3755 = vsel %vm1010, %v3267, 0
    %v3758 = vsel %vm3315, %v3753, 0
    %3760 = vmatpush.bf16.msra.mxu0 0
    %3761 = vmatpush.bf16.msra.mxu0 0
    %3762 = vmatpush.bf16.msra.mxu0 0
    %3763 = vmatpush.bf16.msra.mxu0 0
    %3764 = vmatpush.bf16.msra.mxu0 0
    %3765 = vmatpush.bf16.msra.mxu0 0
    %3766 = vmatpush.bf16.msra.mxu0 0
    %3767 = vmatpush.bf16.msra.mxu0 %v3758
    %3768 = vmatmul.bf16.gmra.mxu0 %v3755
    %v3769 = vpop.f32.mrf.mxu0
    %v3770 = vadd.f32 0.0, %v3769
    %v3771 = vpop.f32.mrf.mxu0
    %3772 = vdwg.mxu0
    %3773 = vrot.lane.b32.xlu0 %v1536, 64
    %v3774 = vpop.permute.xlu0 %3773
    %v3776 = vsel %vm1010, %v3268, 0
    %v3779 = vsel %vm3315, %v3774, 0
    %3781 = vmatpush.bf16.msra.mxu0 0
    %3782 = vmatpush.bf16.msra.mxu0 0
    %3783 = vmatpush.bf16.msra.mxu0 0
    %3784 = vmatpush.bf16.msra.mxu0 0
    %3785 = vmatpush.bf16.msra.mxu0 0
    %3786 = vmatpush.bf16.msra.mxu0 0
    %3787 = vmatpush.bf16.msra.mxu0 0
    %3788 = vmatpush.bf16.msra.mxu0 %v3779
    %3789 = vmatmul.bf16.gmra.mxu0 %v3776
    %v3790 = vpop.f32.mrf.mxu0
    %v3791 = vadd.f32 0.0, %v3790
    %v3792 = vpop.f32.mrf.mxu0
    %3793 = vdwg.mxu0
    %3794 = vrot.lane.b32.xlu0 %v1560, 64
    %v3795 = vpop.permute.xlu0 %3794
    %v3797 = vsel %vm1010, %v3269, 0
    %v3800 = vsel %vm3315, %v3795, 0
    %3802 = vmatpush.bf16.msra.mxu0 0
    %3803 = vmatpush.bf16.msra.mxu0 0
    %3804 = vmatpush.bf16.msra.mxu0 0
    %3805 = vmatpush.bf16.msra.mxu0 0
    %3806 = vmatpush.bf16.msra.mxu0 0
    %3807 = vmatpush.bf16.msra.mxu0 0
    %3808 = vmatpush.bf16.msra.mxu0 0
    %3809 = vmatpush.bf16.msra.mxu0 %v3800
    %3810 = vmatmul.bf16.gmra.mxu0 %v3797
    %v3811 = vpop.f32.mrf.mxu0
    %v3812 = vadd.f32 0.0, %v3811
    %v3813 = vpop.f32.mrf.mxu0
    %3814 = vdwg.mxu0
    %3815 = vrot.lane.b32.xlu0 %v1584, 64
    %v3816 = vpop.permute.xlu0 %3815
    %v3818 = vsel %vm1010, %v3270, 0
    %v3821 = vsel %vm3315, %v3816, 0
    %3823 = vmatpush.bf16.msra.mxu0 0
    %3824 = vmatpush.bf16.msra.mxu0 0
    %3825 = vmatpush.bf16.msra.mxu0 0
    %3826 = vmatpush.bf16.msra.mxu0 0
    %3827 = vmatpush.bf16.msra.mxu0 0
    %3828 = vmatpush.bf16.msra.mxu0 0
    %3829 = vmatpush.bf16.msra.mxu0 0
    %3830 = vmatpush.bf16.msra.mxu0 %v3821
    %3831 = vmatmul.bf16.gmra.mxu0 %v3818
    %v3832 = vpop.f32.mrf.mxu0
    %v3833 = vadd.f32 0.0, %v3832
    %v3834 = vpop.f32.mrf.mxu0
    %3835 = vdwg.mxu0
    %3836 = vrot.lane.b32.xlu0 %v1608, 64
    %v3837 = vpop.permute.xlu0 %3836
    %v3839 = vsel %vm1010, %v3271, 0
    %v3842 = vsel %vm3315, %v3837, 0
    %3844 = vmatpush.bf16.msra.mxu0 0
    %3845 = vmatpush.bf16.msra.mxu0 0
    %3846 = vmatpush.bf16.msra.mxu0 0
    %3847 = vmatpush.bf16.msra.mxu0 0
    %3848 = vmatpush.bf16.msra.mxu0 0
    %3849 = vmatpush.bf16.msra.mxu0 0
    %3850 = vmatpush.bf16.msra.mxu0 0
    %3851 = vmatpush.bf16.msra.mxu0 %v3842
    %3852 = vmatmul.bf16.gmra.mxu0 %v3839
    %v3853 = vpop.f32.mrf.mxu0
    %v3854 = vadd.f32 0.0, %v3853
    %v3855 = vpop.f32.mrf.mxu0
    %3856 = vdwg.mxu0
    %3857 = vrot.lane.b32.xlu0 %v1632, 64
    %v3858 = vpop.permute.xlu0 %3857
    %v3860 = vsel %vm1010, %v3272, 0
    %v3863 = vsel %vm3315, %v3858, 0
    %3865 = vmatpush.bf16.msra.mxu0 0
    %3866 = vmatpush.bf16.msra.mxu0 0
    %3867 = vmatpush.bf16.msra.mxu0 0
    %3868 = vmatpush.bf16.msra.mxu0 0
    %3869 = vmatpush.bf16.msra.mxu0 0
    %3870 = vmatpush.bf16.msra.mxu0 0
    %3871 = vmatpush.bf16.msra.mxu0 0
    %3872 = vmatpush.bf16.msra.mxu0 %v3863
    %3873 = vmatmul.bf16.gmra.mxu0 %v3860
    %v3874 = vpop.f32.mrf.mxu0
    %v3875 = vadd.f32 0.0, %v3874
    %v3876 = vpop.f32.mrf.mxu0
    %3877 = vdwg.mxu0
    %3878 = vrot.lane.b32.xlu0 %v1656, 64
    %v3879 = vpop.permute.xlu0 %3878
    %v3881 = vsel %vm1010, %v3273, 0
    %v3884 = vsel %vm3315, %v3879, 0
    %3886 = vmatpush.bf16.msra.mxu0 0
    %3887 = vmatpush.bf16.msra.mxu0 0
    %3888 = vmatpush.bf16.msra.mxu0 0
    %3889 = vmatpush.bf16.msra.mxu0 0
    %3890 = vmatpush.bf16.msra.mxu0 0
    %3891 = vmatpush.bf16.msra.mxu0 0
    %3892 = vmatpush.bf16.msra.mxu0 0
    %3893 = vmatpush.bf16.msra.mxu0 %v3884
    %3894 = vmatmul.bf16.gmra.mxu0 %v3881
    %v3895 = vpop.f32.mrf.mxu0
    %v3896 = vadd.f32 0.0, %v3895
    %v3897 = vpop.f32.mrf.mxu0
    %3898 = vdwg.mxu0
    %3899 = vrot.lane.b32.xlu0 %v1680, 64
    %v3900 = vpop.permute.xlu0 %3899
    %v3902 = vsel %vm1010, %v3274, 0
    %v3905 = vsel %vm3315, %v3900, 0
    %3907 = vmatpush.bf16.msra.mxu0 0
    %3908 = vmatpush.bf16.msra.mxu0 0
    %3909 = vmatpush.bf16.msra.mxu0 0
    %3910 = vmatpush.bf16.msra.mxu0 0
    %3911 = vmatpush.bf16.msra.mxu0 0
    %3912 = vmatpush.bf16.msra.mxu0 0
    %3913 = vmatpush.bf16.msra.mxu0 0
    %3914 = vmatpush.bf16.msra.mxu0 %v3905
    %3915 = vmatmul.bf16.gmra.mxu0 %v3902
    %v3916 = vpop.f32.mrf.mxu0
    %v3917 = vadd.f32 0.0, %v3916
    %v3918 = vpop.f32.mrf.mxu0
    %3919 = vdwg.mxu0
    %3920 = vrot.lane.b32.xlu0 %v1704, 64
    %v3921 = vpop.permute.xlu0 %3920
    %v3923 = vsel %vm1010, %v3275, 0
    %v3926 = vsel %vm3315, %v3921, 0
    %3928 = vmatpush.bf16.msra.mxu0 0
    %3929 = vmatpush.bf16.msra.mxu0 0
    %3930 = vmatpush.bf16.msra.mxu0 0
    %3931 = vmatpush.bf16.msra.mxu0 0
    %3932 = vmatpush.bf16.msra.mxu0 0
    %3933 = vmatpush.bf16.msra.mxu0 0
    %3934 = vmatpush.bf16.msra.mxu0 0
    %3935 = vmatpush.bf16.msra.mxu0 %v3926
    %3936 = vmatmul.bf16.gmra.mxu0 %v3923
    %v3937 = vpop.f32.mrf.mxu0
    %v3938 = vadd.f32 0.0, %v3937
    %v3939 = vpop.f32.mrf.mxu0
    %3940 = vdwg.mxu0
    %3941 = vrot.lane.b32.xlu0 %v1728, 64
    %v3942 = vpop.permute.xlu0 %3941
    %v3944 = vsel %vm1010, %v3276, 0
    %v3947 = vsel %vm3315, %v3942, 0
    %3949 = vmatpush.bf16.msra.mxu0 0
    %3950 = vmatpush.bf16.msra.mxu0 0
    %3951 = vmatpush.bf16.msra.mxu0 0
    %3952 = vmatpush.bf16.msra.mxu0 0
    %3953 = vmatpush.bf16.msra.mxu0 0
    %3954 = vmatpush.bf16.msra.mxu0 0
    %3955 = vmatpush.bf16.msra.mxu0 0
    %3956 = vmatpush.bf16.msra.mxu0 %v3947
    %3957 = vmatmul.bf16.gmra.mxu0 %v3944
    %v3958 = vpop.f32.mrf.mxu0
    %v3959 = vadd.f32 0.0, %v3958
    %v3960 = vpop.f32.mrf.mxu0
    %3961 = vdwg.mxu0
    %3962 = vrot.lane.b32.xlu0 %v1752, 64
    %v3963 = vpop.permute.xlu0 %3962
    %v3965 = vsel %vm1010, %v3277, 0
    %v3968 = vsel %vm3315, %v3963, 0
    %3970 = vmatpush.bf16.msra.mxu0 0
    %3971 = vmatpush.bf16.msra.mxu0 0
    %3972 = vmatpush.bf16.msra.mxu0 0
    %3973 = vmatpush.bf16.msra.mxu0 0
    %3974 = vmatpush.bf16.msra.mxu0 0
    %3975 = vmatpush.bf16.msra.mxu0 0
    %3976 = vmatpush.bf16.msra.mxu0 0
    %3977 = vmatpush.bf16.msra.mxu0 %v3968
    %3978 = vmatmul.bf16.gmra.mxu0 %v3965
    %v3979 = vpop.f32.mrf.mxu0
    %v3980 = vadd.f32 0.0, %v3979
    %v3981 = vpop.f32.mrf.mxu0
    %3982 = vdwg.mxu0
    %3983 = vrot.lane.b32.xlu0 %v1776, 64
    %v3984 = vpop.permute.xlu0 %3983
    %v3986 = vsel %vm1010, %v3278, 0
    %v3989 = vsel %vm3315, %v3984, 0
    %3991 = vmatpush.bf16.msra.mxu0 0
    %3992 = vmatpush.bf16.msra.mxu0 0
    %3993 = vmatpush.bf16.msra.mxu0 0
    %3994 = vmatpush.bf16.msra.mxu0 0
    %3995 = vmatpush.bf16.msra.mxu0 0
    %3996 = vmatpush.bf16.msra.mxu0 0
    %3997 = vmatpush.bf16.msra.mxu0 0
    %3998 = vmatpush.bf16.msra.mxu0 %v3989
    %3999 = vmatmul.bf16.gmra.mxu0 %v3986
    %v4000 = vpop.f32.mrf.mxu0
    %v4001 = vadd.f32 0.0, %v4000
    %v4002 = vpop.f32.mrf.mxu0
    %4003 = vdwg.mxu0
    %4004 = vrot.lane.b32.xlu0 %v1800, 64
    %v4005 = vpop.permute.xlu0 %4004
    %v4007 = vsel %vm1010, %v3279, 0
    %v4010 = vsel %vm3315, %v4005, 0
    %4012 = vmatpush.bf16.msra.mxu0 0
    %4013 = vmatpush.bf16.msra.mxu0 0
    %4014 = vmatpush.bf16.msra.mxu0 0
    %4015 = vmatpush.bf16.msra.mxu0 0
    %4016 = vmatpush.bf16.msra.mxu0 0
    %4017 = vmatpush.bf16.msra.mxu0 0
    %4018 = vmatpush.bf16.msra.mxu0 0
    %4019 = vmatpush.bf16.msra.mxu0 %v4010
    %4020 = vmatmul.bf16.gmra.mxu0 %v4007
    %v4021 = vpop.f32.mrf.mxu0
    %v4022 = vadd.f32 0.0, %v4021
    %v4023 = vpop.f32.mrf.mxu0
    %4024 = vdwg.mxu0
    %4025 = vrot.lane.b32.xlu0 %v1824, 64
    %v4026 = vpop.permute.xlu0 %4025
    %v4028 = vsel %vm1010, %v3280, 0
    %v4031 = vsel %vm3315, %v4026, 0
    %4033 = vmatpush.bf16.msra.mxu0 0
    %4034 = vmatpush.bf16.msra.mxu0 0
    %4035 = vmatpush.bf16.msra.mxu0 0
    %4036 = vmatpush.bf16.msra.mxu0 0
    %4037 = vmatpush.bf16.msra.mxu0 0
    %4038 = vmatpush.bf16.msra.mxu0 0
    %4039 = vmatpush.bf16.msra.mxu0 0
    %4040 = vmatpush.bf16.msra.mxu0 %v4031
    %4041 = vmatmul.bf16.gmra.mxu0 %v4028
    %v4042 = vpop.f32.mrf.mxu0
    %v4043 = vadd.f32 0.0, %v4042
    %v4044 = vpop.f32.mrf.mxu0
    %4045 = vdwg.mxu0
    %4046 = vrot.lane.b32.xlu0 %v1848, 64
    %v4047 = vpop.permute.xlu0 %4046
    %v4049 = vsel %vm1010, %v3281, 0
    %v4052 = vsel %vm3315, %v4047, 0
    %4054 = vmatpush.bf16.msra.mxu0 0
    %4055 = vmatpush.bf16.msra.mxu0 0
    %4056 = vmatpush.bf16.msra.mxu0 0
    %4057 = vmatpush.bf16.msra.mxu0 0
    %4058 = vmatpush.bf16.msra.mxu0 0
    %4059 = vmatpush.bf16.msra.mxu0 0
    %4060 = vmatpush.bf16.msra.mxu0 0
    %4061 = vmatpush.bf16.msra.mxu0 %v4052
    %4062 = vmatmul.bf16.gmra.mxu0 %v4049
    %v4063 = vpop.f32.mrf.mxu0
    %v4064 = vadd.f32 0.0, %v4063
    %v4065 = vpop.f32.mrf.mxu0
    %4066 = vdwg.mxu0
    %4067 = vrot.lane.b32.xlu0 %v1872, 64
    %v4068 = vpop.permute.xlu0 %4067
    %v4070 = vsel %vm1010, %v3282, 0
    %v4073 = vsel %vm3315, %v4068, 0
    %4075 = vmatpush.bf16.msra.mxu0 0
    %4076 = vmatpush.bf16.msra.mxu0 0
    %4077 = vmatpush.bf16.msra.mxu0 0
    %4078 = vmatpush.bf16.msra.mxu0 0
    %4079 = vmatpush.bf16.msra.mxu0 0
    %4080 = vmatpush.bf16.msra.mxu0 0
    %4081 = vmatpush.bf16.msra.mxu0 0
    %4082 = vmatpush.bf16.msra.mxu0 %v4073
    %4083 = vmatmul.bf16.gmra.mxu0 %v4070
    %v4084 = vpop.f32.mrf.mxu0
    %v4085 = vadd.f32 0.0, %v4084
    %v4086 = vpop.f32.mrf.mxu0
    %4087 = vdwg.mxu0
    %4088 = vrot.lane.b32.xlu0 %v1896, 64
    %v4089 = vpop.permute.xlu0 %4088
    %v4091 = vsel %vm1010, %v3283, 0
    %v4094 = vsel %vm3315, %v4089, 0
    %4096 = vmatpush.bf16.msra.mxu0 0
    %4097 = vmatpush.bf16.msra.mxu0 0
    %4098 = vmatpush.bf16.msra.mxu0 0
    %4099 = vmatpush.bf16.msra.mxu0 0
    %4100 = vmatpush.bf16.msra.mxu0 0
    %4101 = vmatpush.bf16.msra.mxu0 0
    %4102 = vmatpush.bf16.msra.mxu0 0
    %4103 = vmatpush.bf16.msra.mxu0 %v4094
    %4104 = vmatmul.bf16.gmra.mxu0 %v4091
    %v4105 = vpop.f32.mrf.mxu0
    %v4106 = vadd.f32 0.0, %v4105
    %v4107 = vpop.f32.mrf.mxu0
    %4108 = vdwg.mxu0
    %4109 = vrot.lane.b32.xlu0 %v1920, 64
    %v4110 = vpop.permute.xlu0 %4109
    %v4112 = vsel %vm1010, %v3284, 0
    %v4115 = vsel %vm3315, %v4110, 0
    %4117 = vmatpush.bf16.msra.mxu0 0
    %4118 = vmatpush.bf16.msra.mxu0 0
    %4119 = vmatpush.bf16.msra.mxu0 0
    %4120 = vmatpush.bf16.msra.mxu0 0
    %4121 = vmatpush.bf16.msra.mxu0 0
    %4122 = vmatpush.bf16.msra.mxu0 0
    %4123 = vmatpush.bf16.msra.mxu0 0
    %4124 = vmatpush.bf16.msra.mxu0 %v4115
    %4125 = vmatmul.bf16.gmra.mxu0 %v4112
    %v4126 = vpop.f32.mrf.mxu0
    %v4127 = vadd.f32 0.0, %v4126
    %v4128 = vpop.f32.mrf.mxu0
    %4129 = vdwg.mxu0
    %4130 = vrot.lane.b32.xlu0 %v1944, 64
    %v4131 = vpop.permute.xlu0 %4130
    %v4133 = vsel %vm1010, %v3285, 0
    %v4136 = vsel %vm3315, %v4131, 0
    %4138 = vmatpush.bf16.msra.mxu0 0
    %4139 = vmatpush.bf16.msra.mxu0 0
    %4140 = vmatpush.bf16.msra.mxu0 0
    %4141 = vmatpush.bf16.msra.mxu0 0
    %4142 = vmatpush.bf16.msra.mxu0 0
    %4143 = vmatpush.bf16.msra.mxu0 0
    %4144 = vmatpush.bf16.msra.mxu0 0
    %4145 = vmatpush.bf16.msra.mxu0 %v4136
    %4146 = vmatmul.bf16.gmra.mxu0 %v4133
    %v4147 = vpop.f32.mrf.mxu0
    %v4148 = vadd.f32 0.0, %v4147
    %v4149 = vpop.f32.mrf.mxu0
    %4150 = vdwg.mxu0
    %4151 = vrot.lane.b32.xlu0 %v1968, 64
    %v4152 = vpop.permute.xlu0 %4151
    %v4154 = vsel %vm1010, %v3286, 0
    %v4157 = vsel %vm3315, %v4152, 0
    %4159 = vmatpush.bf16.msra.mxu0 0
    %4160 = vmatpush.bf16.msra.mxu0 0
    %4161 = vmatpush.bf16.msra.mxu0 0
    %4162 = vmatpush.bf16.msra.mxu0 0
    %4163 = vmatpush.bf16.msra.mxu0 0
    %4164 = vmatpush.bf16.msra.mxu0 0
    %4165 = vmatpush.bf16.msra.mxu0 0
    %4166 = vmatpush.bf16.msra.mxu0 %v4157
    %4167 = vmatmul.bf16.gmra.mxu0 %v4154
    %v4168 = vpop.f32.mrf.mxu0
    %v4169 = vadd.f32 0.0, %v4168
    %v4170 = vpop.f32.mrf.mxu0
    %4171 = vdwg.mxu0
    %4172 = vrot.lane.b32.xlu0 %v1992, 64
    %v4173 = vpop.permute.xlu0 %4172
    %v4175 = vsel %vm1010, %v3287, 0
    %v4178 = vsel %vm3315, %v4173, 0
    %4180 = vmatpush.bf16.msra.mxu0 0
    %4181 = vmatpush.bf16.msra.mxu0 0
    %4182 = vmatpush.bf16.msra.mxu0 0
    %4183 = vmatpush.bf16.msra.mxu0 0
    %4184 = vmatpush.bf16.msra.mxu0 0
    %4185 = vmatpush.bf16.msra.mxu0 0
    %4186 = vmatpush.bf16.msra.mxu0 0
    %4187 = vmatpush.bf16.msra.mxu0 %v4178
    %4188 = vmatmul.bf16.gmra.mxu0 %v4175
    %v4189 = vpop.f32.mrf.mxu0
    %v4190 = vadd.f32 0.0, %v4189
    %v4191 = vpop.f32.mrf.mxu0
    %4192 = vdwg.mxu0
    %4193 = vrot.lane.b32.xlu0 %v2016, 64
    %v4194 = vpop.permute.xlu0 %4193
    %v4196 = vsel %vm1010, %v3288, 0
    %v4199 = vsel %vm3315, %v4194, 0
    %4201 = vmatpush.bf16.msra.mxu0 0
    %4202 = vmatpush.bf16.msra.mxu0 0
    %4203 = vmatpush.bf16.msra.mxu0 0
    %4204 = vmatpush.bf16.msra.mxu0 0
    %4205 = vmatpush.bf16.msra.mxu0 0
    %4206 = vmatpush.bf16.msra.mxu0 0
    %4207 = vmatpush.bf16.msra.mxu0 0
    %4208 = vmatpush.bf16.msra.mxu0 %v4199
    %4209 = vmatmul.bf16.gmra.mxu0 %v4196
    %v4210 = vpop.f32.mrf.mxu0
    %v4211 = vadd.f32 0.0, %v4210
    %v4212 = vpop.f32.mrf.mxu0
    %4213 = vdwg.mxu0
    %4214 = vrot.lane.b32.xlu0 %v2040, 64
    %v4215 = vpop.permute.xlu0 %4214
    %v4217 = vsel %vm1010, %v3289, 0
    %v4220 = vsel %vm3315, %v4215, 0
    %4222 = vmatpush.bf16.msra.mxu0 0
    %4223 = vmatpush.bf16.msra.mxu0 0
    %4224 = vmatpush.bf16.msra.mxu0 0
    %4225 = vmatpush.bf16.msra.mxu0 0
    %4226 = vmatpush.bf16.msra.mxu0 0
    %4227 = vmatpush.bf16.msra.mxu0 0
    %4228 = vmatpush.bf16.msra.mxu0 0
    %4229 = vmatpush.bf16.msra.mxu0 %v4220
    %4230 = vmatmul.bf16.gmra.mxu0 %v4217
    %v4231 = vpop.f32.mrf.mxu0
    %v4232 = vadd.f32 0.0, %v4231
    %v4233 = vpop.f32.mrf.mxu0
    %4234 = vdwg.mxu0
    %4235 = vrot.lane.b32.xlu0 %v2064, 64
    %v4236 = vpop.permute.xlu0 %4235
    %v4238 = vsel %vm1010, %v3290, 0
    %v4241 = vsel %vm3315, %v4236, 0
    %4243 = vmatpush.bf16.msra.mxu0 0
    %4244 = vmatpush.bf16.msra.mxu0 0
    %4245 = vmatpush.bf16.msra.mxu0 0
    %4246 = vmatpush.bf16.msra.mxu0 0
    %4247 = vmatpush.bf16.msra.mxu0 0
    %4248 = vmatpush.bf16.msra.mxu0 0
    %4249 = vmatpush.bf16.msra.mxu0 0
    %4250 = vmatpush.bf16.msra.mxu0 %v4241
    %4251 = vmatmul.bf16.gmra.mxu0 %v4238
    %v4252 = vpop.f32.mrf.mxu0
    %v4253 = vadd.f32 0.0, %v4252
    %v4254 = vpop.f32.mrf.mxu0
    %4255 = vdwg.mxu0
    %4256 = vrot.lane.b32.xlu0 %v2088, 64
    %v4257 = vpop.permute.xlu0 %4256
    %v4259 = vsel %vm1010, %v3291, 0
    %v4262 = vsel %vm3315, %v4257, 0
    %4264 = vmatpush.bf16.msra.mxu0 0
    %4265 = vmatpush.bf16.msra.mxu0 0
    %4266 = vmatpush.bf16.msra.mxu0 0
    %4267 = vmatpush.bf16.msra.mxu0 0
    %4268 = vmatpush.bf16.msra.mxu0 0
    %4269 = vmatpush.bf16.msra.mxu0 0
    %4270 = vmatpush.bf16.msra.mxu0 0
    %4271 = vmatpush.bf16.msra.mxu0 %v4262
    %4272 = vmatmul.bf16.gmra.mxu0 %v4259
    %v4273 = vpop.f32.mrf.mxu0
    %v4274 = vadd.f32 0.0, %v4273
    %v4275 = vpop.f32.mrf.mxu0
    %4276 = vdwg.mxu0
    %4277 = vrot.lane.b32.xlu0 %v2112, 64
    %v4278 = vpop.permute.xlu0 %4277
    %v4280 = vsel %vm1010, %v3292, 0
    %v4283 = vsel %vm3315, %v4278, 0
    %4285 = vmatpush.bf16.msra.mxu0 0
    %4286 = vmatpush.bf16.msra.mxu0 0
    %4287 = vmatpush.bf16.msra.mxu0 0
    %4288 = vmatpush.bf16.msra.mxu0 0
    %4289 = vmatpush.bf16.msra.mxu0 0
    %4290 = vmatpush.bf16.msra.mxu0 0
    %4291 = vmatpush.bf16.msra.mxu0 0
    %4292 = vmatpush.bf16.msra.mxu0 %v4283
    %4293 = vmatmul.bf16.gmra.mxu0 %v4280
    %v4294 = vpop.f32.mrf.mxu0
    %v4295 = vadd.f32 0.0, %v4294
    %v4296 = vpop.f32.mrf.mxu0
    %4297 = vdwg.mxu0
    %4298 = vrot.lane.b32.xlu0 %v2136, 64
    %v4299 = vpop.permute.xlu0 %4298
    %v4301 = vsel %vm1010, %v3293, 0
    %v4304 = vsel %vm3315, %v4299, 0
    %4306 = vmatpush.bf16.msra.mxu0 0
    %4307 = vmatpush.bf16.msra.mxu0 0
    %4308 = vmatpush.bf16.msra.mxu0 0
    %4309 = vmatpush.bf16.msra.mxu0 0
    %4310 = vmatpush.bf16.msra.mxu0 0
    %4311 = vmatpush.bf16.msra.mxu0 0
    %4312 = vmatpush.bf16.msra.mxu0 0
    %4313 = vmatpush.bf16.msra.mxu0 %v4304
    %4314 = vmatmul.bf16.gmra.mxu0 %v4301
    %v4315 = vpop.f32.mrf.mxu0
    %v4316 = vadd.f32 0.0, %v4315
    %v4317 = vpop.f32.mrf.mxu0
    %4318 = vdwg.mxu0
    %4319 = vrot.lane.b32.xlu0 %v2160, 64
    %v4320 = vpop.permute.xlu0 %4319
    %v4322 = vsel %vm1010, %v3294, 0
    %v4325 = vsel %vm3315, %v4320, 0
    %4327 = vmatpush.bf16.msra.mxu0 0
    %4328 = vmatpush.bf16.msra.mxu0 0
    %4329 = vmatpush.bf16.msra.mxu0 0
    %4330 = vmatpush.bf16.msra.mxu0 0
    %4331 = vmatpush.bf16.msra.mxu0 0
    %4332 = vmatpush.bf16.msra.mxu0 0
    %4333 = vmatpush.bf16.msra.mxu0 0
    %4334 = vmatpush.bf16.msra.mxu0 %v4325
    %4335 = vmatmul.bf16.gmra.mxu0 %v4322
    %v4336 = vpop.f32.mrf.mxu0
    %v4337 = vadd.f32 0.0, %v4336
    %v4338 = vpop.f32.mrf.mxu0
    %4339 = vdwg.mxu0
    %4340 = vrot.lane.b32.xlu0 %v2184, 64
    %v4341 = vpop.permute.xlu0 %4340
    %v4343 = vsel %vm1010, %v3295, 0
    %v4346 = vsel %vm3315, %v4341, 0
    %4348 = vmatpush.bf16.msra.mxu0 0
    %4349 = vmatpush.bf16.msra.mxu0 0
    %4350 = vmatpush.bf16.msra.mxu0 0
    %4351 = vmatpush.bf16.msra.mxu0 0
    %4352 = vmatpush.bf16.msra.mxu0 0
    %4353 = vmatpush.bf16.msra.mxu0 0
    %4354 = vmatpush.bf16.msra.mxu0 0
    %4355 = vmatpush.bf16.msra.mxu0 %v4346
    %4356 = vmatmul.bf16.gmra.mxu0 %v4343
    %v4357 = vpop.f32.mrf.mxu0
    %v4358 = vadd.f32 0.0, %v4357
    %v4359 = vpop.f32.mrf.mxu0
    %4360 = vdwg.mxu0
    %4361 = vrot.lane.b32.xlu0 %v2208, 64
    %v4362 = vpop.permute.xlu0 %4361
    %v4364 = vsel %vm1010, %v3296, 0
    %v4367 = vsel %vm3315, %v4362, 0
    %4369 = vmatpush.bf16.msra.mxu0 0
    %4370 = vmatpush.bf16.msra.mxu0 0
    %4371 = vmatpush.bf16.msra.mxu0 0
    %4372 = vmatpush.bf16.msra.mxu0 0
    %4373 = vmatpush.bf16.msra.mxu0 0
    %4374 = vmatpush.bf16.msra.mxu0 0
    %4375 = vmatpush.bf16.msra.mxu0 0
    %4376 = vmatpush.bf16.msra.mxu0 %v4367
    %4377 = vmatmul.bf16.gmra.mxu0 %v4364
    %v4378 = vpop.f32.mrf.mxu0
    %v4379 = vadd.f32 0.0, %v4378
    %v4380 = vpop.f32.mrf.mxu0
    %4381 = vdwg.mxu0
    %4382 = vrot.lane.b32.xlu0 %v2232, 64
    %v4383 = vpop.permute.xlu0 %4382
    %v4385 = vsel %vm1010, %v3297, 0
    %v4388 = vsel %vm3315, %v4383, 0
    %4390 = vmatpush.bf16.msra.mxu0 0
    %4391 = vmatpush.bf16.msra.mxu0 0
    %4392 = vmatpush.bf16.msra.mxu0 0
    %4393 = vmatpush.bf16.msra.mxu0 0
    %4394 = vmatpush.bf16.msra.mxu0 0
    %4395 = vmatpush.bf16.msra.mxu0 0
    %4396 = vmatpush.bf16.msra.mxu0 0
    %4397 = vmatpush.bf16.msra.mxu0 %v4388
    %4398 = vmatmul.bf16.gmra.mxu0 %v4385
    %v4399 = vpop.f32.mrf.mxu0
    %v4400 = vadd.f32 0.0, %v4399
    %v4401 = vpop.f32.mrf.mxu0
    %4402 = vdwg.mxu0
    %4403 = vrot.lane.b32.xlu0 %v2256, 64
    %v4404 = vpop.permute.xlu0 %4403
    %v4406 = vsel %vm1010, %v3298, 0
    %v4409 = vsel %vm3315, %v4404, 0
    %4411 = vmatpush.bf16.msra.mxu0 0
    %4412 = vmatpush.bf16.msra.mxu0 0
    %4413 = vmatpush.bf16.msra.mxu0 0
    %4414 = vmatpush.bf16.msra.mxu0 0
    %4415 = vmatpush.bf16.msra.mxu0 0
    %4416 = vmatpush.bf16.msra.mxu0 0
    %4417 = vmatpush.bf16.msra.mxu0 0
    %4418 = vmatpush.bf16.msra.mxu0 %v4409
    %4419 = vmatmul.bf16.gmra.mxu0 %v4406
    %v4420 = vpop.f32.mrf.mxu0
    %v4421 = vadd.f32 0.0, %v4420
    %v4422 = vpop.f32.mrf.mxu0
    %4423 = vdwg.mxu0
    %4424 = vrot.lane.b32.xlu0 %v2280, 64
    %v4425 = vpop.permute.xlu0 %4424
    %v4427 = vsel %vm1010, %v3299, 0
    %v4430 = vsel %vm3315, %v4425, 0
    %4432 = vmatpush.bf16.msra.mxu0 0
    %4433 = vmatpush.bf16.msra.mxu0 0
    %4434 = vmatpush.bf16.msra.mxu0 0
    %4435 = vmatpush.bf16.msra.mxu0 0
    %4436 = vmatpush.bf16.msra.mxu0 0
    %4437 = vmatpush.bf16.msra.mxu0 0
    %4438 = vmatpush.bf16.msra.mxu0 0
    %4439 = vmatpush.bf16.msra.mxu0 %v4430
    %4440 = vmatmul.bf16.gmra.mxu0 %v4427
    %v4441 = vpop.f32.mrf.mxu0
    %v4442 = vadd.f32 0.0, %v4441
    %v4443 = vpop.f32.mrf.mxu0
    %4444 = vdwg.mxu0
    %4445 = vrot.lane.b32.xlu0 %v2304, 64
    %v4446 = vpop.permute.xlu0 %4445
    %v4448 = vsel %vm1010, %v3300, 0
    %v4451 = vsel %vm3315, %v4446, 0
    %4453 = vmatpush.bf16.msra.mxu0 0
    %4454 = vmatpush.bf16.msra.mxu0 0
    %4455 = vmatpush.bf16.msra.mxu0 0
    %4456 = vmatpush.bf16.msra.mxu0 0
    %4457 = vmatpush.bf16.msra.mxu0 0
    %4458 = vmatpush.bf16.msra.mxu0 0
    %4459 = vmatpush.bf16.msra.mxu0 0
    %4460 = vmatpush.bf16.msra.mxu0 %v4451
    %4461 = vmatmul.bf16.gmra.mxu0 %v4448
    %v4462 = vpop.f32.mrf.mxu0
    %v4463 = vadd.f32 0.0, %v4462
    %v4464 = vpop.f32.mrf.mxu0
    %4465 = vdwg.mxu0
    %4466 = vrot.lane.b32.xlu0 %v2328, 64
    %v4467 = vpop.permute.xlu0 %4466
    %v4469 = vsel %vm1010, %v3301, 0
    %v4472 = vsel %vm3315, %v4467, 0
    %4474 = vmatpush.bf16.msra.mxu0 0
    %4475 = vmatpush.bf16.msra.mxu0 0
    %4476 = vmatpush.bf16.msra.mxu0 0
    %4477 = vmatpush.bf16.msra.mxu0 0
    %4478 = vmatpush.bf16.msra.mxu0 0
    %4479 = vmatpush.bf16.msra.mxu0 0
    %4480 = vmatpush.bf16.msra.mxu0 0
    %4481 = vmatpush.bf16.msra.mxu0 %v4472
    %4482 = vmatmul.bf16.gmra.mxu0 %v4469
    %v4483 = vpop.f32.mrf.mxu0
    %v4484 = vadd.f32 0.0, %v4483
    %v4485 = vpop.f32.mrf.mxu0
    %4486 = vdwg.mxu0
    %4487 = vrot.lane.b32.xlu0 %v2352, 64
    %v4488 = vpop.permute.xlu0 %4487
    %v4490 = vsel %vm1010, %v3302, 0
    %v4493 = vsel %vm3315, %v4488, 0
    %4495 = vmatpush.bf16.msra.mxu0 0
    %4496 = vmatpush.bf16.msra.mxu0 0
    %4497 = vmatpush.bf16.msra.mxu0 0
    %4498 = vmatpush.bf16.msra.mxu0 0
    %4499 = vmatpush.bf16.msra.mxu0 0
    %4500 = vmatpush.bf16.msra.mxu0 0
    %4501 = vmatpush.bf16.msra.mxu0 0
    %4502 = vmatpush.bf16.msra.mxu0 %v4493
    %4503 = vmatmul.bf16.gmra.mxu0 %v4490
    %v4504 = vpop.f32.mrf.mxu0
    %v4505 = vadd.f32 0.0, %v4504
    %v4506 = vpop.f32.mrf.mxu0
    %4507 = vdwg.mxu0
    %4508 = vrot.lane.b32.xlu0 %v2376, 64
    %v4509 = vpop.permute.xlu0 %4508
    %v4511 = vsel %vm1010, %v3303, 0
    %v4514 = vsel %vm3315, %v4509, 0
    %4516 = vmatpush.bf16.msra.mxu0 0
    %4517 = vmatpush.bf16.msra.mxu0 0
    %4518 = vmatpush.bf16.msra.mxu0 0
    %4519 = vmatpush.bf16.msra.mxu0 0
    %4520 = vmatpush.bf16.msra.mxu0 0
    %4521 = vmatpush.bf16.msra.mxu0 0
    %4522 = vmatpush.bf16.msra.mxu0 0
    %4523 = vmatpush.bf16.msra.mxu0 %v4514
    %4524 = vmatmul.bf16.gmra.mxu0 %v4511
    %v4525 = vpop.f32.mrf.mxu0
    %v4526 = vadd.f32 0.0, %v4525
    %v4527 = vpop.f32.mrf.mxu0
    %4528 = vdwg.mxu0
    %4529 = vrot.lane.b32.xlu0 %v2400, 64
    %v4530 = vpop.permute.xlu0 %4529
    %v4532 = vsel %vm1010, %v3304, 0
    %v4535 = vsel %vm3315, %v4530, 0
    %4537 = vmatpush.bf16.msra.mxu0 0
    %4538 = vmatpush.bf16.msra.mxu0 0
    %4539 = vmatpush.bf16.msra.mxu0 0
    %4540 = vmatpush.bf16.msra.mxu0 0
    %4541 = vmatpush.bf16.msra.mxu0 0
    %4542 = vmatpush.bf16.msra.mxu0 0
    %4543 = vmatpush.bf16.msra.mxu0 0
    %4544 = vmatpush.bf16.msra.mxu0 %v4535
    %4545 = vmatmul.bf16.gmra.mxu0 %v4532
    %v4546 = vpop.f32.mrf.mxu0
    %v4547 = vadd.f32 0.0, %v4546
    %v4548 = vpop.f32.mrf.mxu0
    %4549 = vdwg.mxu0
    %4550 = vrot.lane.b32.xlu0 %v2424, 64
    %v4551 = vpop.permute.xlu0 %4550
    %v4553 = vsel %vm1010, %v3305, 0
    %v4556 = vsel %vm3315, %v4551, 0
    %4558 = vmatpush.bf16.msra.mxu0 0
    %4559 = vmatpush.bf16.msra.mxu0 0
    %4560 = vmatpush.bf16.msra.mxu0 0
    %4561 = vmatpush.bf16.msra.mxu0 0
    %4562 = vmatpush.bf16.msra.mxu0 0
    %4563 = vmatpush.bf16.msra.mxu0 0
    %4564 = vmatpush.bf16.msra.mxu0 0
    %4565 = vmatpush.bf16.msra.mxu0 %v4556
    %4566 = vmatmul.bf16.gmra.mxu0 %v4553
    %v4567 = vpop.f32.mrf.mxu0
    %v4568 = vadd.f32 0.0, %v4567
    %v4569 = vpop.f32.mrf.mxu0
    %4570 = vdwg.mxu0
    %4571 = vrot.lane.b32.xlu0 %v2448, 64
    %v4572 = vpop.permute.xlu0 %4571
    %v4574 = vsel %vm1010, %v3306, 0
    %v4577 = vsel %vm3315, %v4572, 0
    %4579 = vmatpush.bf16.msra.mxu0 0
    %4580 = vmatpush.bf16.msra.mxu0 0
    %4581 = vmatpush.bf16.msra.mxu0 0
    %4582 = vmatpush.bf16.msra.mxu0 0
    %4583 = vmatpush.bf16.msra.mxu0 0
    %4584 = vmatpush.bf16.msra.mxu0 0
    %4585 = vmatpush.bf16.msra.mxu0 0
    %4586 = vmatpush.bf16.msra.mxu0 %v4577
    %4587 = vmatmul.bf16.gmra.mxu0 %v4574
    %v4588 = vpop.f32.mrf.mxu0
    %v4589 = vadd.f32 0.0, %v4588
    %v4590 = vpop.f32.mrf.mxu0
    %4591 = vdwg.mxu0
    %4592 = vrot.lane.b32.xlu0 %v2472, 64
    %v4593 = vpop.permute.xlu0 %4592
    %v4595 = vsel %vm1010, %v3307, 0
    %v4598 = vsel %vm3315, %v4593, 0
    %4600 = vmatpush.bf16.msra.mxu0 0
    %4601 = vmatpush.bf16.msra.mxu0 0
    %4602 = vmatpush.bf16.msra.mxu0 0
    %4603 = vmatpush.bf16.msra.mxu0 0
    %4604 = vmatpush.bf16.msra.mxu0 0
    %4605 = vmatpush.bf16.msra.mxu0 0
    %4606 = vmatpush.bf16.msra.mxu0 0
    %4607 = vmatpush.bf16.msra.mxu0 %v4598
    %4608 = vmatmul.bf16.gmra.mxu0 %v4595
    %v4609 = vpop.f32.mrf.mxu0
    %v4610 = vadd.f32 0.0, %v4609
    %v4611 = vpop.f32.mrf.mxu0
    %4612 = vdwg.mxu0
    %4613 = vrot.lane.b32.xlu0 %v2496, 64
    %v4614 = vpop.permute.xlu0 %4613
    %v4616 = vsel %vm1010, %v3308, 0
    %v4619 = vsel %vm3315, %v4614, 0
    %4621 = vmatpush.bf16.msra.mxu0 0
    %4622 = vmatpush.bf16.msra.mxu0 0
    %4623 = vmatpush.bf16.msra.mxu0 0
    %4624 = vmatpush.bf16.msra.mxu0 0
    %4625 = vmatpush.bf16.msra.mxu0 0
    %4626 = vmatpush.bf16.msra.mxu0 0
    %4627 = vmatpush.bf16.msra.mxu0 0
    %4628 = vmatpush.bf16.msra.mxu0 %v4619
    %4629 = vmatmul.bf16.gmra.mxu0 %v4616
    %v4630 = vpop.f32.mrf.mxu0
    %v4631 = vadd.f32 0.0, %v4630
    %v4632 = vpop.f32.mrf.mxu0
    %4633 = vdwg.mxu0
    %4634 = vrot.lane.b32.xlu0 %v2520, 64
    %v4635 = vpop.permute.xlu0 %4634
    %v4637 = vsel %vm1010, %v3309, 0
    %v4640 = vsel %vm3315, %v4635, 0
    %4642 = vmatpush.bf16.msra.mxu0 0
    %4643 = vmatpush.bf16.msra.mxu0 0
    %4644 = vmatpush.bf16.msra.mxu0 0
    %4645 = vmatpush.bf16.msra.mxu0 0
    %4646 = vmatpush.bf16.msra.mxu0 0
    %4647 = vmatpush.bf16.msra.mxu0 0
    %4648 = vmatpush.bf16.msra.mxu0 0
    %4649 = vmatpush.bf16.msra.mxu0 %v4640
    %4650 = vmatmul.bf16.gmra.mxu0 %v4637
    %v4651 = vpop.f32.mrf.mxu0
    %v4652 = vadd.f32 0.0, %v4651
    %v4653 = vpop.f32.mrf.mxu0
    %4654 = vdwg.mxu0
    %4671 = vrot.lane.b32.xlu0 %v3665, 8
    %v4672 = vpop.permute.xlu0 %4671
    %4673 = vrot.lane.b32.xlu0 %v3686, 8
    %v4674 = vpop.permute.xlu0 %4673
    %4675 = vrot.lane.b32.xlu0 %v3707, 8
    %v4676 = vpop.permute.xlu0 %4675
    %4677 = vrot.lane.b32.xlu0 %v3728, 8
    %v4678 = vpop.permute.xlu0 %4677
    %4679 = vrot.lane.b32.xlu0 %v3749, 8
    %v4680 = vpop.permute.xlu0 %4679
    %4681 = vrot.lane.b32.xlu0 %v3770, 8
    %v4682 = vpop.permute.xlu0 %4681
    %4683 = vrot.lane.b32.xlu0 %v3791, 8
    %v4684 = vpop.permute.xlu0 %4683
    %4685 = vrot.lane.b32.xlu0 %v3812, 8
    %v4686 = vpop.permute.xlu0 %4685
    %4687 = vrot.lane.b32.xlu0 %v3833, 8
    %v4688 = vpop.permute.xlu0 %4687
    %4689 = vrot.lane.b32.xlu0 %v3854, 8
    %v4690 = vpop.permute.xlu0 %4689
    %4691 = vrot.lane.b32.xlu0 %v3875, 8
    %v4692 = vpop.permute.xlu0 %4691
    %4693 = vrot.lane.b32.xlu0 %v3896, 8
    %v4694 = vpop.permute.xlu0 %4693
    %4695 = vrot.lane.b32.xlu0 %v3917, 8
    %v4696 = vpop.permute.xlu0 %4695
    %4697 = vrot.lane.b32.xlu0 %v3938, 8
    %v4698 = vpop.permute.xlu0 %4697
    %4699 = vrot.lane.b32.xlu0 %v3959, 8
    %v4700 = vpop.permute.xlu0 %4699
    %4701 = vrot.lane.b32.xlu0 %v3980, 8
    %v4702 = vpop.permute.xlu0 %4701
    %4735 = vrot.lane.b32.xlu0 %v4001, 16
    %v4736 = vpop.permute.xlu0 %4735
    %4737 = vrot.lane.b32.xlu0 %v4022, 16
    %v4738 = vpop.permute.xlu0 %4737
    %4739 = vrot.lane.b32.xlu0 %v4043, 16
    %v4740 = vpop.permute.xlu0 %4739
    %4741 = vrot.lane.b32.xlu0 %v4064, 16
    %v4742 = vpop.permute.xlu0 %4741
    %4743 = vrot.lane.b32.xlu0 %v4085, 16
    %v4744 = vpop.permute.xlu0 %4743
    %4745 = vrot.lane.b32.xlu0 %v4106, 16
    %v4746 = vpop.permute.xlu0 %4745
    %4747 = vrot.lane.b32.xlu0 %v4127, 16
    %v4748 = vpop.permute.xlu0 %4747
    %4749 = vrot.lane.b32.xlu0 %v4148, 16
    %v4750 = vpop.permute.xlu0 %4749
    %4751 = vrot.lane.b32.xlu0 %v4169, 16
    %v4752 = vpop.permute.xlu0 %4751
    %4753 = vrot.lane.b32.xlu0 %v4190, 16
    %v4754 = vpop.permute.xlu0 %4753
    %4755 = vrot.lane.b32.xlu0 %v4211, 16
    %v4756 = vpop.permute.xlu0 %4755
    %4757 = vrot.lane.b32.xlu0 %v4232, 16
    %v4758 = vpop.permute.xlu0 %4757
    %4759 = vrot.lane.b32.xlu0 %v4253, 16
    %v4760 = vpop.permute.xlu0 %4759
    %4761 = vrot.lane.b32.xlu0 %v4274, 16
    %v4762 = vpop.permute.xlu0 %4761
    %4763 = vrot.lane.b32.xlu0 %v4295, 16
    %v4764 = vpop.permute.xlu0 %4763
    %4765 = vrot.lane.b32.xlu0 %v4316, 16
    %v4766 = vpop.permute.xlu0 %4765
    %4799 = vrot.lane.b32.xlu0 %v4337, 24
    %v4800 = vpop.permute.xlu0 %4799
    %4801 = vrot.lane.b32.xlu0 %v4358, 24
    %v4802 = vpop.permute.xlu0 %4801
    %4803 = vrot.lane.b32.xlu0 %v4379, 24
    %v4804 = vpop.permute.xlu0 %4803
    %4805 = vrot.lane.b32.xlu0 %v4400, 24
    %v4806 = vpop.permute.xlu0 %4805
    %4807 = vrot.lane.b32.xlu0 %v4421, 24
    %v4808 = vpop.permute.xlu0 %4807
    %4809 = vrot.lane.b32.xlu0 %v4442, 24
    %v4810 = vpop.permute.xlu0 %4809
    %4811 = vrot.lane.b32.xlu0 %v4463, 24
    %v4812 = vpop.permute.xlu0 %4811
    %4813 = vrot.lane.b32.xlu0 %v4484, 24
    %v4814 = vpop.permute.xlu0 %4813
    %4815 = vrot.lane.b32.xlu0 %v4505, 24
    %v4816 = vpop.permute.xlu0 %4815
    %4817 = vrot.lane.b32.xlu0 %v4526, 24
    %v4818 = vpop.permute.xlu0 %4817
    %4819 = vrot.lane.b32.xlu0 %v4547, 24
    %v4820 = vpop.permute.xlu0 %4819
    %4821 = vrot.lane.b32.xlu0 %v4568, 24
    %v4822 = vpop.permute.xlu0 %4821
    %4823 = vrot.lane.b32.xlu0 %v4589, 24
    %v4824 = vpop.permute.xlu0 %4823
    %4825 = vrot.lane.b32.xlu0 %v4610, 24
    %v4826 = vpop.permute.xlu0 %4825
    %4827 = vrot.lane.b32.xlu0 %v4631, 24
    %v4828 = vpop.permute.xlu0 %4827
    %4829 = vrot.lane.b32.xlu0 %v4652, 24
    %v4830 = vpop.permute.xlu0 %4829
    %v4847 = vsel %vm1010, %v3329, %v4672
    %v4848 = vsel %vm1010, %v3350, %v4674
    %v4849 = vsel %vm1010, %v3371, %v4676
    %v4850 = vsel %vm1010, %v3392, %v4678
    %v4851 = vsel %vm1010, %v3413, %v4680
    %v4852 = vsel %vm1010, %v3434, %v4682
    %v4853 = vsel %vm1010, %v3455, %v4684
    %v4854 = vsel %vm1010, %v3476, %v4686
    %v4855 = vsel %vm1010, %v3497, %v4688
    %v4856 = vsel %vm1010, %v3518, %v4690
    %v4857 = vsel %vm1010, %v3539, %v4692
    %v4858 = vsel %vm1010, %v3560, %v4694
    %v4859 = vsel %vm1010, %v3581, %v4696
    %v4860 = vsel %vm1010, %v3602, %v4698
    %v4861 = vsel %vm1010, %v3623, %v4700
    %v4862 = vsel %vm1010, %v3644, %v4702
    %vm4863 = vcmask 130048
    %v4864 = vsel %vm4863, %v4847, %v4736
    %v4865 = vsel %vm4863, %v4848, %v4738
    %v4866 = vsel %vm4863, %v4849, %v4740
    %v4867 = vsel %vm4863, %v4850, %v4742
    %v4868 = vsel %vm4863, %v4851, %v4744
    %v4869 = vsel %vm4863, %v4852, %v4746
    %v4870 = vsel %vm4863, %v4853, %v4748
    %v4871 = vsel %vm4863, %v4854, %v4750
    %v4872 = vsel %vm4863, %v4855, %v4752
    %v4873 = vsel %vm4863, %v4856, %v4754
    %v4874 = vsel %vm4863, %v4857, %v4756
    %v4875 = vsel %vm4863, %v4858, %v4758
    %v4876 = vsel %vm4863, %v4859, %v4760
    %v4877 = vsel %vm4863, %v4860, %v4762
    %v4878 = vsel %vm4863, %v4861, %v4764
    %v4879 = vsel %vm4863, %v4862, %v4766
    %vm4880 = vcmask 195584
    %v4881 = vsel %vm4880, %v4864, %v4800
    %v4882 = vsel %vm4880, %v4865, %v4802
    %v4883 = vsel %vm4880, %v4866, %v4804
    %v4884 = vsel %vm4880, %v4867, %v4806
    %v4885 = vsel %vm4880, %v4868, %v4808
    %v4886 = vsel %vm4880, %v4869, %v4810
    %v4887 = vsel %vm4880, %v4870, %v4812
    %v4888 = vsel %vm4880, %v4871, %v4814
    %v4889 = vsel %vm4880, %v4872, %v4816
    %v4890 = vsel %vm4880, %v4873, %v4818
    %v4891 = vsel %vm4880, %v4874, %v4820
    %v4892 = vsel %vm4880, %v4875, %v4822
    %v4893 = vsel %vm4880, %v4876, %v4824
    %v4894 = vsel %vm4880, %v4877, %v4826
    %v4895 = vsel %vm4880, %v4878, %v4828
    %v4896 = vsel %vm4880, %v4879, %v4830
    %v4897 = vpack.c.bf16 %v4882, %v4881
    %v4898 = vpack.c.bf16 %v4884, %v4883
    %v4899 = vpack.c.bf16 %v4886, %v4885
    %v4900 = vpack.c.bf16 %v4888, %v4887
    %v4901 = vpack.c.bf16 %v4890, %v4889
    %v4902 = vpack.c.bf16 %v4892, %v4891
    %v4903 = vpack.c.bf16 %v4894, %v4893
    %v4904 = vpack.c.bf16 %v4896, %v4895
    %s4905 = scalar_lea.vmem [#allocation8], 16
    %v4906 = vld [vmem:[%s4905] sm:$0xf]
    %v4907 = vld [vmem:[%s4905 + $0x4] sm:$0xf]
    %v4908 = vld [vmem:[%s4905 + $0x8] sm:$0xf]
    %v4909 = vld [vmem:[%s4905 + $0xc] sm:$0xf]
    %v4914 = vunpack.c.l.b16 %v4906
    %v4915 = vunpack.c.l.b16 %v4907
    %v4916 = vunpack.c.l.b16 %v4908
    %v4917 = vunpack.c.l.b16 %v4909
    %v4918 = vpack.c.b16 %v4915, %v4914
    %v4919 = vpack.c.b16 %v4917, %v4916
    %v4923 = vsel %vm161, %v4897, 0
    %v4926 = vsel %vm161, %v4898, 0
    %v4929 = vsel %vm161, %v4899, 0
    %v4932 = vsel %vm161, %v4900, 0
    %v4935 = vsel %vm161, %v4901, 0
    %v4938 = vsel %vm161, %v4902, 0
    %v4941 = vsel %vm161, %v4903, 0
    %v4944 = vsel %vm161, %v4904, 0
    %4946 = vmatpush.bf16.msra.mxu0 0
    %4947 = vmatpush.bf16.msra.mxu0 0
    %4948 = vmatpush.bf16.msra.mxu0 0
    %4949 = vmatpush.bf16.msra.mxu0 0
    %4950 = vmatpush.bf16.msra.mxu0 0
    %4951 = vmatpush.bf16.msra.mxu0 0
    %4952 = vmatpush.bf16.msra.mxu0 %v4919
    %4953 = vmatpush.bf16.msra.mxu0 %v4918
    %4954 = vmatmul.bf16.gmra.mxu0 %v4923
    %v4955 = vpop.f32.mrf.mxu0
    %v4956 = vadd.f32 0.0, %v4955
    %v4957 = vpop.f32.mrf.mxu0
    %v4958 = vadd.f32 0.0, %v4957
    %4959 = vmatmul.bf16.gmra.mxu0 %v4926
    %v4960 = vpop.f32.mrf.mxu0
    %v4961 = vadd.f32 0.0, %v4960
    %v4962 = vpop.f32.mrf.mxu0
    %v4963 = vadd.f32 0.0, %v4962
    %4964 = vmatmul.bf16.gmra.mxu0 %v4929
    %v4965 = vpop.f32.mrf.mxu0
    %v4966 = vadd.f32 0.0, %v4965
    %v4967 = vpop.f32.mrf.mxu0
    %v4968 = vadd.f32 0.0, %v4967
    %4969 = vmatmul.bf16.gmra.mxu0 %v4932
    %v4970 = vpop.f32.mrf.mxu0
    %v4971 = vadd.f32 0.0, %v4970
    %v4972 = vpop.f32.mrf.mxu0
    %v4973 = vadd.f32 0.0, %v4972
    %4974 = vmatmul.bf16.gmra.mxu0 %v4935
    %v4975 = vpop.f32.mrf.mxu0
    %v4976 = vadd.f32 0.0, %v4975
    %v4977 = vpop.f32.mrf.mxu0
    %v4978 = vadd.f32 0.0, %v4977
    %4979 = vmatmul.bf16.gmra.mxu0 %v4938
    %v4980 = vpop.f32.mrf.mxu0
    %v4981 = vadd.f32 0.0, %v4980
    %v4982 = vpop.f32.mrf.mxu0
    %v4983 = vadd.f32 0.0, %v4982
    %4984 = vmatmul.bf16.gmra.mxu0 %v4941
    %v4985 = vpop.f32.mrf.mxu0
    %v4986 = vadd.f32 0.0, %v4985
    %v4987 = vpop.f32.mrf.mxu0
    %v4988 = vadd.f32 0.0, %v4987
    %4989 = vmatmul.bf16.gmra.mxu0 %v4944
    %v4990 = vpop.f32.mrf.mxu0
    %v4991 = vadd.f32 0.0, %v4990
    %v4992 = vpop.f32.mrf.mxu0
    %v4993 = vadd.f32 0.0, %v4992
    %4994 = vdwg.mxu0
    %v4995 = vperm.slane %v100, 1
    %v4996 = vadd.f32 %v4956, %v4995
    %v4997 = vadd.f32 %v4958, %v4995
    %v4998 = vadd.f32 %v4961, %v4995
    %v4999 = vadd.f32 %v4963, %v4995
    %v5000 = vadd.f32 %v4966, %v4995
    %v5001 = vadd.f32 %v4968, %v4995
    %v5002 = vadd.f32 %v4971, %v4995
    %v5003 = vadd.f32 %v4973, %v4995
    %v5004 = vadd.f32 %v4976, %v4995
    %v5005 = vadd.f32 %v4978, %v4995
    %v5006 = vadd.f32 %v4981, %v4995
    %v5007 = vadd.f32 %v4983, %v4995
    %v5008 = vadd.f32 %v4986, %v4995
    %v5009 = vadd.f32 %v4988, %v4995
    %v5010 = vadd.f32 %v4991, %v4995
    %v5011 = vadd.f32 %v4993, %v4995
    %v5012 = vadd.f32 %v102, %v4996
    %v5013 = vadd.f32 %v103, %v4997
    %v5014 = vadd.f32 %v104, %v4998
    %v5015 = vadd.f32 %v105, %v4999
    %v5016 = vadd.f32 %v106, %v5000
    %v5017 = vadd.f32 %v107, %v5001
    %v5018 = vadd.f32 %v108, %v5002
    %v5019 = vadd.f32 %v109, %v5003
    %v5020 = vadd.f32 %v110, %v5004
    %v5021 = vadd.f32 %v111, %v5005
    %v5022 = vadd.f32 %v112, %v5006
    %v5023 = vadd.f32 %v113, %v5007
    %v5024 = vadd.f32 %v114, %v5008
    %v5025 = vadd.f32 %v115, %v5009
    %v5026 = vadd.f32 %v116, %v5010
    %v5027 = vadd.f32 %v117, %v5011
    %v5028 = vsel %vm161, %v5012, 0.0
    %5029 = vadd.xlane.f32.xlu0 %v5028
    %v5030 = vpop.xlane.xlu0 %5029
    %v5031 = vsel %vm161, %v5013, 0.0
    %5032 = vadd.xlane.f32.xlu0 %v5031
    %v5033 = vpop.xlane.xlu0 %5032
    %v5034 = vsel %vm161, %v5014, 0.0
    %5035 = vadd.xlane.f32.xlu0 %v5034
    %v5036 = vpop.xlane.xlu0 %5035
    %v5037 = vsel %vm161, %v5015, 0.0
    %5038 = vadd.xlane.f32.xlu0 %v5037
    %v5039 = vpop.xlane.xlu0 %5038
    %v5040 = vsel %vm161, %v5016, 0.0
    %5041 = vadd.xlane.f32.xlu0 %v5040
    %v5042 = vpop.xlane.xlu0 %5041
    %v5043 = vsel %vm161, %v5017, 0.0
    %5044 = vadd.xlane.f32.xlu0 %v5043
    %v5045 = vpop.xlane.xlu0 %5044
    %v5046 = vsel %vm161, %v5018, 0.0
    %5047 = vadd.xlane.f32.xlu0 %v5046
    %v5048 = vpop.xlane.xlu0 %5047
    %v5049 = vsel %vm161, %v5019, 0.0
    %5050 = vadd.xlane.f32.xlu0 %v5049
    %v5051 = vpop.xlane.xlu0 %5050
    %v5052 = vsel %vm161, %v5020, 0.0
    %5053 = vadd.xlane.f32.xlu0 %v5052
    %v5054 = vpop.xlane.xlu0 %5053
    %v5055 = vsel %vm161, %v5021, 0.0
    %5056 = vadd.xlane.f32.xlu0 %v5055
    %v5057 = vpop.xlane.xlu0 %5056
    %v5058 = vsel %vm161, %v5022, 0.0
    %5059 = vadd.xlane.f32.xlu0 %v5058
    %v5060 = vpop.xlane.xlu0 %5059
    %v5061 = vsel %vm161, %v5023, 0.0
    %5062 = vadd.xlane.f32.xlu0 %v5061
    %v5063 = vpop.xlane.xlu0 %5062
    %v5064 = vsel %vm161, %v5024, 0.0
    %5065 = vadd.xlane.f32.xlu0 %v5064
    %v5066 = vpop.xlane.xlu0 %5065
    %v5067 = vsel %vm161, %v5025, 0.0
    %5068 = vadd.xlane.f32.xlu0 %v5067
    %v5069 = vpop.xlane.xlu0 %5068
    %v5070 = vsel %vm161, %v5026, 0.0
    %5071 = vadd.xlane.f32.xlu0 %v5070
    %v5072 = vpop.xlane.xlu0 %5071
    %v5073 = vsel %vm161, %v5027, 0.0
    %5074 = vadd.xlane.f32.xlu0 %v5073
    %v5075 = vpop.xlane.xlu0 %5074
    %v5076 = vmul.f32 %v5030, %v216
    %v5077 = vmul.f32 %v5033, %v216
    %v5078 = vmul.f32 %v5036, %v216
    %v5079 = vmul.f32 %v5039, %v216
    %v5080 = vmul.f32 %v5042, %v216
    %v5081 = vmul.f32 %v5045, %v216
    %v5082 = vmul.f32 %v5048, %v216
    %v5083 = vmul.f32 %v5051, %v216
    %v5084 = vmul.f32 %v5054, %v216
    %v5085 = vmul.f32 %v5057, %v216
    %v5086 = vmul.f32 %v5060, %v216
    %v5087 = vmul.f32 %v5063, %v216
    %v5088 = vmul.f32 %v5066, %v216
    %v5089 = vmul.f32 %v5069, %v216
    %v5090 = vmul.f32 %v5072, %v216
    %v5091 = vmul.f32 %v5075, %v216
    %v5092 = vsub.f32 %v5012, %v5076
    %v5093 = vsub.f32 %v5013, %v5077
    %v5094 = vsub.f32 %v5014, %v5078
    %v5095 = vsub.f32 %v5015, %v5079
    %v5096 = vsub.f32 %v5016, %v5080
    %v5097 = vsub.f32 %v5017, %v5081
    %v5098 = vsub.f32 %v5018, %v5082
    %v5099 = vsub.f32 %v5019, %v5083
    %v5100 = vsub.f32 %v5020, %v5084
    %v5101 = vsub.f32 %v5021, %v5085
    %v5102 = vsub.f32 %v5022, %v5086
    %v5103 = vsub.f32 %v5023, %v5087
    %v5104 = vsub.f32 %v5024, %v5088
    %v5105 = vsub.f32 %v5025, %v5089
    %v5106 = vsub.f32 %v5026, %v5090
    %v5107 = vsub.f32 %v5027, %v5091
    %v5108 = vmul.f32 %v5092, %v5092
    %v5109 = vmul.f32 %v5093, %v5093
    %v5110 = vmul.f32 %v5094, %v5094
    %v5111 = vmul.f32 %v5095, %v5095
    %v5112 = vmul.f32 %v5096, %v5096
    %v5113 = vmul.f32 %v5097, %v5097
    %v5114 = vmul.f32 %v5098, %v5098
    %v5115 = vmul.f32 %v5099, %v5099
    %v5116 = vmul.f32 %v5100, %v5100
    %v5117 = vmul.f32 %v5101, %v5101
    %v5118 = vmul.f32 %v5102, %v5102
    %v5119 = vmul.f32 %v5103, %v5103
    %v5120 = vmul.f32 %v5104, %v5104
    %v5121 = vmul.f32 %v5105, %v5105
    %v5122 = vmul.f32 %v5106, %v5106
    %v5123 = vmul.f32 %v5107, %v5107
    %v5124 = vsel %vm161, %v5108, 0.0
    %5125 = vadd.xlane.f32.xlu0 %v5124
    %v5126 = vpop.xlane.xlu0 %5125
    %v5127 = vsel %vm161, %v5109, 0.0
    %5128 = vadd.xlane.f32.xlu0 %v5127
    %v5129 = vpop.xlane.xlu0 %5128
    %v5130 = vsel %vm161, %v5110, 0.0
    %5131 = vadd.xlane.f32.xlu0 %v5130
    %v5132 = vpop.xlane.xlu0 %5131
    %v5133 = vsel %vm161, %v5111, 0.0
    %5134 = vadd.xlane.f32.xlu0 %v5133
    %v5135 = vpop.xlane.xlu0 %5134
    %v5136 = vsel %vm161, %v5112, 0.0
    %5137 = vadd.xlane.f32.xlu0 %v5136
    %v5138 = vpop.xlane.xlu0 %5137
    %v5139 = vsel %vm161, %v5113, 0.0
    %5140 = vadd.xlane.f32.xlu0 %v5139
    %v5141 = vpop.xlane.xlu0 %5140
    %v5142 = vsel %vm161, %v5114, 0.0
    %5143 = vadd.xlane.f32.xlu0 %v5142
    %v5144 = vpop.xlane.xlu0 %5143
    %v5145 = vsel %vm161, %v5115, 0.0
    %5146 = vadd.xlane.f32.xlu0 %v5145
    %v5147 = vpop.xlane.xlu0 %5146
    %v5148 = vsel %vm161, %v5116, 0.0
    %5149 = vadd.xlane.f32.xlu0 %v5148
    %v5150 = vpop.xlane.xlu0 %5149
    %v5151 = vsel %vm161, %v5117, 0.0
    %5152 = vadd.xlane.f32.xlu0 %v5151
    %v5153 = vpop.xlane.xlu0 %5152
    %v5154 = vsel %vm161, %v5118, 0.0
    %5155 = vadd.xlane.f32.xlu0 %v5154
    %v5156 = vpop.xlane.xlu0 %5155
    %v5157 = vsel %vm161, %v5119, 0.0
    %5158 = vadd.xlane.f32.xlu0 %v5157
    %v5159 = vpop.xlane.xlu0 %5158
    %v5160 = vsel %vm161, %v5120, 0.0
    %5161 = vadd.xlane.f32.xlu0 %v5160
    %v5162 = vpop.xlane.xlu0 %5161
    %v5163 = vsel %vm161, %v5121, 0.0
    %5164 = vadd.xlane.f32.xlu0 %v5163
    %v5165 = vpop.xlane.xlu0 %5164
    %v5166 = vsel %vm161, %v5122, 0.0
    %5167 = vadd.xlane.f32.xlu0 %v5166
    %v5168 = vpop.xlane.xlu0 %5167
    %v5169 = vsel %vm161, %v5123, 0.0
    %5170 = vadd.xlane.f32.xlu0 %v5169
    %v5171 = vpop.xlane.xlu0 %5170
    %v5172 = vmul.f32 %v5126, %v216
    %v5173 = vmul.f32 %v5129, %v216
    %v5174 = vmul.f32 %v5132, %v216
    %v5175 = vmul.f32 %v5135, %v216
    %v5176 = vmul.f32 %v5138, %v216
    %v5177 = vmul.f32 %v5141, %v216
    %v5178 = vmul.f32 %v5144, %v216
    %v5179 = vmul.f32 %v5147, %v216
    %v5180 = vmul.f32 %v5150, %v216
    %v5181 = vmul.f32 %v5153, %v216
    %v5182 = vmul.f32 %v5156, %v216
    %v5183 = vmul.f32 %v5159, %v216
    %v5184 = vmul.f32 %v5162, %v216
    %v5185 = vmul.f32 %v5165, %v216
    %v5186 = vmul.f32 %v5168, %v216
    %v5187 = vmul.f32 %v5171, %v216
    %v5188 = vadd.f32 %v5172, 1e-05
    %v5189 = vadd.f32 %v5173, 1e-05
    %v5190 = vadd.f32 %v5174, 1e-05
    %v5191 = vadd.f32 %v5175, 1e-05
    %v5192 = vadd.f32 %v5176, 1e-05
    %v5193 = vadd.f32 %v5177, 1e-05
    %v5194 = vadd.f32 %v5178, 1e-05
    %v5195 = vadd.f32 %v5179, 1e-05
    %v5196 = vadd.f32 %v5180, 1e-05
    %v5197 = vadd.f32 %v5181, 1e-05
    %v5198 = vadd.f32 %v5182, 1e-05
    %v5199 = vadd.f32 %v5183, 1e-05
    %v5200 = vadd.f32 %v5184, 1e-05
    %v5201 = vadd.f32 %v5185, 1e-05
    %v5202 = vadd.f32 %v5186, 1e-05
    %v5203 = vadd.f32 %v5187, 1e-05
    %v5204 = vrsqrt.pop %v5188
    %v5205 = vmul.f32 %v5204, %v5188
    %v5206 = vmul.f32 %v5205, %v5204
    %v5207 = vmul.f32 0.5, %v5206
    %v5208 = vsub.f32 1.5, %v5207
    %v5209 = vmul.f32 %v5204, %v5208
    %vm5210 = vweird.f32 %v5188
    %vm5211 = vweird.f32 %v5204
    %vm5212 = vmor %vm5210, %vm5211
    %v5213 = vsel %vm5212, %v5204, %v5209
    %v5214 = vrsqrt.pop %v5189
    %v5215 = vmul.f32 %v5214, %v5189
    %v5216 = vmul.f32 %v5215, %v5214
    %v5217 = vmul.f32 0.5, %v5216
    %v5218 = vsub.f32 1.5, %v5217
    %v5219 = vmul.f32 %v5214, %v5218
    %vm5220 = vweird.f32 %v5189
    %vm5221 = vweird.f32 %v5214
    %vm5222 = vmor %vm5220, %vm5221
    %v5223 = vsel %vm5222, %v5214, %v5219
    %v5224 = vrsqrt.pop %v5190
    %v5225 = vmul.f32 %v5224, %v5190
    %v5226 = vmul.f32 %v5225, %v5224
    %v5227 = vmul.f32 0.5, %v5226
    %v5228 = vsub.f32 1.5, %v5227
    %v5229 = vmul.f32 %v5224, %v5228
    %vm5230 = vweird.f32 %v5190
    %vm5231 = vweird.f32 %v5224
    %vm5232 = vmor %vm5230, %vm5231
    %v5233 = vsel %vm5232, %v5224, %v5229
    %v5234 = vrsqrt.pop %v5191
    %v5235 = vmul.f32 %v5234, %v5191
    %v5236 = vmul.f32 %v5235, %v5234
    %v5237 = vmul.f32 0.5, %v5236
    %v5238 = vsub.f32 1.5, %v5237
    %v5239 = vmul.f32 %v5234, %v5238
    %vm5240 = vweird.f32 %v5191
    %vm5241 = vweird.f32 %v5234
    %vm5242 = vmor %vm5240, %vm5241
    %v5243 = vsel %vm5242, %v5234, %v5239
    %v5244 = vrsqrt.pop %v5192
    %v5245 = vmul.f32 %v5244, %v5192
    %v5246 = vmul.f32 %v5245, %v5244
    %v5247 = vmul.f32 0.5, %v5246
    %v5248 = vsub.f32 1.5, %v5247
    %v5249 = vmul.f32 %v5244, %v5248
    %vm5250 = vweird.f32 %v5192
    %vm5251 = vweird.f32 %v5244
    %vm5252 = vmor %vm5250, %vm5251
    %v5253 = vsel %vm5252, %v5244, %v5249
    %v5254 = vrsqrt.pop %v5193
    %v5255 = vmul.f32 %v5254, %v5193
    %v5256 = vmul.f32 %v5255, %v5254
    %v5257 = vmul.f32 0.5, %v5256
    %v5258 = vsub.f32 1.5, %v5257
    %v5259 = vmul.f32 %v5254, %v5258
    %vm5260 = vweird.f32 %v5193
    %vm5261 = vweird.f32 %v5254
    %vm5262 = vmor %vm5260, %vm5261
    %v5263 = vsel %vm5262, %v5254, %v5259
    %v5264 = vrsqrt.pop %v5194
    %v5265 = vmul.f32 %v5264, %v5194
    %v5266 = vmul.f32 %v5265, %v5264
    %v5267 = vmul.f32 0.5, %v5266
    %v5268 = vsub.f32 1.5, %v5267
    %v5269 = vmul.f32 %v5264, %v5268
    %vm5270 = vweird.f32 %v5194
    %vm5271 = vweird.f32 %v5264
    %vm5272 = vmor %vm5270, %vm5271
    %v5273 = vsel %vm5272, %v5264, %v5269
    %v5274 = vrsqrt.pop %v5195
    %v5275 = vmul.f32 %v5274, %v5195
    %v5276 = vmul.f32 %v5275, %v5274
    %v5277 = vmul.f32 0.5, %v5276
    %v5278 = vsub.f32 1.5, %v5277
    %v5279 = vmul.f32 %v5274, %v5278
    %vm5280 = vweird.f32 %v5195
    %vm5281 = vweird.f32 %v5274
    %vm5282 = vmor %vm5280, %vm5281
    %v5283 = vsel %vm5282, %v5274, %v5279
    %v5284 = vrsqrt.pop %v5196
    %v5285 = vmul.f32 %v5284, %v5196
    %v5286 = vmul.f32 %v5285, %v5284
    %v5287 = vmul.f32 0.5, %v5286
    %v5288 = vsub.f32 1.5, %v5287
    %v5289 = vmul.f32 %v5284, %v5288
    %vm5290 = vweird.f32 %v5196
    %vm5291 = vweird.f32 %v5284
    %vm5292 = vmor %vm5290, %vm5291
    %v5293 = vsel %vm5292, %v5284, %v5289
    %v5294 = vrsqrt.pop %v5197
    %v5295 = vmul.f32 %v5294, %v5197
    %v5296 = vmul.f32 %v5295, %v5294
    %v5297 = vmul.f32 0.5, %v5296
    %v5298 = vsub.f32 1.5, %v5297
    %v5299 = vmul.f32 %v5294, %v5298
    %vm5300 = vweird.f32 %v5197
    %vm5301 = vweird.f32 %v5294
    %vm5302 = vmor %vm5300, %vm5301
    %v5303 = vsel %vm5302, %v5294, %v5299
    %v5304 = vrsqrt.pop %v5198
    %v5305 = vmul.f32 %v5304, %v5198
    %v5306 = vmul.f32 %v5305, %v5304
    %v5307 = vmul.f32 0.5, %v5306
    %v5308 = vsub.f32 1.5, %v5307
    %v5309 = vmul.f32 %v5304, %v5308
    %vm5310 = vweird.f32 %v5198
    %vm5311 = vweird.f32 %v5304
    %vm5312 = vmor %vm5310, %vm5311
    %v5313 = vsel %vm5312, %v5304, %v5309
    %v5314 = vrsqrt.pop %v5199
    %v5315 = vmul.f32 %v5314, %v5199
    %v5316 = vmul.f32 %v5315, %v5314
    %v5317 = vmul.f32 0.5, %v5316
    %v5318 = vsub.f32 1.5, %v5317
    %v5319 = vmul.f32 %v5314, %v5318
    %vm5320 = vweird.f32 %v5199
    %vm5321 = vweird.f32 %v5314
    %vm5322 = vmor %vm5320, %vm5321
    %v5323 = vsel %vm5322, %v5314, %v5319
    %v5324 = vrsqrt.pop %v5200
    %v5325 = vmul.f32 %v5324, %v5200
    %v5326 = vmul.f32 %v5325, %v5324
    %v5327 = vmul.f32 0.5, %v5326
    %v5328 = vsub.f32 1.5, %v5327
    %v5329 = vmul.f32 %v5324, %v5328
    %vm5330 = vweird.f32 %v5200
    %vm5331 = vweird.f32 %v5324
    %vm5332 = vmor %vm5330, %vm5331
    %v5333 = vsel %vm5332, %v5324, %v5329
    %v5334 = vrsqrt.pop %v5201
    %v5335 = vmul.f32 %v5334, %v5201
    %v5336 = vmul.f32 %v5335, %v5334
    %v5337 = vmul.f32 0.5, %v5336
    %v5338 = vsub.f32 1.5, %v5337
    %v5339 = vmul.f32 %v5334, %v5338
    %vm5340 = vweird.f32 %v5201
    %vm5341 = vweird.f32 %v5334
    %vm5342 = vmor %vm5340, %vm5341
    %v5343 = vsel %vm5342, %v5334, %v5339
    %v5344 = vrsqrt.pop %v5202
    %v5345 = vmul.f32 %v5344, %v5202
    %v5346 = vmul.f32 %v5345, %v5344
    %v5347 = vmul.f32 0.5, %v5346
    %v5348 = vsub.f32 1.5, %v5347
    %v5349 = vmul.f32 %v5344, %v5348
    %vm5350 = vweird.f32 %v5202
    %vm5351 = vweird.f32 %v5344
    %vm5352 = vmor %vm5350, %vm5351
    %v5353 = vsel %vm5352, %v5344, %v5349
    %v5354 = vrsqrt.pop %v5203
    %v5355 = vmul.f32 %v5354, %v5203
    %v5356 = vmul.f32 %v5355, %v5354
    %v5357 = vmul.f32 0.5, %v5356
    %v5358 = vsub.f32 1.5, %v5357
    %v5359 = vmul.f32 %v5354, %v5358
    %vm5360 = vweird.f32 %v5203
    %vm5361 = vweird.f32 %v5354
    %vm5362 = vmor %vm5360, %vm5361
    %v5363 = vsel %vm5362, %v5354, %v5359
    %v5364 = vmul.f32 %v5092, %v5213
    %v5365 = vmul.f32 %v5093, %v5223
    %v5366 = vmul.f32 %v5094, %v5233
    %v5367 = vmul.f32 %v5095, %v5243
    %v5368 = vmul.f32 %v5096, %v5253
    %v5369 = vmul.f32 %v5097, %v5263
    %v5370 = vmul.f32 %v5098, %v5273
    %v5371 = vmul.f32 %v5099, %v5283
    %v5372 = vmul.f32 %v5100, %v5293
    %v5373 = vmul.f32 %v5101, %v5303
    %v5374 = vmul.f32 %v5102, %v5313
    %v5375 = vmul.f32 %v5103, %v5323
    %v5376 = vmul.f32 %v5104, %v5333
    %v5377 = vmul.f32 %v5105, %v5343
    %v5378 = vmul.f32 %v5106, %v5353
    %v5379 = vmul.f32 %v5107, %v5363
    %v5380 = vperm.slane %v100, 7
    %v5381 = vmul.f32 %v5364, %v5380
    %v5382 = vmul.f32 %v5365, %v5380
    %v5383 = vmul.f32 %v5366, %v5380
    %v5384 = vmul.f32 %v5367, %v5380
    %v5385 = vmul.f32 %v5368, %v5380
    %v5386 = vmul.f32 %v5369, %v5380
    %v5387 = vmul.f32 %v5370, %v5380
    %v5388 = vmul.f32 %v5371, %v5380
    %v5389 = vmul.f32 %v5372, %v5380
    %v5390 = vmul.f32 %v5373, %v5380
    %v5391 = vmul.f32 %v5374, %v5380
    %v5392 = vmul.f32 %v5375, %v5380
    %v5393 = vmul.f32 %v5376, %v5380
    %v5394 = vmul.f32 %v5377, %v5380
    %v5395 = vmul.f32 %v5378, %v5380
    %v5396 = vmul.f32 %v5379, %v5380
    %v5397 = vperm.slane %v101, 0
    %v5398 = vadd.f32 %v5381, %v5397
    %v5399 = vadd.f32 %v5382, %v5397
    %v5400 = vadd.f32 %v5383, %v5397
    %v5401 = vadd.f32 %v5384, %v5397
    %v5402 = vadd.f32 %v5385, %v5397
    %v5403 = vadd.f32 %v5386, %v5397
    %v5404 = vadd.f32 %v5387, %v5397
    %v5405 = vadd.f32 %v5388, %v5397
    %v5406 = vadd.f32 %v5389, %v5397
    %v5407 = vadd.f32 %v5390, %v5397
    %v5408 = vadd.f32 %v5391, %v5397
    %v5409 = vadd.f32 %v5392, %v5397
    %v5410 = vadd.f32 %v5393, %v5397
    %v5411 = vadd.f32 %v5394, %v5397
    %v5412 = vadd.f32 %v5395, %v5397
    %v5413 = vadd.f32 %v5396, %v5397
    %v5414 = vpack.c.bf16 %v5399, %v5398
    %v5415 = vpack.c.bf16 %v5401, %v5400
    %v5416 = vpack.c.bf16 %v5403, %v5402
    %v5417 = vpack.c.bf16 %v5405, %v5404
    %v5418 = vpack.c.bf16 %v5407, %v5406
    %v5419 = vpack.c.bf16 %v5409, %v5408
    %v5420 = vpack.c.bf16 %v5411, %v5410
    %v5421 = vpack.c.bf16 %v5413, %v5412
    %s5422 = scalar_lea.vmem [#allocation8], 32
    %v5423 = vld [vmem:[%s5422] sm:$0xf]
    %v5424 = vld [vmem:[%s5422 + $0x4] sm:$0xf]
    %v5425 = vld [vmem:[%s5422 + $0x8] sm:$0xf]
    %v5426 = vld [vmem:[%s5422 + $0xc] sm:$0xf]
    %v5431 = vunpack.c.l.b16 %v5423
    %v5432 = vunpack.c.l.b16 %v5424
    %v5433 = vunpack.c.l.b16 %v5425
    %v5434 = vunpack.c.l.b16 %v5426
    %v5435 = vpack.c.b16 %v5432, %v5431
    %v5436 = vpack.c.b16 %v5434, %v5433
    %v5440 = vsel %vm161, %v5414, 0
    %v5443 = vsel %vm161, %v5415, 0
    %v5446 = vsel %vm161, %v5416, 0
    %v5449 = vsel %vm161, %v5417, 0
    %v5452 = vsel %vm161, %v5418, 0
    %v5455 = vsel %vm161, %v5419, 0
    %v5458 = vsel %vm161, %v5420, 0
    %v5461 = vsel %vm161, %v5421, 0
    %5463 = vmatpush.bf16.msra.mxu0 0
    %5464 = vmatpush.bf16.msra.mxu0 0
    %5465 = vmatpush.bf16.msra.mxu0 0
    %5466 = vmatpush.bf16.msra.mxu0 0
    %5467 = vmatpush.bf16.msra.mxu0 0
    %5468 = vmatpush.bf16.msra.mxu0 0
    %5469 = vmatpush.bf16.msra.mxu0 %v5436
    %5470 = vmatpush.bf16.msra.mxu0 %v5435
    %5471 = vmatmul.bf16.gmra.mxu0 %v5440
    %v5472 = vpop.f32.mrf.mxu0
    %v5473 = vadd.f32 0.0, %v5472
    %v5474 = vpop.f32.mrf.mxu0
    %v5475 = vadd.f32 0.0, %v5474
    %5476 = vmatmul.bf16.gmra.mxu0 %v5443
    %v5477 = vpop.f32.mrf.mxu0
    %v5478 = vadd.f32 0.0, %v5477
    %v5479 = vpop.f32.mrf.mxu0
    %v5480 = vadd.f32 0.0, %v5479
    %5481 = vmatmul.bf16.gmra.mxu0 %v5446
    %v5482 = vpop.f32.mrf.mxu0
    %v5483 = vadd.f32 0.0, %v5482
    %v5484 = vpop.f32.mrf.mxu0
    %v5485 = vadd.f32 0.0, %v5484
    %5486 = vmatmul.bf16.gmra.mxu0 %v5449
    %v5487 = vpop.f32.mrf.mxu0
    %v5488 = vadd.f32 0.0, %v5487
    %v5489 = vpop.f32.mrf.mxu0
    %v5490 = vadd.f32 0.0, %v5489
    %5491 = vmatmul.bf16.gmra.mxu0 %v5452
    %v5492 = vpop.f32.mrf.mxu0
    %v5493 = vadd.f32 0.0, %v5492
    %v5494 = vpop.f32.mrf.mxu0
    %v5495 = vadd.f32 0.0, %v5494
    %5496 = vmatmul.bf16.gmra.mxu0 %v5455
    %v5497 = vpop.f32.mrf.mxu0
    %v5498 = vadd.f32 0.0, %v5497
    %v5499 = vpop.f32.mrf.mxu0
    %v5500 = vadd.f32 0.0, %v5499
    %5501 = vmatmul.bf16.gmra.mxu0 %v5458
    %v5502 = vpop.f32.mrf.mxu0
    %v5503 = vadd.f32 0.0, %v5502
    %v5504 = vpop.f32.mrf.mxu0
    %v5505 = vadd.f32 0.0, %v5504
    %5506 = vmatmul.bf16.gmra.mxu0 %v5461
    %v5507 = vpop.f32.mrf.mxu0
    %v5508 = vadd.f32 0.0, %v5507
    %v5509 = vpop.f32.mrf.mxu0
    %v5510 = vadd.f32 0.0, %v5509
    %5511 = vdwg.mxu0
    %v5512 = vperm.slane %v100, 2
    %v5513 = vadd.f32 %v5473, %v5512
    %v5514 = vadd.f32 %v5475, %v5512
    %v5515 = vadd.f32 %v5478, %v5512
    %v5516 = vadd.f32 %v5480, %v5512
    %v5517 = vadd.f32 %v5483, %v5512
    %v5518 = vadd.f32 %v5485, %v5512
    %v5519 = vadd.f32 %v5488, %v5512
    %v5520 = vadd.f32 %v5490, %v5512
    %v5521 = vadd.f32 %v5493, %v5512
    %v5522 = vadd.f32 %v5495, %v5512
    %v5523 = vadd.f32 %v5498, %v5512
    %v5524 = vadd.f32 %v5500, %v5512
    %v5525 = vadd.f32 %v5503, %v5512
    %v5526 = vadd.f32 %v5505, %v5512
    %v5527 = vadd.f32 %v5508, %v5512
    %v5528 = vadd.f32 %v5510, %v5512
    %v5529 = vpack.c.bf16 %v119, %v118
    %v5530 = vpack.c.bf16 %v121, %v120
    %v5531 = vpack.c.bf16 %v123, %v122
    %v5532 = vpack.c.bf16 %v125, %v124
    %v5533 = vpack.c.bf16 %v127, %v126
    %v5534 = vpack.c.bf16 %v129, %v128
    %v5535 = vpack.c.bf16 %v131, %v130
    %v5536 = vpack.c.bf16 %v133, %v132
    %v5537 = vpack.c.bf16 %v135, %v134
    %v5538 = vpack.c.bf16 %v137, %v136
    %v5539 = vpack.c.bf16 %v139, %v138
    %v5540 = vpack.c.bf16 %v141, %v140
    %v5541 = vpack.c.bf16 %v143, %v142
    %v5542 = vpack.c.bf16 %v145, %v144
    %v5543 = vpack.c.bf16 %v147, %v146
    %v5544 = vpack.c.bf16 %v149, %v148
    %s5545 = scalar_lea.vmem [#allocation8], 48
    %v5546 = vld [vmem:[%s5545] sm:$0xf]
    %v5547 = vld [vmem:[%s5545 + $0x4] sm:$0xf]
    %v5548 = vld [vmem:[%s5545 + $0x8] sm:$0xf]
    %v5549 = vld [vmem:[%s5545 + $0xc] sm:$0xf]
    %v5550 = vperm.slane %v100, 3
    %v5555 = vunpack.c.l.b16 %v5546
    %v5556 = vunpack.c.l.b16 %v5547
    %v5557 = vunpack.c.l.b16 %v5548
    %v5558 = vunpack.c.l.b16 %v5549
    %v5559 = vpack.c.b16 %v5556, %v5555
    %v5560 = vpack.c.b16 %v5558, %v5557
    %v5564 = vsel %vm161, %v5529, 0
    %v5567 = vsel %vm161, %v5530, 0
    %v5570 = vsel %vm161, %v5531, 0
    %v5573 = vsel %vm161, %v5532, 0
    %v5576 = vsel %vm161, %v5533, 0
    %v5579 = vsel %vm161, %v5534, 0
    %v5582 = vsel %vm161, %v5535, 0
    %v5585 = vsel %vm161, %v5536, 0
    %v5588 = vsel %vm161, %v5537, 0
    %v5591 = vsel %vm161, %v5538, 0
    %v5594 = vsel %vm161, %v5539, 0
    %v5597 = vsel %vm161, %v5540, 0
    %v5600 = vsel %vm161, %v5541, 0
    %v5603 = vsel %vm161, %v5542, 0
    %v5606 = vsel %vm161, %v5543, 0
    %v5609 = vsel %vm161, %v5544, 0
    %5611 = vmatpush.bf16.msra.mxu0 0
    %5612 = vmatpush.bf16.msra.mxu0 0
    %5613 = vmatpush.bf16.msra.mxu0 0
    %5614 = vmatpush.bf16.msra.mxu0 0
    %5615 = vmatpush.bf16.msra.mxu0 0
    %5616 = vmatpush.bf16.msra.mxu0 0
    %5617 = vmatpush.bf16.msra.mxu0 %v5560
    %5618 = vmatpush.bf16.msra.mxu0 %v5559
    %5619 = vmatmul.bf16.gmra.mxu0 %v5564
    %v5620 = vpop.f32.mrf.mxu0
    %v5621 = vadd.f32 %v5550, %v5620
    %v5622 = vpop.f32.mrf.mxu0
    %v5623 = vadd.f32 %v5550, %v5622
    %5624 = vmatmul.bf16.gmra.mxu0 %v5567
    %v5625 = vpop.f32.mrf.mxu0
    %v5626 = vadd.f32 %v5550, %v5625
    %v5627 = vpop.f32.mrf.mxu0
    %v5628 = vadd.f32 %v5550, %v5627
    %5629 = vmatmul.bf16.gmra.mxu0 %v5570
    %v5630 = vpop.f32.mrf.mxu0
    %v5631 = vadd.f32 %v5550, %v5630
    %v5632 = vpop.f32.mrf.mxu0
    %v5633 = vadd.f32 %v5550, %v5632
    %5634 = vmatmul.bf16.gmra.mxu0 %v5573
    %v5635 = vpop.f32.mrf.mxu0
    %v5636 = vadd.f32 %v5550, %v5635
    %v5637 = vpop.f32.mrf.mxu0
    %v5638 = vadd.f32 %v5550, %v5637
    %5639 = vmatmul.bf16.gmra.mxu0 %v5576
    %v5640 = vpop.f32.mrf.mxu0
    %v5641 = vadd.f32 %v5550, %v5640
    %v5642 = vpop.f32.mrf.mxu0
    %v5643 = vadd.f32 %v5550, %v5642
    %5644 = vmatmul.bf16.gmra.mxu0 %v5579
    %v5645 = vpop.f32.mrf.mxu0
    %v5646 = vadd.f32 %v5550, %v5645
    %v5647 = vpop.f32.mrf.mxu0
    %v5648 = vadd.f32 %v5550, %v5647
    %5649 = vmatmul.bf16.gmra.mxu0 %v5582
    %v5650 = vpop.f32.mrf.mxu0
    %v5651 = vadd.f32 %v5550, %v5650
    %v5652 = vpop.f32.mrf.mxu0
    %v5653 = vadd.f32 %v5550, %v5652
    %5654 = vmatmul.bf16.gmra.mxu0 %v5585
    %v5655 = vpop.f32.mrf.mxu0
    %v5656 = vadd.f32 %v5550, %v5655
    %v5657 = vpop.f32.mrf.mxu0
    %v5658 = vadd.f32 %v5550, %v5657
    %5659 = vmatmul.bf16.gmra.mxu0 %v5588
    %v5660 = vpop.f32.mrf.mxu0
    %v5661 = vadd.f32 %v5550, %v5660
    %v5662 = vpop.f32.mrf.mxu0
    %v5663 = vadd.f32 %v5550, %v5662
    %5664 = vmatmul.bf16.gmra.mxu0 %v5591
    %v5665 = vpop.f32.mrf.mxu0
    %v5666 = vadd.f32 %v5550, %v5665
    %v5667 = vpop.f32.mrf.mxu0
    %v5668 = vadd.f32 %v5550, %v5667
    %5669 = vmatmul.bf16.gmra.mxu0 %v5594
    %v5670 = vpop.f32.mrf.mxu0
    %v5671 = vadd.f32 %v5550, %v5670
    %v5672 = vpop.f32.mrf.mxu0
    %v5673 = vadd.f32 %v5550, %v5672
    %5674 = vmatmul.bf16.gmra.mxu0 %v5597
    %v5675 = vpop.f32.mrf.mxu0
    %v5676 = vadd.f32 %v5550, %v5675
    %v5677 = vpop.f32.mrf.mxu0
    %v5678 = vadd.f32 %v5550, %v5677
    %5679 = vmatmul.bf16.gmra.mxu0 %v5600
    %v5680 = vpop.f32.mrf.mxu0
    %v5681 = vadd.f32 %v5550, %v5680
    %v5682 = vpop.f32.mrf.mxu0
    %v5683 = vadd.f32 %v5550, %v5682
    %5684 = vmatmul.bf16.gmra.mxu0 %v5603
    %v5685 = vpop.f32.mrf.mxu0
    %v5686 = vadd.f32 %v5550, %v5685
    %v5687 = vpop.f32.mrf.mxu0
    %v5688 = vadd.f32 %v5550, %v5687
    %5689 = vmatmul.bf16.gmra.mxu0 %v5606
    %v5690 = vpop.f32.mrf.mxu0
    %v5691 = vadd.f32 %v5550, %v5690
    %v5692 = vpop.f32.mrf.mxu0
    %v5693 = vadd.f32 %v5550, %v5692
    %5694 = vmatmul.bf16.gmra.mxu0 %v5609
    %v5695 = vpop.f32.mrf.mxu0
    %v5696 = vadd.f32 %v5550, %v5695
    %v5697 = vpop.f32.mrf.mxu0
    %v5698 = vadd.f32 %v5550, %v5697
    %5699 = vdwg.mxu0
    %5716 = vrot.lane.b32.xlu0 %v5513, 120
    %v5717 = vpop.permute.xlu0 %5716
    %5718 = vrot.lane.b32.xlu0 %v5514, 120
    %v5719 = vpop.permute.xlu0 %5718
    %5720 = vrot.lane.b32.xlu0 %v5515, 120
    %v5721 = vpop.permute.xlu0 %5720
    %5722 = vrot.lane.b32.xlu0 %v5516, 120
    %v5723 = vpop.permute.xlu0 %5722
    %5724 = vrot.lane.b32.xlu0 %v5517, 120
    %v5725 = vpop.permute.xlu0 %5724
    %5726 = vrot.lane.b32.xlu0 %v5518, 120
    %v5727 = vpop.permute.xlu0 %5726
    %5728 = vrot.lane.b32.xlu0 %v5519, 120
    %v5729 = vpop.permute.xlu0 %5728
    %5730 = vrot.lane.b32.xlu0 %v5520, 120
    %v5731 = vpop.permute.xlu0 %5730
    %5732 = vrot.lane.b32.xlu0 %v5521, 120
    %v5733 = vpop.permute.xlu0 %5732
    %5734 = vrot.lane.b32.xlu0 %v5522, 120
    %v5735 = vpop.permute.xlu0 %5734
    %5736 = vrot.lane.b32.xlu0 %v5523, 120
    %v5737 = vpop.permute.xlu0 %5736
    %5738 = vrot.lane.b32.xlu0 %v5524, 120
    %v5739 = vpop.permute.xlu0 %5738
    %5740 = vrot.lane.b32.xlu0 %v5525, 120
    %v5741 = vpop.permute.xlu0 %5740
    %5742 = vrot.lane.b32.xlu0 %v5526, 120
    %v5743 = vpop.permute.xlu0 %5742
    %5744 = vrot.lane.b32.xlu0 %v5527, 120
    %v5745 = vpop.permute.xlu0 %5744
    %5746 = vrot.lane.b32.xlu0 %v5528, 120
    %v5747 = vpop.permute.xlu0 %5746
    %5764 = vrot.lane.b32.xlu0 %v5513, 112
    %v5765 = vpop.permute.xlu0 %5764
    %5766 = vrot.lane.b32.xlu0 %v5514, 112
    %v5767 = vpop.permute.xlu0 %5766
    %5768 = vrot.lane.b32.xlu0 %v5515, 112
    %v5769 = vpop.permute.xlu0 %5768
    %5770 = vrot.lane.b32.xlu0 %v5516, 112
    %v5771 = vpop.permute.xlu0 %5770
    %5772 = vrot.lane.b32.xlu0 %v5517, 112
    %v5773 = vpop.permute.xlu0 %5772
    %5774 = vrot.lane.b32.xlu0 %v5518, 112
    %v5775 = vpop.permute.xlu0 %5774
    %5776 = vrot.lane.b32.xlu0 %v5519, 112
    %v5777 = vpop.permute.xlu0 %5776
    %5778 = vrot.lane.b32.xlu0 %v5520, 112
    %v5779 = vpop.permute.xlu0 %5778
    %5780 = vrot.lane.b32.xlu0 %v5521, 112
    %v5781 = vpop.permute.xlu0 %5780
    %5782 = vrot.lane.b32.xlu0 %v5522, 112
    %v5783 = vpop.permute.xlu0 %5782
    %5784 = vrot.lane.b32.xlu0 %v5523, 112
    %v5785 = vpop.permute.xlu0 %5784
    %5786 = vrot.lane.b32.xlu0 %v5524, 112
    %v5787 = vpop.permute.xlu0 %5786
    %5788 = vrot.lane.b32.xlu0 %v5525, 112
    %v5789 = vpop.permute.xlu0 %5788
    %5790 = vrot.lane.b32.xlu0 %v5526, 112
    %v5791 = vpop.permute.xlu0 %5790
    %5792 = vrot.lane.b32.xlu0 %v5527, 112
    %v5793 = vpop.permute.xlu0 %5792
    %5794 = vrot.lane.b32.xlu0 %v5528, 112
    %v5795 = vpop.permute.xlu0 %5794
    %5812 = vrot.lane.b32.xlu0 %v5513, 104
    %v5813 = vpop.permute.xlu0 %5812
    %5814 = vrot.lane.b32.xlu0 %v5514, 104
    %v5815 = vpop.permute.xlu0 %5814
    %5816 = vrot.lane.b32.xlu0 %v5515, 104
    %v5817 = vpop.permute.xlu0 %5816
    %5818 = vrot.lane.b32.xlu0 %v5516, 104
    %v5819 = vpop.permute.xlu0 %5818
    %5820 = vrot.lane.b32.xlu0 %v5517, 104
    %v5821 = vpop.permute.xlu0 %5820
    %5822 = vrot.lane.b32.xlu0 %v5518, 104
    %v5823 = vpop.permute.xlu0 %5822
    %5824 = vrot.lane.b32.xlu0 %v5519, 104
    %v5825 = vpop.permute.xlu0 %5824
    %5826 = vrot.lane.b32.xlu0 %v5520, 104
    %v5827 = vpop.permute.xlu0 %5826
    %5828 = vrot.lane.b32.xlu0 %v5521, 104
    %v5829 = vpop.permute.xlu0 %5828
    %5830 = vrot.lane.b32.xlu0 %v5522, 104
    %v5831 = vpop.permute.xlu0 %5830
    %5832 = vrot.lane.b32.xlu0 %v5523, 104
    %v5833 = vpop.permute.xlu0 %5832
    %5834 = vrot.lane.b32.xlu0 %v5524, 104
    %v5835 = vpop.permute.xlu0 %5834
    %5836 = vrot.lane.b32.xlu0 %v5525, 104
    %v5837 = vpop.permute.xlu0 %5836
    %5838 = vrot.lane.b32.xlu0 %v5526, 104
    %v5839 = vpop.permute.xlu0 %5838
    %5840 = vrot.lane.b32.xlu0 %v5527, 104
    %v5841 = vpop.permute.xlu0 %5840
    %5842 = vrot.lane.b32.xlu0 %v5528, 104
    %v5843 = vpop.permute.xlu0 %5842
    %v5860 = vmul.f32 %v5513, 0.35355338
    %v5861 = vmul.f32 %v5514, 0.35355338
    %v5862 = vmul.f32 %v5515, 0.35355338
    %v5863 = vmul.f32 %v5516, 0.35355338
    %v5864 = vmul.f32 %v5517, 0.35355338
    %v5865 = vmul.f32 %v5518, 0.35355338
    %v5866 = vmul.f32 %v5519, 0.35355338
    %v5867 = vmul.f32 %v5520, 0.35355338
    %v5868 = vmul.f32 %v5521, 0.35355338
    %v5869 = vmul.f32 %v5522, 0.35355338
    %v5870 = vmul.f32 %v5523, 0.35355338
    %v5871 = vmul.f32 %v5524, 0.35355338
    %v5872 = vmul.f32 %v5525, 0.35355338
    %v5873 = vmul.f32 %v5526, 0.35355338
    %v5874 = vmul.f32 %v5527, 0.35355338
    %v5875 = vmul.f32 %v5528, 0.35355338
    %v5876 = vmul.f32 %v5717, 0.35355338
    %v5877 = vmul.f32 %v5719, 0.35355338
    %v5878 = vmul.f32 %v5721, 0.35355338
    %v5879 = vmul.f32 %v5723, 0.35355338
    %v5880 = vmul.f32 %v5725, 0.35355338
    %v5881 = vmul.f32 %v5727, 0.35355338
    %v5882 = vmul.f32 %v5729, 0.35355338
    %v5883 = vmul.f32 %v5731, 0.35355338
    %v5884 = vmul.f32 %v5733, 0.35355338
    %v5885 = vmul.f32 %v5735, 0.35355338
    %v5886 = vmul.f32 %v5737, 0.35355338
    %v5887 = vmul.f32 %v5739, 0.35355338
    %v5888 = vmul.f32 %v5741, 0.35355338
    %v5889 = vmul.f32 %v5743, 0.35355338
    %v5890 = vmul.f32 %v5745, 0.35355338
    %v5891 = vmul.f32 %v5747, 0.35355338
    %v5892 = vmul.f32 %v5765, 0.35355338
    %v5893 = vmul.f32 %v5767, 0.35355338
    %v5894 = vmul.f32 %v5769, 0.35355338
    %v5895 = vmul.f32 %v5771, 0.35355338
    %v5896 = vmul.f32 %v5773, 0.35355338
    %v5897 = vmul.f32 %v5775, 0.35355338
    %v5898 = vmul.f32 %v5777, 0.35355338
    %v5899 = vmul.f32 %v5779, 0.35355338
    %v5900 = vmul.f32 %v5781, 0.35355338
    %v5901 = vmul.f32 %v5783, 0.35355338
    %v5902 = vmul.f32 %v5785, 0.35355338
    %v5903 = vmul.f32 %v5787, 0.35355338
    %v5904 = vmul.f32 %v5789, 0.35355338
    %v5905 = vmul.f32 %v5791, 0.35355338
    %v5906 = vmul.f32 %v5793, 0.35355338
    %v5907 = vmul.f32 %v5795, 0.35355338
    %v5908 = vmul.f32 %v5813, 0.35355338
    %v5909 = vmul.f32 %v5815, 0.35355338
    %v5910 = vmul.f32 %v5817, 0.35355338
    %v5911 = vmul.f32 %v5819, 0.35355338
    %v5912 = vmul.f32 %v5821, 0.35355338
    %v5913 = vmul.f32 %v5823, 0.35355338
    %v5914 = vmul.f32 %v5825, 0.35355338
    %v5915 = vmul.f32 %v5827, 0.35355338
    %v5916 = vmul.f32 %v5829, 0.35355338
    %v5917 = vmul.f32 %v5831, 0.35355338
    %v5918 = vmul.f32 %v5833, 0.35355338
    %v5919 = vmul.f32 %v5835, 0.35355338
    %v5920 = vmul.f32 %v5837, 0.35355338
    %v5921 = vmul.f32 %v5839, 0.35355338
    %v5922 = vmul.f32 %v5841, 0.35355338
    %v5923 = vmul.f32 %v5843, 0.35355338
    %v5924 = vpack.c.bf16 %v5860, %v5860
    %v5925 = vpack.c.bf16 %v5861, %v5861
    %v5926 = vpack.c.bf16 %v5862, %v5862
    %v5927 = vpack.c.bf16 %v5863, %v5863
    %v5928 = vpack.c.bf16 %v5864, %v5864
    %v5929 = vpack.c.bf16 %v5865, %v5865
    %v5930 = vpack.c.bf16 %v5866, %v5866
    %v5931 = vpack.c.bf16 %v5867, %v5867
    %v5932 = vpack.c.bf16 %v5868, %v5868
    %v5933 = vpack.c.bf16 %v5869, %v5869
    %v5934 = vpack.c.bf16 %v5870, %v5870
    %v5935 = vpack.c.bf16 %v5871, %v5871
    %v5936 = vpack.c.bf16 %v5872, %v5872
    %v5937 = vpack.c.bf16 %v5873, %v5873
    %v5938 = vpack.c.bf16 %v5874, %v5874
    %v5939 = vpack.c.bf16 %v5875, %v5875
    %v5940 = vpack.c.bf16 %v5876, %v5876
    %v5941 = vpack.c.bf16 %v5877, %v5877
    %v5942 = vpack.c.bf16 %v5878, %v5878
    %v5943 = vpack.c.bf16 %v5879, %v5879
    %v5944 = vpack.c.bf16 %v5880, %v5880
    %v5945 = vpack.c.bf16 %v5881, %v5881
    %v5946 = vpack.c.bf16 %v5882, %v5882
    %v5947 = vpack.c.bf16 %v5883, %v5883
    %v5948 = vpack.c.bf16 %v5884, %v5884
    %v5949 = vpack.c.bf16 %v5885, %v5885
    %v5950 = vpack.c.bf16 %v5886, %v5886
    %v5951 = vpack.c.bf16 %v5887, %v5887
    %v5952 = vpack.c.bf16 %v5888, %v5888
    %v5953 = vpack.c.bf16 %v5889, %v5889
    %v5954 = vpack.c.bf16 %v5890, %v5890
    %v5955 = vpack.c.bf16 %v5891, %v5891
    %v5956 = vpack.c.bf16 %v5892, %v5892
    %v5957 = vpack.c.bf16 %v5893, %v5893
    %v5958 = vpack.c.bf16 %v5894, %v5894
    %v5959 = vpack.c.bf16 %v5895, %v5895
    %v5960 = vpack.c.bf16 %v5896, %v5896
    %v5961 = vpack.c.bf16 %v5897, %v5897
    %v5962 = vpack.c.bf16 %v5898, %v5898
    %v5963 = vpack.c.bf16 %v5899, %v5899
    %v5964 = vpack.c.bf16 %v5900, %v5900
    %v5965 = vpack.c.bf16 %v5901, %v5901
    %v5966 = vpack.c.bf16 %v5902, %v5902
    %v5967 = vpack.c.bf16 %v5903, %v5903
    %v5968 = vpack.c.bf16 %v5904, %v5904
    %v5969 = vpack.c.bf16 %v5905, %v5905
    %v5970 = vpack.c.bf16 %v5906, %v5906
    %v5971 = vpack.c.bf16 %v5907, %v5907
    %v5972 = vpack.c.bf16 %v5908, %v5908
    %v5973 = vpack.c.bf16 %v5909, %v5909
    %v5974 = vpack.c.bf16 %v5910, %v5910
    %v5975 = vpack.c.bf16 %v5911, %v5911
    %v5976 = vpack.c.bf16 %v5912, %v5912
    %v5977 = vpack.c.bf16 %v5913, %v5913
    %v5978 = vpack.c.bf16 %v5914, %v5914
    %v5979 = vpack.c.bf16 %v5915, %v5915
    %v5980 = vpack.c.bf16 %v5916, %v5916
    %v5981 = vpack.c.bf16 %v5917, %v5917
    %v5982 = vpack.c.bf16 %v5918, %v5918
    %v5983 = vpack.c.bf16 %v5919, %v5919
    %v5984 = vpack.c.bf16 %v5920, %v5920
    %v5985 = vpack.c.bf16 %v5921, %v5921
    %v5986 = vpack.c.bf16 %v5922, %v5922
    %v5987 = vpack.c.bf16 %v5923, %v5923
    %6020 = vrot.lane.b32.xlu0 %v5621, 120
    %v6021 = vpop.permute.xlu0 %6020
    %6022 = vrot.lane.b32.xlu0 %v5623, 120
    %v6023 = vpop.permute.xlu0 %6022
    %6024 = vrot.lane.b32.xlu0 %v5626, 120
    %v6025 = vpop.permute.xlu0 %6024
    %6026 = vrot.lane.b32.xlu0 %v5628, 120
    %v6027 = vpop.permute.xlu0 %6026
    %6028 = vrot.lane.b32.xlu0 %v5631, 120
    %v6029 = vpop.permute.xlu0 %6028
    %6030 = vrot.lane.b32.xlu0 %v5633, 120
    %v6031 = vpop.permute.xlu0 %6030
    %6032 = vrot.lane.b32.xlu0 %v5636, 120
    %v6033 = vpop.permute.xlu0 %6032
    %6034 = vrot.lane.b32.xlu0 %v5638, 120
    %v6035 = vpop.permute.xlu0 %6034
    %6036 = vrot.lane.b32.xlu0 %v5641, 120
    %v6037 = vpop.permute.xlu0 %6036
    %6038 = vrot.lane.b32.xlu0 %v5643, 120
    %v6039 = vpop.permute.xlu0 %6038
    %6040 = vrot.lane.b32.xlu0 %v5646, 120
    %v6041 = vpop.permute.xlu0 %6040
    %6042 = vrot.lane.b32.xlu0 %v5648, 120
    %v6043 = vpop.permute.xlu0 %6042
    %6044 = vrot.lane.b32.xlu0 %v5651, 120
    %v6045 = vpop.permute.xlu0 %6044
    %6046 = vrot.lane.b32.xlu0 %v5653, 120
    %v6047 = vpop.permute.xlu0 %6046
    %6048 = vrot.lane.b32.xlu0 %v5656, 120
    %v6049 = vpop.permute.xlu0 %6048
    %6050 = vrot.lane.b32.xlu0 %v5658, 120
    %v6051 = vpop.permute.xlu0 %6050
    %6052 = vrot.lane.b32.xlu0 %v5661, 120
    %v6053 = vpop.permute.xlu0 %6052
    %6054 = vrot.lane.b32.xlu0 %v5663, 120
    %v6055 = vpop.permute.xlu0 %6054
    %6056 = vrot.lane.b32.xlu0 %v5666, 120
    %v6057 = vpop.permute.xlu0 %6056
    %6058 = vrot.lane.b32.xlu0 %v5668, 120
    %v6059 = vpop.permute.xlu0 %6058
    %6060 = vrot.lane.b32.xlu0 %v5671, 120
    %v6061 = vpop.permute.xlu0 %6060
    %6062 = vrot.lane.b32.xlu0 %v5673, 120
    %v6063 = vpop.permute.xlu0 %6062
    %6064 = vrot.lane.b32.xlu0 %v5676, 120
    %v6065 = vpop.permute.xlu0 %6064
    %6066 = vrot.lane.b32.xlu0 %v5678, 120
    %v6067 = vpop.permute.xlu0 %6066
    %6068 = vrot.lane.b32.xlu0 %v5681, 120
    %v6069 = vpop.permute.xlu0 %6068
    %6070 = vrot.lane.b32.xlu0 %v5683, 120
    %v6071 = vpop.permute.xlu0 %6070
    %6072 = vrot.lane.b32.xlu0 %v5686, 120
    %v6073 = vpop.permute.xlu0 %6072
    %6074 = vrot.lane.b32.xlu0 %v5688, 120
    %v6075 = vpop.permute.xlu0 %6074
    %6076 = vrot.lane.b32.xlu0 %v5691, 120
    %v6077 = vpop.permute.xlu0 %6076
    %6078 = vrot.lane.b32.xlu0 %v5693, 120
    %v6079 = vpop.permute.xlu0 %6078
    %6080 = vrot.lane.b32.xlu0 %v5696, 120
    %v6081 = vpop.permute.xlu0 %6080
    %6082 = vrot.lane.b32.xlu0 %v5698, 120
    %v6083 = vpop.permute.xlu0 %6082
    %6116 = vrot.lane.b32.xlu0 %v5621, 112
    %v6117 = vpop.permute.xlu0 %6116
    %6118 = vrot.lane.b32.xlu0 %v5623, 112
    %v6119 = vpop.permute.xlu0 %6118
    %6120 = vrot.lane.b32.xlu0 %v5626, 112
    %v6121 = vpop.permute.xlu0 %6120
    %6122 = vrot.lane.b32.xlu0 %v5628, 112
    %v6123 = vpop.permute.xlu0 %6122
    %6124 = vrot.lane.b32.xlu0 %v5631, 112
    %v6125 = vpop.permute.xlu0 %6124
    %6126 = vrot.lane.b32.xlu0 %v5633, 112
    %v6127 = vpop.permute.xlu0 %6126
    %6128 = vrot.lane.b32.xlu0 %v5636, 112
    %v6129 = vpop.permute.xlu0 %6128
    %6130 = vrot.lane.b32.xlu0 %v5638, 112
    %v6131 = vpop.permute.xlu0 %6130
    %6132 = vrot.lane.b32.xlu0 %v5641, 112
    %v6133 = vpop.permute.xlu0 %6132
    %6134 = vrot.lane.b32.xlu0 %v5643, 112
    %v6135 = vpop.permute.xlu0 %6134
    %6136 = vrot.lane.b32.xlu0 %v5646, 112
    %v6137 = vpop.permute.xlu0 %6136
    %6138 = vrot.lane.b32.xlu0 %v5648, 112
    %v6139 = vpop.permute.xlu0 %6138
    %6140 = vrot.lane.b32.xlu0 %v5651, 112
    %v6141 = vpop.permute.xlu0 %6140
    %6142 = vrot.lane.b32.xlu0 %v5653, 112
    %v6143 = vpop.permute.xlu0 %6142
    %6144 = vrot.lane.b32.xlu0 %v5656, 112
    %v6145 = vpop.permute.xlu0 %6144
    %6146 = vrot.lane.b32.xlu0 %v5658, 112
    %v6147 = vpop.permute.xlu0 %6146
    %6148 = vrot.lane.b32.xlu0 %v5661, 112
    %v6149 = vpop.permute.xlu0 %6148
    %6150 = vrot.lane.b32.xlu0 %v5663, 112
    %v6151 = vpop.permute.xlu0 %6150
    %6152 = vrot.lane.b32.xlu0 %v5666, 112
    %v6153 = vpop.permute.xlu0 %6152
    %6154 = vrot.lane.b32.xlu0 %v5668, 112
    %v6155 = vpop.permute.xlu0 %6154
    %6156 = vrot.lane.b32.xlu0 %v5671, 112
    %v6157 = vpop.permute.xlu0 %6156
    %6158 = vrot.lane.b32.xlu0 %v5673, 112
    %v6159 = vpop.permute.xlu0 %6158
    %6160 = vrot.lane.b32.xlu0 %v5676, 112
    %v6161 = vpop.permute.xlu0 %6160
    %6162 = vrot.lane.b32.xlu0 %v5678, 112
    %v6163 = vpop.permute.xlu0 %6162
    %6164 = vrot.lane.b32.xlu0 %v5681, 112
    %v6165 = vpop.permute.xlu0 %6164
    %6166 = vrot.lane.b32.xlu0 %v5683, 112
    %v6167 = vpop.permute.xlu0 %6166
    %6168 = vrot.lane.b32.xlu0 %v5686, 112
    %v6169 = vpop.permute.xlu0 %6168
    %6170 = vrot.lane.b32.xlu0 %v5688, 112
    %v6171 = vpop.permute.xlu0 %6170
    %6172 = vrot.lane.b32.xlu0 %v5691, 112
    %v6173 = vpop.permute.xlu0 %6172
    %6174 = vrot.lane.b32.xlu0 %v5693, 112
    %v6175 = vpop.permute.xlu0 %6174
    %6176 = vrot.lane.b32.xlu0 %v5696, 112
    %v6177 = vpop.permute.xlu0 %6176
    %6178 = vrot.lane.b32.xlu0 %v5698, 112
    %v6179 = vpop.permute.xlu0 %6178
    %6212 = vrot.lane.b32.xlu0 %v5621, 104
    %v6213 = vpop.permute.xlu0 %6212
    %6214 = vrot.lane.b32.xlu0 %v5623, 104
    %v6215 = vpop.permute.xlu0 %6214
    %6216 = vrot.lane.b32.xlu0 %v5626, 104
    %v6217 = vpop.permute.xlu0 %6216
    %6218 = vrot.lane.b32.xlu0 %v5628, 104
    %v6219 = vpop.permute.xlu0 %6218
    %6220 = vrot.lane.b32.xlu0 %v5631, 104
    %v6221 = vpop.permute.xlu0 %6220
    %6222 = vrot.lane.b32.xlu0 %v5633, 104
    %v6223 = vpop.permute.xlu0 %6222
    %6224 = vrot.lane.b32.xlu0 %v5636, 104
    %v6225 = vpop.permute.xlu0 %6224
    %6226 = vrot.lane.b32.xlu0 %v5638, 104
    %v6227 = vpop.permute.xlu0 %6226
    %6228 = vrot.lane.b32.xlu0 %v5641, 104
    %v6229 = vpop.permute.xlu0 %6228
    %6230 = vrot.lane.b32.xlu0 %v5643, 104
    %v6231 = vpop.permute.xlu0 %6230
    %6232 = vrot.lane.b32.xlu0 %v5646, 104
    %v6233 = vpop.permute.xlu0 %6232
    %6234 = vrot.lane.b32.xlu0 %v5648, 104
    %v6235 = vpop.permute.xlu0 %6234
    %6236 = vrot.lane.b32.xlu0 %v5651, 104
    %v6237 = vpop.permute.xlu0 %6236
    %6238 = vrot.lane.b32.xlu0 %v5653, 104
    %v6239 = vpop.permute.xlu0 %6238
    %6240 = vrot.lane.b32.xlu0 %v5656, 104
    %v6241 = vpop.permute.xlu0 %6240
    %6242 = vrot.lane.b32.xlu0 %v5658, 104
    %v6243 = vpop.permute.xlu0 %6242
    %6244 = vrot.lane.b32.xlu0 %v5661, 104
    %v6245 = vpop.permute.xlu0 %6244
    %6246 = vrot.lane.b32.xlu0 %v5663, 104
    %v6247 = vpop.permute.xlu0 %6246
    %6248 = vrot.lane.b32.xlu0 %v5666, 104
    %v6249 = vpop.permute.xlu0 %6248
    %6250 = vrot.lane.b32.xlu0 %v5668, 104
    %v6251 = vpop.permute.xlu0 %6250
    %6252 = vrot.lane.b32.xlu0 %v5671, 104
    %v6253 = vpop.permute.xlu0 %6252
    %6254 = vrot.lane.b32.xlu0 %v5673, 104
    %v6255 = vpop.permute.xlu0 %6254
    %6256 = vrot.lane.b32.xlu0 %v5676, 104
    %v6257 = vpop.permute.xlu0 %6256
    %6258 = vrot.lane.b32.xlu0 %v5678, 104
    %v6259 = vpop.permute.xlu0 %6258
    %6260 = vrot.lane.b32.xlu0 %v5681, 104
    %v6261 = vpop.permute.xlu0 %6260
    %6262 = vrot.lane.b32.xlu0 %v5683, 104
    %v6263 = vpop.permute.xlu0 %6262
    %6264 = vrot.lane.b32.xlu0 %v5686, 104
    %v6265 = vpop.permute.xlu0 %6264
    %6266 = vrot.lane.b32.xlu0 %v5688, 104
    %v6267 = vpop.permute.xlu0 %6266
    %6268 = vrot.lane.b32.xlu0 %v5691, 104
    %v6269 = vpop.permute.xlu0 %6268
    %6270 = vrot.lane.b32.xlu0 %v5693, 104
    %v6271 = vpop.permute.xlu0 %6270
    %6272 = vrot.lane.b32.xlu0 %v5696, 104
    %v6273 = vpop.permute.xlu0 %6272
    %6274 = vrot.lane.b32.xlu0 %v5698, 104
    %v6275 = vpop.permute.xlu0 %6274
    %v6308 = vpack.c.bf16 %v5621, %v5621
    %v6309 = vpack.c.bf16 %v5623, %v5623
    %v6310 = vpack.c.bf16 %v5626, %v5626
    %v6311 = vpack.c.bf16 %v5628, %v5628
    %v6312 = vpack.c.bf16 %v5631, %v5631
    %v6313 = vpack.c.bf16 %v5633, %v5633
    %v6314 = vpack.c.bf16 %v5636, %v5636
    %v6315 = vpack.c.bf16 %v5638, %v5638
    %v6316 = vpack.c.bf16 %v5641, %v5641
    %v6317 = vpack.c.bf16 %v5643, %v5643
    %v6318 = vpack.c.bf16 %v5646, %v5646
    %v6319 = vpack.c.bf16 %v5648, %v5648
    %v6320 = vpack.c.bf16 %v5651, %v5651
    %v6321 = vpack.c.bf16 %v5653, %v5653
    %v6322 = vpack.c.bf16 %v5656, %v5656
    %v6323 = vpack.c.bf16 %v5658, %v5658
    %v6324 = vpack.c.bf16 %v5661, %v5661
    %v6325 = vpack.c.bf16 %v5663, %v5663
    %v6326 = vpack.c.bf16 %v5666, %v5666
    %v6327 = vpack.c.bf16 %v5668, %v5668
    %v6328 = vpack.c.bf16 %v5671, %v5671
    %v6329 = vpack.c.bf16 %v5673, %v5673
    %v6330 = vpack.c.bf16 %v5676, %v5676
    %v6331 = vpack.c.bf16 %v5678, %v5678
    %v6332 = vpack.c.bf16 %v5681, %v5681
    %v6333 = vpack.c.bf16 %v5683, %v5683
    %v6334 = vpack.c.bf16 %v5686, %v5686
    %v6335 = vpack.c.bf16 %v5688, %v5688
    %v6336 = vpack.c.bf16 %v5691, %v5691
    %v6337 = vpack.c.bf16 %v5693, %v5693
    %v6338 = vpack.c.bf16 %v5696, %v5696
    %v6339 = vpack.c.bf16 %v5698, %v5698
    %v6340 = vpack.c.bf16 %v6021, %v6021
    %v6341 = vpack.c.bf16 %v6023, %v6023
    %v6342 = vpack.c.bf16 %v6025, %v6025
    %v6343 = vpack.c.bf16 %v6027, %v6027
    %v6344 = vpack.c.bf16 %v6029, %v6029
    %v6345 = vpack.c.bf16 %v6031, %v6031
    %v6346 = vpack.c.bf16 %v6033, %v6033
    %v6347 = vpack.c.bf16 %v6035, %v6035
    %v6348 = vpack.c.bf16 %v6037, %v6037
    %v6349 = vpack.c.bf16 %v6039, %v6039
    %v6350 = vpack.c.bf16 %v6041, %v6041
    %v6351 = vpack.c.bf16 %v6043, %v6043
    %v6352 = vpack.c.bf16 %v6045, %v6045
    %v6353 = vpack.c.bf16 %v6047, %v6047
    %v6354 = vpack.c.bf16 %v6049, %v6049
    %v6355 = vpack.c.bf16 %v6051, %v6051
    %v6356 = vpack.c.bf16 %v6053, %v6053
    %v6357 = vpack.c.bf16 %v6055, %v6055
    %v6358 = vpack.c.bf16 %v6057, %v6057
    %v6359 = vpack.c.bf16 %v6059, %v6059
    %v6360 = vpack.c.bf16 %v6061, %v6061
    %v6361 = vpack.c.bf16 %v6063, %v6063
    %v6362 = vpack.c.bf16 %v6065, %v6065
    %v6363 = vpack.c.bf16 %v6067, %v6067
    %v6364 = vpack.c.bf16 %v6069, %v6069
    %v6365 = vpack.c.bf16 %v6071, %v6071
    %v6366 = vpack.c.bf16 %v6073, %v6073
    %v6367 = vpack.c.bf16 %v6075, %v6075
    %v6368 = vpack.c.bf16 %v6077, %v6077
    %v6369 = vpack.c.bf16 %v6079, %v6079
    %v6370 = vpack.c.bf16 %v6081, %v6081
    %v6371 = vpack.c.bf16 %v6083, %v6083
    %v6372 = vpack.c.bf16 %v6117, %v6117
    %v6373 = vpack.c.bf16 %v6119, %v6119
    %v6374 = vpack.c.bf16 %v6121, %v6121
    %v6375 = vpack.c.bf16 %v6123, %v6123
    %v6376 = vpack.c.bf16 %v6125, %v6125
    %v6377 = vpack.c.bf16 %v6127, %v6127
    %v6378 = vpack.c.bf16 %v6129, %v6129
    %v6379 = vpack.c.bf16 %v6131, %v6131
    %v6380 = vpack.c.bf16 %v6133, %v6133
    %v6381 = vpack.c.bf16 %v6135, %v6135
    %v6382 = vpack.c.bf16 %v6137, %v6137
    %v6383 = vpack.c.bf16 %v6139, %v6139
    %v6384 = vpack.c.bf16 %v6141, %v6141
    %v6385 = vpack.c.bf16 %v6143, %v6143
    %v6386 = vpack.c.bf16 %v6145, %v6145
    %v6387 = vpack.c.bf16 %v6147, %v6147
    %v6388 = vpack.c.bf16 %v6149, %v6149
    %v6389 = vpack.c.bf16 %v6151, %v6151
    %v6390 = vpack.c.bf16 %v6153, %v6153
    %v6391 = vpack.c.bf16 %v6155, %v6155
    %v6392 = vpack.c.bf16 %v6157, %v6157
    %v6393 = vpack.c.bf16 %v6159, %v6159
    %v6394 = vpack.c.bf16 %v6161, %v6161
    %v6395 = vpack.c.bf16 %v6163, %v6163
    %v6396 = vpack.c.bf16 %v6165, %v6165
    %v6397 = vpack.c.bf16 %v6167, %v6167
    %v6398 = vpack.c.bf16 %v6169, %v6169
    %v6399 = vpack.c.bf16 %v6171, %v6171
    %v6400 = vpack.c.bf16 %v6173, %v6173
    %v6401 = vpack.c.bf16 %v6175, %v6175
    %v6402 = vpack.c.bf16 %v6177, %v6177
    %v6403 = vpack.c.bf16 %v6179, %v6179
    %v6404 = vpack.c.bf16 %v6213, %v6213
    %v6405 = vpack.c.bf16 %v6215, %v6215
    %v6406 = vpack.c.bf16 %v6217, %v6217
    %v6407 = vpack.c.bf16 %v6219, %v6219
    %v6408 = vpack.c.bf16 %v6221, %v6221
    %v6409 = vpack.c.bf16 %v6223, %v6223
    %v6410 = vpack.c.bf16 %v6225, %v6225
    %v6411 = vpack.c.bf16 %v6227, %v6227
    %v6412 = vpack.c.bf16 %v6229, %v6229
    %v6413 = vpack.c.bf16 %v6231, %v6231
    %v6414 = vpack.c.bf16 %v6233, %v6233
    %v6415 = vpack.c.bf16 %v6235, %v6235
    %v6416 = vpack.c.bf16 %v6237, %v6237
    %v6417 = vpack.c.bf16 %v6239, %v6239
    %v6418 = vpack.c.bf16 %v6241, %v6241
    %v6419 = vpack.c.bf16 %v6243, %v6243
    %v6420 = vpack.c.bf16 %v6245, %v6245
    %v6421 = vpack.c.bf16 %v6247, %v6247
    %v6422 = vpack.c.bf16 %v6249, %v6249
    %v6423 = vpack.c.bf16 %v6251, %v6251
    %v6424 = vpack.c.bf16 %v6253, %v6253
    %v6425 = vpack.c.bf16 %v6255, %v6255
    %v6426 = vpack.c.bf16 %v6257, %v6257
    %v6427 = vpack.c.bf16 %v6259, %v6259
    %v6428 = vpack.c.bf16 %v6261, %v6261
    %v6429 = vpack.c.bf16 %v6263, %v6263
    %v6430 = vpack.c.bf16 %v6265, %v6265
    %v6431 = vpack.c.bf16 %v6267, %v6267
    %v6432 = vpack.c.bf16 %v6269, %v6269
    %v6433 = vpack.c.bf16 %v6271, %v6271
    %v6434 = vpack.c.bf16 %v6273, %v6273
    %v6435 = vpack.c.bf16 %v6275, %v6275
    %v6438 = vunpack.c.l.b16 %v6308
    %v6439 = vunpack.c.l.b16 %v6309
    %v6440 = vpack.c.b16 %v6439, %v6438
    %v6442 = vsel %vm1010, %v5924, 0
    %v6445 = vsel %vm1010, %v6440, 0
    %6447 = vmatpush.bf16.xpose.msra.mxu0 0
    %6448 = vmatpush.bf16.xpose.msra.mxu0 0
    %6449 = vmatpush.bf16.xpose.msra.mxu0 0
    %6450 = vmatpush.bf16.xpose.msra.mxu0 0
    %6451 = vmatpush.bf16.xpose.msra.mxu0 0
    %6452 = vmatpush.bf16.xpose.msra.mxu0 0
    %6453 = vmatpush.bf16.xpose.msra.mxu0 0
    %6454 = vmatpush.bf16.xpose.msra.mxu0 %v6445
    %6455 = vmatmul.bf16.gmra.mxu0 %v6442
    %v6456 = vpop.f32.mrf.mxu0
    %v6457 = vadd.f32 0.0, %v6456
    %v6458 = vpop.f32.mrf.mxu0
    %6459 = vdwg.mxu0
    %v6462 = vunpack.c.l.b16 %v6310
    %v6463 = vunpack.c.l.b16 %v6311
    %v6464 = vpack.c.b16 %v6463, %v6462
    %v6466 = vsel %vm1010, %v5925, 0
    %v6469 = vsel %vm1010, %v6464, 0
    %6471 = vmatpush.bf16.xpose.msra.mxu0 0
    %6472 = vmatpush.bf16.xpose.msra.mxu0 0
    %6473 = vmatpush.bf16.xpose.msra.mxu0 0
    %6474 = vmatpush.bf16.xpose.msra.mxu0 0
    %6475 = vmatpush.bf16.xpose.msra.mxu0 0
    %6476 = vmatpush.bf16.xpose.msra.mxu0 0
    %6477 = vmatpush.bf16.xpose.msra.mxu0 0
    %6478 = vmatpush.bf16.xpose.msra.mxu0 %v6469
    %6479 = vmatmul.bf16.gmra.mxu0 %v6466
    %v6480 = vpop.f32.mrf.mxu0
    %v6481 = vadd.f32 0.0, %v6480
    %v6482 = vpop.f32.mrf.mxu0
    %6483 = vdwg.mxu0
    %v6486 = vunpack.c.l.b16 %v6312
    %v6487 = vunpack.c.l.b16 %v6313
    %v6488 = vpack.c.b16 %v6487, %v6486
    %v6490 = vsel %vm1010, %v5926, 0
    %v6493 = vsel %vm1010, %v6488, 0
    %6495 = vmatpush.bf16.xpose.msra.mxu0 0
    %6496 = vmatpush.bf16.xpose.msra.mxu0 0
    %6497 = vmatpush.bf16.xpose.msra.mxu0 0
    %6498 = vmatpush.bf16.xpose.msra.mxu0 0
    %6499 = vmatpush.bf16.xpose.msra.mxu0 0
    %6500 = vmatpush.bf16.xpose.msra.mxu0 0
    %6501 = vmatpush.bf16.xpose.msra.mxu0 0
    %6502 = vmatpush.bf16.xpose.msra.mxu0 %v6493
    %6503 = vmatmul.bf16.gmra.mxu0 %v6490
    %v6504 = vpop.f32.mrf.mxu0
    %v6505 = vadd.f32 0.0, %v6504
    %v6506 = vpop.f32.mrf.mxu0
    %6507 = vdwg.mxu0
    %v6510 = vunpack.c.l.b16 %v6314
    %v6511 = vunpack.c.l.b16 %v6315
    %v6512 = vpack.c.b16 %v6511, %v6510
    %v6514 = vsel %vm1010, %v5927, 0
    %v6517 = vsel %vm1010, %v6512, 0
    %6519 = vmatpush.bf16.xpose.msra.mxu0 0
    %6520 = vmatpush.bf16.xpose.msra.mxu0 0
    %6521 = vmatpush.bf16.xpose.msra.mxu0 0
    %6522 = vmatpush.bf16.xpose.msra.mxu0 0
    %6523 = vmatpush.bf16.xpose.msra.mxu0 0
    %6524 = vmatpush.bf16.xpose.msra.mxu0 0
    %6525 = vmatpush.bf16.xpose.msra.mxu0 0
    %6526 = vmatpush.bf16.xpose.msra.mxu0 %v6517
    %6527 = vmatmul.bf16.gmra.mxu0 %v6514
    %v6528 = vpop.f32.mrf.mxu0
    %v6529 = vadd.f32 0.0, %v6528
    %v6530 = vpop.f32.mrf.mxu0
    %6531 = vdwg.mxu0
    %v6534 = vunpack.c.l.b16 %v6316
    %v6535 = vunpack.c.l.b16 %v6317
    %v6536 = vpack.c.b16 %v6535, %v6534
    %v6538 = vsel %vm1010, %v5928, 0
    %v6541 = vsel %vm1010, %v6536, 0
    %6543 = vmatpush.bf16.xpose.msra.mxu0 0
    %6544 = vmatpush.bf16.xpose.msra.mxu0 0
    %6545 = vmatpush.bf16.xpose.msra.mxu0 0
    %6546 = vmatpush.bf16.xpose.msra.mxu0 0
    %6547 = vmatpush.bf16.xpose.msra.mxu0 0
    %6548 = vmatpush.bf16.xpose.msra.mxu0 0
    %6549 = vmatpush.bf16.xpose.msra.mxu0 0
    %6550 = vmatpush.bf16.xpose.msra.mxu0 %v6541
    %6551 = vmatmul.bf16.gmra.mxu0 %v6538
    %v6552 = vpop.f32.mrf.mxu0
    %v6553 = vadd.f32 0.0, %v6552
    %v6554 = vpop.f32.mrf.mxu0
    %6555 = vdwg.mxu0
    %v6558 = vunpack.c.l.b16 %v6318
    %v6559 = vunpack.c.l.b16 %v6319
    %v6560 = vpack.c.b16 %v6559, %v6558
    %v6562 = vsel %vm1010, %v5929, 0
    %v6565 = vsel %vm1010, %v6560, 0
    %6567 = vmatpush.bf16.xpose.msra.mxu0 0
    %6568 = vmatpush.bf16.xpose.msra.mxu0 0
    %6569 = vmatpush.bf16.xpose.msra.mxu0 0
    %6570 = vmatpush.bf16.xpose.msra.mxu0 0
    %6571 = vmatpush.bf16.xpose.msra.mxu0 0
    %6572 = vmatpush.bf16.xpose.msra.mxu0 0
    %6573 = vmatpush.bf16.xpose.msra.mxu0 0
    %6574 = vmatpush.bf16.xpose.msra.mxu0 %v6565
    %6575 = vmatmul.bf16.gmra.mxu0 %v6562
    %v6576 = vpop.f32.mrf.mxu0
    %v6577 = vadd.f32 0.0, %v6576
    %v6578 = vpop.f32.mrf.mxu0
    %6579 = vdwg.mxu0
    %v6582 = vunpack.c.l.b16 %v6320
    %v6583 = vunpack.c.l.b16 %v6321
    %v6584 = vpack.c.b16 %v6583, %v6582
    %v6586 = vsel %vm1010, %v5930, 0
    %v6589 = vsel %vm1010, %v6584, 0
    %6591 = vmatpush.bf16.xpose.msra.mxu0 0
    %6592 = vmatpush.bf16.xpose.msra.mxu0 0
    %6593 = vmatpush.bf16.xpose.msra.mxu0 0
    %6594 = vmatpush.bf16.xpose.msra.mxu0 0
    %6595 = vmatpush.bf16.xpose.msra.mxu0 0
    %6596 = vmatpush.bf16.xpose.msra.mxu0 0
    %6597 = vmatpush.bf16.xpose.msra.mxu0 0
    %6598 = vmatpush.bf16.xpose.msra.mxu0 %v6589
    %6599 = vmatmul.bf16.gmra.mxu0 %v6586
    %v6600 = vpop.f32.mrf.mxu0
    %v6601 = vadd.f32 0.0, %v6600
    %v6602 = vpop.f32.mrf.mxu0
    %6603 = vdwg.mxu0
    %v6606 = vunpack.c.l.b16 %v6322
    %v6607 = vunpack.c.l.b16 %v6323
    %v6608 = vpack.c.b16 %v6607, %v6606
    %v6610 = vsel %vm1010, %v5931, 0
    %v6613 = vsel %vm1010, %v6608, 0
    %6615 = vmatpush.bf16.xpose.msra.mxu0 0
    %6616 = vmatpush.bf16.xpose.msra.mxu0 0
    %6617 = vmatpush.bf16.xpose.msra.mxu0 0
    %6618 = vmatpush.bf16.xpose.msra.mxu0 0
    %6619 = vmatpush.bf16.xpose.msra.mxu0 0
    %6620 = vmatpush.bf16.xpose.msra.mxu0 0
    %6621 = vmatpush.bf16.xpose.msra.mxu0 0
    %6622 = vmatpush.bf16.xpose.msra.mxu0 %v6613
    %6623 = vmatmul.bf16.gmra.mxu0 %v6610
    %v6624 = vpop.f32.mrf.mxu0
    %v6625 = vadd.f32 0.0, %v6624
    %v6626 = vpop.f32.mrf.mxu0
    %6627 = vdwg.mxu0
    %v6630 = vunpack.c.l.b16 %v6324
    %v6631 = vunpack.c.l.b16 %v6325
    %v6632 = vpack.c.b16 %v6631, %v6630
    %v6634 = vsel %vm1010, %v5932, 0
    %v6637 = vsel %vm1010, %v6632, 0
    %6639 = vmatpush.bf16.xpose.msra.mxu0 0
    %6640 = vmatpush.bf16.xpose.msra.mxu0 0
    %6641 = vmatpush.bf16.xpose.msra.mxu0 0
    %6642 = vmatpush.bf16.xpose.msra.mxu0 0
    %6643 = vmatpush.bf16.xpose.msra.mxu0 0
    %6644 = vmatpush.bf16.xpose.msra.mxu0 0
    %6645 = vmatpush.bf16.xpose.msra.mxu0 0
    %6646 = vmatpush.bf16.xpose.msra.mxu0 %v6637
    %6647 = vmatmul.bf16.gmra.mxu0 %v6634
    %v6648 = vpop.f32.mrf.mxu0
    %v6649 = vadd.f32 0.0, %v6648
    %v6650 = vpop.f32.mrf.mxu0
    %6651 = vdwg.mxu0
    %v6654 = vunpack.c.l.b16 %v6326
    %v6655 = vunpack.c.l.b16 %v6327
    %v6656 = vpack.c.b16 %v6655, %v6654
    %v6658 = vsel %vm1010, %v5933, 0
    %v6661 = vsel %vm1010, %v6656, 0
    %6663 = vmatpush.bf16.xpose.msra.mxu0 0
    %6664 = vmatpush.bf16.xpose.msra.mxu0 0
    %6665 = vmatpush.bf16.xpose.msra.mxu0 0
    %6666 = vmatpush.bf16.xpose.msra.mxu0 0
    %6667 = vmatpush.bf16.xpose.msra.mxu0 0
    %6668 = vmatpush.bf16.xpose.msra.mxu0 0
    %6669 = vmatpush.bf16.xpose.msra.mxu0 0
    %6670 = vmatpush.bf16.xpose.msra.mxu0 %v6661
    %6671 = vmatmul.bf16.gmra.mxu0 %v6658
    %v6672 = vpop.f32.mrf.mxu0
    %v6673 = vadd.f32 0.0, %v6672
    %v6674 = vpop.f32.mrf.mxu0
    %6675 = vdwg.mxu0
    %v6678 = vunpack.c.l.b16 %v6328
    %v6679 = vunpack.c.l.b16 %v6329
    %v6680 = vpack.c.b16 %v6679, %v6678
    %v6682 = vsel %vm1010, %v5934, 0
    %v6685 = vsel %vm1010, %v6680, 0
    %6687 = vmatpush.bf16.xpose.msra.mxu0 0
    %6688 = vmatpush.bf16.xpose.msra.mxu0 0
    %6689 = vmatpush.bf16.xpose.msra.mxu0 0
    %6690 = vmatpush.bf16.xpose.msra.mxu0 0
    %6691 = vmatpush.bf16.xpose.msra.mxu0 0
    %6692 = vmatpush.bf16.xpose.msra.mxu0 0
    %6693 = vmatpush.bf16.xpose.msra.mxu0 0
    %6694 = vmatpush.bf16.xpose.msra.mxu0 %v6685
    %6695 = vmatmul.bf16.gmra.mxu0 %v6682
    %v6696 = vpop.f32.mrf.mxu0
    %v6697 = vadd.f32 0.0, %v6696
    %v6698 = vpop.f32.mrf.mxu0
    %6699 = vdwg.mxu0
    %v6702 = vunpack.c.l.b16 %v6330
    %v6703 = vunpack.c.l.b16 %v6331
    %v6704 = vpack.c.b16 %v6703, %v6702
    %v6706 = vsel %vm1010, %v5935, 0
    %v6709 = vsel %vm1010, %v6704, 0
    %6711 = vmatpush.bf16.xpose.msra.mxu0 0
    %6712 = vmatpush.bf16.xpose.msra.mxu0 0
    %6713 = vmatpush.bf16.xpose.msra.mxu0 0
    %6714 = vmatpush.bf16.xpose.msra.mxu0 0
    %6715 = vmatpush.bf16.xpose.msra.mxu0 0
    %6716 = vmatpush.bf16.xpose.msra.mxu0 0
    %6717 = vmatpush.bf16.xpose.msra.mxu0 0
    %6718 = vmatpush.bf16.xpose.msra.mxu0 %v6709
    %6719 = vmatmul.bf16.gmra.mxu0 %v6706
    %v6720 = vpop.f32.mrf.mxu0
    %v6721 = vadd.f32 0.0, %v6720
    %v6722 = vpop.f32.mrf.mxu0
    %6723 = vdwg.mxu0
    %v6726 = vunpack.c.l.b16 %v6332
    %v6727 = vunpack.c.l.b16 %v6333
    %v6728 = vpack.c.b16 %v6727, %v6726
    %v6730 = vsel %vm1010, %v5936, 0
    %v6733 = vsel %vm1010, %v6728, 0
    %6735 = vmatpush.bf16.xpose.msra.mxu0 0
    %6736 = vmatpush.bf16.xpose.msra.mxu0 0
    %6737 = vmatpush.bf16.xpose.msra.mxu0 0
    %6738 = vmatpush.bf16.xpose.msra.mxu0 0
    %6739 = vmatpush.bf16.xpose.msra.mxu0 0
    %6740 = vmatpush.bf16.xpose.msra.mxu0 0
    %6741 = vmatpush.bf16.xpose.msra.mxu0 0
    %6742 = vmatpush.bf16.xpose.msra.mxu0 %v6733
    %6743 = vmatmul.bf16.gmra.mxu0 %v6730
    %v6744 = vpop.f32.mrf.mxu0
    %v6745 = vadd.f32 0.0, %v6744
    %v6746 = vpop.f32.mrf.mxu0
    %6747 = vdwg.mxu0
    %v6750 = vunpack.c.l.b16 %v6334
    %v6751 = vunpack.c.l.b16 %v6335
    %v6752 = vpack.c.b16 %v6751, %v6750
    %v6754 = vsel %vm1010, %v5937, 0
    %v6757 = vsel %vm1010, %v6752, 0
    %6759 = vmatpush.bf16.xpose.msra.mxu0 0
    %6760 = vmatpush.bf16.xpose.msra.mxu0 0
    %6761 = vmatpush.bf16.xpose.msra.mxu0 0
    %6762 = vmatpush.bf16.xpose.msra.mxu0 0
    %6763 = vmatpush.bf16.xpose.msra.mxu0 0
    %6764 = vmatpush.bf16.xpose.msra.mxu0 0
    %6765 = vmatpush.bf16.xpose.msra.mxu0 0
    %6766 = vmatpush.bf16.xpose.msra.mxu0 %v6757
    %6767 = vmatmul.bf16.gmra.mxu0 %v6754
    %v6768 = vpop.f32.mrf.mxu0
    %v6769 = vadd.f32 0.0, %v6768
    %v6770 = vpop.f32.mrf.mxu0
    %6771 = vdwg.mxu0
    %v6774 = vunpack.c.l.b16 %v6336
    %v6775 = vunpack.c.l.b16 %v6337
    %v6776 = vpack.c.b16 %v6775, %v6774
    %v6778 = vsel %vm1010, %v5938, 0
    %v6781 = vsel %vm1010, %v6776, 0
    %6783 = vmatpush.bf16.xpose.msra.mxu0 0
    %6784 = vmatpush.bf16.xpose.msra.mxu0 0
    %6785 = vmatpush.bf16.xpose.msra.mxu0 0
    %6786 = vmatpush.bf16.xpose.msra.mxu0 0
    %6787 = vmatpush.bf16.xpose.msra.mxu0 0
    %6788 = vmatpush.bf16.xpose.msra.mxu0 0
    %6789 = vmatpush.bf16.xpose.msra.mxu0 0
    %6790 = vmatpush.bf16.xpose.msra.mxu0 %v6781
    %6791 = vmatmul.bf16.gmra.mxu0 %v6778
    %v6792 = vpop.f32.mrf.mxu0
    %v6793 = vadd.f32 0.0, %v6792
    %v6794 = vpop.f32.mrf.mxu0
    %6795 = vdwg.mxu0
    %v6798 = vunpack.c.l.b16 %v6338
    %v6799 = vunpack.c.l.b16 %v6339
    %v6800 = vpack.c.b16 %v6799, %v6798
    %v6802 = vsel %vm1010, %v5939, 0
    %v6805 = vsel %vm1010, %v6800, 0
    %6807 = vmatpush.bf16.xpose.msra.mxu0 0
    %6808 = vmatpush.bf16.xpose.msra.mxu0 0
    %6809 = vmatpush.bf16.xpose.msra.mxu0 0
    %6810 = vmatpush.bf16.xpose.msra.mxu0 0
    %6811 = vmatpush.bf16.xpose.msra.mxu0 0
    %6812 = vmatpush.bf16.xpose.msra.mxu0 0
    %6813 = vmatpush.bf16.xpose.msra.mxu0 0
    %6814 = vmatpush.bf16.xpose.msra.mxu0 %v6805
    %6815 = vmatmul.bf16.gmra.mxu0 %v6802
    %v6816 = vpop.f32.mrf.mxu0
    %v6817 = vadd.f32 0.0, %v6816
    %v6818 = vpop.f32.mrf.mxu0
    %6819 = vdwg.mxu0
    %v6822 = vunpack.c.l.b16 %v6340
    %v6823 = vunpack.c.l.b16 %v6341
    %v6824 = vpack.c.b16 %v6823, %v6822
    %v6826 = vsel %vm1010, %v5940, 0
    %v6829 = vsel %vm1010, %v6824, 0
    %6831 = vmatpush.bf16.xpose.msra.mxu0 0
    %6832 = vmatpush.bf16.xpose.msra.mxu0 0
    %6833 = vmatpush.bf16.xpose.msra.mxu0 0
    %6834 = vmatpush.bf16.xpose.msra.mxu0 0
    %6835 = vmatpush.bf16.xpose.msra.mxu0 0
    %6836 = vmatpush.bf16.xpose.msra.mxu0 0
    %6837 = vmatpush.bf16.xpose.msra.mxu0 0
    %6838 = vmatpush.bf16.xpose.msra.mxu0 %v6829
    %6839 = vmatmul.bf16.gmra.mxu0 %v6826
    %v6840 = vpop.f32.mrf.mxu0
    %v6841 = vadd.f32 0.0, %v6840
    %v6842 = vpop.f32.mrf.mxu0
    %6843 = vdwg.mxu0
    %v6846 = vunpack.c.l.b16 %v6342
    %v6847 = vunpack.c.l.b16 %v6343
    %v6848 = vpack.c.b16 %v6847, %v6846
    %v6850 = vsel %vm1010, %v5941, 0
    %v6853 = vsel %vm1010, %v6848, 0
    %6855 = vmatpush.bf16.xpose.msra.mxu0 0
    %6856 = vmatpush.bf16.xpose.msra.mxu0 0
    %6857 = vmatpush.bf16.xpose.msra.mxu0 0
    %6858 = vmatpush.bf16.xpose.msra.mxu0 0
    %6859 = vmatpush.bf16.xpose.msra.mxu0 0
    %6860 = vmatpush.bf16.xpose.msra.mxu0 0
    %6861 = vmatpush.bf16.xpose.msra.mxu0 0
    %6862 = vmatpush.bf16.xpose.msra.mxu0 %v6853
    %6863 = vmatmul.bf16.gmra.mxu0 %v6850
    %v6864 = vpop.f32.mrf.mxu0
    %v6865 = vadd.f32 0.0, %v6864
    %v6866 = vpop.f32.mrf.mxu0
    %6867 = vdwg.mxu0
    %v6870 = vunpack.c.l.b16 %v6344
    %v6871 = vunpack.c.l.b16 %v6345
    %v6872 = vpack.c.b16 %v6871, %v6870
    %v6874 = vsel %vm1010, %v5942, 0
    %v6877 = vsel %vm1010, %v6872, 0
    %6879 = vmatpush.bf16.xpose.msra.mxu0 0
    %6880 = vmatpush.bf16.xpose.msra.mxu0 0
    %6881 = vmatpush.bf16.xpose.msra.mxu0 0
    %6882 = vmatpush.bf16.xpose.msra.mxu0 0
    %6883 = vmatpush.bf16.xpose.msra.mxu0 0
    %6884 = vmatpush.bf16.xpose.msra.mxu0 0
    %6885 = vmatpush.bf16.xpose.msra.mxu0 0
    %6886 = vmatpush.bf16.xpose.msra.mxu0 %v6877
    %6887 = vmatmul.bf16.gmra.mxu0 %v6874
    %v6888 = vpop.f32.mrf.mxu0
    %v6889 = vadd.f32 0.0, %v6888
    %v6890 = vpop.f32.mrf.mxu0
    %6891 = vdwg.mxu0
    %v6894 = vunpack.c.l.b16 %v6346
    %v6895 = vunpack.c.l.b16 %v6347
    %v6896 = vpack.c.b16 %v6895, %v6894
    %v6898 = vsel %vm1010, %v5943, 0
    %v6901 = vsel %vm1010, %v6896, 0
    %6903 = vmatpush.bf16.xpose.msra.mxu0 0
    %6904 = vmatpush.bf16.xpose.msra.mxu0 0
    %6905 = vmatpush.bf16.xpose.msra.mxu0 0
    %6906 = vmatpush.bf16.xpose.msra.mxu0 0
    %6907 = vmatpush.bf16.xpose.msra.mxu0 0
    %6908 = vmatpush.bf16.xpose.msra.mxu0 0
    %6909 = vmatpush.bf16.xpose.msra.mxu0 0
    %6910 = vmatpush.bf16.xpose.msra.mxu0 %v6901
    %6911 = vmatmul.bf16.gmra.mxu0 %v6898
    %v6912 = vpop.f32.mrf.mxu0
    %v6913 = vadd.f32 0.0, %v6912
    %v6914 = vpop.f32.mrf.mxu0
    %6915 = vdwg.mxu0
    %v6918 = vunpack.c.l.b16 %v6348
    %v6919 = vunpack.c.l.b16 %v6349
    %v6920 = vpack.c.b16 %v6919, %v6918
    %v6922 = vsel %vm1010, %v5944, 0
    %v6925 = vsel %vm1010, %v6920, 0
    %6927 = vmatpush.bf16.xpose.msra.mxu0 0
    %6928 = vmatpush.bf16.xpose.msra.mxu0 0
    %6929 = vmatpush.bf16.xpose.msra.mxu0 0
    %6930 = vmatpush.bf16.xpose.msra.mxu0 0
    %6931 = vmatpush.bf16.xpose.msra.mxu0 0
    %6932 = vmatpush.bf16.xpose.msra.mxu0 0
    %6933 = vmatpush.bf16.xpose.msra.mxu0 0
    %6934 = vmatpush.bf16.xpose.msra.mxu0 %v6925
    %6935 = vmatmul.bf16.gmra.mxu0 %v6922
    %v6936 = vpop.f32.mrf.mxu0
    %v6937 = vadd.f32 0.0, %v6936
    %v6938 = vpop.f32.mrf.mxu0
    %6939 = vdwg.mxu0
    %v6942 = vunpack.c.l.b16 %v6350
    %v6943 = vunpack.c.l.b16 %v6351
    %v6944 = vpack.c.b16 %v6943, %v6942
    %v6946 = vsel %vm1010, %v5945, 0
    %v6949 = vsel %vm1010, %v6944, 0
    %6951 = vmatpush.bf16.xpose.msra.mxu0 0
    %6952 = vmatpush.bf16.xpose.msra.mxu0 0
    %6953 = vmatpush.bf16.xpose.msra.mxu0 0
    %6954 = vmatpush.bf16.xpose.msra.mxu0 0
    %6955 = vmatpush.bf16.xpose.msra.mxu0 0
    %6956 = vmatpush.bf16.xpose.msra.mxu0 0
    %6957 = vmatpush.bf16.xpose.msra.mxu0 0
    %6958 = vmatpush.bf16.xpose.msra.mxu0 %v6949
    %6959 = vmatmul.bf16.gmra.mxu0 %v6946
    %v6960 = vpop.f32.mrf.mxu0
    %v6961 = vadd.f32 0.0, %v6960
    %v6962 = vpop.f32.mrf.mxu0
    %6963 = vdwg.mxu0
    %v6966 = vunpack.c.l.b16 %v6352
    %v6967 = vunpack.c.l.b16 %v6353
    %v6968 = vpack.c.b16 %v6967, %v6966
    %v6970 = vsel %vm1010, %v5946, 0
    %v6973 = vsel %vm1010, %v6968, 0
    %6975 = vmatpush.bf16.xpose.msra.mxu0 0
    %6976 = vmatpush.bf16.xpose.msra.mxu0 0
    %6977 = vmatpush.bf16.xpose.msra.mxu0 0
    %6978 = vmatpush.bf16.xpose.msra.mxu0 0
    %6979 = vmatpush.bf16.xpose.msra.mxu0 0
    %6980 = vmatpush.bf16.xpose.msra.mxu0 0
    %6981 = vmatpush.bf16.xpose.msra.mxu0 0
    %6982 = vmatpush.bf16.xpose.msra.mxu0 %v6973
    %6983 = vmatmul.bf16.gmra.mxu0 %v6970
    %v6984 = vpop.f32.mrf.mxu0
    %v6985 = vadd.f32 0.0, %v6984
    %v6986 = vpop.f32.mrf.mxu0
    %6987 = vdwg.mxu0
    %v6990 = vunpack.c.l.b16 %v6354
    %v6991 = vunpack.c.l.b16 %v6355
    %v6992 = vpack.c.b16 %v6991, %v6990
    %v6994 = vsel %vm1010, %v5947, 0
    %v6997 = vsel %vm1010, %v6992, 0
    %6999 = vmatpush.bf16.xpose.msra.mxu0 0
    %7000 = vmatpush.bf16.xpose.msra.mxu0 0
    %7001 = vmatpush.bf16.xpose.msra.mxu0 0
    %7002 = vmatpush.bf16.xpose.msra.mxu0 0
    %7003 = vmatpush.bf16.xpose.msra.mxu0 0
    %7004 = vmatpush.bf16.xpose.msra.mxu0 0
    %7005 = vmatpush.bf16.xpose.msra.mxu0 0
    %7006 = vmatpush.bf16.xpose.msra.mxu0 %v6997
    %7007 = vmatmul.bf16.gmra.mxu0 %v6994
    %v7008 = vpop.f32.mrf.mxu0
    %v7009 = vadd.f32 0.0, %v7008
    %v7010 = vpop.f32.mrf.mxu0
    %7011 = vdwg.mxu0
    %v7014 = vunpack.c.l.b16 %v6356
    %v7015 = vunpack.c.l.b16 %v6357
    %v7016 = vpack.c.b16 %v7015, %v7014
    %v7018 = vsel %vm1010, %v5948, 0
    %v7021 = vsel %vm1010, %v7016, 0
    %7023 = vmatpush.bf16.xpose.msra.mxu0 0
    %7024 = vmatpush.bf16.xpose.msra.mxu0 0
    %7025 = vmatpush.bf16.xpose.msra.mxu0 0
    %7026 = vmatpush.bf16.xpose.msra.mxu0 0
    %7027 = vmatpush.bf16.xpose.msra.mxu0 0
    %7028 = vmatpush.bf16.xpose.msra.mxu0 0
    %7029 = vmatpush.bf16.xpose.msra.mxu0 0
    %7030 = vmatpush.bf16.xpose.msra.mxu0 %v7021
    %7031 = vmatmul.bf16.gmra.mxu0 %v7018
    %v7032 = vpop.f32.mrf.mxu0
    %v7033 = vadd.f32 0.0, %v7032
    %v7034 = vpop.f32.mrf.mxu0
    %7035 = vdwg.mxu0
    %v7038 = vunpack.c.l.b16 %v6358
    %v7039 = vunpack.c.l.b16 %v6359
    %v7040 = vpack.c.b16 %v7039, %v7038
    %v7042 = vsel %vm1010, %v5949, 0
    %v7045 = vsel %vm1010, %v7040, 0
    %7047 = vmatpush.bf16.xpose.msra.mxu0 0
    %7048 = vmatpush.bf16.xpose.msra.mxu0 0
    %7049 = vmatpush.bf16.xpose.msra.mxu0 0
    %7050 = vmatpush.bf16.xpose.msra.mxu0 0
    %7051 = vmatpush.bf16.xpose.msra.mxu0 0
    %7052 = vmatpush.bf16.xpose.msra.mxu0 0
    %7053 = vmatpush.bf16.xpose.msra.mxu0 0
    %7054 = vmatpush.bf16.xpose.msra.mxu0 %v7045
    %7055 = vmatmul.bf16.gmra.mxu0 %v7042
    %v7056 = vpop.f32.mrf.mxu0
    %v7057 = vadd.f32 0.0, %v7056
    %v7058 = vpop.f32.mrf.mxu0
    %7059 = vdwg.mxu0
    %v7062 = vunpack.c.l.b16 %v6360
    %v7063 = vunpack.c.l.b16 %v6361
    %v7064 = vpack.c.b16 %v7063, %v7062
    %v7066 = vsel %vm1010, %v5950, 0
    %v7069 = vsel %vm1010, %v7064, 0
    %7071 = vmatpush.bf16.xpose.msra.mxu0 0
    %7072 = vmatpush.bf16.xpose.msra.mxu0 0
    %7073 = vmatpush.bf16.xpose.msra.mxu0 0
    %7074 = vmatpush.bf16.xpose.msra.mxu0 0
    %7075 = vmatpush.bf16.xpose.msra.mxu0 0
    %7076 = vmatpush.bf16.xpose.msra.mxu0 0
    %7077 = vmatpush.bf16.xpose.msra.mxu0 0
    %7078 = vmatpush.bf16.xpose.msra.mxu0 %v7069
    %7079 = vmatmul.bf16.gmra.mxu0 %v7066
    %v7080 = vpop.f32.mrf.mxu0
    %v7081 = vadd.f32 0.0, %v7080
    %v7082 = vpop.f32.mrf.mxu0
    %7083 = vdwg.mxu0
    %v7086 = vunpack.c.l.b16 %v6362
    %v7087 = vunpack.c.l.b16 %v6363
    %v7088 = vpack.c.b16 %v7087, %v7086
    %v7090 = vsel %vm1010, %v5951, 0
    %v7093 = vsel %vm1010, %v7088, 0
    %7095 = vmatpush.bf16.xpose.msra.mxu0 0
    %7096 = vmatpush.bf16.xpose.msra.mxu0 0
    %7097 = vmatpush.bf16.xpose.msra.mxu0 0
    %7098 = vmatpush.bf16.xpose.msra.mxu0 0
    %7099 = vmatpush.bf16.xpose.msra.mxu0 0
    %7100 = vmatpush.bf16.xpose.msra.mxu0 0
    %7101 = vmatpush.bf16.xpose.msra.mxu0 0
    %7102 = vmatpush.bf16.xpose.msra.mxu0 %v7093
    %7103 = vmatmul.bf16.gmra.mxu0 %v7090
    %v7104 = vpop.f32.mrf.mxu0
    %v7105 = vadd.f32 0.0, %v7104
    %v7106 = vpop.f32.mrf.mxu0
    %7107 = vdwg.mxu0
    %v7110 = vunpack.c.l.b16 %v6364
    %v7111 = vunpack.c.l.b16 %v6365
    %v7112 = vpack.c.b16 %v7111, %v7110
    %v7114 = vsel %vm1010, %v5952, 0
    %v7117 = vsel %vm1010, %v7112, 0
    %7119 = vmatpush.bf16.xpose.msra.mxu0 0
    %7120 = vmatpush.bf16.xpose.msra.mxu0 0
    %7121 = vmatpush.bf16.xpose.msra.mxu0 0
    %7122 = vmatpush.bf16.xpose.msra.mxu0 0
    %7123 = vmatpush.bf16.xpose.msra.mxu0 0
    %7124 = vmatpush.bf16.xpose.msra.mxu0 0
    %7125 = vmatpush.bf16.xpose.msra.mxu0 0
    %7126 = vmatpush.bf16.xpose.msra.mxu0 %v7117
    %7127 = vmatmul.bf16.gmra.mxu0 %v7114
    %v7128 = vpop.f32.mrf.mxu0
    %v7129 = vadd.f32 0.0, %v7128
    %v7130 = vpop.f32.mrf.mxu0
    %7131 = vdwg.mxu0
    %v7134 = vunpack.c.l.b16 %v6366
    %v7135 = vunpack.c.l.b16 %v6367
    %v7136 = vpack.c.b16 %v7135, %v7134
    %v7138 = vsel %vm1010, %v5953, 0
    %v7141 = vsel %vm1010, %v7136, 0
    %7143 = vmatpush.bf16.xpose.msra.mxu0 0
    %7144 = vmatpush.bf16.xpose.msra.mxu0 0
    %7145 = vmatpush.bf16.xpose.msra.mxu0 0
    %7146 = vmatpush.bf16.xpose.msra.mxu0 0
    %7147 = vmatpush.bf16.xpose.msra.mxu0 0
    %7148 = vmatpush.bf16.xpose.msra.mxu0 0
    %7149 = vmatpush.bf16.xpose.msra.mxu0 0
    %7150 = vmatpush.bf16.xpose.msra.mxu0 %v7141
    %7151 = vmatmul.bf16.gmra.mxu0 %v7138
    %v7152 = vpop.f32.mrf.mxu0
    %v7153 = vadd.f32 0.0, %v7152
    %v7154 = vpop.f32.mrf.mxu0
    %7155 = vdwg.mxu0
    %v7158 = vunpack.c.l.b16 %v6368
    %v7159 = vunpack.c.l.b16 %v6369
    %v7160 = vpack.c.b16 %v7159, %v7158
    %v7162 = vsel %vm1010, %v5954, 0
    %v7165 = vsel %vm1010, %v7160, 0
    %7167 = vmatpush.bf16.xpose.msra.mxu0 0
    %7168 = vmatpush.bf16.xpose.msra.mxu0 0
    %7169 = vmatpush.bf16.xpose.msra.mxu0 0
    %7170 = vmatpush.bf16.xpose.msra.mxu0 0
    %7171 = vmatpush.bf16.xpose.msra.mxu0 0
    %7172 = vmatpush.bf16.xpose.msra.mxu0 0
    %7173 = vmatpush.bf16.xpose.msra.mxu0 0
    %7174 = vmatpush.bf16.xpose.msra.mxu0 %v7165
    %7175 = vmatmul.bf16.gmra.mxu0 %v7162
    %v7176 = vpop.f32.mrf.mxu0
    %v7177 = vadd.f32 0.0, %v7176
    %v7178 = vpop.f32.mrf.mxu0
    %7179 = vdwg.mxu0
    %v7182 = vunpack.c.l.b16 %v6370
    %v7183 = vunpack.c.l.b16 %v6371
    %v7184 = vpack.c.b16 %v7183, %v7182
    %v7186 = vsel %vm1010, %v5955, 0
    %v7189 = vsel %vm1010, %v7184, 0
    %7191 = vmatpush.bf16.xpose.msra.mxu0 0
    %7192 = vmatpush.bf16.xpose.msra.mxu0 0
    %7193 = vmatpush.bf16.xpose.msra.mxu0 0
    %7194 = vmatpush.bf16.xpose.msra.mxu0 0
    %7195 = vmatpush.bf16.xpose.msra.mxu0 0
    %7196 = vmatpush.bf16.xpose.msra.mxu0 0
    %7197 = vmatpush.bf16.xpose.msra.mxu0 0
    %7198 = vmatpush.bf16.xpose.msra.mxu0 %v7189
    %7199 = vmatmul.bf16.gmra.mxu0 %v7186
    %v7200 = vpop.f32.mrf.mxu0
    %v7201 = vadd.f32 0.0, %v7200
    %v7202 = vpop.f32.mrf.mxu0
    %7203 = vdwg.mxu0
    %v7206 = vunpack.c.l.b16 %v6372
    %v7207 = vunpack.c.l.b16 %v6373
    %v7208 = vpack.c.b16 %v7207, %v7206
    %v7210 = vsel %vm1010, %v5956, 0
    %v7213 = vsel %vm1010, %v7208, 0
    %7215 = vmatpush.bf16.xpose.msra.mxu0 0
    %7216 = vmatpush.bf16.xpose.msra.mxu0 0
    %7217 = vmatpush.bf16.xpose.msra.mxu0 0
    %7218 = vmatpush.bf16.xpose.msra.mxu0 0
    %7219 = vmatpush.bf16.xpose.msra.mxu0 0
    %7220 = vmatpush.bf16.xpose.msra.mxu0 0
    %7221 = vmatpush.bf16.xpose.msra.mxu0 0
    %7222 = vmatpush.bf16.xpose.msra.mxu0 %v7213
    %7223 = vmatmul.bf16.gmra.mxu0 %v7210
    %v7224 = vpop.f32.mrf.mxu0
    %v7225 = vadd.f32 0.0, %v7224
    %v7226 = vpop.f32.mrf.mxu0
    %7227 = vdwg.mxu0
    %v7230 = vunpack.c.l.b16 %v6374
    %v7231 = vunpack.c.l.b16 %v6375
    %v7232 = vpack.c.b16 %v7231, %v7230
    %v7234 = vsel %vm1010, %v5957, 0
    %v7237 = vsel %vm1010, %v7232, 0
    %7239 = vmatpush.bf16.xpose.msra.mxu0 0
    %7240 = vmatpush.bf16.xpose.msra.mxu0 0
    %7241 = vmatpush.bf16.xpose.msra.mxu0 0
    %7242 = vmatpush.bf16.xpose.msra.mxu0 0
    %7243 = vmatpush.bf16.xpose.msra.mxu0 0
    %7244 = vmatpush.bf16.xpose.msra.mxu0 0
    %7245 = vmatpush.bf16.xpose.msra.mxu0 0
    %7246 = vmatpush.bf16.xpose.msra.mxu0 %v7237
    %7247 = vmatmul.bf16.gmra.mxu0 %v7234
    %v7248 = vpop.f32.mrf.mxu0
    %v7249 = vadd.f32 0.0, %v7248
    %v7250 = vpop.f32.mrf.mxu0
    %7251 = vdwg.mxu0
    %v7254 = vunpack.c.l.b16 %v6376
    %v7255 = vunpack.c.l.b16 %v6377
    %v7256 = vpack.c.b16 %v7255, %v7254
    %v7258 = vsel %vm1010, %v5958, 0
    %v7261 = vsel %vm1010, %v7256, 0
    %7263 = vmatpush.bf16.xpose.msra.mxu0 0
    %7264 = vmatpush.bf16.xpose.msra.mxu0 0
    %7265 = vmatpush.bf16.xpose.msra.mxu0 0
    %7266 = vmatpush.bf16.xpose.msra.mxu0 0
    %7267 = vmatpush.bf16.xpose.msra.mxu0 0
    %7268 = vmatpush.bf16.xpose.msra.mxu0 0
    %7269 = vmatpush.bf16.xpose.msra.mxu0 0
    %7270 = vmatpush.bf16.xpose.msra.mxu0 %v7261
    %7271 = vmatmul.bf16.gmra.mxu0 %v7258
    %v7272 = vpop.f32.mrf.mxu0
    %v7273 = vadd.f32 0.0, %v7272
    %v7274 = vpop.f32.mrf.mxu0
    %7275 = vdwg.mxu0
    %v7278 = vunpack.c.l.b16 %v6378
    %v7279 = vunpack.c.l.b16 %v6379
    %v7280 = vpack.c.b16 %v7279, %v7278
    %v7282 = vsel %vm1010, %v5959, 0
    %v7285 = vsel %vm1010, %v7280, 0
    %7287 = vmatpush.bf16.xpose.msra.mxu0 0
    %7288 = vmatpush.bf16.xpose.msra.mxu0 0
    %7289 = vmatpush.bf16.xpose.msra.mxu0 0
    %7290 = vmatpush.bf16.xpose.msra.mxu0 0
    %7291 = vmatpush.bf16.xpose.msra.mxu0 0
    %7292 = vmatpush.bf16.xpose.msra.mxu0 0
    %7293 = vmatpush.bf16.xpose.msra.mxu0 0
    %7294 = vmatpush.bf16.xpose.msra.mxu0 %v7285
    %7295 = vmatmul.bf16.gmra.mxu0 %v7282
    %v7296 = vpop.f32.mrf.mxu0
    %v7297 = vadd.f32 0.0, %v7296
    %v7298 = vpop.f32.mrf.mxu0
    %7299 = vdwg.mxu0
    %v7302 = vunpack.c.l.b16 %v6380
    %v7303 = vunpack.c.l.b16 %v6381
    %v7304 = vpack.c.b16 %v7303, %v7302
    %v7306 = vsel %vm1010, %v5960, 0
    %v7309 = vsel %vm1010, %v7304, 0
    %7311 = vmatpush.bf16.xpose.msra.mxu0 0
    %7312 = vmatpush.bf16.xpose.msra.mxu0 0
    %7313 = vmatpush.bf16.xpose.msra.mxu0 0
    %7314 = vmatpush.bf16.xpose.msra.mxu0 0
    %7315 = vmatpush.bf16.xpose.msra.mxu0 0
    %7316 = vmatpush.bf16.xpose.msra.mxu0 0
    %7317 = vmatpush.bf16.xpose.msra.mxu0 0
    %7318 = vmatpush.bf16.xpose.msra.mxu0 %v7309
    %7319 = vmatmul.bf16.gmra.mxu0 %v7306
    %v7320 = vpop.f32.mrf.mxu0
    %v7321 = vadd.f32 0.0, %v7320
    %v7322 = vpop.f32.mrf.mxu0
    %7323 = vdwg.mxu0
    %v7326 = vunpack.c.l.b16 %v6382
    %v7327 = vunpack.c.l.b16 %v6383
    %v7328 = vpack.c.b16 %v7327, %v7326
    %v7330 = vsel %vm1010, %v5961, 0
    %v7333 = vsel %vm1010, %v7328, 0
    %7335 = vmatpush.bf16.xpose.msra.mxu0 0
    %7336 = vmatpush.bf16.xpose.msra.mxu0 0
    %7337 = vmatpush.bf16.xpose.msra.mxu0 0
    %7338 = vmatpush.bf16.xpose.msra.mxu0 0
    %7339 = vmatpush.bf16.xpose.msra.mxu0 0
    %7340 = vmatpush.bf16.xpose.msra.mxu0 0
    %7341 = vmatpush.bf16.xpose.msra.mxu0 0
    %7342 = vmatpush.bf16.xpose.msra.mxu0 %v7333
    %7343 = vmatmul.bf16.gmra.mxu0 %v7330
    %v7344 = vpop.f32.mrf.mxu0
    %v7345 = vadd.f32 0.0, %v7344
    %v7346 = vpop.f32.mrf.mxu0
    %7347 = vdwg.mxu0
    %v7350 = vunpack.c.l.b16 %v6384
    %v7351 = vunpack.c.l.b16 %v6385
    %v7352 = vpack.c.b16 %v7351, %v7350
    %v7354 = vsel %vm1010, %v5962, 0
    %v7357 = vsel %vm1010, %v7352, 0
    %7359 = vmatpush.bf16.xpose.msra.mxu0 0
    %7360 = vmatpush.bf16.xpose.msra.mxu0 0
    %7361 = vmatpush.bf16.xpose.msra.mxu0 0
    %7362 = vmatpush.bf16.xpose.msra.mxu0 0
    %7363 = vmatpush.bf16.xpose.msra.mxu0 0
    %7364 = vmatpush.bf16.xpose.msra.mxu0 0
    %7365 = vmatpush.bf16.xpose.msra.mxu0 0
    %7366 = vmatpush.bf16.xpose.msra.mxu0 %v7357
    %7367 = vmatmul.bf16.gmra.mxu0 %v7354
    %v7368 = vpop.f32.mrf.mxu0
    %v7369 = vadd.f32 0.0, %v7368
    %v7370 = vpop.f32.mrf.mxu0
    %7371 = vdwg.mxu0
    %v7374 = vunpack.c.l.b16 %v6386
    %v7375 = vunpack.c.l.b16 %v6387
    %v7376 = vpack.c.b16 %v7375, %v7374
    %v7378 = vsel %vm1010, %v5963, 0
    %v7381 = vsel %vm1010, %v7376, 0
    %7383 = vmatpush.bf16.xpose.msra.mxu0 0
    %7384 = vmatpush.bf16.xpose.msra.mxu0 0
    %7385 = vmatpush.bf16.xpose.msra.mxu0 0
    %7386 = vmatpush.bf16.xpose.msra.mxu0 0
    %7387 = vmatpush.bf16.xpose.msra.mxu0 0
    %7388 = vmatpush.bf16.xpose.msra.mxu0 0
    %7389 = vmatpush.bf16.xpose.msra.mxu0 0
    %7390 = vmatpush.bf16.xpose.msra.mxu0 %v7381
    %7391 = vmatmul.bf16.gmra.mxu0 %v7378
    %v7392 = vpop.f32.mrf.mxu0
    %v7393 = vadd.f32 0.0, %v7392
    %v7394 = vpop.f32.mrf.mxu0
    %7395 = vdwg.mxu0
    %v7398 = vunpack.c.l.b16 %v6388
    %v7399 = vunpack.c.l.b16 %v6389
    %v7400 = vpack.c.b16 %v7399, %v7398
    %v7402 = vsel %vm1010, %v5964, 0
    %v7405 = vsel %vm1010, %v7400, 0
    %7407 = vmatpush.bf16.xpose.msra.mxu0 0
    %7408 = vmatpush.bf16.xpose.msra.mxu0 0
    %7409 = vmatpush.bf16.xpose.msra.mxu0 0
    %7410 = vmatpush.bf16.xpose.msra.mxu0 0
    %7411 = vmatpush.bf16.xpose.msra.mxu0 0
    %7412 = vmatpush.bf16.xpose.msra.mxu0 0
    %7413 = vmatpush.bf16.xpose.msra.mxu0 0
    %7414 = vmatpush.bf16.xpose.msra.mxu0 %v7405
    %7415 = vmatmul.bf16.gmra.mxu0 %v7402
    %v7416 = vpop.f32.mrf.mxu0
    %v7417 = vadd.f32 0.0, %v7416
    %v7418 = vpop.f32.mrf.mxu0
    %7419 = vdwg.mxu0
    %v7422 = vunpack.c.l.b16 %v6390
    %v7423 = vunpack.c.l.b16 %v6391
    %v7424 = vpack.c.b16 %v7423, %v7422
    %v7426 = vsel %vm1010, %v5965, 0
    %v7429 = vsel %vm1010, %v7424, 0
    %7431 = vmatpush.bf16.xpose.msra.mxu0 0
    %7432 = vmatpush.bf16.xpose.msra.mxu0 0
    %7433 = vmatpush.bf16.xpose.msra.mxu0 0
    %7434 = vmatpush.bf16.xpose.msra.mxu0 0
    %7435 = vmatpush.bf16.xpose.msra.mxu0 0
    %7436 = vmatpush.bf16.xpose.msra.mxu0 0
    %7437 = vmatpush.bf16.xpose.msra.mxu0 0
    %7438 = vmatpush.bf16.xpose.msra.mxu0 %v7429
    %7439 = vmatmul.bf16.gmra.mxu0 %v7426
    %v7440 = vpop.f32.mrf.mxu0
    %v7441 = vadd.f32 0.0, %v7440
    %v7442 = vpop.f32.mrf.mxu0
    %7443 = vdwg.mxu0
    %v7446 = vunpack.c.l.b16 %v6392
    %v7447 = vunpack.c.l.b16 %v6393
    %v7448 = vpack.c.b16 %v7447, %v7446
    %v7450 = vsel %vm1010, %v5966, 0
    %v7453 = vsel %vm1010, %v7448, 0
    %7455 = vmatpush.bf16.xpose.msra.mxu0 0
    %7456 = vmatpush.bf16.xpose.msra.mxu0 0
    %7457 = vmatpush.bf16.xpose.msra.mxu0 0
    %7458 = vmatpush.bf16.xpose.msra.mxu0 0
    %7459 = vmatpush.bf16.xpose.msra.mxu0 0
    %7460 = vmatpush.bf16.xpose.msra.mxu0 0
    %7461 = vmatpush.bf16.xpose.msra.mxu0 0
    %7462 = vmatpush.bf16.xpose.msra.mxu0 %v7453
    %7463 = vmatmul.bf16.gmra.mxu0 %v7450
    %v7464 = vpop.f32.mrf.mxu0
    %v7465 = vadd.f32 0.0, %v7464
    %v7466 = vpop.f32.mrf.mxu0
    %7467 = vdwg.mxu0
    %v7470 = vunpack.c.l.b16 %v6394
    %v7471 = vunpack.c.l.b16 %v6395
    %v7472 = vpack.c.b16 %v7471, %v7470
    %v7474 = vsel %vm1010, %v5967, 0
    %v7477 = vsel %vm1010, %v7472, 0
    %7479 = vmatpush.bf16.xpose.msra.mxu0 0
    %7480 = vmatpush.bf16.xpose.msra.mxu0 0
    %7481 = vmatpush.bf16.xpose.msra.mxu0 0
    %7482 = vmatpush.bf16.xpose.msra.mxu0 0
    %7483 = vmatpush.bf16.xpose.msra.mxu0 0
    %7484 = vmatpush.bf16.xpose.msra.mxu0 0
    %7485 = vmatpush.bf16.xpose.msra.mxu0 0
    %7486 = vmatpush.bf16.xpose.msra.mxu0 %v7477
    %7487 = vmatmul.bf16.gmra.mxu0 %v7474
    %v7488 = vpop.f32.mrf.mxu0
    %v7489 = vadd.f32 0.0, %v7488
    %v7490 = vpop.f32.mrf.mxu0
    %7491 = vdwg.mxu0
    %v7494 = vunpack.c.l.b16 %v6396
    %v7495 = vunpack.c.l.b16 %v6397
    %v7496 = vpack.c.b16 %v7495, %v7494
    %v7498 = vsel %vm1010, %v5968, 0
    %v7501 = vsel %vm1010, %v7496, 0
    %7503 = vmatpush.bf16.xpose.msra.mxu0 0
    %7504 = vmatpush.bf16.xpose.msra.mxu0 0
    %7505 = vmatpush.bf16.xpose.msra.mxu0 0
    %7506 = vmatpush.bf16.xpose.msra.mxu0 0
    %7507 = vmatpush.bf16.xpose.msra.mxu0 0
    %7508 = vmatpush.bf16.xpose.msra.mxu0 0
    %7509 = vmatpush.bf16.xpose.msra.mxu0 0
    %7510 = vmatpush.bf16.xpose.msra.mxu0 %v7501
    %7511 = vmatmul.bf16.gmra.mxu0 %v7498
    %v7512 = vpop.f32.mrf.mxu0
    %v7513 = vadd.f32 0.0, %v7512
    %v7514 = vpop.f32.mrf.mxu0
    %7515 = vdwg.mxu0
    %v7518 = vunpack.c.l.b16 %v6398
    %v7519 = vunpack.c.l.b16 %v6399
    %v7520 = vpack.c.b16 %v7519, %v7518
    %v7522 = vsel %vm1010, %v5969, 0
    %v7525 = vsel %vm1010, %v7520, 0
    %7527 = vmatpush.bf16.xpose.msra.mxu0 0
    %7528 = vmatpush.bf16.xpose.msra.mxu0 0
    %7529 = vmatpush.bf16.xpose.msra.mxu0 0
    %7530 = vmatpush.bf16.xpose.msra.mxu0 0
    %7531 = vmatpush.bf16.xpose.msra.mxu0 0
    %7532 = vmatpush.bf16.xpose.msra.mxu0 0
    %7533 = vmatpush.bf16.xpose.msra.mxu0 0
    %7534 = vmatpush.bf16.xpose.msra.mxu0 %v7525
    %7535 = vmatmul.bf16.gmra.mxu0 %v7522
    %v7536 = vpop.f32.mrf.mxu0
    %v7537 = vadd.f32 0.0, %v7536
    %v7538 = vpop.f32.mrf.mxu0
    %7539 = vdwg.mxu0
    %v7542 = vunpack.c.l.b16 %v6400
    %v7543 = vunpack.c.l.b16 %v6401
    %v7544 = vpack.c.b16 %v7543, %v7542
    %v7546 = vsel %vm1010, %v5970, 0
    %v7549 = vsel %vm1010, %v7544, 0
    %7551 = vmatpush.bf16.xpose.msra.mxu0 0
    %7552 = vmatpush.bf16.xpose.msra.mxu0 0
    %7553 = vmatpush.bf16.xpose.msra.mxu0 0
    %7554 = vmatpush.bf16.xpose.msra.mxu0 0
    %7555 = vmatpush.bf16.xpose.msra.mxu0 0
    %7556 = vmatpush.bf16.xpose.msra.mxu0 0
    %7557 = vmatpush.bf16.xpose.msra.mxu0 0
    %7558 = vmatpush.bf16.xpose.msra.mxu0 %v7549
    %7559 = vmatmul.bf16.gmra.mxu0 %v7546
    %v7560 = vpop.f32.mrf.mxu0
    %v7561 = vadd.f32 0.0, %v7560
    %v7562 = vpop.f32.mrf.mxu0
    %7563 = vdwg.mxu0
    %v7566 = vunpack.c.l.b16 %v6402
    %v7567 = vunpack.c.l.b16 %v6403
    %v7568 = vpack.c.b16 %v7567, %v7566
    %v7570 = vsel %vm1010, %v5971, 0
    %v7573 = vsel %vm1010, %v7568, 0
    %7575 = vmatpush.bf16.xpose.msra.mxu0 0
    %7576 = vmatpush.bf16.xpose.msra.mxu0 0
    %7577 = vmatpush.bf16.xpose.msra.mxu0 0
    %7578 = vmatpush.bf16.xpose.msra.mxu0 0
    %7579 = vmatpush.bf16.xpose.msra.mxu0 0
    %7580 = vmatpush.bf16.xpose.msra.mxu0 0
    %7581 = vmatpush.bf16.xpose.msra.mxu0 0
    %7582 = vmatpush.bf16.xpose.msra.mxu0 %v7573
    %7583 = vmatmul.bf16.gmra.mxu0 %v7570
    %v7584 = vpop.f32.mrf.mxu0
    %v7585 = vadd.f32 0.0, %v7584
    %v7586 = vpop.f32.mrf.mxu0
    %7587 = vdwg.mxu0
    %v7590 = vunpack.c.l.b16 %v6404
    %v7591 = vunpack.c.l.b16 %v6405
    %v7592 = vpack.c.b16 %v7591, %v7590
    %v7594 = vsel %vm1010, %v5972, 0
    %v7597 = vsel %vm1010, %v7592, 0
    %7599 = vmatpush.bf16.xpose.msra.mxu0 0
    %7600 = vmatpush.bf16.xpose.msra.mxu0 0
    %7601 = vmatpush.bf16.xpose.msra.mxu0 0
    %7602 = vmatpush.bf16.xpose.msra.mxu0 0
    %7603 = vmatpush.bf16.xpose.msra.mxu0 0
    %7604 = vmatpush.bf16.xpose.msra.mxu0 0
    %7605 = vmatpush.bf16.xpose.msra.mxu0 0
    %7606 = vmatpush.bf16.xpose.msra.mxu0 %v7597
    %7607 = vmatmul.bf16.gmra.mxu0 %v7594
    %v7608 = vpop.f32.mrf.mxu0
    %v7609 = vadd.f32 0.0, %v7608
    %v7610 = vpop.f32.mrf.mxu0
    %7611 = vdwg.mxu0
    %v7614 = vunpack.c.l.b16 %v6406
    %v7615 = vunpack.c.l.b16 %v6407
    %v7616 = vpack.c.b16 %v7615, %v7614
    %v7618 = vsel %vm1010, %v5973, 0
    %v7621 = vsel %vm1010, %v7616, 0
    %7623 = vmatpush.bf16.xpose.msra.mxu0 0
    %7624 = vmatpush.bf16.xpose.msra.mxu0 0
    %7625 = vmatpush.bf16.xpose.msra.mxu0 0
    %7626 = vmatpush.bf16.xpose.msra.mxu0 0
    %7627 = vmatpush.bf16.xpose.msra.mxu0 0
    %7628 = vmatpush.bf16.xpose.msra.mxu0 0
    %7629 = vmatpush.bf16.xpose.msra.mxu0 0
    %7630 = vmatpush.bf16.xpose.msra.mxu0 %v7621
    %7631 = vmatmul.bf16.gmra.mxu0 %v7618
    %v7632 = vpop.f32.mrf.mxu0
    %v7633 = vadd.f32 0.0, %v7632
    %v7634 = vpop.f32.mrf.mxu0
    %7635 = vdwg.mxu0
    %v7638 = vunpack.c.l.b16 %v6408
    %v7639 = vunpack.c.l.b16 %v6409
    %v7640 = vpack.c.b16 %v7639, %v7638
    %v7642 = vsel %vm1010, %v5974, 0
    %v7645 = vsel %vm1010, %v7640, 0
    %7647 = vmatpush.bf16.xpose.msra.mxu0 0
    %7648 = vmatpush.bf16.xpose.msra.mxu0 0
    %7649 = vmatpush.bf16.xpose.msra.mxu0 0
    %7650 = vmatpush.bf16.xpose.msra.mxu0 0
    %7651 = vmatpush.bf16.xpose.msra.mxu0 0
    %7652 = vmatpush.bf16.xpose.msra.mxu0 0
    %7653 = vmatpush.bf16.xpose.msra.mxu0 0
    %7654 = vmatpush.bf16.xpose.msra.mxu0 %v7645
    %7655 = vmatmul.bf16.gmra.mxu0 %v7642
    %v7656 = vpop.f32.mrf.mxu0
    %v7657 = vadd.f32 0.0, %v7656
    %v7658 = vpop.f32.mrf.mxu0
    %7659 = vdwg.mxu0
    %v7662 = vunpack.c.l.b16 %v6410
    %v7663 = vunpack.c.l.b16 %v6411
    %v7664 = vpack.c.b16 %v7663, %v7662
    %v7666 = vsel %vm1010, %v5975, 0
    %v7669 = vsel %vm1010, %v7664, 0
    %7671 = vmatpush.bf16.xpose.msra.mxu0 0
    %7672 = vmatpush.bf16.xpose.msra.mxu0 0
    %7673 = vmatpush.bf16.xpose.msra.mxu0 0
    %7674 = vmatpush.bf16.xpose.msra.mxu0 0
    %7675 = vmatpush.bf16.xpose.msra.mxu0 0
    %7676 = vmatpush.bf16.xpose.msra.mxu0 0
    %7677 = vmatpush.bf16.xpose.msra.mxu0 0
    %7678 = vmatpush.bf16.xpose.msra.mxu0 %v7669
    %7679 = vmatmul.bf16.gmra.mxu0 %v7666
    %v7680 = vpop.f32.mrf.mxu0
    %v7681 = vadd.f32 0.0, %v7680
    %v7682 = vpop.f32.mrf.mxu0
    %7683 = vdwg.mxu0
    %v7686 = vunpack.c.l.b16 %v6412
    %v7687 = vunpack.c.l.b16 %v6413
    %v7688 = vpack.c.b16 %v7687, %v7686
    %v7690 = vsel %vm1010, %v5976, 0
    %v7693 = vsel %vm1010, %v7688, 0
    %7695 = vmatpush.bf16.xpose.msra.mxu0 0
    %7696 = vmatpush.bf16.xpose.msra.mxu0 0
    %7697 = vmatpush.bf16.xpose.msra.mxu0 0
    %7698 = vmatpush.bf16.xpose.msra.mxu0 0
    %7699 = vmatpush.bf16.xpose.msra.mxu0 0
    %7700 = vmatpush.bf16.xpose.msra.mxu0 0
    %7701 = vmatpush.bf16.xpose.msra.mxu0 0
    %7702 = vmatpush.bf16.xpose.msra.mxu0 %v7693
    %7703 = vmatmul.bf16.gmra.mxu0 %v7690
    %v7704 = vpop.f32.mrf.mxu0
    %v7705 = vadd.f32 0.0, %v7704
    %v7706 = vpop.f32.mrf.mxu0
    %7707 = vdwg.mxu0
    %v7710 = vunpack.c.l.b16 %v6414
    %v7711 = vunpack.c.l.b16 %v6415
    %v7712 = vpack.c.b16 %v7711, %v7710
    %v7714 = vsel %vm1010, %v5977, 0
    %v7717 = vsel %vm1010, %v7712, 0
    %7719 = vmatpush.bf16.xpose.msra.mxu0 0
    %7720 = vmatpush.bf16.xpose.msra.mxu0 0
    %7721 = vmatpush.bf16.xpose.msra.mxu0 0
    %7722 = vmatpush.bf16.xpose.msra.mxu0 0
    %7723 = vmatpush.bf16.xpose.msra.mxu0 0
    %7724 = vmatpush.bf16.xpose.msra.mxu0 0
    %7725 = vmatpush.bf16.xpose.msra.mxu0 0
    %7726 = vmatpush.bf16.xpose.msra.mxu0 %v7717
    %7727 = vmatmul.bf16.gmra.mxu0 %v7714
    %v7728 = vpop.f32.mrf.mxu0
    %v7729 = vadd.f32 0.0, %v7728
    %v7730 = vpop.f32.mrf.mxu0
    %7731 = vdwg.mxu0
    %v7734 = vunpack.c.l.b16 %v6416
    %v7735 = vunpack.c.l.b16 %v6417
    %v7736 = vpack.c.b16 %v7735, %v7734
    %v7738 = vsel %vm1010, %v5978, 0
    %v7741 = vsel %vm1010, %v7736, 0
    %7743 = vmatpush.bf16.xpose.msra.mxu0 0
    %7744 = vmatpush.bf16.xpose.msra.mxu0 0
    %7745 = vmatpush.bf16.xpose.msra.mxu0 0
    %7746 = vmatpush.bf16.xpose.msra.mxu0 0
    %7747 = vmatpush.bf16.xpose.msra.mxu0 0
    %7748 = vmatpush.bf16.xpose.msra.mxu0 0
    %7749 = vmatpush.bf16.xpose.msra.mxu0 0
    %7750 = vmatpush.bf16.xpose.msra.mxu0 %v7741
    %7751 = vmatmul.bf16.gmra.mxu0 %v7738
    %v7752 = vpop.f32.mrf.mxu0
    %v7753 = vadd.f32 0.0, %v7752
    %v7754 = vpop.f32.mrf.mxu0
    %7755 = vdwg.mxu0
    %v7758 = vunpack.c.l.b16 %v6418
    %v7759 = vunpack.c.l.b16 %v6419
    %v7760 = vpack.c.b16 %v7759, %v7758
    %v7762 = vsel %vm1010, %v5979, 0
    %v7765 = vsel %vm1010, %v7760, 0
    %7767 = vmatpush.bf16.xpose.msra.mxu0 0
    %7768 = vmatpush.bf16.xpose.msra.mxu0 0
    %7769 = vmatpush.bf16.xpose.msra.mxu0 0
    %7770 = vmatpush.bf16.xpose.msra.mxu0 0
    %7771 = vmatpush.bf16.xpose.msra.mxu0 0
    %7772 = vmatpush.bf16.xpose.msra.mxu0 0
    %7773 = vmatpush.bf16.xpose.msra.mxu0 0
    %7774 = vmatpush.bf16.xpose.msra.mxu0 %v7765
    %7775 = vmatmul.bf16.gmra.mxu0 %v7762
    %v7776 = vpop.f32.mrf.mxu0
    %v7777 = vadd.f32 0.0, %v7776
    %v7778 = vpop.f32.mrf.mxu0
    %7779 = vdwg.mxu0
    %v7782 = vunpack.c.l.b16 %v6420
    %v7783 = vunpack.c.l.b16 %v6421
    %v7784 = vpack.c.b16 %v7783, %v7782
    %v7786 = vsel %vm1010, %v5980, 0
    %v7789 = vsel %vm1010, %v7784, 0
    %7791 = vmatpush.bf16.xpose.msra.mxu0 0
    %7792 = vmatpush.bf16.xpose.msra.mxu0 0
    %7793 = vmatpush.bf16.xpose.msra.mxu0 0
    %7794 = vmatpush.bf16.xpose.msra.mxu0 0
    %7795 = vmatpush.bf16.xpose.msra.mxu0 0
    %7796 = vmatpush.bf16.xpose.msra.mxu0 0
    %7797 = vmatpush.bf16.xpose.msra.mxu0 0
    %7798 = vmatpush.bf16.xpose.msra.mxu0 %v7789
    %7799 = vmatmul.bf16.gmra.mxu0 %v7786
    %v7800 = vpop.f32.mrf.mxu0
    %v7801 = vadd.f32 0.0, %v7800
    %v7802 = vpop.f32.mrf.mxu0
    %7803 = vdwg.mxu0
    %v7806 = vunpack.c.l.b16 %v6422
    %v7807 = vunpack.c.l.b16 %v6423
    %v7808 = vpack.c.b16 %v7807, %v7806
    %v7810 = vsel %vm1010, %v5981, 0
    %v7813 = vsel %vm1010, %v7808, 0
    %7815 = vmatpush.bf16.xpose.msra.mxu0 0
    %7816 = vmatpush.bf16.xpose.msra.mxu0 0
    %7817 = vmatpush.bf16.xpose.msra.mxu0 0
    %7818 = vmatpush.bf16.xpose.msra.mxu0 0
    %7819 = vmatpush.bf16.xpose.msra.mxu0 0
    %7820 = vmatpush.bf16.xpose.msra.mxu0 0
    %7821 = vmatpush.bf16.xpose.msra.mxu0 0
    %7822 = vmatpush.bf16.xpose.msra.mxu0 %v7813
    %7823 = vmatmul.bf16.gmra.mxu0 %v7810
    %v7824 = vpop.f32.mrf.mxu0
    %v7825 = vadd.f32 0.0, %v7824
    %v7826 = vpop.f32.mrf.mxu0
    %7827 = vdwg.mxu0
    %v7830 = vunpack.c.l.b16 %v6424
    %v7831 = vunpack.c.l.b16 %v6425
    %v7832 = vpack.c.b16 %v7831, %v7830
    %v7834 = vsel %vm1010, %v5982, 0
    %v7837 = vsel %vm1010, %v7832, 0
    %7839 = vmatpush.bf16.xpose.msra.mxu0 0
    %7840 = vmatpush.bf16.xpose.msra.mxu0 0
    %7841 = vmatpush.bf16.xpose.msra.mxu0 0
    %7842 = vmatpush.bf16.xpose.msra.mxu0 0
    %7843 = vmatpush.bf16.xpose.msra.mxu0 0
    %7844 = vmatpush.bf16.xpose.msra.mxu0 0
    %7845 = vmatpush.bf16.xpose.msra.mxu0 0
    %7846 = vmatpush.bf16.xpose.msra.mxu0 %v7837
    %7847 = vmatmul.bf16.gmra.mxu0 %v7834
    %v7848 = vpop.f32.mrf.mxu0
    %v7849 = vadd.f32 0.0, %v7848
    %v7850 = vpop.f32.mrf.mxu0
    %7851 = vdwg.mxu0
    %v7854 = vunpack.c.l.b16 %v6426
    %v7855 = vunpack.c.l.b16 %v6427
    %v7856 = vpack.c.b16 %v7855, %v7854
    %v7858 = vsel %vm1010, %v5983, 0
    %v7861 = vsel %vm1010, %v7856, 0
    %7863 = vmatpush.bf16.xpose.msra.mxu0 0
    %7864 = vmatpush.bf16.xpose.msra.mxu0 0
    %7865 = vmatpush.bf16.xpose.msra.mxu0 0
    %7866 = vmatpush.bf16.xpose.msra.mxu0 0
    %7867 = vmatpush.bf16.xpose.msra.mxu0 0
    %7868 = vmatpush.bf16.xpose.msra.mxu0 0
    %7869 = vmatpush.bf16.xpose.msra.mxu0 0
    %7870 = vmatpush.bf16.xpose.msra.mxu0 %v7861
    %7871 = vmatmul.bf16.gmra.mxu0 %v7858
    %v7872 = vpop.f32.mrf.mxu0
    %v7873 = vadd.f32 0.0, %v7872
    %v7874 = vpop.f32.mrf.mxu0
    %7875 = vdwg.mxu0
    %v7878 = vunpack.c.l.b16 %v6428
    %v7879 = vunpack.c.l.b16 %v6429
    %v7880 = vpack.c.b16 %v7879, %v7878
    %v7882 = vsel %vm1010, %v5984, 0
    %v7885 = vsel %vm1010, %v7880, 0
    %7887 = vmatpush.bf16.xpose.msra.mxu0 0
    %7888 = vmatpush.bf16.xpose.msra.mxu0 0
    %7889 = vmatpush.bf16.xpose.msra.mxu0 0
    %7890 = vmatpush.bf16.xpose.msra.mxu0 0
    %7891 = vmatpush.bf16.xpose.msra.mxu0 0
    %7892 = vmatpush.bf16.xpose.msra.mxu0 0
    %7893 = vmatpush.bf16.xpose.msra.mxu0 0
    %7894 = vmatpush.bf16.xpose.msra.mxu0 %v7885
    %7895 = vmatmul.bf16.gmra.mxu0 %v7882
    %v7896 = vpop.f32.mrf.mxu0
    %v7897 = vadd.f32 0.0, %v7896
    %v7898 = vpop.f32.mrf.mxu0
    %7899 = vdwg.mxu0
    %v7902 = vunpack.c.l.b16 %v6430
    %v7903 = vunpack.c.l.b16 %v6431
    %v7904 = vpack.c.b16 %v7903, %v7902
    %v7906 = vsel %vm1010, %v5985, 0
    %v7909 = vsel %vm1010, %v7904, 0
    %7911 = vmatpush.bf16.xpose.msra.mxu0 0
    %7912 = vmatpush.bf16.xpose.msra.mxu0 0
    %7913 = vmatpush.bf16.xpose.msra.mxu0 0
    %7914 = vmatpush.bf16.xpose.msra.mxu0 0
    %7915 = vmatpush.bf16.xpose.msra.mxu0 0
    %7916 = vmatpush.bf16.xpose.msra.mxu0 0
    %7917 = vmatpush.bf16.xpose.msra.mxu0 0
    %7918 = vmatpush.bf16.xpose.msra.mxu0 %v7909
    %7919 = vmatmul.bf16.gmra.mxu0 %v7906
    %v7920 = vpop.f32.mrf.mxu0
    %v7921 = vadd.f32 0.0, %v7920
    %v7922 = vpop.f32.mrf.mxu0
    %7923 = vdwg.mxu0
    %v7926 = vunpack.c.l.b16 %v6432
    %v7927 = vunpack.c.l.b16 %v6433
    %v7928 = vpack.c.b16 %v7927, %v7926
    %v7930 = vsel %vm1010, %v5986, 0
    %v7933 = vsel %vm1010, %v7928, 0
    %7935 = vmatpush.bf16.xpose.msra.mxu0 0
    %7936 = vmatpush.bf16.xpose.msra.mxu0 0
    %7937 = vmatpush.bf16.xpose.msra.mxu0 0
    %7938 = vmatpush.bf16.xpose.msra.mxu0 0
    %7939 = vmatpush.bf16.xpose.msra.mxu0 0
    %7940 = vmatpush.bf16.xpose.msra.mxu0 0
    %7941 = vmatpush.bf16.xpose.msra.mxu0 0
    %7942 = vmatpush.bf16.xpose.msra.mxu0 %v7933
    %7943 = vmatmul.bf16.gmra.mxu0 %v7930
    %v7944 = vpop.f32.mrf.mxu0
    %v7945 = vadd.f32 0.0, %v7944
    %v7946 = vpop.f32.mrf.mxu0
    %7947 = vdwg.mxu0
    %v7950 = vunpack.c.l.b16 %v6434
    %v7951 = vunpack.c.l.b16 %v6435
    %v7952 = vpack.c.b16 %v7951, %v7950
    %v7954 = vsel %vm1010, %v5987, 0
    %v7957 = vsel %vm1010, %v7952, 0
    %7959 = vmatpush.bf16.xpose.msra.mxu0 0
    %7960 = vmatpush.bf16.xpose.msra.mxu0 0
    %7961 = vmatpush.bf16.xpose.msra.mxu0 0
    %7962 = vmatpush.bf16.xpose.msra.mxu0 0
    %7963 = vmatpush.bf16.xpose.msra.mxu0 0
    %7964 = vmatpush.bf16.xpose.msra.mxu0 0
    %7965 = vmatpush.bf16.xpose.msra.mxu0 0
    %7966 = vmatpush.bf16.xpose.msra.mxu0 %v7957
    %7967 = vmatmul.bf16.gmra.mxu0 %v7954
    %v7968 = vpop.f32.mrf.mxu0
    %v7969 = vadd.f32 0.0, %v7968
    %v7970 = vpop.f32.mrf.mxu0
    %7971 = vdwg.mxu0
    %v7972 = vsel %vm4863, %v6457, -inf
    %7973 = vmax.xlane.f32.xlu0 %v7972
    %v7974 = vpop.xlane.xlu0 %7973
    %v7975 = vsel %vm4863, %v6481, -inf
    %7976 = vmax.xlane.f32.xlu0 %v7975
    %v7977 = vpop.xlane.xlu0 %7976
    %v7978 = vsel %vm4863, %v6505, -inf
    %7979 = vmax.xlane.f32.xlu0 %v7978
    %v7980 = vpop.xlane.xlu0 %7979
    %v7981 = vsel %vm4863, %v6529, -inf
    %7982 = vmax.xlane.f32.xlu0 %v7981
    %v7983 = vpop.xlane.xlu0 %7982
    %v7984 = vsel %vm4863, %v6553, -inf
    %7985 = vmax.xlane.f32.xlu0 %v7984
    %v7986 = vpop.xlane.xlu0 %7985
    %v7987 = vsel %vm4863, %v6577, -inf
    %7988 = vmax.xlane.f32.xlu0 %v7987
    %v7989 = vpop.xlane.xlu0 %7988
    %v7990 = vsel %vm4863, %v6601, -inf
    %7991 = vmax.xlane.f32.xlu0 %v7990
    %v7992 = vpop.xlane.xlu0 %7991
    %v7993 = vsel %vm4863, %v6625, -inf
    %7994 = vmax.xlane.f32.xlu0 %v7993
    %v7995 = vpop.xlane.xlu0 %7994
    %v7996 = vsel %vm4863, %v6649, -inf
    %7997 = vmax.xlane.f32.xlu0 %v7996
    %v7998 = vpop.xlane.xlu0 %7997
    %v7999 = vsel %vm4863, %v6673, -inf
    %8000 = vmax.xlane.f32.xlu0 %v7999
    %v8001 = vpop.xlane.xlu0 %8000
    %v8002 = vsel %vm4863, %v6697, -inf
    %8003 = vmax.xlane.f32.xlu0 %v8002
    %v8004 = vpop.xlane.xlu0 %8003
    %v8005 = vsel %vm4863, %v6721, -inf
    %8006 = vmax.xlane.f32.xlu0 %v8005
    %v8007 = vpop.xlane.xlu0 %8006
    %v8008 = vsel %vm4863, %v6745, -inf
    %8009 = vmax.xlane.f32.xlu0 %v8008
    %v8010 = vpop.xlane.xlu0 %8009
    %v8011 = vsel %vm4863, %v6769, -inf
    %8012 = vmax.xlane.f32.xlu0 %v8011
    %v8013 = vpop.xlane.xlu0 %8012
    %v8014 = vsel %vm4863, %v6793, -inf
    %8015 = vmax.xlane.f32.xlu0 %v8014
    %v8016 = vpop.xlane.xlu0 %8015
    %v8017 = vsel %vm4863, %v6817, -inf
    %8018 = vmax.xlane.f32.xlu0 %v8017
    %v8019 = vpop.xlane.xlu0 %8018
    %v8020 = vsel %vm4863, %v6841, -inf
    %8021 = vmax.xlane.f32.xlu0 %v8020
    %v8022 = vpop.xlane.xlu0 %8021
    %v8023 = vsel %vm4863, %v6865, -inf
    %8024 = vmax.xlane.f32.xlu0 %v8023
    %v8025 = vpop.xlane.xlu0 %8024
    %v8026 = vsel %vm4863, %v6889, -inf
    %8027 = vmax.xlane.f32.xlu0 %v8026
    %v8028 = vpop.xlane.xlu0 %8027
    %v8029 = vsel %vm4863, %v6913, -inf
    %8030 = vmax.xlane.f32.xlu0 %v8029
    %v8031 = vpop.xlane.xlu0 %8030
    %v8032 = vsel %vm4863, %v6937, -inf
    %8033 = vmax.xlane.f32.xlu0 %v8032
    %v8034 = vpop.xlane.xlu0 %8033
    %v8035 = vsel %vm4863, %v6961, -inf
    %8036 = vmax.xlane.f32.xlu0 %v8035
    %v8037 = vpop.xlane.xlu0 %8036
    %v8038 = vsel %vm4863, %v6985, -inf
    %8039 = vmax.xlane.f32.xlu0 %v8038
    %v8040 = vpop.xlane.xlu0 %8039
    %v8041 = vsel %vm4863, %v7009, -inf
    %8042 = vmax.xlane.f32.xlu0 %v8041
    %v8043 = vpop.xlane.xlu0 %8042
    %v8044 = vsel %vm4863, %v7033, -inf
    %8045 = vmax.xlane.f32.xlu0 %v8044
    %v8046 = vpop.xlane.xlu0 %8045
    %v8047 = vsel %vm4863, %v7057, -inf
    %8048 = vmax.xlane.f32.xlu0 %v8047
    %v8049 = vpop.xlane.xlu0 %8048
    %v8050 = vsel %vm4863, %v7081, -inf
    %8051 = vmax.xlane.f32.xlu0 %v8050
    %v8052 = vpop.xlane.xlu0 %8051
    %v8053 = vsel %vm4863, %v7105, -inf
    %8054 = vmax.xlane.f32.xlu0 %v8053
    %v8055 = vpop.xlane.xlu0 %8054
    %v8056 = vsel %vm4863, %v7129, -inf
    %8057 = vmax.xlane.f32.xlu0 %v8056
    %v8058 = vpop.xlane.xlu0 %8057
    %v8059 = vsel %vm4863, %v7153, -inf
    %8060 = vmax.xlane.f32.xlu0 %v8059
    %v8061 = vpop.xlane.xlu0 %8060
    %v8062 = vsel %vm4863, %v7177, -inf
    %8063 = vmax.xlane.f32.xlu0 %v8062
    %v8064 = vpop.xlane.xlu0 %8063
    %v8065 = vsel %vm4863, %v7201, -inf
    %8066 = vmax.xlane.f32.xlu0 %v8065
    %v8067 = vpop.xlane.xlu0 %8066
    %v8068 = vsel %vm4863, %v7225, -inf
    %8069 = vmax.xlane.f32.xlu0 %v8068
    %v8070 = vpop.xlane.xlu0 %8069
    %v8071 = vsel %vm4863, %v7249, -inf
    %8072 = vmax.xlane.f32.xlu0 %v8071
    %v8073 = vpop.xlane.xlu0 %8072
    %v8074 = vsel %vm4863, %v7273, -inf
    %8075 = vmax.xlane.f32.xlu0 %v8074
    %v8076 = vpop.xlane.xlu0 %8075
    %v8077 = vsel %vm4863, %v7297, -inf
    %8078 = vmax.xlane.f32.xlu0 %v8077
    %v8079 = vpop.xlane.xlu0 %8078
    %v8080 = vsel %vm4863, %v7321, -inf
    %8081 = vmax.xlane.f32.xlu0 %v8080
    %v8082 = vpop.xlane.xlu0 %8081
    %v8083 = vsel %vm4863, %v7345, -inf
    %8084 = vmax.xlane.f32.xlu0 %v8083
    %v8085 = vpop.xlane.xlu0 %8084
    %v8086 = vsel %vm4863, %v7369, -inf
    %8087 = vmax.xlane.f32.xlu0 %v8086
    %v8088 = vpop.xlane.xlu0 %8087
    %v8089 = vsel %vm4863, %v7393, -inf
    %8090 = vmax.xlane.f32.xlu0 %v8089
    %v8091 = vpop.xlane.xlu0 %8090
    %v8092 = vsel %vm4863, %v7417, -inf
    %8093 = vmax.xlane.f32.xlu0 %v8092
    %v8094 = vpop.xlane.xlu0 %8093
    %v8095 = vsel %vm4863, %v7441, -inf
    %8096 = vmax.xlane.f32.xlu0 %v8095
    %v8097 = vpop.xlane.xlu0 %8096
    %v8098 = vsel %vm4863, %v7465, -inf
    %8099 = vmax.xlane.f32.xlu0 %v8098
    %v8100 = vpop.xlane.xlu0 %8099
    %v8101 = vsel %vm4863, %v7489, -inf
    %8102 = vmax.xlane.f32.xlu0 %v8101
    %v8103 = vpop.xlane.xlu0 %8102
    %v8104 = vsel %vm4863, %v7513, -inf
    %8105 = vmax.xlane.f32.xlu0 %v8104
    %v8106 = vpop.xlane.xlu0 %8105
    %v8107 = vsel %vm4863, %v7537, -inf
    %8108 = vmax.xlane.f32.xlu0 %v8107
    %v8109 = vpop.xlane.xlu0 %8108
    %v8110 = vsel %vm4863, %v7561, -inf
    %8111 = vmax.xlane.f32.xlu0 %v8110
    %v8112 = vpop.xlane.xlu0 %8111
    %v8113 = vsel %vm4863, %v7585, -inf
    %8114 = vmax.xlane.f32.xlu0 %v8113
    %v8115 = vpop.xlane.xlu0 %8114
    %v8116 = vsel %vm4863, %v7609, -inf
    %8117 = vmax.xlane.f32.xlu0 %v8116
    %v8118 = vpop.xlane.xlu0 %8117
    %v8119 = vsel %vm4863, %v7633, -inf
    %8120 = vmax.xlane.f32.xlu0 %v8119
    %v8121 = vpop.xlane.xlu0 %8120
    %v8122 = vsel %vm4863, %v7657, -inf
    %8123 = vmax.xlane.f32.xlu0 %v8122
    %v8124 = vpop.xlane.xlu0 %8123
    %v8125 = vsel %vm4863, %v7681, -inf
    %8126 = vmax.xlane.f32.xlu0 %v8125
    %v8127 = vpop.xlane.xlu0 %8126
    %v8128 = vsel %vm4863, %v7705, -inf
    %8129 = vmax.xlane.f32.xlu0 %v8128
    %v8130 = vpop.xlane.xlu0 %8129
    %v8131 = vsel %vm4863, %v7729, -inf
    %8132 = vmax.xlane.f32.xlu0 %v8131
    %v8133 = vpop.xlane.xlu0 %8132
    %v8134 = vsel %vm4863, %v7753, -inf
    %8135 = vmax.xlane.f32.xlu0 %v8134
    %v8136 = vpop.xlane.xlu0 %8135
    %v8137 = vsel %vm4863, %v7777, -inf
    %8138 = vmax.xlane.f32.xlu0 %v8137
    %v8139 = vpop.xlane.xlu0 %8138
    %v8140 = vsel %vm4863, %v7801, -inf
    %8141 = vmax.xlane.f32.xlu0 %v8140
    %v8142 = vpop.xlane.xlu0 %8141
    %v8143 = vsel %vm4863, %v7825, -inf
    %8144 = vmax.xlane.f32.xlu0 %v8143
    %v8145 = vpop.xlane.xlu0 %8144
    %v8146 = vsel %vm4863, %v7849, -inf
    %8147 = vmax.xlane.f32.xlu0 %v8146
    %v8148 = vpop.xlane.xlu0 %8147
    %v8149 = vsel %vm4863, %v7873, -inf
    %8150 = vmax.xlane.f32.xlu0 %v8149
    %v8151 = vpop.xlane.xlu0 %8150
    %v8152 = vsel %vm4863, %v7897, -inf
    %8153 = vmax.xlane.f32.xlu0 %v8152
    %v8154 = vpop.xlane.xlu0 %8153
    %v8155 = vsel %vm4863, %v7921, -inf
    %8156 = vmax.xlane.f32.xlu0 %v8155
    %v8157 = vpop.xlane.xlu0 %8156
    %v8158 = vsel %vm4863, %v7945, -inf
    %8159 = vmax.xlane.f32.xlu0 %v8158
    %v8160 = vpop.xlane.xlu0 %8159
    %v8161 = vsel %vm4863, %v7969, -inf
    %8162 = vmax.xlane.f32.xlu0 %v8161
    %v8163 = vpop.xlane.xlu0 %8162
    %v8164 = vsub.f32 %v6457, %v7974
    %v8165 = vsub.f32 %v6481, %v7977
    %v8166 = vsub.f32 %v6505, %v7980
    %v8167 = vsub.f32 %v6529, %v7983
    %v8168 = vsub.f32 %v6553, %v7986
    %v8169 = vsub.f32 %v6577, %v7989
    %v8170 = vsub.f32 %v6601, %v7992
    %v8171 = vsub.f32 %v6625, %v7995
    %v8172 = vsub.f32 %v6649, %v7998
    %v8173 = vsub.f32 %v6673, %v8001
    %v8174 = vsub.f32 %v6697, %v8004
    %v8175 = vsub.f32 %v6721, %v8007
    %v8176 = vsub.f32 %v6745, %v8010
    %v8177 = vsub.f32 %v6769, %v8013
    %v8178 = vsub.f32 %v6793, %v8016
    %v8179 = vsub.f32 %v6817, %v8019
    %v8180 = vsub.f32 %v6841, %v8022
    %v8181 = vsub.f32 %v6865, %v8025
    %v8182 = vsub.f32 %v6889, %v8028
    %v8183 = vsub.f32 %v6913, %v8031
    %v8184 = vsub.f32 %v6937, %v8034
    %v8185 = vsub.f32 %v6961, %v8037
    %v8186 = vsub.f32 %v6985, %v8040
    %v8187 = vsub.f32 %v7009, %v8043
    %v8188 = vsub.f32 %v7033, %v8046
    %v8189 = vsub.f32 %v7057, %v8049
    %v8190 = vsub.f32 %v7081, %v8052
    %v8191 = vsub.f32 %v7105, %v8055
    %v8192 = vsub.f32 %v7129, %v8058
    %v8193 = vsub.f32 %v7153, %v8061
    %v8194 = vsub.f32 %v7177, %v8064
    %v8195 = vsub.f32 %v7201, %v8067
    %v8196 = vsub.f32 %v7225, %v8070
    %v8197 = vsub.f32 %v7249, %v8073
    %v8198 = vsub.f32 %v7273, %v8076
    %v8199 = vsub.f32 %v7297, %v8079
    %v8200 = vsub.f32 %v7321, %v8082
    %v8201 = vsub.f32 %v7345, %v8085
    %v8202 = vsub.f32 %v7369, %v8088
    %v8203 = vsub.f32 %v7393, %v8091
    %v8204 = vsub.f32 %v7417, %v8094
    %v8205 = vsub.f32 %v7441, %v8097
    %v8206 = vsub.f32 %v7465, %v8100
    %v8207 = vsub.f32 %v7489, %v8103
    %v8208 = vsub.f32 %v7513, %v8106
    %v8209 = vsub.f32 %v7537, %v8109
    %v8210 = vsub.f32 %v7561, %v8112
    %v8211 = vsub.f32 %v7585, %v8115
    %v8212 = vsub.f32 %v7609, %v8118
    %v8213 = vsub.f32 %v7633, %v8121
    %v8214 = vsub.f32 %v7657, %v8124
    %v8215 = vsub.f32 %v7681, %v8127
    %v8216 = vsub.f32 %v7705, %v8130
    %v8217 = vsub.f32 %v7729, %v8133
    %v8218 = vsub.f32 %v7753, %v8136
    %v8219 = vsub.f32 %v7777, %v8139
    %v8220 = vsub.f32 %v7801, %v8142
    %v8221 = vsub.f32 %v7825, %v8145
    %v8222 = vsub.f32 %v7849, %v8148
    %v8223 = vsub.f32 %v7873, %v8151
    %v8224 = vsub.f32 %v7897, %v8154
    %v8225 = vsub.f32 %v7921, %v8157
    %v8226 = vsub.f32 %v7945, %v8160
    %v8227 = vsub.f32 %v7969, %v8163
    %v8228 = vmul.f32 %v8164, 1.442695
    %v8229 = vpow.pop %v8228
    %v8230 = vmul.f32 %v8165, 1.442695
    %v8231 = vpow.pop %v8230
    %v8232 = vmul.f32 %v8166, 1.442695
    %v8233 = vpow.pop %v8232
    %v8234 = vmul.f32 %v8167, 1.442695
    %v8235 = vpow.pop %v8234
    %v8236 = vmul.f32 %v8168, 1.442695
    %v8237 = vpow.pop %v8236
    %v8238 = vmul.f32 %v8169, 1.442695
    %v8239 = vpow.pop %v8238
    %v8240 = vmul.f32 %v8170, 1.442695
    %v8241 = vpow.pop %v8240
    %v8242 = vmul.f32 %v8171, 1.442695
    %v8243 = vpow.pop %v8242
    %v8244 = vmul.f32 %v8172, 1.442695
    %v8245 = vpow.pop %v8244
    %v8246 = vmul.f32 %v8173, 1.442695
    %v8247 = vpow.pop %v8246
    %v8248 = vmul.f32 %v8174, 1.442695
    %v8249 = vpow.pop %v8248
    %v8250 = vmul.f32 %v8175, 1.442695
    %v8251 = vpow.pop %v8250
    %v8252 = vmul.f32 %v8176, 1.442695
    %v8253 = vpow.pop %v8252
    %v8254 = vmul.f32 %v8177, 1.442695
    %v8255 = vpow.pop %v8254
    %v8256 = vmul.f32 %v8178, 1.442695
    %v8257 = vpow.pop %v8256
    %v8258 = vmul.f32 %v8179, 1.442695
    %v8259 = vpow.pop %v8258
    %v8260 = vmul.f32 %v8180, 1.442695
    %v8261 = vpow.pop %v8260
    %v8262 = vmul.f32 %v8181, 1.442695
    %v8263 = vpow.pop %v8262
    %v8264 = vmul.f32 %v8182, 1.442695
    %v8265 = vpow.pop %v8264
    %v8266 = vmul.f32 %v8183, 1.442695
    %v8267 = vpow.pop %v8266
    %v8268 = vmul.f32 %v8184, 1.442695
    %v8269 = vpow.pop %v8268
    %v8270 = vmul.f32 %v8185, 1.442695
    %v8271 = vpow.pop %v8270
    %v8272 = vmul.f32 %v8186, 1.442695
    %v8273 = vpow.pop %v8272
    %v8274 = vmul.f32 %v8187, 1.442695
    %v8275 = vpow.pop %v8274
    %v8276 = vmul.f32 %v8188, 1.442695
    %v8277 = vpow.pop %v8276
    %v8278 = vmul.f32 %v8189, 1.442695
    %v8279 = vpow.pop %v8278
    %v8280 = vmul.f32 %v8190, 1.442695
    %v8281 = vpow.pop %v8280
    %v8282 = vmul.f32 %v8191, 1.442695
    %v8283 = vpow.pop %v8282
    %v8284 = vmul.f32 %v8192, 1.442695
    %v8285 = vpow.pop %v8284
    %v8286 = vmul.f32 %v8193, 1.442695
    %v8287 = vpow.pop %v8286
    %v8288 = vmul.f32 %v8194, 1.442695
    %v8289 = vpow.pop %v8288
    %v8290 = vmul.f32 %v8195, 1.442695
    %v8291 = vpow.pop %v8290
    %v8292 = vmul.f32 %v8196, 1.442695
    %v8293 = vpow.pop %v8292
    %v8294 = vmul.f32 %v8197, 1.442695
    %v8295 = vpow.pop %v8294
    %v8296 = vmul.f32 %v8198, 1.442695
    %v8297 = vpow.pop %v8296
    %v8298 = vmul.f32 %v8199, 1.442695
    %v8299 = vpow.pop %v8298
    %v8300 = vmul.f32 %v8200, 1.442695
    %v8301 = vpow.pop %v8300
    %v8302 = vmul.f32 %v8201, 1.442695
    %v8303 = vpow.pop %v8302
    %v8304 = vmul.f32 %v8202, 1.442695
    %v8305 = vpow.pop %v8304
    %v8306 = vmul.f32 %v8203, 1.442695
    %v8307 = vpow.pop %v8306
    %v8308 = vmul.f32 %v8204, 1.442695
    %v8309 = vpow.pop %v8308
    %v8310 = vmul.f32 %v8205, 1.442695
    %v8311 = vpow.pop %v8310
    %v8312 = vmul.f32 %v8206, 1.442695
    %v8313 = vpow.pop %v8312
    %v8314 = vmul.f32 %v8207, 1.442695
    %v8315 = vpow.pop %v8314
    %v8316 = vmul.f32 %v8208, 1.442695
    %v8317 = vpow.pop %v8316
    %v8318 = vmul.f32 %v8209, 1.442695
    %v8319 = vpow.pop %v8318
    %v8320 = vmul.f32 %v8210, 1.442695
    %v8321 = vpow.pop %v8320
    %v8322 = vmul.f32 %v8211, 1.442695
    %v8323 = vpow.pop %v8322
    %v8324 = vmul.f32 %v8212, 1.442695
    %v8325 = vpow.pop %v8324
    %v8326 = vmul.f32 %v8213, 1.442695
    %v8327 = vpow.pop %v8326
    %v8328 = vmul.f32 %v8214, 1.442695
    %v8329 = vpow.pop %v8328
    %v8330 = vmul.f32 %v8215, 1.442695
    %v8331 = vpow.pop %v8330
    %v8332 = vmul.f32 %v8216, 1.442695
    %v8333 = vpow.pop %v8332
    %v8334 = vmul.f32 %v8217, 1.442695
    %v8335 = vpow.pop %v8334
    %v8336 = vmul.f32 %v8218, 1.442695
    %v8337 = vpow.pop %v8336
    %v8338 = vmul.f32 %v8219, 1.442695
    %v8339 = vpow.pop %v8338
    %v8340 = vmul.f32 %v8220, 1.442695
    %v8341 = vpow.pop %v8340
    %v8342 = vmul.f32 %v8221, 1.442695
    %v8343 = vpow.pop %v8342
    %v8344 = vmul.f32 %v8222, 1.442695
    %v8345 = vpow.pop %v8344
    %v8346 = vmul.f32 %v8223, 1.442695
    %v8347 = vpow.pop %v8346
    %v8348 = vmul.f32 %v8224, 1.442695
    %v8349 = vpow.pop %v8348
    %v8350 = vmul.f32 %v8225, 1.442695
    %v8351 = vpow.pop %v8350
    %v8352 = vmul.f32 %v8226, 1.442695
    %v8353 = vpow.pop %v8352
    %v8354 = vmul.f32 %v8227, 1.442695
    %v8355 = vpow.pop %v8354
    %v8356 = vsel %vm4863, %v8229, 0.0
    %8357 = vadd.xlane.f32.xlu0 %v8356
    %v8358 = vpop.xlane.xlu0 %8357
    %v8359 = vsel %vm4863, %v8231, 0.0
    %8360 = vadd.xlane.f32.xlu0 %v8359
    %v8361 = vpop.xlane.xlu0 %8360
    %v8362 = vsel %vm4863, %v8233, 0.0
    %8363 = vadd.xlane.f32.xlu0 %v8362
    %v8364 = vpop.xlane.xlu0 %8363
    %v8365 = vsel %vm4863, %v8235, 0.0
    %8366 = vadd.xlane.f32.xlu0 %v8365
    %v8367 = vpop.xlane.xlu0 %8366
    %v8368 = vsel %vm4863, %v8237, 0.0
    %8369 = vadd.xlane.f32.xlu0 %v8368
    %v8370 = vpop.xlane.xlu0 %8369
    %v8371 = vsel %vm4863, %v8239, 0.0
    %8372 = vadd.xlane.f32.xlu0 %v8371
    %v8373 = vpop.xlane.xlu0 %8372
    %v8374 = vsel %vm4863, %v8241, 0.0
    %8375 = vadd.xlane.f32.xlu0 %v8374
    %v8376 = vpop.xlane.xlu0 %8375
    %v8377 = vsel %vm4863, %v8243, 0.0
    %8378 = vadd.xlane.f32.xlu0 %v8377
    %v8379 = vpop.xlane.xlu0 %8378
    %v8380 = vsel %vm4863, %v8245, 0.0
    %8381 = vadd.xlane.f32.xlu0 %v8380
    %v8382 = vpop.xlane.xlu0 %8381
    %v8383 = vsel %vm4863, %v8247, 0.0
    %8384 = vadd.xlane.f32.xlu0 %v8383
    %v8385 = vpop.xlane.xlu0 %8384
    %v8386 = vsel %vm4863, %v8249, 0.0
    %8387 = vadd.xlane.f32.xlu0 %v8386
    %v8388 = vpop.xlane.xlu0 %8387
    %v8389 = vsel %vm4863, %v8251, 0.0
    %8390 = vadd.xlane.f32.xlu0 %v8389
    %v8391 = vpop.xlane.xlu0 %8390
    %v8392 = vsel %vm4863, %v8253, 0.0
    %8393 = vadd.xlane.f32.xlu0 %v8392
    %v8394 = vpop.xlane.xlu0 %8393
    %v8395 = vsel %vm4863, %v8255, 0.0
    %8396 = vadd.xlane.f32.xlu0 %v8395
    %v8397 = vpop.xlane.xlu0 %8396
    %v8398 = vsel %vm4863, %v8257, 0.0
    %8399 = vadd.xlane.f32.xlu0 %v8398
    %v8400 = vpop.xlane.xlu0 %8399
    %v8401 = vsel %vm4863, %v8259, 0.0
    %8402 = vadd.xlane.f32.xlu0 %v8401
    %v8403 = vpop.xlane.xlu0 %8402
    %v8404 = vsel %vm4863, %v8261, 0.0
    %8405 = vadd.xlane.f32.xlu0 %v8404
    %v8406 = vpop.xlane.xlu0 %8405
    %v8407 = vsel %vm4863, %v8263, 0.0
    %8408 = vadd.xlane.f32.xlu0 %v8407
    %v8409 = vpop.xlane.xlu0 %8408
    %v8410 = vsel %vm4863, %v8265, 0.0
    %8411 = vadd.xlane.f32.xlu0 %v8410
    %v8412 = vpop.xlane.xlu0 %8411
    %v8413 = vsel %vm4863, %v8267, 0.0
    %8414 = vadd.xlane.f32.xlu0 %v8413
    %v8415 = vpop.xlane.xlu0 %8414
    %v8416 = vsel %vm4863, %v8269, 0.0
    %8417 = vadd.xlane.f32.xlu0 %v8416
    %v8418 = vpop.xlane.xlu0 %8417
    %v8419 = vsel %vm4863, %v8271, 0.0
    %8420 = vadd.xlane.f32.xlu0 %v8419
    %v8421 = vpop.xlane.xlu0 %8420
    %v8422 = vsel %vm4863, %v8273, 0.0
    %8423 = vadd.xlane.f32.xlu0 %v8422
    %v8424 = vpop.xlane.xlu0 %8423
    %v8425 = vsel %vm4863, %v8275, 0.0
    %8426 = vadd.xlane.f32.xlu0 %v8425
    %v8427 = vpop.xlane.xlu0 %8426
    %v8428 = vsel %vm4863, %v8277, 0.0
    %8429 = vadd.xlane.f32.xlu0 %v8428
    %v8430 = vpop.xlane.xlu0 %8429
    %v8431 = vsel %vm4863, %v8279, 0.0
    %8432 = vadd.xlane.f32.xlu0 %v8431
    %v8433 = vpop.xlane.xlu0 %8432
    %v8434 = vsel %vm4863, %v8281, 0.0
    %8435 = vadd.xlane.f32.xlu0 %v8434
    %v8436 = vpop.xlane.xlu0 %8435
    %v8437 = vsel %vm4863, %v8283, 0.0
    %8438 = vadd.xlane.f32.xlu0 %v8437
    %v8439 = vpop.xlane.xlu0 %8438
    %v8440 = vsel %vm4863, %v8285, 0.0
    %8441 = vadd.xlane.f32.xlu0 %v8440
    %v8442 = vpop.xlane.xlu0 %8441
    %v8443 = vsel %vm4863, %v8287, 0.0
    %8444 = vadd.xlane.f32.xlu0 %v8443
    %v8445 = vpop.xlane.xlu0 %8444
    %v8446 = vsel %vm4863, %v8289, 0.0
    %8447 = vadd.xlane.f32.xlu0 %v8446
    %v8448 = vpop.xlane.xlu0 %8447
    %v8449 = vsel %vm4863, %v8291, 0.0
    %8450 = vadd.xlane.f32.xlu0 %v8449
    %v8451 = vpop.xlane.xlu0 %8450
    %v8452 = vsel %vm4863, %v8293, 0.0
    %8453 = vadd.xlane.f32.xlu0 %v8452
    %v8454 = vpop.xlane.xlu0 %8453
    %v8455 = vsel %vm4863, %v8295, 0.0
    %8456 = vadd.xlane.f32.xlu0 %v8455
    %v8457 = vpop.xlane.xlu0 %8456
    %v8458 = vsel %vm4863, %v8297, 0.0
    %8459 = vadd.xlane.f32.xlu0 %v8458
    %v8460 = vpop.xlane.xlu0 %8459
    %v8461 = vsel %vm4863, %v8299, 0.0
    %8462 = vadd.xlane.f32.xlu0 %v8461
    %v8463 = vpop.xlane.xlu0 %8462
    %v8464 = vsel %vm4863, %v8301, 0.0
    %8465 = vadd.xlane.f32.xlu0 %v8464
    %v8466 = vpop.xlane.xlu0 %8465
    %v8467 = vsel %vm4863, %v8303, 0.0
    %8468 = vadd.xlane.f32.xlu0 %v8467
    %v8469 = vpop.xlane.xlu0 %8468
    %v8470 = vsel %vm4863, %v8305, 0.0
    %8471 = vadd.xlane.f32.xlu0 %v8470
    %v8472 = vpop.xlane.xlu0 %8471
    %v8473 = vsel %vm4863, %v8307, 0.0
    %8474 = vadd.xlane.f32.xlu0 %v8473
    %v8475 = vpop.xlane.xlu0 %8474
    %v8476 = vsel %vm4863, %v8309, 0.0
    %8477 = vadd.xlane.f32.xlu0 %v8476
    %v8478 = vpop.xlane.xlu0 %8477
    %v8479 = vsel %vm4863, %v8311, 0.0
    %8480 = vadd.xlane.f32.xlu0 %v8479
    %v8481 = vpop.xlane.xlu0 %8480
    %v8482 = vsel %vm4863, %v8313, 0.0
    %8483 = vadd.xlane.f32.xlu0 %v8482
    %v8484 = vpop.xlane.xlu0 %8483
    %v8485 = vsel %vm4863, %v8315, 0.0
    %8486 = vadd.xlane.f32.xlu0 %v8485
    %v8487 = vpop.xlane.xlu0 %8486
    %v8488 = vsel %vm4863, %v8317, 0.0
    %8489 = vadd.xlane.f32.xlu0 %v8488
    %v8490 = vpop.xlane.xlu0 %8489
    %v8491 = vsel %vm4863, %v8319, 0.0
    %8492 = vadd.xlane.f32.xlu0 %v8491
    %v8493 = vpop.xlane.xlu0 %8492
    %v8494 = vsel %vm4863, %v8321, 0.0
    %8495 = vadd.xlane.f32.xlu0 %v8494
    %v8496 = vpop.xlane.xlu0 %8495
    %v8497 = vsel %vm4863, %v8323, 0.0
    %8498 = vadd.xlane.f32.xlu0 %v8497
    %v8499 = vpop.xlane.xlu0 %8498
    %v8500 = vsel %vm4863, %v8325, 0.0
    %8501 = vadd.xlane.f32.xlu0 %v8500
    %v8502 = vpop.xlane.xlu0 %8501
    %v8503 = vsel %vm4863, %v8327, 0.0
    %8504 = vadd.xlane.f32.xlu0 %v8503
    %v8505 = vpop.xlane.xlu0 %8504
    %v8506 = vsel %vm4863, %v8329, 0.0
    %8507 = vadd.xlane.f32.xlu0 %v8506
    %v8508 = vpop.xlane.xlu0 %8507
    %v8509 = vsel %vm4863, %v8331, 0.0
    %8510 = vadd.xlane.f32.xlu0 %v8509
    %v8511 = vpop.xlane.xlu0 %8510
    %v8512 = vsel %vm4863, %v8333, 0.0
    %8513 = vadd.xlane.f32.xlu0 %v8512
    %v8514 = vpop.xlane.xlu0 %8513
    %v8515 = vsel %vm4863, %v8335, 0.0
    %8516 = vadd.xlane.f32.xlu0 %v8515
    %v8517 = vpop.xlane.xlu0 %8516
    %v8518 = vsel %vm4863, %v8337, 0.0
    %8519 = vadd.xlane.f32.xlu0 %v8518
    %v8520 = vpop.xlane.xlu0 %8519
    %v8521 = vsel %vm4863, %v8339, 0.0
    %8522 = vadd.xlane.f32.xlu0 %v8521
    %v8523 = vpop.xlane.xlu0 %8522
    %v8524 = vsel %vm4863, %v8341, 0.0
    %8525 = vadd.xlane.f32.xlu0 %v8524
    %v8526 = vpop.xlane.xlu0 %8525
    %v8527 = vsel %vm4863, %v8343, 0.0
    %8528 = vadd.xlane.f32.xlu0 %v8527
    %v8529 = vpop.xlane.xlu0 %8528
    %v8530 = vsel %vm4863, %v8345, 0.0
    %8531 = vadd.xlane.f32.xlu0 %v8530
    %v8532 = vpop.xlane.xlu0 %8531
    %v8533 = vsel %vm4863, %v8347, 0.0
    %8534 = vadd.xlane.f32.xlu0 %v8533
    %v8535 = vpop.xlane.xlu0 %8534
    %v8536 = vsel %vm4863, %v8349, 0.0
    %8537 = vadd.xlane.f32.xlu0 %v8536
    %v8538 = vpop.xlane.xlu0 %8537
    %v8539 = vsel %vm4863, %v8351, 0.0
    %8540 = vadd.xlane.f32.xlu0 %v8539
    %v8541 = vpop.xlane.xlu0 %8540
    %v8542 = vsel %vm4863, %v8353, 0.0
    %8543 = vadd.xlane.f32.xlu0 %v8542
    %v8544 = vpop.xlane.xlu0 %8543
    %v8545 = vsel %vm4863, %v8355, 0.0
    %8546 = vadd.xlane.f32.xlu0 %v8545
    %v8547 = vpop.xlane.xlu0 %8546
    %v8548 = vrcp.pop %v8358
    %v8549 = vrcp.pop %v8361
    %v8550 = vrcp.pop %v8364
    %v8551 = vrcp.pop %v8367
    %v8552 = vrcp.pop %v8370
    %v8553 = vrcp.pop %v8373
    %v8554 = vrcp.pop %v8376
    %v8555 = vrcp.pop %v8379
    %v8556 = vrcp.pop %v8382
    %v8557 = vrcp.pop %v8385
    %v8558 = vrcp.pop %v8388
    %v8559 = vrcp.pop %v8391
    %v8560 = vrcp.pop %v8394
    %v8561 = vrcp.pop %v8397
    %v8562 = vrcp.pop %v8400
    %v8563 = vrcp.pop %v8403
    %v8564 = vrcp.pop %v8406
    %v8565 = vrcp.pop %v8409
    %v8566 = vrcp.pop %v8412
    %v8567 = vrcp.pop %v8415
    %v8568 = vrcp.pop %v8418
    %v8569 = vrcp.pop %v8421
    %v8570 = vrcp.pop %v8424
    %v8571 = vrcp.pop %v8427
    %v8572 = vrcp.pop %v8430
    %v8573 = vrcp.pop %v8433
    %v8574 = vrcp.pop %v8436
    %v8575 = vrcp.pop %v8439
    %v8576 = vrcp.pop %v8442
    %v8577 = vrcp.pop %v8445
    %v8578 = vrcp.pop %v8448
    %v8579 = vrcp.pop %v8451
    %v8580 = vrcp.pop %v8454
    %v8581 = vrcp.pop %v8457
    %v8582 = vrcp.pop %v8460
    %v8583 = vrcp.pop %v8463
    %v8584 = vrcp.pop %v8466
    %v8585 = vrcp.pop %v8469
    %v8586 = vrcp.pop %v8472
    %v8587 = vrcp.pop %v8475
    %v8588 = vrcp.pop %v8478
    %v8589 = vrcp.pop %v8481
    %v8590 = vrcp.pop %v8484
    %v8591 = vrcp.pop %v8487
    %v8592 = vrcp.pop %v8490
    %v8593 = vrcp.pop %v8493
    %v8594 = vrcp.pop %v8496
    %v8595 = vrcp.pop %v8499
    %v8596 = vrcp.pop %v8502
    %v8597 = vrcp.pop %v8505
    %v8598 = vrcp.pop %v8508
    %v8599 = vrcp.pop %v8511
    %v8600 = vrcp.pop %v8514
    %v8601 = vrcp.pop %v8517
    %v8602 = vrcp.pop %v8520
    %v8603 = vrcp.pop %v8523
    %v8604 = vrcp.pop %v8526
    %v8605 = vrcp.pop %v8529
    %v8606 = vrcp.pop %v8532
    %v8607 = vrcp.pop %v8535
    %v8608 = vrcp.pop %v8538
    %v8609 = vrcp.pop %v8541
    %v8610 = vrcp.pop %v8544
    %v8611 = vrcp.pop %v8547
    %v8612 = vmul.f32 %v8229, %v8548
    %v8613 = vmul.f32 %v8231, %v8549
    %v8614 = vmul.f32 %v8233, %v8550
    %v8615 = vmul.f32 %v8235, %v8551
    %v8616 = vmul.f32 %v8237, %v8552
    %v8617 = vmul.f32 %v8239, %v8553
    %v8618 = vmul.f32 %v8241, %v8554
    %v8619 = vmul.f32 %v8243, %v8555
    %v8620 = vmul.f32 %v8245, %v8556
    %v8621 = vmul.f32 %v8247, %v8557
    %v8622 = vmul.f32 %v8249, %v8558
    %v8623 = vmul.f32 %v8251, %v8559
    %v8624 = vmul.f32 %v8253, %v8560
    %v8625 = vmul.f32 %v8255, %v8561
    %v8626 = vmul.f32 %v8257, %v8562
    %v8627 = vmul.f32 %v8259, %v8563
    %v8628 = vmul.f32 %v8261, %v8564
    %v8629 = vmul.f32 %v8263, %v8565
    %v8630 = vmul.f32 %v8265, %v8566
    %v8631 = vmul.f32 %v8267, %v8567
    %v8632 = vmul.f32 %v8269, %v8568
    %v8633 = vmul.f32 %v8271, %v8569
    %v8634 = vmul.f32 %v8273, %v8570
    %v8635 = vmul.f32 %v8275, %v8571
    %v8636 = vmul.f32 %v8277, %v8572
    %v8637 = vmul.f32 %v8279, %v8573
    %v8638 = vmul.f32 %v8281, %v8574
    %v8639 = vmul.f32 %v8283, %v8575
    %v8640 = vmul.f32 %v8285, %v8576
    %v8641 = vmul.f32 %v8287, %v8577
    %v8642 = vmul.f32 %v8289, %v8578
    %v8643 = vmul.f32 %v8291, %v8579
    %v8644 = vmul.f32 %v8293, %v8580
    %v8645 = vmul.f32 %v8295, %v8581
    %v8646 = vmul.f32 %v8297, %v8582
    %v8647 = vmul.f32 %v8299, %v8583
    %v8648 = vmul.f32 %v8301, %v8584
    %v8649 = vmul.f32 %v8303, %v8585
    %v8650 = vmul.f32 %v8305, %v8586
    %v8651 = vmul.f32 %v8307, %v8587
    %v8652 = vmul.f32 %v8309, %v8588
    %v8653 = vmul.f32 %v8311, %v8589
    %v8654 = vmul.f32 %v8313, %v8590
    %v8655 = vmul.f32 %v8315, %v8591
    %v8656 = vmul.f32 %v8317, %v8592
    %v8657 = vmul.f32 %v8319, %v8593
    %v8658 = vmul.f32 %v8321, %v8594
    %v8659 = vmul.f32 %v8323, %v8595
    %v8660 = vmul.f32 %v8325, %v8596
    %v8661 = vmul.f32 %v8327, %v8597
    %v8662 = vmul.f32 %v8329, %v8598
    %v8663 = vmul.f32 %v8331, %v8599
    %v8664 = vmul.f32 %v8333, %v8600
    %v8665 = vmul.f32 %v8335, %v8601
    %v8666 = vmul.f32 %v8337, %v8602
    %v8667 = vmul.f32 %v8339, %v8603
    %v8668 = vmul.f32 %v8341, %v8604
    %v8669 = vmul.f32 %v8343, %v8605
    %v8670 = vmul.f32 %v8345, %v8606
    %v8671 = vmul.f32 %v8347, %v8607
    %v8672 = vmul.f32 %v8349, %v8608
    %v8673 = vmul.f32 %v8351, %v8609
    %v8674 = vmul.f32 %v8353, %v8610
    %v8675 = vmul.f32 %v8355, %v8611
    %v8676 = vpack.c.bf16 %v8612, %v8612
    %v8677 = vpack.c.bf16 %v8613, %v8613
    %v8678 = vpack.c.bf16 %v8614, %v8614
    %v8679 = vpack.c.bf16 %v8615, %v8615
    %v8680 = vpack.c.bf16 %v8616, %v8616
    %v8681 = vpack.c.bf16 %v8617, %v8617
    %v8682 = vpack.c.bf16 %v8618, %v8618
    %v8683 = vpack.c.bf16 %v8619, %v8619
    %v8684 = vpack.c.bf16 %v8620, %v8620
    %v8685 = vpack.c.bf16 %v8621, %v8621
    %v8686 = vpack.c.bf16 %v8622, %v8622
    %v8687 = vpack.c.bf16 %v8623, %v8623
    %v8688 = vpack.c.bf16 %v8624, %v8624
    %v8689 = vpack.c.bf16 %v8625, %v8625
    %v8690 = vpack.c.bf16 %v8626, %v8626
    %v8691 = vpack.c.bf16 %v8627, %v8627
    %v8692 = vpack.c.bf16 %v8628, %v8628
    %v8693 = vpack.c.bf16 %v8629, %v8629
    %v8694 = vpack.c.bf16 %v8630, %v8630
    %v8695 = vpack.c.bf16 %v8631, %v8631
    %v8696 = vpack.c.bf16 %v8632, %v8632
    %v8697 = vpack.c.bf16 %v8633, %v8633
    %v8698 = vpack.c.bf16 %v8634, %v8634
    %v8699 = vpack.c.bf16 %v8635, %v8635
    %v8700 = vpack.c.bf16 %v8636, %v8636
    %v8701 = vpack.c.bf16 %v8637, %v8637
    %v8702 = vpack.c.bf16 %v8638, %v8638
    %v8703 = vpack.c.bf16 %v8639, %v8639
    %v8704 = vpack.c.bf16 %v8640, %v8640
    %v8705 = vpack.c.bf16 %v8641, %v8641
    %v8706 = vpack.c.bf16 %v8642, %v8642
    %v8707 = vpack.c.bf16 %v8643, %v8643
    %v8708 = vpack.c.bf16 %v8644, %v8644
    %v8709 = vpack.c.bf16 %v8645, %v8645
    %v8710 = vpack.c.bf16 %v8646, %v8646
    %v8711 = vpack.c.bf16 %v8647, %v8647
    %v8712 = vpack.c.bf16 %v8648, %v8648
    %v8713 = vpack.c.bf16 %v8649, %v8649
    %v8714 = vpack.c.bf16 %v8650, %v8650
    %v8715 = vpack.c.bf16 %v8651, %v8651
    %v8716 = vpack.c.bf16 %v8652, %v8652
    %v8717 = vpack.c.bf16 %v8653, %v8653
    %v8718 = vpack.c.bf16 %v8654, %v8654
    %v8719 = vpack.c.bf16 %v8655, %v8655
    %v8720 = vpack.c.bf16 %v8656, %v8656
    %v8721 = vpack.c.bf16 %v8657, %v8657
    %v8722 = vpack.c.bf16 %v8658, %v8658
    %v8723 = vpack.c.bf16 %v8659, %v8659
    %v8724 = vpack.c.bf16 %v8660, %v8660
    %v8725 = vpack.c.bf16 %v8661, %v8661
    %v8726 = vpack.c.bf16 %v8662, %v8662
    %v8727 = vpack.c.bf16 %v8663, %v8663
    %v8728 = vpack.c.bf16 %v8664, %v8664
    %v8729 = vpack.c.bf16 %v8665, %v8665
    %v8730 = vpack.c.bf16 %v8666, %v8666
    %v8731 = vpack.c.bf16 %v8667, %v8667
    %v8732 = vpack.c.bf16 %v8668, %v8668
    %v8733 = vpack.c.bf16 %v8669, %v8669
    %v8734 = vpack.c.bf16 %v8670, %v8670
    %v8735 = vpack.c.bf16 %v8671, %v8671
    %v8736 = vpack.c.bf16 %v8672, %v8672
    %v8737 = vpack.c.bf16 %v8673, %v8673
    %v8738 = vpack.c.bf16 %v8674, %v8674
    %v8739 = vpack.c.bf16 %v8675, %v8675
    %8740 = vrot.lane.b32.xlu0 %v6440, 96
    %v8741 = vpop.permute.xlu0 %8740
    %v8744 = vsel %vm4863, %v8676, 0
    %8746 = vmatpush.bf16.msra.mxu0 0
    %8747 = vmatpush.bf16.msra.mxu0 0
    %8748 = vmatpush.bf16.msra.mxu0 0
    %8749 = vmatpush.bf16.msra.mxu0 0
    %8750 = vmatpush.bf16.msra.mxu0 0
    %8751 = vmatpush.bf16.msra.mxu0 0
    %8752 = vmatpush.bf16.msra.mxu0 0
    %8753 = vmatpush.bf16.msra.mxu0 %v8741
    %8754 = vmatmul.bf16.gmra.mxu0 %v8744
    %v8755 = vpop.f32.mrf.mxu0
    %v8756 = vadd.f32 0.0, %v8755
    %v8757 = vpop.f32.mrf.mxu0
    %8758 = vdwg.mxu0
    %8759 = vrot.lane.b32.xlu0 %v6464, 96
    %v8760 = vpop.permute.xlu0 %8759
    %v8763 = vsel %vm4863, %v8677, 0
    %8765 = vmatpush.bf16.msra.mxu0 0
    %8766 = vmatpush.bf16.msra.mxu0 0
    %8767 = vmatpush.bf16.msra.mxu0 0
    %8768 = vmatpush.bf16.msra.mxu0 0
    %8769 = vmatpush.bf16.msra.mxu0 0
    %8770 = vmatpush.bf16.msra.mxu0 0
    %8771 = vmatpush.bf16.msra.mxu0 0
    %8772 = vmatpush.bf16.msra.mxu0 %v8760
    %8773 = vmatmul.bf16.gmra.mxu0 %v8763
    %v8774 = vpop.f32.mrf.mxu0
    %v8775 = vadd.f32 0.0, %v8774
    %v8776 = vpop.f32.mrf.mxu0
    %8777 = vdwg.mxu0
    %8778 = vrot.lane.b32.xlu0 %v6488, 96
    %v8779 = vpop.permute.xlu0 %8778
    %v8782 = vsel %vm4863, %v8678, 0
    %8784 = vmatpush.bf16.msra.mxu0 0
    %8785 = vmatpush.bf16.msra.mxu0 0
    %8786 = vmatpush.bf16.msra.mxu0 0
    %8787 = vmatpush.bf16.msra.mxu0 0
    %8788 = vmatpush.bf16.msra.mxu0 0
    %8789 = vmatpush.bf16.msra.mxu0 0
    %8790 = vmatpush.bf16.msra.mxu0 0
    %8791 = vmatpush.bf16.msra.mxu0 %v8779
    %8792 = vmatmul.bf16.gmra.mxu0 %v8782
    %v8793 = vpop.f32.mrf.mxu0
    %v8794 = vadd.f32 0.0, %v8793
    %v8795 = vpop.f32.mrf.mxu0
    %8796 = vdwg.mxu0
    %8797 = vrot.lane.b32.xlu0 %v6512, 96
    %v8798 = vpop.permute.xlu0 %8797
    %v8801 = vsel %vm4863, %v8679, 0
    %8803 = vmatpush.bf16.msra.mxu0 0
    %8804 = vmatpush.bf16.msra.mxu0 0
    %8805 = vmatpush.bf16.msra.mxu0 0
    %8806 = vmatpush.bf16.msra.mxu0 0
    %8807 = vmatpush.bf16.msra.mxu0 0
    %8808 = vmatpush.bf16.msra.mxu0 0
    %8809 = vmatpush.bf16.msra.mxu0 0
    %8810 = vmatpush.bf16.msra.mxu0 %v8798
    %8811 = vmatmul.bf16.gmra.mxu0 %v8801
    %v8812 = vpop.f32.mrf.mxu0
    %v8813 = vadd.f32 0.0, %v8812
    %v8814 = vpop.f32.mrf.mxu0
    %8815 = vdwg.mxu0
    %8816 = vrot.lane.b32.xlu0 %v6536, 96
    %v8817 = vpop.permute.xlu0 %8816
    %v8820 = vsel %vm4863, %v8680, 0
    %8822 = vmatpush.bf16.msra.mxu0 0
    %8823 = vmatpush.bf16.msra.mxu0 0
    %8824 = vmatpush.bf16.msra.mxu0 0
    %8825 = vmatpush.bf16.msra.mxu0 0
    %8826 = vmatpush.bf16.msra.mxu0 0
    %8827 = vmatpush.bf16.msra.mxu0 0
    %8828 = vmatpush.bf16.msra.mxu0 0
    %8829 = vmatpush.bf16.msra.mxu0 %v8817
    %8830 = vmatmul.bf16.gmra.mxu0 %v8820
    %v8831 = vpop.f32.mrf.mxu0
    %v8832 = vadd.f32 0.0, %v8831
    %v8833 = vpop.f32.mrf.mxu0
    %8834 = vdwg.mxu0
    %8835 = vrot.lane.b32.xlu0 %v6560, 96
    %v8836 = vpop.permute.xlu0 %8835
    %v8839 = vsel %vm4863, %v8681, 0
    %8841 = vmatpush.bf16.msra.mxu0 0
    %8842 = vmatpush.bf16.msra.mxu0 0
    %8843 = vmatpush.bf16.msra.mxu0 0
    %8844 = vmatpush.bf16.msra.mxu0 0
    %8845 = vmatpush.bf16.msra.mxu0 0
    %8846 = vmatpush.bf16.msra.mxu0 0
    %8847 = vmatpush.bf16.msra.mxu0 0
    %8848 = vmatpush.bf16.msra.mxu0 %v8836
    %8849 = vmatmul.bf16.gmra.mxu0 %v8839
    %v8850 = vpop.f32.mrf.mxu0
    %v8851 = vadd.f32 0.0, %v8850
    %v8852 = vpop.f32.mrf.mxu0
    %8853 = vdwg.mxu0
    %8854 = vrot.lane.b32.xlu0 %v6584, 96
    %v8855 = vpop.permute.xlu0 %8854
    %v8858 = vsel %vm4863, %v8682, 0
    %8860 = vmatpush.bf16.msra.mxu0 0
    %8861 = vmatpush.bf16.msra.mxu0 0
    %8862 = vmatpush.bf16.msra.mxu0 0
    %8863 = vmatpush.bf16.msra.mxu0 0
    %8864 = vmatpush.bf16.msra.mxu0 0
    %8865 = vmatpush.bf16.msra.mxu0 0
    %8866 = vmatpush.bf16.msra.mxu0 0
    %8867 = vmatpush.bf16.msra.mxu0 %v8855
    %8868 = vmatmul.bf16.gmra.mxu0 %v8858
    %v8869 = vpop.f32.mrf.mxu0
    %v8870 = vadd.f32 0.0, %v8869
    %v8871 = vpop.f32.mrf.mxu0
    %8872 = vdwg.mxu0
    %8873 = vrot.lane.b32.xlu0 %v6608, 96
    %v8874 = vpop.permute.xlu0 %8873
    %v8877 = vsel %vm4863, %v8683, 0
    %8879 = vmatpush.bf16.msra.mxu0 0
    %8880 = vmatpush.bf16.msra.mxu0 0
    %8881 = vmatpush.bf16.msra.mxu0 0
    %8882 = vmatpush.bf16.msra.mxu0 0
    %8883 = vmatpush.bf16.msra.mxu0 0
    %8884 = vmatpush.bf16.msra.mxu0 0
    %8885 = vmatpush.bf16.msra.mxu0 0
    %8886 = vmatpush.bf16.msra.mxu0 %v8874
    %8887 = vmatmul.bf16.gmra.mxu0 %v8877
    %v8888 = vpop.f32.mrf.mxu0
    %v8889 = vadd.f32 0.0, %v8888
    %v8890 = vpop.f32.mrf.mxu0
    %8891 = vdwg.mxu0
    %8892 = vrot.lane.b32.xlu0 %v6632, 96
    %v8893 = vpop.permute.xlu0 %8892
    %v8896 = vsel %vm4863, %v8684, 0
    %8898 = vmatpush.bf16.msra.mxu0 0
    %8899 = vmatpush.bf16.msra.mxu0 0
    %8900 = vmatpush.bf16.msra.mxu0 0
    %8901 = vmatpush.bf16.msra.mxu0 0
    %8902 = vmatpush.bf16.msra.mxu0 0
    %8903 = vmatpush.bf16.msra.mxu0 0
    %8904 = vmatpush.bf16.msra.mxu0 0
    %8905 = vmatpush.bf16.msra.mxu0 %v8893
    %8906 = vmatmul.bf16.gmra.mxu0 %v8896
    %v8907 = vpop.f32.mrf.mxu0
    %v8908 = vadd.f32 0.0, %v8907
    %v8909 = vpop.f32.mrf.mxu0
    %8910 = vdwg.mxu0
    %8911 = vrot.lane.b32.xlu0 %v6656, 96
    %v8912 = vpop.permute.xlu0 %8911
    %v8915 = vsel %vm4863, %v8685, 0
    %8917 = vmatpush.bf16.msra.mxu0 0
    %8918 = vmatpush.bf16.msra.mxu0 0
    %8919 = vmatpush.bf16.msra.mxu0 0
    %8920 = vmatpush.bf16.msra.mxu0 0
    %8921 = vmatpush.bf16.msra.mxu0 0
    %8922 = vmatpush.bf16.msra.mxu0 0
    %8923 = vmatpush.bf16.msra.mxu0 0
    %8924 = vmatpush.bf16.msra.mxu0 %v8912
    %8925 = vmatmul.bf16.gmra.mxu0 %v8915
    %v8926 = vpop.f32.mrf.mxu0
    %v8927 = vadd.f32 0.0, %v8926
    %v8928 = vpop.f32.mrf.mxu0
    %8929 = vdwg.mxu0
    %8930 = vrot.lane.b32.xlu0 %v6680, 96
    %v8931 = vpop.permute.xlu0 %8930
    %v8934 = vsel %vm4863, %v8686, 0
    %8936 = vmatpush.bf16.msra.mxu0 0
    %8937 = vmatpush.bf16.msra.mxu0 0
    %8938 = vmatpush.bf16.msra.mxu0 0
    %8939 = vmatpush.bf16.msra.mxu0 0
    %8940 = vmatpush.bf16.msra.mxu0 0
    %8941 = vmatpush.bf16.msra.mxu0 0
    %8942 = vmatpush.bf16.msra.mxu0 0
    %8943 = vmatpush.bf16.msra.mxu0 %v8931
    %8944 = vmatmul.bf16.gmra.mxu0 %v8934
    %v8945 = vpop.f32.mrf.mxu0
    %v8946 = vadd.f32 0.0, %v8945
    %v8947 = vpop.f32.mrf.mxu0
    %8948 = vdwg.mxu0
    %8949 = vrot.lane.b32.xlu0 %v6704, 96
    %v8950 = vpop.permute.xlu0 %8949
    %v8953 = vsel %vm4863, %v8687, 0
    %8955 = vmatpush.bf16.msra.mxu0 0
    %8956 = vmatpush.bf16.msra.mxu0 0
    %8957 = vmatpush.bf16.msra.mxu0 0
    %8958 = vmatpush.bf16.msra.mxu0 0
    %8959 = vmatpush.bf16.msra.mxu0 0
    %8960 = vmatpush.bf16.msra.mxu0 0
    %8961 = vmatpush.bf16.msra.mxu0 0
    %8962 = vmatpush.bf16.msra.mxu0 %v8950
    %8963 = vmatmul.bf16.gmra.mxu0 %v8953
    %v8964 = vpop.f32.mrf.mxu0
    %v8965 = vadd.f32 0.0, %v8964
    %v8966 = vpop.f32.mrf.mxu0
    %8967 = vdwg.mxu0
    %8968 = vrot.lane.b32.xlu0 %v6728, 96
    %v8969 = vpop.permute.xlu0 %8968
    %v8972 = vsel %vm4863, %v8688, 0
    %8974 = vmatpush.bf16.msra.mxu0 0
    %8975 = vmatpush.bf16.msra.mxu0 0
    %8976 = vmatpush.bf16.msra.mxu0 0
    %8977 = vmatpush.bf16.msra.mxu0 0
    %8978 = vmatpush.bf16.msra.mxu0 0
    %8979 = vmatpush.bf16.msra.mxu0 0
    %8980 = vmatpush.bf16.msra.mxu0 0
    %8981 = vmatpush.bf16.msra.mxu0 %v8969
    %8982 = vmatmul.bf16.gmra.mxu0 %v8972
    %v8983 = vpop.f32.mrf.mxu0
    %v8984 = vadd.f32 0.0, %v8983
    %v8985 = vpop.f32.mrf.mxu0
    %8986 = vdwg.mxu0
    %8987 = vrot.lane.b32.xlu0 %v6752, 96
    %v8988 = vpop.permute.xlu0 %8987
    %v8991 = vsel %vm4863, %v8689, 0
    %8993 = vmatpush.bf16.msra.mxu0 0
    %8994 = vmatpush.bf16.msra.mxu0 0
    %8995 = vmatpush.bf16.msra.mxu0 0
    %8996 = vmatpush.bf16.msra.mxu0 0
    %8997 = vmatpush.bf16.msra.mxu0 0
    %8998 = vmatpush.bf16.msra.mxu0 0
    %8999 = vmatpush.bf16.msra.mxu0 0
    %9000 = vmatpush.bf16.msra.mxu0 %v8988
    %9001 = vmatmul.bf16.gmra.mxu0 %v8991
    %v9002 = vpop.f32.mrf.mxu0
    %v9003 = vadd.f32 0.0, %v9002
    %v9004 = vpop.f32.mrf.mxu0
    %9005 = vdwg.mxu0
    %9006 = vrot.lane.b32.xlu0 %v6776, 96
    %v9007 = vpop.permute.xlu0 %9006
    %v9010 = vsel %vm4863, %v8690, 0
    %9012 = vmatpush.bf16.msra.mxu0 0
    %9013 = vmatpush.bf16.msra.mxu0 0
    %9014 = vmatpush.bf16.msra.mxu0 0
    %9015 = vmatpush.bf16.msra.mxu0 0
    %9016 = vmatpush.bf16.msra.mxu0 0
    %9017 = vmatpush.bf16.msra.mxu0 0
    %9018 = vmatpush.bf16.msra.mxu0 0
    %9019 = vmatpush.bf16.msra.mxu0 %v9007
    %9020 = vmatmul.bf16.gmra.mxu0 %v9010
    %v9021 = vpop.f32.mrf.mxu0
    %v9022 = vadd.f32 0.0, %v9021
    %v9023 = vpop.f32.mrf.mxu0
    %9024 = vdwg.mxu0
    %9025 = vrot.lane.b32.xlu0 %v6800, 96
    %v9026 = vpop.permute.xlu0 %9025
    %v9029 = vsel %vm4863, %v8691, 0
    %9031 = vmatpush.bf16.msra.mxu0 0
    %9032 = vmatpush.bf16.msra.mxu0 0
    %9033 = vmatpush.bf16.msra.mxu0 0
    %9034 = vmatpush.bf16.msra.mxu0 0
    %9035 = vmatpush.bf16.msra.mxu0 0
    %9036 = vmatpush.bf16.msra.mxu0 0
    %9037 = vmatpush.bf16.msra.mxu0 0
    %9038 = vmatpush.bf16.msra.mxu0 %v9026
    %9039 = vmatmul.bf16.gmra.mxu0 %v9029
    %v9040 = vpop.f32.mrf.mxu0
    %v9041 = vadd.f32 0.0, %v9040
    %v9042 = vpop.f32.mrf.mxu0
    %9043 = vdwg.mxu0
    %9044 = vrot.lane.b32.xlu0 %v6824, 96
    %v9045 = vpop.permute.xlu0 %9044
    %v9048 = vsel %vm4863, %v8692, 0
    %9050 = vmatpush.bf16.msra.mxu0 0
    %9051 = vmatpush.bf16.msra.mxu0 0
    %9052 = vmatpush.bf16.msra.mxu0 0
    %9053 = vmatpush.bf16.msra.mxu0 0
    %9054 = vmatpush.bf16.msra.mxu0 0
    %9055 = vmatpush.bf16.msra.mxu0 0
    %9056 = vmatpush.bf16.msra.mxu0 0
    %9057 = vmatpush.bf16.msra.mxu0 %v9045
    %9058 = vmatmul.bf16.gmra.mxu0 %v9048
    %v9059 = vpop.f32.mrf.mxu0
    %v9060 = vadd.f32 0.0, %v9059
    %v9061 = vpop.f32.mrf.mxu0
    %9062 = vdwg.mxu0
    %9063 = vrot.lane.b32.xlu0 %v6848, 96
    %v9064 = vpop.permute.xlu0 %9063
    %v9067 = vsel %vm4863, %v8693, 0
    %9069 = vmatpush.bf16.msra.mxu0 0
    %9070 = vmatpush.bf16.msra.mxu0 0
    %9071 = vmatpush.bf16.msra.mxu0 0
    %9072 = vmatpush.bf16.msra.mxu0 0
    %9073 = vmatpush.bf16.msra.mxu0 0
    %9074 = vmatpush.bf16.msra.mxu0 0
    %9075 = vmatpush.bf16.msra.mxu0 0
    %9076 = vmatpush.bf16.msra.mxu0 %v9064
    %9077 = vmatmul.bf16.gmra.mxu0 %v9067
    %v9078 = vpop.f32.mrf.mxu0
    %v9079 = vadd.f32 0.0, %v9078
    %v9080 = vpop.f32.mrf.mxu0
    %9081 = vdwg.mxu0
    %9082 = vrot.lane.b32.xlu0 %v6872, 96
    %v9083 = vpop.permute.xlu0 %9082
    %v9086 = vsel %vm4863, %v8694, 0
    %9088 = vmatpush.bf16.msra.mxu0 0
    %9089 = vmatpush.bf16.msra.mxu0 0
    %9090 = vmatpush.bf16.msra.mxu0 0
    %9091 = vmatpush.bf16.msra.mxu0 0
    %9092 = vmatpush.bf16.msra.mxu0 0
    %9093 = vmatpush.bf16.msra.mxu0 0
    %9094 = vmatpush.bf16.msra.mxu0 0
    %9095 = vmatpush.bf16.msra.mxu0 %v9083
    %9096 = vmatmul.bf16.gmra.mxu0 %v9086
    %v9097 = vpop.f32.mrf.mxu0
    %v9098 = vadd.f32 0.0, %v9097
    %v9099 = vpop.f32.mrf.mxu0
    %9100 = vdwg.mxu0
    %9101 = vrot.lane.b32.xlu0 %v6896, 96
    %v9102 = vpop.permute.xlu0 %9101
    %v9105 = vsel %vm4863, %v8695, 0
    %9107 = vmatpush.bf16.msra.mxu0 0
    %9108 = vmatpush.bf16.msra.mxu0 0
    %9109 = vmatpush.bf16.msra.mxu0 0
    %9110 = vmatpush.bf16.msra.mxu0 0
    %9111 = vmatpush.bf16.msra.mxu0 0
    %9112 = vmatpush.bf16.msra.mxu0 0
    %9113 = vmatpush.bf16.msra.mxu0 0
    %9114 = vmatpush.bf16.msra.mxu0 %v9102
    %9115 = vmatmul.bf16.gmra.mxu0 %v9105
    %v9116 = vpop.f32.mrf.mxu0
    %v9117 = vadd.f32 0.0, %v9116
    %v9118 = vpop.f32.mrf.mxu0
    %9119 = vdwg.mxu0
    %9120 = vrot.lane.b32.xlu0 %v6920, 96
    %v9121 = vpop.permute.xlu0 %9120
    %v9124 = vsel %vm4863, %v8696, 0
    %9126 = vmatpush.bf16.msra.mxu0 0
    %9127 = vmatpush.bf16.msra.mxu0 0
    %9128 = vmatpush.bf16.msra.mxu0 0
    %9129 = vmatpush.bf16.msra.mxu0 0
    %9130 = vmatpush.bf16.msra.mxu0 0
    %9131 = vmatpush.bf16.msra.mxu0 0
    %9132 = vmatpush.bf16.msra.mxu0 0
    %9133 = vmatpush.bf16.msra.mxu0 %v9121
    %9134 = vmatmul.bf16.gmra.mxu0 %v9124
    %v9135 = vpop.f32.mrf.mxu0
    %v9136 = vadd.f32 0.0, %v9135
    %v9137 = vpop.f32.mrf.mxu0
    %9138 = vdwg.mxu0
    %9139 = vrot.lane.b32.xlu0 %v6944, 96
    %v9140 = vpop.permute.xlu0 %9139
    %v9143 = vsel %vm4863, %v8697, 0
    %9145 = vmatpush.bf16.msra.mxu0 0
    %9146 = vmatpush.bf16.msra.mxu0 0
    %9147 = vmatpush.bf16.msra.mxu0 0
    %9148 = vmatpush.bf16.msra.mxu0 0
    %9149 = vmatpush.bf16.msra.mxu0 0
    %9150 = vmatpush.bf16.msra.mxu0 0
    %9151 = vmatpush.bf16.msra.mxu0 0
    %9152 = vmatpush.bf16.msra.mxu0 %v9140
    %9153 = vmatmul.bf16.gmra.mxu0 %v9143
    %v9154 = vpop.f32.mrf.mxu0
    %v9155 = vadd.f32 0.0, %v9154
    %v9156 = vpop.f32.mrf.mxu0
    %9157 = vdwg.mxu0
    %9158 = vrot.lane.b32.xlu0 %v6968, 96
    %v9159 = vpop.permute.xlu0 %9158
    %v9162 = vsel %vm4863, %v8698, 0
    %9164 = vmatpush.bf16.msra.mxu0 0
    %9165 = vmatpush.bf16.msra.mxu0 0
    %9166 = vmatpush.bf16.msra.mxu0 0
    %9167 = vmatpush.bf16.msra.mxu0 0
    %9168 = vmatpush.bf16.msra.mxu0 0
    %9169 = vmatpush.bf16.msra.mxu0 0
    %9170 = vmatpush.bf16.msra.mxu0 0
    %9171 = vmatpush.bf16.msra.mxu0 %v9159
    %9172 = vmatmul.bf16.gmra.mxu0 %v9162
    %v9173 = vpop.f32.mrf.mxu0
    %v9174 = vadd.f32 0.0, %v9173
    %v9175 = vpop.f32.mrf.mxu0
    %9176 = vdwg.mxu0
    %9177 = vrot.lane.b32.xlu0 %v6992, 96
    %v9178 = vpop.permute.xlu0 %9177
    %v9181 = vsel %vm4863, %v8699, 0
    %9183 = vmatpush.bf16.msra.mxu0 0
    %9184 = vmatpush.bf16.msra.mxu0 0
    %9185 = vmatpush.bf16.msra.mxu0 0
    %9186 = vmatpush.bf16.msra.mxu0 0
    %9187 = vmatpush.bf16.msra.mxu0 0
    %9188 = vmatpush.bf16.msra.mxu0 0
    %9189 = vmatpush.bf16.msra.mxu0 0
    %9190 = vmatpush.bf16.msra.mxu0 %v9178
    %9191 = vmatmul.bf16.gmra.mxu0 %v9181
    %v9192 = vpop.f32.mrf.mxu0
    %v9193 = vadd.f32 0.0, %v9192
    %v9194 = vpop.f32.mrf.mxu0
    %9195 = vdwg.mxu0
    %9196 = vrot.lane.b32.xlu0 %v7016, 96
    %v9197 = vpop.permute.xlu0 %9196
    %v9200 = vsel %vm4863, %v8700, 0
    %9202 = vmatpush.bf16.msra.mxu0 0
    %9203 = vmatpush.bf16.msra.mxu0 0
    %9204 = vmatpush.bf16.msra.mxu0 0
    %9205 = vmatpush.bf16.msra.mxu0 0
    %9206 = vmatpush.bf16.msra.mxu0 0
    %9207 = vmatpush.bf16.msra.mxu0 0
    %9208 = vmatpush.bf16.msra.mxu0 0
    %9209 = vmatpush.bf16.msra.mxu0 %v9197
    %9210 = vmatmul.bf16.gmra.mxu0 %v9200
    %v9211 = vpop.f32.mrf.mxu0
    %v9212 = vadd.f32 0.0, %v9211
    %v9213 = vpop.f32.mrf.mxu0
    %9214 = vdwg.mxu0
    %9215 = vrot.lane.b32.xlu0 %v7040, 96
    %v9216 = vpop.permute.xlu0 %9215
    %v9219 = vsel %vm4863, %v8701, 0
    %9221 = vmatpush.bf16.msra.mxu0 0
    %9222 = vmatpush.bf16.msra.mxu0 0
    %9223 = vmatpush.bf16.msra.mxu0 0
    %9224 = vmatpush.bf16.msra.mxu0 0
    %9225 = vmatpush.bf16.msra.mxu0 0
    %9226 = vmatpush.bf16.msra.mxu0 0
    %9227 = vmatpush.bf16.msra.mxu0 0
    %9228 = vmatpush.bf16.msra.mxu0 %v9216
    %9229 = vmatmul.bf16.gmra.mxu0 %v9219
    %v9230 = vpop.f32.mrf.mxu0
    %v9231 = vadd.f32 0.0, %v9230
    %v9232 = vpop.f32.mrf.mxu0
    %9233 = vdwg.mxu0
    %9234 = vrot.lane.b32.xlu0 %v7064, 96
    %v9235 = vpop.permute.xlu0 %9234
    %v9238 = vsel %vm4863, %v8702, 0
    %9240 = vmatpush.bf16.msra.mxu0 0
    %9241 = vmatpush.bf16.msra.mxu0 0
    %9242 = vmatpush.bf16.msra.mxu0 0
    %9243 = vmatpush.bf16.msra.mxu0 0
    %9244 = vmatpush.bf16.msra.mxu0 0
    %9245 = vmatpush.bf16.msra.mxu0 0
    %9246 = vmatpush.bf16.msra.mxu0 0
    %9247 = vmatpush.bf16.msra.mxu0 %v9235
    %9248 = vmatmul.bf16.gmra.mxu0 %v9238
    %v9249 = vpop.f32.mrf.mxu0
    %v9250 = vadd.f32 0.0, %v9249
    %v9251 = vpop.f32.mrf.mxu0
    %9252 = vdwg.mxu0
    %9253 = vrot.lane.b32.xlu0 %v7088, 96
    %v9254 = vpop.permute.xlu0 %9253
    %v9257 = vsel %vm4863, %v8703, 0
    %9259 = vmatpush.bf16.msra.mxu0 0
    %9260 = vmatpush.bf16.msra.mxu0 0
    %9261 = vmatpush.bf16.msra.mxu0 0
    %9262 = vmatpush.bf16.msra.mxu0 0
    %9263 = vmatpush.bf16.msra.mxu0 0
    %9264 = vmatpush.bf16.msra.mxu0 0
    %9265 = vmatpush.bf16.msra.mxu0 0
    %9266 = vmatpush.bf16.msra.mxu0 %v9254
    %9267 = vmatmul.bf16.gmra.mxu0 %v9257
    %v9268 = vpop.f32.mrf.mxu0
    %v9269 = vadd.f32 0.0, %v9268
    %v9270 = vpop.f32.mrf.mxu0
    %9271 = vdwg.mxu0
    %9272 = vrot.lane.b32.xlu0 %v7112, 96
    %v9273 = vpop.permute.xlu0 %9272
    %v9276 = vsel %vm4863, %v8704, 0
    %9278 = vmatpush.bf16.msra.mxu0 0
    %9279 = vmatpush.bf16.msra.mxu0 0
    %9280 = vmatpush.bf16.msra.mxu0 0
    %9281 = vmatpush.bf16.msra.mxu0 0
    %9282 = vmatpush.bf16.msra.mxu0 0
    %9283 = vmatpush.bf16.msra.mxu0 0
    %9284 = vmatpush.bf16.msra.mxu0 0
    %9285 = vmatpush.bf16.msra.mxu0 %v9273
    %9286 = vmatmul.bf16.gmra.mxu0 %v9276
    %v9287 = vpop.f32.mrf.mxu0
    %v9288 = vadd.f32 0.0, %v9287
    %v9289 = vpop.f32.mrf.mxu0
    %9290 = vdwg.mxu0
    %9291 = vrot.lane.b32.xlu0 %v7136, 96
    %v9292 = vpop.permute.xlu0 %9291
    %v9295 = vsel %vm4863, %v8705, 0
    %9297 = vmatpush.bf16.msra.mxu0 0
    %9298 = vmatpush.bf16.msra.mxu0 0
    %9299 = vmatpush.bf16.msra.mxu0 0
    %9300 = vmatpush.bf16.msra.mxu0 0
    %9301 = vmatpush.bf16.msra.mxu0 0
    %9302 = vmatpush.bf16.msra.mxu0 0
    %9303 = vmatpush.bf16.msra.mxu0 0
    %9304 = vmatpush.bf16.msra.mxu0 %v9292
    %9305 = vmatmul.bf16.gmra.mxu0 %v9295
    %v9306 = vpop.f32.mrf.mxu0
    %v9307 = vadd.f32 0.0, %v9306
    %v9308 = vpop.f32.mrf.mxu0
    %9309 = vdwg.mxu0
    %9310 = vrot.lane.b32.xlu0 %v7160, 96
    %v9311 = vpop.permute.xlu0 %9310
    %v9314 = vsel %vm4863, %v8706, 0
    %9316 = vmatpush.bf16.msra.mxu0 0
    %9317 = vmatpush.bf16.msra.mxu0 0
    %9318 = vmatpush.bf16.msra.mxu0 0
    %9319 = vmatpush.bf16.msra.mxu0 0
    %9320 = vmatpush.bf16.msra.mxu0 0
    %9321 = vmatpush.bf16.msra.mxu0 0
    %9322 = vmatpush.bf16.msra.mxu0 0
    %9323 = vmatpush.bf16.msra.mxu0 %v9311
    %9324 = vmatmul.bf16.gmra.mxu0 %v9314
    %v9325 = vpop.f32.mrf.mxu0
    %v9326 = vadd.f32 0.0, %v9325
    %v9327 = vpop.f32.mrf.mxu0
    %9328 = vdwg.mxu0
    %9329 = vrot.lane.b32.xlu0 %v7184, 96
    %v9330 = vpop.permute.xlu0 %9329
    %v9333 = vsel %vm4863, %v8707, 0
    %9335 = vmatpush.bf16.msra.mxu0 0
    %9336 = vmatpush.bf16.msra.mxu0 0
    %9337 = vmatpush.bf16.msra.mxu0 0
    %9338 = vmatpush.bf16.msra.mxu0 0
    %9339 = vmatpush.bf16.msra.mxu0 0
    %9340 = vmatpush.bf16.msra.mxu0 0
    %9341 = vmatpush.bf16.msra.mxu0 0
    %9342 = vmatpush.bf16.msra.mxu0 %v9330
    %9343 = vmatmul.bf16.gmra.mxu0 %v9333
    %v9344 = vpop.f32.mrf.mxu0
    %v9345 = vadd.f32 0.0, %v9344
    %v9346 = vpop.f32.mrf.mxu0
    %9347 = vdwg.mxu0
    %9348 = vrot.lane.b32.xlu0 %v7208, 96
    %v9349 = vpop.permute.xlu0 %9348
    %v9352 = vsel %vm4863, %v8708, 0
    %9354 = vmatpush.bf16.msra.mxu0 0
    %9355 = vmatpush.bf16.msra.mxu0 0
    %9356 = vmatpush.bf16.msra.mxu0 0
    %9357 = vmatpush.bf16.msra.mxu0 0
    %9358 = vmatpush.bf16.msra.mxu0 0
    %9359 = vmatpush.bf16.msra.mxu0 0
    %9360 = vmatpush.bf16.msra.mxu0 0
    %9361 = vmatpush.bf16.msra.mxu0 %v9349
    %9362 = vmatmul.bf16.gmra.mxu0 %v9352
    %v9363 = vpop.f32.mrf.mxu0
    %v9364 = vadd.f32 0.0, %v9363
    %v9365 = vpop.f32.mrf.mxu0
    %9366 = vdwg.mxu0
    %9367 = vrot.lane.b32.xlu0 %v7232, 96
    %v9368 = vpop.permute.xlu0 %9367
    %v9371 = vsel %vm4863, %v8709, 0
    %9373 = vmatpush.bf16.msra.mxu0 0
    %9374 = vmatpush.bf16.msra.mxu0 0
    %9375 = vmatpush.bf16.msra.mxu0 0
    %9376 = vmatpush.bf16.msra.mxu0 0
    %9377 = vmatpush.bf16.msra.mxu0 0
    %9378 = vmatpush.bf16.msra.mxu0 0
    %9379 = vmatpush.bf16.msra.mxu0 0
    %9380 = vmatpush.bf16.msra.mxu0 %v9368
    %9381 = vmatmul.bf16.gmra.mxu0 %v9371
    %v9382 = vpop.f32.mrf.mxu0
    %v9383 = vadd.f32 0.0, %v9382
    %v9384 = vpop.f32.mrf.mxu0
    %9385 = vdwg.mxu0
    %9386 = vrot.lane.b32.xlu0 %v7256, 96
    %v9387 = vpop.permute.xlu0 %9386
    %v9390 = vsel %vm4863, %v8710, 0
    %9392 = vmatpush.bf16.msra.mxu0 0
    %9393 = vmatpush.bf16.msra.mxu0 0
    %9394 = vmatpush.bf16.msra.mxu0 0
    %9395 = vmatpush.bf16.msra.mxu0 0
    %9396 = vmatpush.bf16.msra.mxu0 0
    %9397 = vmatpush.bf16.msra.mxu0 0
    %9398 = vmatpush.bf16.msra.mxu0 0
    %9399 = vmatpush.bf16.msra.mxu0 %v9387
    %9400 = vmatmul.bf16.gmra.mxu0 %v9390
    %v9401 = vpop.f32.mrf.mxu0
    %v9402 = vadd.f32 0.0, %v9401
    %v9403 = vpop.f32.mrf.mxu0
    %9404 = vdwg.mxu0
    %9405 = vrot.lane.b32.xlu0 %v7280, 96
    %v9406 = vpop.permute.xlu0 %9405
    %v9409 = vsel %vm4863, %v8711, 0
    %9411 = vmatpush.bf16.msra.mxu0 0
    %9412 = vmatpush.bf16.msra.mxu0 0
    %9413 = vmatpush.bf16.msra.mxu0 0
    %9414 = vmatpush.bf16.msra.mxu0 0
    %9415 = vmatpush.bf16.msra.mxu0 0
    %9416 = vmatpush.bf16.msra.mxu0 0
    %9417 = vmatpush.bf16.msra.mxu0 0
    %9418 = vmatpush.bf16.msra.mxu0 %v9406
    %9419 = vmatmul.bf16.gmra.mxu0 %v9409
    %v9420 = vpop.f32.mrf.mxu0
    %v9421 = vadd.f32 0.0, %v9420
    %v9422 = vpop.f32.mrf.mxu0
    %9423 = vdwg.mxu0
    %9424 = vrot.lane.b32.xlu0 %v7304, 96
    %v9425 = vpop.permute.xlu0 %9424
    %v9428 = vsel %vm4863, %v8712, 0
    %9430 = vmatpush.bf16.msra.mxu0 0
    %9431 = vmatpush.bf16.msra.mxu0 0
    %9432 = vmatpush.bf16.msra.mxu0 0
    %9433 = vmatpush.bf16.msra.mxu0 0
    %9434 = vmatpush.bf16.msra.mxu0 0
    %9435 = vmatpush.bf16.msra.mxu0 0
    %9436 = vmatpush.bf16.msra.mxu0 0
    %9437 = vmatpush.bf16.msra.mxu0 %v9425
    %9438 = vmatmul.bf16.gmra.mxu0 %v9428
    %v9439 = vpop.f32.mrf.mxu0
    %v9440 = vadd.f32 0.0, %v9439
    %v9441 = vpop.f32.mrf.mxu0
    %9442 = vdwg.mxu0
    %9443 = vrot.lane.b32.xlu0 %v7328, 96
    %v9444 = vpop.permute.xlu0 %9443
    %v9447 = vsel %vm4863, %v8713, 0
    %9449 = vmatpush.bf16.msra.mxu0 0
    %9450 = vmatpush.bf16.msra.mxu0 0
    %9451 = vmatpush.bf16.msra.mxu0 0
    %9452 = vmatpush.bf16.msra.mxu0 0
    %9453 = vmatpush.bf16.msra.mxu0 0
    %9454 = vmatpush.bf16.msra.mxu0 0
    %9455 = vmatpush.bf16.msra.mxu0 0
    %9456 = vmatpush.bf16.msra.mxu0 %v9444
    %9457 = vmatmul.bf16.gmra.mxu0 %v9447
    %v9458 = vpop.f32.mrf.mxu0
    %v9459 = vadd.f32 0.0, %v9458
    %v9460 = vpop.f32.mrf.mxu0
    %9461 = vdwg.mxu0
    %9462 = vrot.lane.b32.xlu0 %v7352, 96
    %v9463 = vpop.permute.xlu0 %9462
    %v9466 = vsel %vm4863, %v8714, 0
    %9468 = vmatpush.bf16.msra.mxu0 0
    %9469 = vmatpush.bf16.msra.mxu0 0
    %9470 = vmatpush.bf16.msra.mxu0 0
    %9471 = vmatpush.bf16.msra.mxu0 0
    %9472 = vmatpush.bf16.msra.mxu0 0
    %9473 = vmatpush.bf16.msra.mxu0 0
    %9474 = vmatpush.bf16.msra.mxu0 0
    %9475 = vmatpush.bf16.msra.mxu0 %v9463
    %9476 = vmatmul.bf16.gmra.mxu0 %v9466
    %v9477 = vpop.f32.mrf.mxu0
    %v9478 = vadd.f32 0.0, %v9477
    %v9479 = vpop.f32.mrf.mxu0
    %9480 = vdwg.mxu0
    %9481 = vrot.lane.b32.xlu0 %v7376, 96
    %v9482 = vpop.permute.xlu0 %9481
    %v9485 = vsel %vm4863, %v8715, 0
    %9487 = vmatpush.bf16.msra.mxu0 0
    %9488 = vmatpush.bf16.msra.mxu0 0
    %9489 = vmatpush.bf16.msra.mxu0 0
    %9490 = vmatpush.bf16.msra.mxu0 0
    %9491 = vmatpush.bf16.msra.mxu0 0
    %9492 = vmatpush.bf16.msra.mxu0 0
    %9493 = vmatpush.bf16.msra.mxu0 0
    %9494 = vmatpush.bf16.msra.mxu0 %v9482
    %9495 = vmatmul.bf16.gmra.mxu0 %v9485
    %v9496 = vpop.f32.mrf.mxu0
    %v9497 = vadd.f32 0.0, %v9496
    %v9498 = vpop.f32.mrf.mxu0
    %9499 = vdwg.mxu0
    %9500 = vrot.lane.b32.xlu0 %v7400, 96
    %v9501 = vpop.permute.xlu0 %9500
    %v9504 = vsel %vm4863, %v8716, 0
    %9506 = vmatpush.bf16.msra.mxu0 0
    %9507 = vmatpush.bf16.msra.mxu0 0
    %9508 = vmatpush.bf16.msra.mxu0 0
    %9509 = vmatpush.bf16.msra.mxu0 0
    %9510 = vmatpush.bf16.msra.mxu0 0
    %9511 = vmatpush.bf16.msra.mxu0 0
    %9512 = vmatpush.bf16.msra.mxu0 0
    %9513 = vmatpush.bf16.msra.mxu0 %v9501
    %9514 = vmatmul.bf16.gmra.mxu0 %v9504
    %v9515 = vpop.f32.mrf.mxu0
    %v9516 = vadd.f32 0.0, %v9515
    %v9517 = vpop.f32.mrf.mxu0
    %9518 = vdwg.mxu0
    %9519 = vrot.lane.b32.xlu0 %v7424, 96
    %v9520 = vpop.permute.xlu0 %9519
    %v9523 = vsel %vm4863, %v8717, 0
    %9525 = vmatpush.bf16.msra.mxu0 0
    %9526 = vmatpush.bf16.msra.mxu0 0
    %9527 = vmatpush.bf16.msra.mxu0 0
    %9528 = vmatpush.bf16.msra.mxu0 0
    %9529 = vmatpush.bf16.msra.mxu0 0
    %9530 = vmatpush.bf16.msra.mxu0 0
    %9531 = vmatpush.bf16.msra.mxu0 0
    %9532 = vmatpush.bf16.msra.mxu0 %v9520
    %9533 = vmatmul.bf16.gmra.mxu0 %v9523
    %v9534 = vpop.f32.mrf.mxu0
    %v9535 = vadd.f32 0.0, %v9534
    %v9536 = vpop.f32.mrf.mxu0
    %9537 = vdwg.mxu0
    %9538 = vrot.lane.b32.xlu0 %v7448, 96
    %v9539 = vpop.permute.xlu0 %9538
    %v9542 = vsel %vm4863, %v8718, 0
    %9544 = vmatpush.bf16.msra.mxu0 0
    %9545 = vmatpush.bf16.msra.mxu0 0
    %9546 = vmatpush.bf16.msra.mxu0 0
    %9547 = vmatpush.bf16.msra.mxu0 0
    %9548 = vmatpush.bf16.msra.mxu0 0
    %9549 = vmatpush.bf16.msra.mxu0 0
    %9550 = vmatpush.bf16.msra.mxu0 0
    %9551 = vmatpush.bf16.msra.mxu0 %v9539
    %9552 = vmatmul.bf16.gmra.mxu0 %v9542
    %v9553 = vpop.f32.mrf.mxu0
    %v9554 = vadd.f32 0.0, %v9553
    %v9555 = vpop.f32.mrf.mxu0
    %9556 = vdwg.mxu0
    %9557 = vrot.lane.b32.xlu0 %v7472, 96
    %v9558 = vpop.permute.xlu0 %9557
    %v9561 = vsel %vm4863, %v8719, 0
    %9563 = vmatpush.bf16.msra.mxu0 0
    %9564 = vmatpush.bf16.msra.mxu0 0
    %9565 = vmatpush.bf16.msra.mxu0 0
    %9566 = vmatpush.bf16.msra.mxu0 0
    %9567 = vmatpush.bf16.msra.mxu0 0
    %9568 = vmatpush.bf16.msra.mxu0 0
    %9569 = vmatpush.bf16.msra.mxu0 0
    %9570 = vmatpush.bf16.msra.mxu0 %v9558
    %9571 = vmatmul.bf16.gmra.mxu0 %v9561
    %v9572 = vpop.f32.mrf.mxu0
    %v9573 = vadd.f32 0.0, %v9572
    %v9574 = vpop.f32.mrf.mxu0
    %9575 = vdwg.mxu0
    %9576 = vrot.lane.b32.xlu0 %v7496, 96
    %v9577 = vpop.permute.xlu0 %9576
    %v9580 = vsel %vm4863, %v8720, 0
    %9582 = vmatpush.bf16.msra.mxu0 0
    %9583 = vmatpush.bf16.msra.mxu0 0
    %9584 = vmatpush.bf16.msra.mxu0 0
    %9585 = vmatpush.bf16.msra.mxu0 0
    %9586 = vmatpush.bf16.msra.mxu0 0
    %9587 = vmatpush.bf16.msra.mxu0 0
    %9588 = vmatpush.bf16.msra.mxu0 0
    %9589 = vmatpush.bf16.msra.mxu0 %v9577
    %9590 = vmatmul.bf16.gmra.mxu0 %v9580
    %v9591 = vpop.f32.mrf.mxu0
    %v9592 = vadd.f32 0.0, %v9591
    %v9593 = vpop.f32.mrf.mxu0
    %9594 = vdwg.mxu0
    %9595 = vrot.lane.b32.xlu0 %v7520, 96
    %v9596 = vpop.permute.xlu0 %9595
    %v9599 = vsel %vm4863, %v8721, 0
    %9601 = vmatpush.bf16.msra.mxu0 0
    %9602 = vmatpush.bf16.msra.mxu0 0
    %9603 = vmatpush.bf16.msra.mxu0 0
    %9604 = vmatpush.bf16.msra.mxu0 0
    %9605 = vmatpush.bf16.msra.mxu0 0
    %9606 = vmatpush.bf16.msra.mxu0 0
    %9607 = vmatpush.bf16.msra.mxu0 0
    %9608 = vmatpush.bf16.msra.mxu0 %v9596
    %9609 = vmatmul.bf16.gmra.mxu0 %v9599
    %v9610 = vpop.f32.mrf.mxu0
    %v9611 = vadd.f32 0.0, %v9610
    %v9612 = vpop.f32.mrf.mxu0
    %9613 = vdwg.mxu0
    %9614 = vrot.lane.b32.xlu0 %v7544, 96
    %v9615 = vpop.permute.xlu0 %9614
    %v9618 = vsel %vm4863, %v8722, 0
    %9620 = vmatpush.bf16.msra.mxu0 0
    %9621 = vmatpush.bf16.msra.mxu0 0
    %9622 = vmatpush.bf16.msra.mxu0 0
    %9623 = vmatpush.bf16.msra.mxu0 0
    %9624 = vmatpush.bf16.msra.mxu0 0
    %9625 = vmatpush.bf16.msra.mxu0 0
    %9626 = vmatpush.bf16.msra.mxu0 0
    %9627 = vmatpush.bf16.msra.mxu0 %v9615
    %9628 = vmatmul.bf16.gmra.mxu0 %v9618
    %v9629 = vpop.f32.mrf.mxu0
    %v9630 = vadd.f32 0.0, %v9629
    %v9631 = vpop.f32.mrf.mxu0
    %9632 = vdwg.mxu0
    %9633 = vrot.lane.b32.xlu0 %v7568, 96
    %v9634 = vpop.permute.xlu0 %9633
    %v9637 = vsel %vm4863, %v8723, 0
    %9639 = vmatpush.bf16.msra.mxu0 0
    %9640 = vmatpush.bf16.msra.mxu0 0
    %9641 = vmatpush.bf16.msra.mxu0 0
    %9642 = vmatpush.bf16.msra.mxu0 0
    %9643 = vmatpush.bf16.msra.mxu0 0
    %9644 = vmatpush.bf16.msra.mxu0 0
    %9645 = vmatpush.bf16.msra.mxu0 0
    %9646 = vmatpush.bf16.msra.mxu0 %v9634
    %9647 = vmatmul.bf16.gmra.mxu0 %v9637
    %v9648 = vpop.f32.mrf.mxu0
    %v9649 = vadd.f32 0.0, %v9648
    %v9650 = vpop.f32.mrf.mxu0
    %9651 = vdwg.mxu0
    %9652 = vrot.lane.b32.xlu0 %v7592, 96
    %v9653 = vpop.permute.xlu0 %9652
    %v9656 = vsel %vm4863, %v8724, 0
    %9658 = vmatpush.bf16.msra.mxu0 0
    %9659 = vmatpush.bf16.msra.mxu0 0
    %9660 = vmatpush.bf16.msra.mxu0 0
    %9661 = vmatpush.bf16.msra.mxu0 0
    %9662 = vmatpush.bf16.msra.mxu0 0
    %9663 = vmatpush.bf16.msra.mxu0 0
    %9664 = vmatpush.bf16.msra.mxu0 0
    %9665 = vmatpush.bf16.msra.mxu0 %v9653
    %9666 = vmatmul.bf16.gmra.mxu0 %v9656
    %v9667 = vpop.f32.mrf.mxu0
    %v9668 = vadd.f32 0.0, %v9667
    %v9669 = vpop.f32.mrf.mxu0
    %9670 = vdwg.mxu0
    %9671 = vrot.lane.b32.xlu0 %v7616, 96
    %v9672 = vpop.permute.xlu0 %9671
    %v9675 = vsel %vm4863, %v8725, 0
    %9677 = vmatpush.bf16.msra.mxu0 0
    %9678 = vmatpush.bf16.msra.mxu0 0
    %9679 = vmatpush.bf16.msra.mxu0 0
    %9680 = vmatpush.bf16.msra.mxu0 0
    %9681 = vmatpush.bf16.msra.mxu0 0
    %9682 = vmatpush.bf16.msra.mxu0 0
    %9683 = vmatpush.bf16.msra.mxu0 0
    %9684 = vmatpush.bf16.msra.mxu0 %v9672
    %9685 = vmatmul.bf16.gmra.mxu0 %v9675
    %v9686 = vpop.f32.mrf.mxu0
    %v9687 = vadd.f32 0.0, %v9686
    %v9688 = vpop.f32.mrf.mxu0
    %9689 = vdwg.mxu0
    %9690 = vrot.lane.b32.xlu0 %v7640, 96
    %v9691 = vpop.permute.xlu0 %9690
    %v9694 = vsel %vm4863, %v8726, 0
    %9696 = vmatpush.bf16.msra.mxu0 0
    %9697 = vmatpush.bf16.msra.mxu0 0
    %9698 = vmatpush.bf16.msra.mxu0 0
    %9699 = vmatpush.bf16.msra.mxu0 0
    %9700 = vmatpush.bf16.msra.mxu0 0
    %9701 = vmatpush.bf16.msra.mxu0 0
    %9702 = vmatpush.bf16.msra.mxu0 0
    %9703 = vmatpush.bf16.msra.mxu0 %v9691
    %9704 = vmatmul.bf16.gmra.mxu0 %v9694
    %v9705 = vpop.f32.mrf.mxu0
    %v9706 = vadd.f32 0.0, %v9705
    %v9707 = vpop.f32.mrf.mxu0
    %9708 = vdwg.mxu0
    %9709 = vrot.lane.b32.xlu0 %v7664, 96
    %v9710 = vpop.permute.xlu0 %9709
    %v9713 = vsel %vm4863, %v8727, 0
    %9715 = vmatpush.bf16.msra.mxu0 0
    %9716 = vmatpush.bf16.msra.mxu0 0
    %9717 = vmatpush.bf16.msra.mxu0 0
    %9718 = vmatpush.bf16.msra.mxu0 0
    %9719 = vmatpush.bf16.msra.mxu0 0
    %9720 = vmatpush.bf16.msra.mxu0 0
    %9721 = vmatpush.bf16.msra.mxu0 0
    %9722 = vmatpush.bf16.msra.mxu0 %v9710
    %9723 = vmatmul.bf16.gmra.mxu0 %v9713
    %v9724 = vpop.f32.mrf.mxu0
    %v9725 = vadd.f32 0.0, %v9724
    %v9726 = vpop.f32.mrf.mxu0
    %9727 = vdwg.mxu0
    %9728 = vrot.lane.b32.xlu0 %v7688, 96
    %v9729 = vpop.permute.xlu0 %9728
    %v9732 = vsel %vm4863, %v8728, 0
    %9734 = vmatpush.bf16.msra.mxu0 0
    %9735 = vmatpush.bf16.msra.mxu0 0
    %9736 = vmatpush.bf16.msra.mxu0 0
    %9737 = vmatpush.bf16.msra.mxu0 0
    %9738 = vmatpush.bf16.msra.mxu0 0
    %9739 = vmatpush.bf16.msra.mxu0 0
    %9740 = vmatpush.bf16.msra.mxu0 0
    %9741 = vmatpush.bf16.msra.mxu0 %v9729
    %9742 = vmatmul.bf16.gmra.mxu0 %v9732
    %v9743 = vpop.f32.mrf.mxu0
    %v9744 = vadd.f32 0.0, %v9743
    %v9745 = vpop.f32.mrf.mxu0
    %9746 = vdwg.mxu0
    %9747 = vrot.lane.b32.xlu0 %v7712, 96
    %v9748 = vpop.permute.xlu0 %9747
    %v9751 = vsel %vm4863, %v8729, 0
    %9753 = vmatpush.bf16.msra.mxu0 0
    %9754 = vmatpush.bf16.msra.mxu0 0
    %9755 = vmatpush.bf16.msra.mxu0 0
    %9756 = vmatpush.bf16.msra.mxu0 0
    %9757 = vmatpush.bf16.msra.mxu0 0
    %9758 = vmatpush.bf16.msra.mxu0 0
    %9759 = vmatpush.bf16.msra.mxu0 0
    %9760 = vmatpush.bf16.msra.mxu0 %v9748
    %9761 = vmatmul.bf16.gmra.mxu0 %v9751
    %v9762 = vpop.f32.mrf.mxu0
    %v9763 = vadd.f32 0.0, %v9762
    %v9764 = vpop.f32.mrf.mxu0
    %9765 = vdwg.mxu0
    %9766 = vrot.lane.b32.xlu0 %v7736, 96
    %v9767 = vpop.permute.xlu0 %9766
    %v9770 = vsel %vm4863, %v8730, 0
    %9772 = vmatpush.bf16.msra.mxu0 0
    %9773 = vmatpush.bf16.msra.mxu0 0
    %9774 = vmatpush.bf16.msra.mxu0 0
    %9775 = vmatpush.bf16.msra.mxu0 0
    %9776 = vmatpush.bf16.msra.mxu0 0
    %9777 = vmatpush.bf16.msra.mxu0 0
    %9778 = vmatpush.bf16.msra.mxu0 0
    %9779 = vmatpush.bf16.msra.mxu0 %v9767
    %9780 = vmatmul.bf16.gmra.mxu0 %v9770
    %v9781 = vpop.f32.mrf.mxu0
    %v9782 = vadd.f32 0.0, %v9781
    %v9783 = vpop.f32.mrf.mxu0
    %9784 = vdwg.mxu0
    %9785 = vrot.lane.b32.xlu0 %v7760, 96
    %v9786 = vpop.permute.xlu0 %9785
    %v9789 = vsel %vm4863, %v8731, 0
    %9791 = vmatpush.bf16.msra.mxu0 0
    %9792 = vmatpush.bf16.msra.mxu0 0
    %9793 = vmatpush.bf16.msra.mxu0 0
    %9794 = vmatpush.bf16.msra.mxu0 0
    %9795 = vmatpush.bf16.msra.mxu0 0
    %9796 = vmatpush.bf16.msra.mxu0 0
    %9797 = vmatpush.bf16.msra.mxu0 0
    %9798 = vmatpush.bf16.msra.mxu0 %v9786
    %9799 = vmatmul.bf16.gmra.mxu0 %v9789
    %v9800 = vpop.f32.mrf.mxu0
    %v9801 = vadd.f32 0.0, %v9800
    %v9802 = vpop.f32.mrf.mxu0
    %9803 = vdwg.mxu0
    %9804 = vrot.lane.b32.xlu0 %v7784, 96
    %v9805 = vpop.permute.xlu0 %9804
    %v9808 = vsel %vm4863, %v8732, 0
    %9810 = vmatpush.bf16.msra.mxu0 0
    %9811 = vmatpush.bf16.msra.mxu0 0
    %9812 = vmatpush.bf16.msra.mxu0 0
    %9813 = vmatpush.bf16.msra.mxu0 0
    %9814 = vmatpush.bf16.msra.mxu0 0
    %9815 = vmatpush.bf16.msra.mxu0 0
    %9816 = vmatpush.bf16.msra.mxu0 0
    %9817 = vmatpush.bf16.msra.mxu0 %v9805
    %9818 = vmatmul.bf16.gmra.mxu0 %v9808
    %v9819 = vpop.f32.mrf.mxu0
    %v9820 = vadd.f32 0.0, %v9819
    %v9821 = vpop.f32.mrf.mxu0
    %9822 = vdwg.mxu0
    %9823 = vrot.lane.b32.xlu0 %v7808, 96
    %v9824 = vpop.permute.xlu0 %9823
    %v9827 = vsel %vm4863, %v8733, 0
    %9829 = vmatpush.bf16.msra.mxu0 0
    %9830 = vmatpush.bf16.msra.mxu0 0
    %9831 = vmatpush.bf16.msra.mxu0 0
    %9832 = vmatpush.bf16.msra.mxu0 0
    %9833 = vmatpush.bf16.msra.mxu0 0
    %9834 = vmatpush.bf16.msra.mxu0 0
    %9835 = vmatpush.bf16.msra.mxu0 0
    %9836 = vmatpush.bf16.msra.mxu0 %v9824
    %9837 = vmatmul.bf16.gmra.mxu0 %v9827
    %v9838 = vpop.f32.mrf.mxu0
    %v9839 = vadd.f32 0.0, %v9838
    %v9840 = vpop.f32.mrf.mxu0
    %9841 = vdwg.mxu0
    %9842 = vrot.lane.b32.xlu0 %v7832, 96
    %v9843 = vpop.permute.xlu0 %9842
    %v9846 = vsel %vm4863, %v8734, 0
    %9848 = vmatpush.bf16.msra.mxu0 0
    %9849 = vmatpush.bf16.msra.mxu0 0
    %9850 = vmatpush.bf16.msra.mxu0 0
    %9851 = vmatpush.bf16.msra.mxu0 0
    %9852 = vmatpush.bf16.msra.mxu0 0
    %9853 = vmatpush.bf16.msra.mxu0 0
    %9854 = vmatpush.bf16.msra.mxu0 0
    %9855 = vmatpush.bf16.msra.mxu0 %v9843
    %9856 = vmatmul.bf16.gmra.mxu0 %v9846
    %v9857 = vpop.f32.mrf.mxu0
    %v9858 = vadd.f32 0.0, %v9857
    %v9859 = vpop.f32.mrf.mxu0
    %9860 = vdwg.mxu0
    %9861 = vrot.lane.b32.xlu0 %v7856, 96
    %v9862 = vpop.permute.xlu0 %9861
    %v9865 = vsel %vm4863, %v8735, 0
    %9867 = vmatpush.bf16.msra.mxu0 0
    %9868 = vmatpush.bf16.msra.mxu0 0
    %9869 = vmatpush.bf16.msra.mxu0 0
    %9870 = vmatpush.bf16.msra.mxu0 0
    %9871 = vmatpush.bf16.msra.mxu0 0
    %9872 = vmatpush.bf16.msra.mxu0 0
    %9873 = vmatpush.bf16.msra.mxu0 0
    %9874 = vmatpush.bf16.msra.mxu0 %v9862
    %9875 = vmatmul.bf16.gmra.mxu0 %v9865
    %v9876 = vpop.f32.mrf.mxu0
    %v9877 = vadd.f32 0.0, %v9876
    %v9878 = vpop.f32.mrf.mxu0
    %9879 = vdwg.mxu0
    %9880 = vrot.lane.b32.xlu0 %v7880, 96
    %v9881 = vpop.permute.xlu0 %9880
    %v9884 = vsel %vm4863, %v8736, 0
    %9886 = vmatpush.bf16.msra.mxu0 0
    %9887 = vmatpush.bf16.msra.mxu0 0
    %9888 = vmatpush.bf16.msra.mxu0 0
    %9889 = vmatpush.bf16.msra.mxu0 0
    %9890 = vmatpush.bf16.msra.mxu0 0
    %9891 = vmatpush.bf16.msra.mxu0 0
    %9892 = vmatpush.bf16.msra.mxu0 0
    %9893 = vmatpush.bf16.msra.mxu0 %v9881
    %9894 = vmatmul.bf16.gmra.mxu0 %v9884
    %v9895 = vpop.f32.mrf.mxu0
    %v9896 = vadd.f32 0.0, %v9895
    %v9897 = vpop.f32.mrf.mxu0
    %9898 = vdwg.mxu0
    %9899 = vrot.lane.b32.xlu0 %v7904, 96
    %v9900 = vpop.permute.xlu0 %9899
    %v9903 = vsel %vm4863, %v8737, 0
    %9905 = vmatpush.bf16.msra.mxu0 0
    %9906 = vmatpush.bf16.msra.mxu0 0
    %9907 = vmatpush.bf16.msra.mxu0 0
    %9908 = vmatpush.bf16.msra.mxu0 0
    %9909 = vmatpush.bf16.msra.mxu0 0
    %9910 = vmatpush.bf16.msra.mxu0 0
    %9911 = vmatpush.bf16.msra.mxu0 0
    %9912 = vmatpush.bf16.msra.mxu0 %v9900
    %9913 = vmatmul.bf16.gmra.mxu0 %v9903
    %v9914 = vpop.f32.mrf.mxu0
    %v9915 = vadd.f32 0.0, %v9914
    %v9916 = vpop.f32.mrf.mxu0
    %9917 = vdwg.mxu0
    %9918 = vrot.lane.b32.xlu0 %v7928, 96
    %v9919 = vpop.permute.xlu0 %9918
    %v9922 = vsel %vm4863, %v8738, 0
    %9924 = vmatpush.bf16.msra.mxu0 0
    %9925 = vmatpush.bf16.msra.mxu0 0
    %9926 = vmatpush.bf16.msra.mxu0 0
    %9927 = vmatpush.bf16.msra.mxu0 0
    %9928 = vmatpush.bf16.msra.mxu0 0
    %9929 = vmatpush.bf16.msra.mxu0 0
    %9930 = vmatpush.bf16.msra.mxu0 0
    %9931 = vmatpush.bf16.msra.mxu0 %v9919
    %9932 = vmatmul.bf16.gmra.mxu0 %v9922
    %v9933 = vpop.f32.mrf.mxu0
    %v9934 = vadd.f32 0.0, %v9933
    %v9935 = vpop.f32.mrf.mxu0
    %9936 = vdwg.mxu0
    %9937 = vrot.lane.b32.xlu0 %v7952, 96
    %v9938 = vpop.permute.xlu0 %9937
    %v9941 = vsel %vm4863, %v8739, 0
    %9943 = vmatpush.bf16.msra.mxu0 0
    %9944 = vmatpush.bf16.msra.mxu0 0
    %9945 = vmatpush.bf16.msra.mxu0 0
    %9946 = vmatpush.bf16.msra.mxu0 0
    %9947 = vmatpush.bf16.msra.mxu0 0
    %9948 = vmatpush.bf16.msra.mxu0 0
    %9949 = vmatpush.bf16.msra.mxu0 0
    %9950 = vmatpush.bf16.msra.mxu0 %v9938
    %9951 = vmatmul.bf16.gmra.mxu0 %v9941
    %v9952 = vpop.f32.mrf.mxu0
    %v9953 = vadd.f32 0.0, %v9952
    %v9954 = vpop.f32.mrf.mxu0
    %9955 = vdwg.mxu0
    %9972 = vrot.lane.b32.xlu0 %v9060, 8
    %v9973 = vpop.permute.xlu0 %9972
    %9974 = vrot.lane.b32.xlu0 %v9079, 8
    %v9975 = vpop.permute.xlu0 %9974
    %9976 = vrot.lane.b32.xlu0 %v9098, 8
    %v9977 = vpop.permute.xlu0 %9976
    %9978 = vrot.lane.b32.xlu0 %v9117, 8
    %v9979 = vpop.permute.xlu0 %9978
    %9980 = vrot.lane.b32.xlu0 %v9136, 8
    %v9981 = vpop.permute.xlu0 %9980
    %9982 = vrot.lane.b32.xlu0 %v9155, 8
    %v9983 = vpop.permute.xlu0 %9982
    %9984 = vrot.lane.b32.xlu0 %v9174, 8
    %v9985 = vpop.permute.xlu0 %9984
    %9986 = vrot.lane.b32.xlu0 %v9193, 8
    %v9987 = vpop.permute.xlu0 %9986
    %9988 = vrot.lane.b32.xlu0 %v9212, 8
    %v9989 = vpop.permute.xlu0 %9988
    %9990 = vrot.lane.b32.xlu0 %v9231, 8
    %v9991 = vpop.permute.xlu0 %9990
    %9992 = vrot.lane.b32.xlu0 %v9250, 8
    %v9993 = vpop.permute.xlu0 %9992
    %9994 = vrot.lane.b32.xlu0 %v9269, 8
    %v9995 = vpop.permute.xlu0 %9994
    %9996 = vrot.lane.b32.xlu0 %v9288, 8
    %v9997 = vpop.permute.xlu0 %9996
    %9998 = vrot.lane.b32.xlu0 %v9307, 8
    %v9999 = vpop.permute.xlu0 %9998
    %10000 = vrot.lane.b32.xlu0 %v9326, 8
    %v10001 = vpop.permute.xlu0 %10000
    %10002 = vrot.lane.b32.xlu0 %v9345, 8
    %v10003 = vpop.permute.xlu0 %10002
    %10036 = vrot.lane.b32.xlu0 %v9364, 16
    %v10037 = vpop.permute.xlu0 %10036
    %10038 = vrot.lane.b32.xlu0 %v9383, 16
    %v10039 = vpop.permute.xlu0 %10038
    %10040 = vrot.lane.b32.xlu0 %v9402, 16
    %v10041 = vpop.permute.xlu0 %10040
    %10042 = vrot.lane.b32.xlu0 %v9421, 16
    %v10043 = vpop.permute.xlu0 %10042
    %10044 = vrot.lane.b32.xlu0 %v9440, 16
    %v10045 = vpop.permute.xlu0 %10044
    %10046 = vrot.lane.b32.xlu0 %v9459, 16
    %v10047 = vpop.permute.xlu0 %10046
    %10048 = vrot.lane.b32.xlu0 %v9478, 16
    %v10049 = vpop.permute.xlu0 %10048
    %10050 = vrot.lane.b32.xlu0 %v9497, 16
    %v10051 = vpop.permute.xlu0 %10050
    %10052 = vrot.lane.b32.xlu0 %v9516, 16
    %v10053 = vpop.permute.xlu0 %10052
    %10054 = vrot.lane.b32.xlu0 %v9535, 16
    %v10055 = vpop.permute.xlu0 %10054
    %10056 = vrot.lane.b32.xlu0 %v9554, 16
    %v10057 = vpop.permute.xlu0 %10056
    %10058 = vrot.lane.b32.xlu0 %v9573, 16
    %v10059 = vpop.permute.xlu0 %10058
    %10060 = vrot.lane.b32.xlu0 %v9592, 16
    %v10061 = vpop.permute.xlu0 %10060
    %10062 = vrot.lane.b32.xlu0 %v9611, 16
    %v10063 = vpop.permute.xlu0 %10062
    %10064 = vrot.lane.b32.xlu0 %v9630, 16
    %v10065 = vpop.permute.xlu0 %10064
    %10066 = vrot.lane.b32.xlu0 %v9649, 16
    %v10067 = vpop.permute.xlu0 %10066
    %10100 = vrot.lane.b32.xlu0 %v9668, 24
    %v10101 = vpop.permute.xlu0 %10100
    %10102 = vrot.lane.b32.xlu0 %v9687, 24
    %v10103 = vpop.permute.xlu0 %10102
    %10104 = vrot.lane.b32.xlu0 %v9706, 24
    %v10105 = vpop.permute.xlu0 %10104
    %10106 = vrot.lane.b32.xlu0 %v9725, 24
    %v10107 = vpop.permute.xlu0 %10106
    %10108 = vrot.lane.b32.xlu0 %v9744, 24
    %v10109 = vpop.permute.xlu0 %10108
    %10110 = vrot.lane.b32.xlu0 %v9763, 24
    %v10111 = vpop.permute.xlu0 %10110
    %10112 = vrot.lane.b32.xlu0 %v9782, 24
    %v10113 = vpop.permute.xlu0 %10112
    %10114 = vrot.lane.b32.xlu0 %v9801, 24
    %v10115 = vpop.permute.xlu0 %10114
    %10116 = vrot.lane.b32.xlu0 %v9820, 24
    %v10117 = vpop.permute.xlu0 %10116
    %10118 = vrot.lane.b32.xlu0 %v9839, 24
    %v10119 = vpop.permute.xlu0 %10118
    %10120 = vrot.lane.b32.xlu0 %v9858, 24
    %v10121 = vpop.permute.xlu0 %10120
    %10122 = vrot.lane.b32.xlu0 %v9877, 24
    %v10123 = vpop.permute.xlu0 %10122
    %10124 = vrot.lane.b32.xlu0 %v9896, 24
    %v10125 = vpop.permute.xlu0 %10124
    %10126 = vrot.lane.b32.xlu0 %v9915, 24
    %v10127 = vpop.permute.xlu0 %10126
    %10128 = vrot.lane.b32.xlu0 %v9934, 24
    %v10129 = vpop.permute.xlu0 %10128
    %10130 = vrot.lane.b32.xlu0 %v9953, 24
    %v10131 = vpop.permute.xlu0 %10130
    %v10148 = vsel %vm1010, %v8756, %v9973
    %v10149 = vsel %vm1010, %v8775, %v9975
    %v10150 = vsel %vm1010, %v8794, %v9977
    %v10151 = vsel %vm1010, %v8813, %v9979
    %v10152 = vsel %vm1010, %v8832, %v9981
    %v10153 = vsel %vm1010, %v8851, %v9983
    %v10154 = vsel %vm1010, %v8870, %v9985
    %v10155 = vsel %vm1010, %v8889, %v9987
    %v10156 = vsel %vm1010, %v8908, %v9989
    %v10157 = vsel %vm1010, %v8927, %v9991
    %v10158 = vsel %vm1010, %v8946, %v9993
    %v10159 = vsel %vm1010, %v8965, %v9995
    %v10160 = vsel %vm1010, %v8984, %v9997
    %v10161 = vsel %vm1010, %v9003, %v9999
    %v10162 = vsel %vm1010, %v9022, %v10001
    %v10163 = vsel %vm1010, %v9041, %v10003
    %v10164 = vsel %vm4863, %v10148, %v10037
    %v10165 = vsel %vm4863, %v10149, %v10039
    %v10166 = vsel %vm4863, %v10150, %v10041
    %v10167 = vsel %vm4863, %v10151, %v10043
    %v10168 = vsel %vm4863, %v10152, %v10045
    %v10169 = vsel %vm4863, %v10153, %v10047
    %v10170 = vsel %vm4863, %v10154, %v10049
    %v10171 = vsel %vm4863, %v10155, %v10051
    %v10172 = vsel %vm4863, %v10156, %v10053
    %v10173 = vsel %vm4863, %v10157, %v10055
    %v10174 = vsel %vm4863, %v10158, %v10057
    %v10175 = vsel %vm4863, %v10159, %v10059
    %v10176 = vsel %vm4863, %v10160, %v10061
    %v10177 = vsel %vm4863, %v10161, %v10063
    %v10178 = vsel %vm4863, %v10162, %v10065
    %v10179 = vsel %vm4863, %v10163, %v10067
    %v10180 = vsel %vm4880, %v10164, %v10101
    %v10181 = vsel %vm4880, %v10165, %v10103
    %v10182 = vsel %vm4880, %v10166, %v10105
    %v10183 = vsel %vm4880, %v10167, %v10107
    %v10184 = vsel %vm4880, %v10168, %v10109
    %v10185 = vsel %vm4880, %v10169, %v10111
    %v10186 = vsel %vm4880, %v10170, %v10113
    %v10187 = vsel %vm4880, %v10171, %v10115
    %v10188 = vsel %vm4880, %v10172, %v10117
    %v10189 = vsel %vm4880, %v10173, %v10119
    %v10190 = vsel %vm4880, %v10174, %v10121
    %v10191 = vsel %vm4880, %v10175, %v10123
    %v10192 = vsel %vm4880, %v10176, %v10125
    %v10193 = vsel %vm4880, %v10177, %v10127
    %v10194 = vsel %vm4880, %v10178, %v10129
    %v10195 = vsel %vm4880, %v10179, %v10131
    %v10196 = vpack.c.bf16 %v10181, %v10180
    %v10197 = vpack.c.bf16 %v10183, %v10182
    %v10198 = vpack.c.bf16 %v10185, %v10184
    %v10199 = vpack.c.bf16 %v10187, %v10186
    %v10200 = vpack.c.bf16 %v10189, %v10188
    %v10201 = vpack.c.bf16 %v10191, %v10190
    %v10202 = vpack.c.bf16 %v10193, %v10192
    %v10203 = vpack.c.bf16 %v10195, %v10194
    %s10204 = scalar_lea.vmem [#allocation8], 64
    %v10205 = vld [vmem:[%s10204] sm:$0xf]
    %v10206 = vld [vmem:[%s10204 + $0x4] sm:$0xf]
    %v10207 = vld [vmem:[%s10204 + $0x8] sm:$0xf]
    %v10208 = vld [vmem:[%s10204 + $0xc] sm:$0xf]
    %v10213 = vunpack.c.l.b16 %v10205
    %v10214 = vunpack.c.l.b16 %v10206
    %v10215 = vunpack.c.l.b16 %v10207
    %v10216 = vunpack.c.l.b16 %v10208
    %v10217 = vpack.c.b16 %v10214, %v10213
    %v10218 = vpack.c.b16 %v10216, %v10215
    %v10222 = vsel %vm161, %v10196, 0
    %v10225 = vsel %vm161, %v10197, 0
    %v10228 = vsel %vm161, %v10198, 0
    %v10231 = vsel %vm161, %v10199, 0
    %v10234 = vsel %vm161, %v10200, 0
    %v10237 = vsel %vm161, %v10201, 0
    %v10240 = vsel %vm161, %v10202, 0
    %v10243 = vsel %vm161, %v10203, 0
    %10245 = vmatpush.bf16.msra.mxu0 0
    %10246 = vmatpush.bf16.msra.mxu0 0
    %10247 = vmatpush.bf16.msra.mxu0 0
    %10248 = vmatpush.bf16.msra.mxu0 0
    %10249 = vmatpush.bf16.msra.mxu0 0
    %10250 = vmatpush.bf16.msra.mxu0 0
    %10251 = vmatpush.bf16.msra.mxu0 %v10218
    %10252 = vmatpush.bf16.msra.mxu0 %v10217
    %10253 = vmatmul.bf16.gmra.mxu0 %v10222
    %v10254 = vpop.f32.mrf.mxu0
    %v10255 = vadd.f32 0.0, %v10254
    %v10256 = vpop.f32.mrf.mxu0
    %v10257 = vadd.f32 0.0, %v10256
    %10258 = vmatmul.bf16.gmra.mxu0 %v10225
    %v10259 = vpop.f32.mrf.mxu0
    %v10260 = vadd.f32 0.0, %v10259
    %v10261 = vpop.f32.mrf.mxu0
    %v10262 = vadd.f32 0.0, %v10261
    %10263 = vmatmul.bf16.gmra.mxu0 %v10228
    %v10264 = vpop.f32.mrf.mxu0
    %v10265 = vadd.f32 0.0, %v10264
    %v10266 = vpop.f32.mrf.mxu0
    %v10267 = vadd.f32 0.0, %v10266
    %10268 = vmatmul.bf16.gmra.mxu0 %v10231
    %v10269 = vpop.f32.mrf.mxu0
    %v10270 = vadd.f32 0.0, %v10269
    %v10271 = vpop.f32.mrf.mxu0
    %v10272 = vadd.f32 0.0, %v10271
    %10273 = vmatmul.bf16.gmra.mxu0 %v10234
    %v10274 = vpop.f32.mrf.mxu0
    %v10275 = vadd.f32 0.0, %v10274
    %v10276 = vpop.f32.mrf.mxu0
    %v10277 = vadd.f32 0.0, %v10276
    %10278 = vmatmul.bf16.gmra.mxu0 %v10237
    %v10279 = vpop.f32.mrf.mxu0
    %v10280 = vadd.f32 0.0, %v10279
    %v10281 = vpop.f32.mrf.mxu0
    %v10282 = vadd.f32 0.0, %v10281
    %10283 = vmatmul.bf16.gmra.mxu0 %v10240
    %v10284 = vpop.f32.mrf.mxu0
    %v10285 = vadd.f32 0.0, %v10284
    %v10286 = vpop.f32.mrf.mxu0
    %v10287 = vadd.f32 0.0, %v10286
    %10288 = vmatmul.bf16.gmra.mxu0 %v10243
    %v10289 = vpop.f32.mrf.mxu0
    %v10290 = vadd.f32 0.0, %v10289
    %v10291 = vpop.f32.mrf.mxu0
    %v10292 = vadd.f32 0.0, %v10291
    %10293 = vdwg.mxu0
    %v10294 = vperm.slane %v100, 4
    %v10295 = vadd.f32 %v10255, %v10294
    %v10296 = vadd.f32 %v10257, %v10294
    %v10297 = vadd.f32 %v10260, %v10294
    %v10298 = vadd.f32 %v10262, %v10294
    %v10299 = vadd.f32 %v10265, %v10294
    %v10300 = vadd.f32 %v10267, %v10294
    %v10301 = vadd.f32 %v10270, %v10294
    %v10302 = vadd.f32 %v10272, %v10294
    %v10303 = vadd.f32 %v10275, %v10294
    %v10304 = vadd.f32 %v10277, %v10294
    %v10305 = vadd.f32 %v10280, %v10294
    %v10306 = vadd.f32 %v10282, %v10294
    %v10307 = vadd.f32 %v10285, %v10294
    %v10308 = vadd.f32 %v10287, %v10294
    %v10309 = vadd.f32 %v10290, %v10294
    %v10310 = vadd.f32 %v10292, %v10294
    %v10311 = vadd.f32 %v5012, %v10295
    %v10312 = vadd.f32 %v5013, %v10296
    %v10313 = vadd.f32 %v5014, %v10297
    %v10314 = vadd.f32 %v5015, %v10298
    %v10315 = vadd.f32 %v5016, %v10299
    %v10316 = vadd.f32 %v5017, %v10300
    %v10317 = vadd.f32 %v5018, %v10301
    %v10318 = vadd.f32 %v5019, %v10302
    %v10319 = vadd.f32 %v5020, %v10303
    %v10320 = vadd.f32 %v5021, %v10304
    %v10321 = vadd.f32 %v5022, %v10305
    %v10322 = vadd.f32 %v5023, %v10306
    %v10323 = vadd.f32 %v5024, %v10307
    %v10324 = vadd.f32 %v5025, %v10308
    %v10325 = vadd.f32 %v5026, %v10309
    %v10326 = vadd.f32 %v5027, %v10310
    %v10327 = vsel %vm161, %v10311, 0.0
    %10328 = vadd.xlane.f32.xlu0 %v10327
    %v10329 = vpop.xlane.xlu0 %10328
    %v10330 = vsel %vm161, %v10312, 0.0
    %10331 = vadd.xlane.f32.xlu0 %v10330
    %v10332 = vpop.xlane.xlu0 %10331
    %v10333 = vsel %vm161, %v10313, 0.0
    %10334 = vadd.xlane.f32.xlu0 %v10333
    %v10335 = vpop.xlane.xlu0 %10334
    %v10336 = vsel %vm161, %v10314, 0.0
    %10337 = vadd.xlane.f32.xlu0 %v10336
    %v10338 = vpop.xlane.xlu0 %10337
    %v10339 = vsel %vm161, %v10315, 0.0
    %10340 = vadd.xlane.f32.xlu0 %v10339
    %v10341 = vpop.xlane.xlu0 %10340
    %v10342 = vsel %vm161, %v10316, 0.0
    %10343 = vadd.xlane.f32.xlu0 %v10342
    %v10344 = vpop.xlane.xlu0 %10343
    %v10345 = vsel %vm161, %v10317, 0.0
    %10346 = vadd.xlane.f32.xlu0 %v10345
    %v10347 = vpop.xlane.xlu0 %10346
    %v10348 = vsel %vm161, %v10318, 0.0
    %10349 = vadd.xlane.f32.xlu0 %v10348
    %v10350 = vpop.xlane.xlu0 %10349
    %v10351 = vsel %vm161, %v10319, 0.0
    %10352 = vadd.xlane.f32.xlu0 %v10351
    %v10353 = vpop.xlane.xlu0 %10352
    %v10354 = vsel %vm161, %v10320, 0.0
    %10355 = vadd.xlane.f32.xlu0 %v10354
    %v10356 = vpop.xlane.xlu0 %10355
    %v10357 = vsel %vm161, %v10321, 0.0
    %10358 = vadd.xlane.f32.xlu0 %v10357
    %v10359 = vpop.xlane.xlu0 %10358
    %v10360 = vsel %vm161, %v10322, 0.0
    %10361 = vadd.xlane.f32.xlu0 %v10360
    %v10362 = vpop.xlane.xlu0 %10361
    %v10363 = vsel %vm161, %v10323, 0.0
    %10364 = vadd.xlane.f32.xlu0 %v10363
    %v10365 = vpop.xlane.xlu0 %10364
    %v10366 = vsel %vm161, %v10324, 0.0
    %10367 = vadd.xlane.f32.xlu0 %v10366
    %v10368 = vpop.xlane.xlu0 %10367
    %v10369 = vsel %vm161, %v10325, 0.0
    %10370 = vadd.xlane.f32.xlu0 %v10369
    %v10371 = vpop.xlane.xlu0 %10370
    %v10372 = vsel %vm161, %v10326, 0.0
    %10373 = vadd.xlane.f32.xlu0 %v10372
    %v10374 = vpop.xlane.xlu0 %10373
    %v10375 = vmul.f32 %v10329, %v216
    %v10376 = vmul.f32 %v10332, %v216
    %v10377 = vmul.f32 %v10335, %v216
    %v10378 = vmul.f32 %v10338, %v216
    %v10379 = vmul.f32 %v10341, %v216
    %v10380 = vmul.f32 %v10344, %v216
    %v10381 = vmul.f32 %v10347, %v216
    %v10382 = vmul.f32 %v10350, %v216
    %v10383 = vmul.f32 %v10353, %v216
    %v10384 = vmul.f32 %v10356, %v216
    %v10385 = vmul.f32 %v10359, %v216
    %v10386 = vmul.f32 %v10362, %v216
    %v10387 = vmul.f32 %v10365, %v216
    %v10388 = vmul.f32 %v10368, %v216
    %v10389 = vmul.f32 %v10371, %v216
    %v10390 = vmul.f32 %v10374, %v216
    %v10391 = vsub.f32 %v10311, %v10375
    %v10392 = vsub.f32 %v10312, %v10376
    %v10393 = vsub.f32 %v10313, %v10377
    %v10394 = vsub.f32 %v10314, %v10378
    %v10395 = vsub.f32 %v10315, %v10379
    %v10396 = vsub.f32 %v10316, %v10380
    %v10397 = vsub.f32 %v10317, %v10381
    %v10398 = vsub.f32 %v10318, %v10382
    %v10399 = vsub.f32 %v10319, %v10383
    %v10400 = vsub.f32 %v10320, %v10384
    %v10401 = vsub.f32 %v10321, %v10385
    %v10402 = vsub.f32 %v10322, %v10386
    %v10403 = vsub.f32 %v10323, %v10387
    %v10404 = vsub.f32 %v10324, %v10388
    %v10405 = vsub.f32 %v10325, %v10389
    %v10406 = vsub.f32 %v10326, %v10390
    %v10407 = vmul.f32 %v10391, %v10391
    %v10408 = vmul.f32 %v10392, %v10392
    %v10409 = vmul.f32 %v10393, %v10393
    %v10410 = vmul.f32 %v10394, %v10394
    %v10411 = vmul.f32 %v10395, %v10395
    %v10412 = vmul.f32 %v10396, %v10396
    %v10413 = vmul.f32 %v10397, %v10397
    %v10414 = vmul.f32 %v10398, %v10398
    %v10415 = vmul.f32 %v10399, %v10399
    %v10416 = vmul.f32 %v10400, %v10400
    %v10417 = vmul.f32 %v10401, %v10401
    %v10418 = vmul.f32 %v10402, %v10402
    %v10419 = vmul.f32 %v10403, %v10403
    %v10420 = vmul.f32 %v10404, %v10404
    %v10421 = vmul.f32 %v10405, %v10405
    %v10422 = vmul.f32 %v10406, %v10406
    %v10423 = vsel %vm161, %v10407, 0.0
    %10424 = vadd.xlane.f32.xlu0 %v10423
    %v10425 = vpop.xlane.xlu0 %10424
    %v10426 = vsel %vm161, %v10408, 0.0
    %10427 = vadd.xlane.f32.xlu0 %v10426
    %v10428 = vpop.xlane.xlu0 %10427
    %v10429 = vsel %vm161, %v10409, 0.0
    %10430 = vadd.xlane.f32.xlu0 %v10429
    %v10431 = vpop.xlane.xlu0 %10430
    %v10432 = vsel %vm161, %v10410, 0.0
    %10433 = vadd.xlane.f32.xlu0 %v10432
    %v10434 = vpop.xlane.xlu0 %10433
    %v10435 = vsel %vm161, %v10411, 0.0
    %10436 = vadd.xlane.f32.xlu0 %v10435
    %v10437 = vpop.xlane.xlu0 %10436
    %v10438 = vsel %vm161, %v10412, 0.0
    %10439 = vadd.xlane.f32.xlu0 %v10438
    %v10440 = vpop.xlane.xlu0 %10439
    %v10441 = vsel %vm161, %v10413, 0.0
    %10442 = vadd.xlane.f32.xlu0 %v10441
    %v10443 = vpop.xlane.xlu0 %10442
    %v10444 = vsel %vm161, %v10414, 0.0
    %10445 = vadd.xlane.f32.xlu0 %v10444
    %v10446 = vpop.xlane.xlu0 %10445
    %v10447 = vsel %vm161, %v10415, 0.0
    %10448 = vadd.xlane.f32.xlu0 %v10447
    %v10449 = vpop.xlane.xlu0 %10448
    %v10450 = vsel %vm161, %v10416, 0.0
    %10451 = vadd.xlane.f32.xlu0 %v10450
    %v10452 = vpop.xlane.xlu0 %10451
    %v10453 = vsel %vm161, %v10417, 0.0
    %10454 = vadd.xlane.f32.xlu0 %v10453
    %v10455 = vpop.xlane.xlu0 %10454
    %v10456 = vsel %vm161, %v10418, 0.0
    %10457 = vadd.xlane.f32.xlu0 %v10456
    %v10458 = vpop.xlane.xlu0 %10457
    %v10459 = vsel %vm161, %v10419, 0.0
    %10460 = vadd.xlane.f32.xlu0 %v10459
    %v10461 = vpop.xlane.xlu0 %10460
    %v10462 = vsel %vm161, %v10420, 0.0
    %10463 = vadd.xlane.f32.xlu0 %v10462
    %v10464 = vpop.xlane.xlu0 %10463
    %v10465 = vsel %vm161, %v10421, 0.0
    %10466 = vadd.xlane.f32.xlu0 %v10465
    %v10467 = vpop.xlane.xlu0 %10466
    %v10468 = vsel %vm161, %v10422, 0.0
    %10469 = vadd.xlane.f32.xlu0 %v10468
    %v10470 = vpop.xlane.xlu0 %10469
    %v10471 = vmul.f32 %v10425, %v216
    %v10472 = vmul.f32 %v10428, %v216
    %v10473 = vmul.f32 %v10431, %v216
    %v10474 = vmul.f32 %v10434, %v216
    %v10475 = vmul.f32 %v10437, %v216
    %v10476 = vmul.f32 %v10440, %v216
    %v10477 = vmul.f32 %v10443, %v216
    %v10478 = vmul.f32 %v10446, %v216
    %v10479 = vmul.f32 %v10449, %v216
    %v10480 = vmul.f32 %v10452, %v216
    %v10481 = vmul.f32 %v10455, %v216
    %v10482 = vmul.f32 %v10458, %v216
    %v10483 = vmul.f32 %v10461, %v216
    %v10484 = vmul.f32 %v10464, %v216
    %v10485 = vmul.f32 %v10467, %v216
    %v10486 = vmul.f32 %v10470, %v216
    %v10487 = vadd.f32 %v10471, 1e-05
    %v10488 = vadd.f32 %v10472, 1e-05
    %v10489 = vadd.f32 %v10473, 1e-05
    %v10490 = vadd.f32 %v10474, 1e-05
    %v10491 = vadd.f32 %v10475, 1e-05
    %v10492 = vadd.f32 %v10476, 1e-05
    %v10493 = vadd.f32 %v10477, 1e-05
    %v10494 = vadd.f32 %v10478, 1e-05
    %v10495 = vadd.f32 %v10479, 1e-05
    %v10496 = vadd.f32 %v10480, 1e-05
    %v10497 = vadd.f32 %v10481, 1e-05
    %v10498 = vadd.f32 %v10482, 1e-05
    %v10499 = vadd.f32 %v10483, 1e-05
    %v10500 = vadd.f32 %v10484, 1e-05
    %v10501 = vadd.f32 %v10485, 1e-05
    %v10502 = vadd.f32 %v10486, 1e-05
    %v10503 = vrsqrt.pop %v10487
    %v10504 = vmul.f32 %v10503, %v10487
    %v10505 = vmul.f32 %v10504, %v10503
    %v10506 = vmul.f32 0.5, %v10505
    %v10507 = vsub.f32 1.5, %v10506
    %v10508 = vmul.f32 %v10503, %v10507
    %vm10509 = vweird.f32 %v10487
    %vm10510 = vweird.f32 %v10503
    %vm10511 = vmor %vm10509, %vm10510
    %v10512 = vsel %vm10511, %v10503, %v10508
    %v10513 = vrsqrt.pop %v10488
    %v10514 = vmul.f32 %v10513, %v10488
    %v10515 = vmul.f32 %v10514, %v10513
    %v10516 = vmul.f32 0.5, %v10515
    %v10517 = vsub.f32 1.5, %v10516
    %v10518 = vmul.f32 %v10513, %v10517
    %vm10519 = vweird.f32 %v10488
    %vm10520 = vweird.f32 %v10513
    %vm10521 = vmor %vm10519, %vm10520
    %v10522 = vsel %vm10521, %v10513, %v10518
    %v10523 = vrsqrt.pop %v10489
    %v10524 = vmul.f32 %v10523, %v10489
    %v10525 = vmul.f32 %v10524, %v10523
    %v10526 = vmul.f32 0.5, %v10525
    %v10527 = vsub.f32 1.5, %v10526
    %v10528 = vmul.f32 %v10523, %v10527
    %vm10529 = vweird.f32 %v10489
    %vm10530 = vweird.f32 %v10523
    %vm10531 = vmor %vm10529, %vm10530
    %v10532 = vsel %vm10531, %v10523, %v10528
    %v10533 = vrsqrt.pop %v10490
    %v10534 = vmul.f32 %v10533, %v10490
    %v10535 = vmul.f32 %v10534, %v10533
    %v10536 = vmul.f32 0.5, %v10535
    %v10537 = vsub.f32 1.5, %v10536
    %v10538 = vmul.f32 %v10533, %v10537
    %vm10539 = vweird.f32 %v10490
    %vm10540 = vweird.f32 %v10533
    %vm10541 = vmor %vm10539, %vm10540
    %v10542 = vsel %vm10541, %v10533, %v10538
    %v10543 = vrsqrt.pop %v10491
    %v10544 = vmul.f32 %v10543, %v10491
    %v10545 = vmul.f32 %v10544, %v10543
    %v10546 = vmul.f32 0.5, %v10545
    %v10547 = vsub.f32 1.5, %v10546
    %v10548 = vmul.f32 %v10543, %v10547
    %vm10549 = vweird.f32 %v10491
    %vm10550 = vweird.f32 %v10543
    %vm10551 = vmor %vm10549, %vm10550
    %v10552 = vsel %vm10551, %v10543, %v10548
    %v10553 = vrsqrt.pop %v10492
    %v10554 = vmul.f32 %v10553, %v10492
    %v10555 = vmul.f32 %v10554, %v10553
    %v10556 = vmul.f32 0.5, %v10555
    %v10557 = vsub.f32 1.5, %v10556
    %v10558 = vmul.f32 %v10553, %v10557
    %vm10559 = vweird.f32 %v10492
    %vm10560 = vweird.f32 %v10553
    %vm10561 = vmor %vm10559, %vm10560
    %v10562 = vsel %vm10561, %v10553, %v10558
    %v10563 = vrsqrt.pop %v10493
    %v10564 = vmul.f32 %v10563, %v10493
    %v10565 = vmul.f32 %v10564, %v10563
    %v10566 = vmul.f32 0.5, %v10565
    %v10567 = vsub.f32 1.5, %v10566
    %v10568 = vmul.f32 %v10563, %v10567
    %vm10569 = vweird.f32 %v10493
    %vm10570 = vweird.f32 %v10563
    %vm10571 = vmor %vm10569, %vm10570
    %v10572 = vsel %vm10571, %v10563, %v10568
    %v10573 = vrsqrt.pop %v10494
    %v10574 = vmul.f32 %v10573, %v10494
    %v10575 = vmul.f32 %v10574, %v10573
    %v10576 = vmul.f32 0.5, %v10575
    %v10577 = vsub.f32 1.5, %v10576
    %v10578 = vmul.f32 %v10573, %v10577
    %vm10579 = vweird.f32 %v10494
    %vm10580 = vweird.f32 %v10573
    %vm10581 = vmor %vm10579, %vm10580
    %v10582 = vsel %vm10581, %v10573, %v10578
    %v10583 = vrsqrt.pop %v10495
    %v10584 = vmul.f32 %v10583, %v10495
    %v10585 = vmul.f32 %v10584, %v10583
    %v10586 = vmul.f32 0.5, %v10585
    %v10587 = vsub.f32 1.5, %v10586
    %v10588 = vmul.f32 %v10583, %v10587
    %vm10589 = vweird.f32 %v10495
    %vm10590 = vweird.f32 %v10583
    %vm10591 = vmor %vm10589, %vm10590
    %v10592 = vsel %vm10591, %v10583, %v10588
    %v10593 = vrsqrt.pop %v10496
    %v10594 = vmul.f32 %v10593, %v10496
    %v10595 = vmul.f32 %v10594, %v10593
    %v10596 = vmul.f32 0.5, %v10595
    %v10597 = vsub.f32 1.5, %v10596
    %v10598 = vmul.f32 %v10593, %v10597
    %vm10599 = vweird.f32 %v10496
    %vm10600 = vweird.f32 %v10593
    %vm10601 = vmor %vm10599, %vm10600
    %v10602 = vsel %vm10601, %v10593, %v10598
    %v10603 = vrsqrt.pop %v10497
    %v10604 = vmul.f32 %v10603, %v10497
    %v10605 = vmul.f32 %v10604, %v10603
    %v10606 = vmul.f32 0.5, %v10605
    %v10607 = vsub.f32 1.5, %v10606
    %v10608 = vmul.f32 %v10603, %v10607
    %vm10609 = vweird.f32 %v10497
    %vm10610 = vweird.f32 %v10603
    %vm10611 = vmor %vm10609, %vm10610
    %v10612 = vsel %vm10611, %v10603, %v10608
    %v10613 = vrsqrt.pop %v10498
    %v10614 = vmul.f32 %v10613, %v10498
    %v10615 = vmul.f32 %v10614, %v10613
    %v10616 = vmul.f32 0.5, %v10615
    %v10617 = vsub.f32 1.5, %v10616
    %v10618 = vmul.f32 %v10613, %v10617
    %vm10619 = vweird.f32 %v10498
    %vm10620 = vweird.f32 %v10613
    %vm10621 = vmor %vm10619, %vm10620
    %v10622 = vsel %vm10621, %v10613, %v10618
    %v10623 = vrsqrt.pop %v10499
    %v10624 = vmul.f32 %v10623, %v10499
    %v10625 = vmul.f32 %v10624, %v10623
    %v10626 = vmul.f32 0.5, %v10625
    %v10627 = vsub.f32 1.5, %v10626
    %v10628 = vmul.f32 %v10623, %v10627
    %vm10629 = vweird.f32 %v10499
    %vm10630 = vweird.f32 %v10623
    %vm10631 = vmor %vm10629, %vm10630
    %v10632 = vsel %vm10631, %v10623, %v10628
    %v10633 = vrsqrt.pop %v10500
    %v10634 = vmul.f32 %v10633, %v10500
    %v10635 = vmul.f32 %v10634, %v10633
    %v10636 = vmul.f32 0.5, %v10635
    %v10637 = vsub.f32 1.5, %v10636
    %v10638 = vmul.f32 %v10633, %v10637
    %vm10639 = vweird.f32 %v10500
    %vm10640 = vweird.f32 %v10633
    %vm10641 = vmor %vm10639, %vm10640
    %v10642 = vsel %vm10641, %v10633, %v10638
    %v10643 = vrsqrt.pop %v10501
    %v10644 = vmul.f32 %v10643, %v10501
    %v10645 = vmul.f32 %v10644, %v10643
    %v10646 = vmul.f32 0.5, %v10645
    %v10647 = vsub.f32 1.5, %v10646
    %v10648 = vmul.f32 %v10643, %v10647
    %vm10649 = vweird.f32 %v10501
    %vm10650 = vweird.f32 %v10643
    %vm10651 = vmor %vm10649, %vm10650
    %v10652 = vsel %vm10651, %v10643, %v10648
    %v10653 = vrsqrt.pop %v10502
    %v10654 = vmul.f32 %v10653, %v10502
    %v10655 = vmul.f32 %v10654, %v10653
    %v10656 = vmul.f32 0.5, %v10655
    %v10657 = vsub.f32 1.5, %v10656
    %v10658 = vmul.f32 %v10653, %v10657
    %vm10659 = vweird.f32 %v10502
    %vm10660 = vweird.f32 %v10653
    %vm10661 = vmor %vm10659, %vm10660
    %v10662 = vsel %vm10661, %v10653, %v10658
    %v10663 = vmul.f32 %v10391, %v10512
    %v10664 = vmul.f32 %v10392, %v10522
    %v10665 = vmul.f32 %v10393, %v10532
    %v10666 = vmul.f32 %v10394, %v10542
    %v10667 = vmul.f32 %v10395, %v10552
    %v10668 = vmul.f32 %v10396, %v10562
    %v10669 = vmul.f32 %v10397, %v10572
    %v10670 = vmul.f32 %v10398, %v10582
    %v10671 = vmul.f32 %v10399, %v10592
    %v10672 = vmul.f32 %v10400, %v10602
    %v10673 = vmul.f32 %v10401, %v10612
    %v10674 = vmul.f32 %v10402, %v10622
    %v10675 = vmul.f32 %v10403, %v10632
    %v10676 = vmul.f32 %v10404, %v10642
    %v10677 = vmul.f32 %v10405, %v10652
    %v10678 = vmul.f32 %v10406, %v10662
    %v10679 = vperm.slane %v101, 1
    %v10680 = vmul.f32 %v10663, %v10679
    %v10681 = vmul.f32 %v10664, %v10679
    %v10682 = vmul.f32 %v10665, %v10679
    %v10683 = vmul.f32 %v10666, %v10679
    %v10684 = vmul.f32 %v10667, %v10679
    %v10685 = vmul.f32 %v10668, %v10679
    %v10686 = vmul.f32 %v10669, %v10679
    %v10687 = vmul.f32 %v10670, %v10679
    %v10688 = vmul.f32 %v10671, %v10679
    %v10689 = vmul.f32 %v10672, %v10679
    %v10690 = vmul.f32 %v10673, %v10679
    %v10691 = vmul.f32 %v10674, %v10679
    %v10692 = vmul.f32 %v10675, %v10679
    %v10693 = vmul.f32 %v10676, %v10679
    %v10694 = vmul.f32 %v10677, %v10679
    %v10695 = vmul.f32 %v10678, %v10679
    %v10696 = vperm.slane %v101, 2
    %v10697 = vadd.f32 %v10680, %v10696
    %v10698 = vadd.f32 %v10681, %v10696
    %v10699 = vadd.f32 %v10682, %v10696
    %v10700 = vadd.f32 %v10683, %v10696
    %v10701 = vadd.f32 %v10684, %v10696
    %v10702 = vadd.f32 %v10685, %v10696
    %v10703 = vadd.f32 %v10686, %v10696
    %v10704 = vadd.f32 %v10687, %v10696
    %v10705 = vadd.f32 %v10688, %v10696
    %v10706 = vadd.f32 %v10689, %v10696
    %v10707 = vadd.f32 %v10690, %v10696
    %v10708 = vadd.f32 %v10691, %v10696
    %v10709 = vadd.f32 %v10692, %v10696
    %v10710 = vadd.f32 %v10693, %v10696
    %v10711 = vadd.f32 %v10694, %v10696
    %v10712 = vadd.f32 %v10695, %v10696
    %v10713 = vld [vmem:[#allocation7] sm:$0xf]
    %v10714 = vld [vmem:[#allocation7 + $0x4] sm:$0xf]
    %v10715 = vld [vmem:[#allocation7 + $0x8] sm:$0xf]
    %v10716 = vld [vmem:[#allocation7 + $0xc] sm:$0xf]
    %v10717 = vld [vmem:[#allocation7 + $0x10] sm:$0xf]
    %v10718 = vld [vmem:[#allocation7 + $0x14] sm:$0xf]
    %v10719 = vld [vmem:[#allocation7 + $0x18] sm:$0xf]
    %v10720 = vld [vmem:[#allocation7 + $0x1c] sm:$0xf]
    %v10721 = vld [vmem:[#allocation7 + $0x20] sm:$0xf]
    %v10722 = vld [vmem:[#allocation7 + $0x24] sm:$0xf]
    %v10723 = vld [vmem:[#allocation7 + $0x28] sm:$0xf]
    %v10724 = vld [vmem:[#allocation7 + $0x2c] sm:$0xf]
    %v10725 = vld [vmem:[#allocation7 + $0x30] sm:$0xf]
    %v10726 = vld [vmem:[#allocation7 + $0x34] sm:$0xf]
    %v10727 = vld [vmem:[#allocation7 + $0x38] sm:$0xf]
    %v10728 = vld [vmem:[#allocation7 + $0x3c] sm:$0xf]
    %v10729 = vpack.c.bf16 %v10698, %v10697
    %v10730 = vpack.c.bf16 %v10700, %v10699
    %v10731 = vpack.c.bf16 %v10702, %v10701
    %v10732 = vpack.c.bf16 %v10704, %v10703
    %v10733 = vpack.c.bf16 %v10706, %v10705
    %v10734 = vpack.c.bf16 %v10708, %v10707
    %v10735 = vpack.c.bf16 %v10710, %v10709
    %v10736 = vpack.c.bf16 %v10712, %v10711
    %v10753 = vunpack.c.l.b16 %v10713
    %v10754 = vunpack.c.l.b16 %v10714
    %v10755 = vunpack.c.l.b16 %v10715
    %v10756 = vunpack.c.l.b16 %v10716
    %v10757 = vunpack.c.l.b16 %v10717
    %v10758 = vunpack.c.l.b16 %v10718
    %v10759 = vunpack.c.l.b16 %v10719
    %v10760 = vunpack.c.l.b16 %v10720
    %v10761 = vunpack.c.l.b16 %v10721
    %v10762 = vunpack.c.l.b16 %v10722
    %v10763 = vunpack.c.l.b16 %v10723
    %v10764 = vunpack.c.l.b16 %v10724
    %v10765 = vunpack.c.l.b16 %v10725
    %v10766 = vunpack.c.l.b16 %v10726
    %v10767 = vunpack.c.l.b16 %v10727
    %v10768 = vunpack.c.l.b16 %v10728
    %v10769 = vpack.c.b16 %v10754, %v10753
    %v10770 = vpack.c.b16 %v10756, %v10755
    %v10771 = vpack.c.b16 %v10758, %v10757
    %v10772 = vpack.c.b16 %v10760, %v10759
    %v10773 = vpack.c.b16 %v10762, %v10761
    %v10774 = vpack.c.b16 %v10764, %v10763
    %v10775 = vpack.c.b16 %v10766, %v10765
    %v10776 = vpack.c.b16 %v10768, %v10767
    %10785 = vmatpush.bf16.msra.mxu0 %v10736
    %10786 = vmatpush.bf16.msra.mxu0 %v10735
    %10787 = vmatpush.bf16.msra.mxu0 %v10734
    %10788 = vmatpush.bf16.msra.mxu0 %v10733
    %10789 = vmatpush.bf16.msra.mxu0 %v10732
    %10790 = vmatpush.bf16.msra.mxu0 %v10731
    %10791 = vmatpush.bf16.msra.mxu0 %v10730
    %10792 = vmatpush.bf16.msra.mxu0 %v10729
    %10793 = vmatmul.bf16.gmra.mxu0 %v10769
    %v10794 = vpop.f32.mrf.mxu0
    %v10795 = vadd.f32 0.0, %v10794
    %v10796 = vpop.f32.mrf.mxu0
    %v10797 = vadd.f32 0.0, %v10796
    %10798 = vmatmul.bf16.gmra.mxu0 %v10770
    %v10799 = vpop.f32.mrf.mxu0
    %v10800 = vadd.f32 0.0, %v10799
    %v10801 = vpop.f32.mrf.mxu0
    %v10802 = vadd.f32 0.0, %v10801
    %10803 = vmatmul.bf16.gmra.mxu0 %v10771
    %v10804 = vpop.f32.mrf.mxu0
    %v10805 = vadd.f32 0.0, %v10804
    %v10806 = vpop.f32.mrf.mxu0
    %v10807 = vadd.f32 0.0, %v10806
    %10808 = vmatmul.bf16.gmra.mxu0 %v10772
    %v10809 = vpop.f32.mrf.mxu0
    %v10810 = vadd.f32 0.0, %v10809
    %v10811 = vpop.f32.mrf.mxu0
    %v10812 = vadd.f32 0.0, %v10811
    %10813 = vmatmul.bf16.gmra.mxu0 %v10773
    %v10814 = vpop.f32.mrf.mxu0
    %v10815 = vadd.f32 0.0, %v10814
    %v10816 = vpop.f32.mrf.mxu0
    %v10817 = vadd.f32 0.0, %v10816
    %10818 = vmatmul.bf16.gmra.mxu0 %v10774
    %v10819 = vpop.f32.mrf.mxu0
    %v10820 = vadd.f32 0.0, %v10819
    %v10821 = vpop.f32.mrf.mxu0
    %v10822 = vadd.f32 0.0, %v10821
    %10823 = vmatmul.bf16.gmra.mxu0 %v10775
    %v10824 = vpop.f32.mrf.mxu0
    %v10825 = vadd.f32 0.0, %v10824
    %v10826 = vpop.f32.mrf.mxu0
    %v10827 = vadd.f32 0.0, %v10826
    %10828 = vmatmul.bf16.gmra.mxu0 %v10776
    %v10829 = vpop.f32.mrf.mxu0
    %v10830 = vadd.f32 0.0, %v10829
    %v10831 = vpop.f32.mrf.mxu0
    %v10832 = vadd.f32 0.0, %v10831
    %10833 = vdwg.mxu0
    %v10834 = vpack.c.bf16 %v10797, %v10795
    %v10835 = vpack.c.bf16 %v10802, %v10800
    %v10836 = vpack.c.bf16 %v10807, %v10805
    %v10837 = vpack.c.bf16 %v10812, %v10810
    %v10838 = vpack.c.bf16 %v10817, %v10815
    %v10839 = vpack.c.bf16 %v10822, %v10820
    %v10840 = vpack.c.bf16 %v10827, %v10825
    %v10841 = vpack.c.bf16 %v10832, %v10830
    %s10842 = scalar_lea.vmem [#allocation8], 80
    %v10843 = vld [vmem:[%s10842] sm:$0xf]
    %v10844 = vld [vmem:[%s10842 + $0x4] sm:$0xf]
    %v10845 = vld [vmem:[%s10842 + $0x8] sm:$0xf]
    %v10846 = vld [vmem:[%s10842 + $0xc] sm:$0xf]
    %v10851 = vunpack.c.l.b16 %v10843
    %v10852 = vunpack.c.l.b16 %v10844
    %v10853 = vunpack.c.l.b16 %v10845
    %v10854 = vunpack.c.l.b16 %v10846
    %v10855 = vpack.c.b16 %v10852, %v10851
    %v10856 = vpack.c.b16 %v10854, %v10853
    %v10860 = vsel %vm161, %v10834, 0
    %v10863 = vsel %vm161, %v10835, 0
    %v10866 = vsel %vm161, %v10836, 0
    %v10869 = vsel %vm161, %v10837, 0
    %v10872 = vsel %vm161, %v10838, 0
    %v10875 = vsel %vm161, %v10839, 0
    %v10878 = vsel %vm161, %v10840, 0
    %v10881 = vsel %vm161, %v10841, 0
    %10883 = vmatpush.bf16.msra.mxu0 0
    %10884 = vmatpush.bf16.msra.mxu0 0
    %10885 = vmatpush.bf16.msra.mxu0 0
    %10886 = vmatpush.bf16.msra.mxu0 0
    %10887 = vmatpush.bf16.msra.mxu0 0
    %10888 = vmatpush.bf16.msra.mxu0 0
    %10889 = vmatpush.bf16.msra.mxu0 %v10856
    %10890 = vmatpush.bf16.msra.mxu0 %v10855
    %10891 = vmatmul.bf16.gmra.mxu0 %v10860
    %v10892 = vpop.f32.mrf.mxu0
    %v10893 = vadd.f32 0.0, %v10892
    %v10894 = vpop.f32.mrf.mxu0
    %v10895 = vadd.f32 0.0, %v10894
    %10896 = vmatmul.bf16.gmra.mxu0 %v10863
    %v10897 = vpop.f32.mrf.mxu0
    %v10898 = vadd.f32 0.0, %v10897
    %v10899 = vpop.f32.mrf.mxu0
    %v10900 = vadd.f32 0.0, %v10899
    %10901 = vmatmul.bf16.gmra.mxu0 %v10866
    %v10902 = vpop.f32.mrf.mxu0
    %v10903 = vadd.f32 0.0, %v10902
    %v10904 = vpop.f32.mrf.mxu0
    %v10905 = vadd.f32 0.0, %v10904
    %10906 = vmatmul.bf16.gmra.mxu0 %v10869
    %v10907 = vpop.f32.mrf.mxu0
    %v10908 = vadd.f32 0.0, %v10907
    %v10909 = vpop.f32.mrf.mxu0
    %v10910 = vadd.f32 0.0, %v10909
    %10911 = vmatmul.bf16.gmra.mxu0 %v10872
    %v10912 = vpop.f32.mrf.mxu0
    %v10913 = vadd.f32 0.0, %v10912
    %v10914 = vpop.f32.mrf.mxu0
    %v10915 = vadd.f32 0.0, %v10914
    %10916 = vmatmul.bf16.gmra.mxu0 %v10875
    %v10917 = vpop.f32.mrf.mxu0
    %v10918 = vadd.f32 0.0, %v10917
    %v10919 = vpop.f32.mrf.mxu0
    %v10920 = vadd.f32 0.0, %v10919
    %10921 = vmatmul.bf16.gmra.mxu0 %v10878
    %v10922 = vpop.f32.mrf.mxu0
    %v10923 = vadd.f32 0.0, %v10922
    %v10924 = vpop.f32.mrf.mxu0
    %v10925 = vadd.f32 0.0, %v10924
    %10926 = vmatmul.bf16.gmra.mxu0 %v10881
    %v10927 = vpop.f32.mrf.mxu0
    %v10928 = vadd.f32 0.0, %v10927
    %v10929 = vpop.f32.mrf.mxu0
    %v10930 = vadd.f32 0.0, %v10929
    %10931 = vdwg.mxu0
    %v10932 = vmax.f32 %v10893, 0.0
    %v10933 = vmax.f32 %v10895, 0.0
    %v10934 = vmax.f32 %v10898, 0.0
    %v10935 = vmax.f32 %v10900, 0.0
    %v10936 = vmax.f32 %v10903, 0.0
    %v10937 = vmax.f32 %v10905, 0.0
    %v10938 = vmax.f32 %v10908, 0.0
    %v10939 = vmax.f32 %v10910, 0.0
    %v10940 = vmax.f32 %v10913, 0.0
    %v10941 = vmax.f32 %v10915, 0.0
    %v10942 = vmax.f32 %v10918, 0.0
    %v10943 = vmax.f32 %v10920, 0.0
    %v10944 = vmax.f32 %v10923, 0.0
    %v10945 = vmax.f32 %v10925, 0.0
    %v10946 = vmax.f32 %v10928, 0.0
    %v10947 = vmax.f32 %v10930, 0.0
    %v10948 = vadd.f32 %v10311, %v10932
    %v10949 = vadd.f32 %v10312, %v10933
    %v10950 = vadd.f32 %v10313, %v10934
    %v10951 = vadd.f32 %v10314, %v10935
    %v10952 = vadd.f32 %v10315, %v10936
    %v10953 = vadd.f32 %v10316, %v10937
    %v10954 = vadd.f32 %v10317, %v10938
    %v10955 = vadd.f32 %v10318, %v10939
    %v10956 = vadd.f32 %v10319, %v10940
    %v10957 = vadd.f32 %v10320, %v10941
    %v10958 = vadd.f32 %v10321, %v10942
    %v10959 = vadd.f32 %v10322, %v10943
    %v10960 = vadd.f32 %v10323, %v10944
    %v10961 = vadd.f32 %v10324, %v10945
    %v10962 = vadd.f32 %v10325, %v10946
    %v10963 = vadd.f32 %v10326, %v10947
    %10964 = vst.msk [vmem:[#allocation11] sm:$0xff] %vm161, %v10948
    %10965 = vst.msk [vmem:[#allocation11 + $0x8] sm:$0xff] %vm161, %v10949
    %10966 = vst.msk [vmem:[#allocation11 + $0x10] sm:$0xff] %vm161, %v10950
    %10967 = vst.msk [vmem:[#allocation11 + $0x18] sm:$0xff] %vm161, %v10951
    %10968 = vst.msk [vmem:[#allocation11 + $0x20] sm:$0xff] %vm161, %v10952
    %10969 = vst.msk [vmem:[#allocation11 + $0x28] sm:$0xff] %vm161, %v10953
    %10970 = vst.msk [vmem:[#allocation11 + $0x30] sm:$0xff] %vm161, %v10954
    %10971 = vst.msk [vmem:[#allocation11 + $0x38] sm:$0xff] %vm161, %v10955
    %10972 = vst.msk [vmem:[#allocation11 + $0x40] sm:$0xff] %vm161, %v10956
    %10973 = vst.msk [vmem:[#allocation11 + $0x48] sm:$0xff] %vm161, %v10957
    %10974 = vst.msk [vmem:[#allocation11 + $0x50] sm:$0xff] %vm161, %v10958
    %10975 = vst.msk [vmem:[#allocation11 + $0x58] sm:$0xff] %vm161, %v10959
    %10976 = vst.msk [vmem:[#allocation11 + $0x60] sm:$0xff] %vm161, %v10960
    %10977 = vst.msk [vmem:[#allocation11 + $0x68] sm:$0xff] %vm161, %v10961
    %10978 = vst.msk [vmem:[#allocation11 + $0x70] sm:$0xff] %vm161, %v10962
    %10979 = vst.msk [vmem:[#allocation11 + $0x78] sm:$0xff] %vm161, %v10963
    // Predicated region
    $region42: #{decoder_layer.1} parent=1 // pred_check
      _
    $region43: #{decoder_layer.1} parent=1 // pred_check_branch
      %10981 = sbr.rel (0) target = $region45
    $region44: #{decoder_layer.1} parent=1 // pred_region
      %10983 = vsyncadd [#allocation4], 0
      %s10984 = sshll.u32 [#allocation11], 4
      %s10985 = int_to_ptr.vmem [resolvable:$true] %s10984
      %s10986 = sshll.u32 %s5, 4
      %s10987 = int_to_ptr.hbm [resolvable:$true] %s10986
      %10992 = dma.vmem_to_hbm [thread:$0]  %s10985, 2048, %s10987, [#allocation4], 128, 128, 8
    $region45: #{decoder_layer.1} parent=1 // pred_fallthru
      _
    // Predicated region
    $region46: #{decoder_layer.1} parent=1 // pred_check
      _
    $region47: #{decoder_layer.1} parent=1 // pred_check_branch
      %10994 = sbr.rel (0) target = $region49
    $region48: #{decoder_layer.1} parent=1 // pred_region
      %10996 = dma.done [#allocation4], 2048
    $region49: #{decoder_layer.1} parent=1 // pred_fallthru
      _
    %10997 = vsyncpa [#allocation3], 1
    %10998 = vsyncpa [#allocation6], 1
    %10999 = vsyncpa [#allocation9], 1
    %11000 = vsyncpa [#allocation4], 1

</llo_original>
